<compile_context>
chip_gen: v6e
topology: v6e:2x2x1
jax: 0.10.0
libtpu: 0.0.40
codegen_flags: <defaults>
</compile_context>

<pallas_src>
import jax
import jax.numpy as jnp
from jax.experimental import pallas as pl
from jax.experimental.pallas import tpu as pltpu

# ---- module config (matches nn.Module defaults: ca_attention=1, expand=2) ----
DIM = 16                       # dim, divisible by ca_num_heads=4 and sa_num_heads=8
CA_HEADS = 4                   # ca_num_heads
EXPAND = 2                     # expand_ratio
CG = DIM // CA_HEADS           # dim // ca_num_heads == split_groups
C2 = DIM * EXPAND              # proj0 output channels
KMAX = 3 + (CA_HEADS - 1) * 2  # largest local conv kernel size (= 9)
PMAX = KMAX // 2               # its padding (= 4)
BN_EPS = 1e-5


# ----------------------------- in-kernel helpers ------------------------------
def _erf(x):
    # Abramowitz & Stegun 7.1.26 rational approximation (|err| <= 1.5e-7, i.e.
    # float32-exact for practical purposes), built only from ops with
    # guaranteed Mosaic lowerings (exp, div, mul, add, select).
    a1, a2, a3, a4, a5 = 0.254829592, -0.284496736, 1.421413741, -1.453152027, 1.061405429
    p = 0.3275911
    sgn = jnp.where(x >= 0.0, 1.0, -1.0)
    ax = jnp.abs(x)
    t = 1.0 / (1.0 + p * ax)
    poly = ((((a5 * t + a4) * t + a3) * t + a2) * t + a1) * t
    return sgn * (1.0 - poly * jnp.exp(-ax * ax))


def _gelu_exact(x):
    # nn.GELU() default (erf form): 0.5 * x * (1 + erf(x / sqrt(2)))
    return 0.5 * x * (1.0 + _erf(x * 0.7071067811865476))


# ----------------------------- fused kernel -----------------------------------
def _make_fused_kernel(B, H, W):
    C = DIM

    def kernel(x_ref, wv_ref, ws_ref, wdw_ref, bdw_ref,
               w0_ref, b0_ref, gma_ref, bta_ref,
               w1_ref, b1_ref, wp_ref, bp_ref,
               o_ref, pad_scr, z_scr):
        # ---- v / s Linears (qkv_bias=False -> no bias add) -------------------
        # TODO(synk): for large M on v6e/v7x, cast matmul operands to bf16
        # (keep f32 accumulation); at M=128 / K=16 it is latency-bound noise.
        x = x_ref[...]                                             # (M, C)
        v = jnp.dot(x, wv_ref[...], preferred_element_type=jnp.float32)
        s = jnp.dot(x, ws_ref[...], preferred_element_type=jnp.float32)

        # ---- scatter s into a zero-padded NHWC VMEM scratch ------------------
        # (padding folded in-kernel: no HBM round-trip of the padded tensor)
        pad_scr[...] = jnp.zeros_like(pad_scr)
        for b in range(B):
            for h in range(H):
                r = (b * H + h) * W                                # 8-row aligned
                pad_scr[b, PMAX + h, PMAX:PMAX + W, :] = s[r:r + W, :]

        # ---- fused multi-scale depthwise conv --------------------------------
        # One 9x9 depthwise conv whose taps outside each head's true
        # (3/5/7/9)^2 centered window are zero -> identical to the four
        # "same"-padded per-head convs.  Channel order c = head*CG + group.
        # TODO(synk): for production H/W, repack lanes as (B*H, W*C) so the
        # last dim is a multiple of 128 and skip the structurally-zero taps per
        # head; at these toy sizes the conv is a negligible fraction of wall.
        w_dw = wdw_ref[...]                                        # (9, 9, C)
        acc = jnp.zeros((B, H, W, C), jnp.float32)
        for kh in range(KMAX):
            for kw in range(KMAX):
                acc = acc + (pad_scr[:, kh:kh + H, kw:kw + W, :]
                             * w_dw[kh, kw, :])
        acc = acc + bdw_ref[...]                                   # (1, C) bcast

        # ---- layout bridge back to (M, C) rows via VMEM scratch --------------
        for b in range(B):
            for h in range(H):
                r = (b * H + h) * W
                z_scr[r:r + W, :] = acc[b, h]
        z = z_scr[...]                                             # (M, C)

        # ---- proj0 (grouped 1x1 conv as block-diag dense) + BN + GELU --------
        y0 = jnp.dot(z, w0_ref[...], preferred_element_type=jnp.float32) + b0_ref[...]
        # BatchNorm2d training-mode forward: biased batch stats over (B, H, W).
        mean = jnp.mean(y0, axis=0, keepdims=True)
        var = jnp.mean((y0 - mean) ** 2, axis=0, keepdims=True)
        yn = (y0 - mean) * jax.lax.rsqrt(var + BN_EPS) * gma_ref[...] + bta_ref[...]
        g = _gelu_exact(yn)

        # ---- proj1 (1x1 conv), modulate by v, final proj Linear --------------
        s_out = jnp.dot(g, w1_ref[...], preferred_element_type=jnp.float32) + b1_ref[...]
        mod = s_out * v
        o_ref[...] = (jnp.dot(mod, wp_ref[...], preferred_element_type=jnp.float32)
                      + bp_ref[...]).astype(o_ref.dtype)

    return kernel


# --------------------------------- wrapper -------------------------------------
def attention_ca_forward(x, params, H, W):
    """Forward of Attention with ca_attention=1.  x: (B, N, C), N = H*W."""
    B, N, C = x.shape
    assert N == H * W and C == DIM
    M = B * N
    xf = x.reshape(M, C)

    kernel = _make_fused_kernel(B, H, W)
    z2 = lambda i: (0, 0)
    z3 = lambda i: (0, 0, 0)

    # TODO(synk): for production M (e.g. 56x56 maps), tile the row dimension
    # with a two-pass BatchNorm (stats pass + normalize pass), mark the row
    # axis "parallel" (v7x dual TensorCore), and re-derive the tile for v7x's
    # 64 MiB VMEM.  Here the whole working set is a few hundred KB, and the
    # single whole-array block keeps the BN batch statistics exact.
    out = pl.pallas_call(
        kernel,
        out_shape=jax.ShapeDtypeStruct((M, C), x.dtype),
        grid=(1,),
        in_specs=[
            pl.BlockSpec((M, C), z2),                 # x (flattened rows)
            pl.BlockSpec((C, C), z2),                 # wv_t
            pl.BlockSpec((C, C), z2),                 # ws_t
            pl.BlockSpec((KMAX, KMAX, C), z3),        # fused depthwise taps
            pl.BlockSpec((1, C), z2),                 # depthwise bias
            pl.BlockSpec((C, C2), z2),                # proj0 (block-diag dense)
            pl.BlockSpec((1, C2), z2),                # proj0 bias
            pl.BlockSpec((1, C2), z2),                # bn gamma
            pl.BlockSpec((1, C2), z2),                # bn beta
            pl.BlockSpec((C2, C), z2),                # proj1 weight (T)
            pl.BlockSpec((1, C), z2),                 # proj1 bias
            pl.BlockSpec((C, C), z2),                 # proj weight (T)
            pl.BlockSpec((1, C), z2),                 # proj bias
        ],
        out_specs=pl.BlockSpec((M, C), z2),
        scratch_shapes=[
            pltpu.VMEM((B, H + 2 * PMAX, W + 2 * PMAX, C), jnp.float32),  # padded s
            pltpu.VMEM((M, C), jnp.float32),                              # conv rows
        ],
        compiler_params=pltpu.CompilerParams(
            dimension_semantics=("arbitrary",)),
    )(xf, params["wv_t"], params["ws_t"], params["w_dw"], params["b_dw"],
      params["w0_dense"], params["b0"], params["gamma"], params["beta"],
      params["w1_t"], params["b1"], params["wp_t"], params["bp"])

    # proj_drop has p=0.0 -> identity
    return out.reshape(B, N, C)


# ------------------------- deterministic parameter init -------------------------
def init_params(key):
    ks = jax.random.split(key, 8)
    std = 0.02  # trunc_normal_(std=0.02) for Linear weights

    wv = std * jax.random.truncated_normal(ks[0], -2.0, 2.0, (DIM, DIM), jnp.float32)
    ws = std * jax.random.truncated_normal(ks[1], -2.0, 2.0, (DIM, DIM), jnp.float32)
    wp = std * jax.random.truncated_normal(ks[2], -2.0, 2.0, (DIM, DIM), jnp.float32)

    # local_conv_{i+1}: depthwise Conv2d(CG, CG, k=3+2i, pad=1+i, groups=CG).
    # Pack all heads into a single (KMAX, KMAX, C) depthwise filter (smaller
    # kernels zero-padded & centered -> identical "same" conv); channel c = i*CG + g.
    w_dw = jnp.zeros((KMAX, KMAX, DIM), jnp.float32)
    kconv = jax.random.split(ks[3], CA_HEADS)
    for i in range(CA_HEADS):
        k = 3 + 2 * i
        fan_out = k * k  # k*k*out_channels // groups with out_channels == groups
        w_i = jnp.sqrt(2.0 / fan_out) * jax.random.normal(kconv[i], (CG, k, k), jnp.float32)
        off = (KMAX - k) // 2
        w_dw = w_dw.at[off:off + k, off:off + k, i * CG:(i + 1) * CG].set(
            jnp.transpose(w_i, (1, 2, 0)))
    b_dw = jnp.zeros((1, DIM), jnp.float32)  # conv biases are zero-initialized

    # proj0: Conv2d(C, C2, 1, groups=CG); PyTorch weight shape (C2, C//CG, 1, 1).
    # Dense (C, C2) block-diagonal matrix whose row index uses the conv-output
    # channel order c = head*CG + group, which folds in the torch.cat channel
    # permutation (c' = group*heads + head) for free.
    out_pg = C2 // CG          # output channels per group (= heads * expand)
    in_pg = DIM // CG          # input channels per group (= CA_HEADS)
    w0 = jnp.sqrt(2.0 / out_pg) * jax.random.normal(ks[4], (C2, in_pg), jnp.float32)
    w0_r = w0.reshape(CG, out_pg, in_pg)                  # [g, j, i]
    eye_g = jnp.eye(CG, dtype=jnp.float32)
    # dense[i*CG + g, h*out_pg + j] = w0_r[g, j, i] * (g == h)
    w0_dense = jnp.einsum('gji,gh->ighj', w0_r, eye_g).reshape(DIM, C2)
    b0 = jnp.zeros((1, C2), jnp.float32)

    gamma = jnp.ones((1, C2), jnp.float32)   # BatchNorm2d defaults
    beta = jnp.zeros((1, C2), jnp.float32)

    # proj1: Conv2d(C2, C, 1)
    w1 = jnp.sqrt(2.0 / DIM) * jax.random.normal(ks[5], (DIM, C2), jnp.float32)
    b1 = jnp.zeros((1, DIM), jnp.float32)

    return {
        "wv_t": wv.T, "ws_t": ws.T,
        "w_dw": w_dw, "b_dw": b_dw,
        "w0_dense": w0_dense, "b0": b0, "gamma": gamma, "beta": beta,
        "w1_t": w1.T, "b1": b1,
        "wp_t": wp.T, "bp": jnp.zeros((1, DIM), jnp.float32),
    }


if __name__ == "__main__":
    B, H, W = 2, 8, 8
    N = H * W
    key = jax.random.PRNGKey(0)
    kx, kp = jax.random.split(key)
    x = jax.random.normal(kx, (B, N, DIM), jnp.float32)
    params = init_params(kp)

    out = attention_ca_forward(x, params, H, W)
    out = jax.block_until_ready(out)
    assert out.shape == (B, N, DIM) and out.dtype == jnp.float32
    assert bool(jnp.all(jnp.isfinite(out)))
    print("KERNEL_OK")
</pallas_src>

<mosaic_0001>
module attributes {stable_mosaic.version = 11 : i64} {
  func.func @kernel(%arg0: i32, %arg1: memref<128x16xf32, #tpu.memory_space<vmem>>, %arg2: memref<16x16xf32, #tpu.memory_space<vmem>>, %arg3: memref<16x16xf32, #tpu.memory_space<vmem>>, %arg4: memref<9x9x16xf32, #tpu.memory_space<vmem>>, %arg5: memref<1x16xf32, #tpu.memory_space<vmem>>, %arg6: memref<16x32xf32, #tpu.memory_space<vmem>>, %arg7: memref<1x32xf32, #tpu.memory_space<vmem>>, %arg8: memref<1x32xf32, #tpu.memory_space<vmem>>, %arg9: memref<1x32xf32, #tpu.memory_space<vmem>>, %arg10: memref<32x16xf32, #tpu.memory_space<vmem>>, %arg11: memref<1x16xf32, #tpu.memory_space<vmem>>, %arg12: memref<16x16xf32, #tpu.memory_space<vmem>>, %arg13: memref<1x16xf32, #tpu.memory_space<vmem>>, %arg14: memref<128x16xf32, #tpu.memory_space<vmem>>, %arg15: memref<2x16x16x16xf32, #tpu.memory_space<vmem>>, %arg16: memref<128x16xf32, #tpu.memory_space<vmem>>) attributes {dimension_semantics = [#tpu.dimension_semantics<arbitrary>], iteration_bounds = array<i64: 1>, scalar_prefetch = 0 : i64, scratch_operands = 2 : i64, tpu.core_type = #tpu.core_type<tc>, window_params = [{pipeline_mode = #tpu.pipeline_mode<synchronous>, transform_indices = @transform_0, window_bounds = array<i64: 128, 16>}, {pipeline_mode = #tpu.pipeline_mode<synchronous>, transform_indices = @transform_1, window_bounds = array<i64: 16, 16>}, {pipeline_mode = #tpu.pipeline_mode<synchronous>, transform_indices = @transform_2, window_bounds = array<i64: 16, 16>}, {pipeline_mode = #tpu.pipeline_mode<synchronous>, transform_indices = @transform_3, window_bounds = array<i64: 9, 9, 16>}, {pipeline_mode = #tpu.pipeline_mode<synchronous>, transform_indices = @transform_4, window_bounds = array<i64: 1, 16>}, {pipeline_mode = #tpu.pipeline_mode<synchronous>, transform_indices = @transform_5, window_bounds = array<i64: 16, 32>}, {pipeline_mode = #tpu.pipeline_mode<synchronous>, transform_indices = @transform_6, window_bounds = array<i64: 1, 32>}, {pipeline_mode = #tpu.pipeline_mode<synchronous>, transform_indices = @transform_7, window_bounds = array<i64: 1, 32>}, {pipeline_mode = #tpu.pipeline_mode<synchronous>, transform_indices = @transform_8, window_bounds = array<i64: 1, 32>}, {pipeline_mode = #tpu.pipeline_mode<synchronous>, transform_indices = @transform_9, window_bounds = array<i64: 32, 16>}, {pipeline_mode = #tpu.pipeline_mode<synchronous>, transform_indices = @transform_10, window_bounds = array<i64: 1, 16>}, {pipeline_mode = #tpu.pipeline_mode<synchronous>, transform_indices = @transform_11, window_bounds = array<i64: 16, 16>}, {pipeline_mode = #tpu.pipeline_mode<synchronous>, transform_indices = @transform_12, window_bounds = array<i64: 1, 16>}, {pipeline_mode = #tpu.pipeline_mode<synchronous>, transform_indices = @transform_13, window_bounds = array<i64: 128, 16>}]} {
    %c0 = arith.constant 0 : index
    %c0_0 = arith.constant 0 : index
    %0 = vector.load %arg1[%c0, %c0_0] : memref<128x16xf32, #tpu.memory_space<vmem>>, vector<128x16xf32>
    %c0_1 = arith.constant 0 : index
    %c0_2 = arith.constant 0 : index
    %1 = vector.load %arg2[%c0_1, %c0_2] : memref<16x16xf32, #tpu.memory_space<vmem>>, vector<16x16xf32>
    %cst = arith.constant dense<0.000000e+00> : vector<128x16xf32>
    %2 = tpu.matmul %0, %1, %cst {dimension_numbers = #tpu.dot_dimension_numbers<[1], [0], [0], [1], [0, 0, 1, 1], [], []>} : vector<128x16xf32>, vector<16x16xf32>, vector<128x16xf32> -> vector<128x16xf32>
    %c0_3 = arith.constant 0 : index
    %c0_4 = arith.constant 0 : index
    %3 = vector.load %arg3[%c0_3, %c0_4] : memref<16x16xf32, #tpu.memory_space<vmem>>, vector<16x16xf32>
    %cst_5 = arith.constant dense<0.000000e+00> : vector<128x16xf32>
    %4 = tpu.matmul %0, %3, %cst_5 {dimension_numbers = #tpu.dot_dimension_numbers<[1], [0], [0], [1], [0, 0, 1, 1], [], []>} : vector<128x16xf32>, vector<16x16xf32>, vector<128x16xf32> -> vector<128x16xf32>
    %cst_6 = arith.constant 0.000000e+00 : f32
    %5 = vector.broadcast %cst_6 : f32 to vector<2x16x16x16xf32>
    %c0_7 = arith.constant 0 : index
    %c0_8 = arith.constant 0 : index
    %c0_9 = arith.constant 0 : index
    %c0_10 = arith.constant 0 : index
    %6 = vector.load %arg15[%c0_7, %c0_8, %c0_9, %c0_10] : memref<2x16x16x16xf32, #tpu.memory_space<vmem>>, vector<2x16x16x16xf32>
    tpu.vector_store %arg15[%c0_7, %c0_8, %c0_9, %c0_10], %5 {strides = array<i32>} : memref<2x16x16x16xf32, #tpu.memory_space<vmem>>, vector<2x16x16x16xf32>,
    %7 = vector.extract_strided_slice %4 {offsets = [0, 0], sizes = [8, 16], strides = [1, 1]} : vector<128x16xf32> to vector<8x16xf32>
    %c0_11 = arith.constant 0 : index
    %c4 = arith.constant 4 : index
    %c4_12 = arith.constant 4 : index
    %c0_13 = arith.constant 0 : index
    %8 = vector.load %arg15[%c0_11, %c4, %c4_12, %c0_13] : memref<2x16x16x16xf32, #tpu.memory_space<vmem>>, vector<1x1x8x16xf32>
    %9 = vector.shape_cast %8 : vector<1x1x8x16xf32> to vector<8x16xf32>
    %10 = vector.shape_cast %7 : vector<8x16xf32> to vector<1x1x8x16xf32>
    tpu.vector_store %arg15[%c0_11, %c4, %c4_12, %c0_13], %10 {strides = array<i32>} : memref<2x16x16x16xf32, #tpu.memory_space<vmem>>, vector<1x1x8x16xf32>,
    %11 = vector.extract_strided_slice %4 {offsets = [8, 0], sizes = [8, 16], strides = [1, 1]} : vector<128x16xf32> to vector<8x16xf32>
    %c0_14 = arith.constant 0 : index
    %c5 = arith.constant 5 : index
    %c4_15 = arith.constant 4 : index
    %c0_16 = arith.constant 0 : index
    %12 = vector.load %arg15[%c0_14, %c5, %c4_15, %c0_16] : memref<2x16x16x16xf32, #tpu.memory_space<vmem>>, vector<1x1x8x16xf32>
    %13 = vector.shape_cast %12 : vector<1x1x8x16xf32> to vector<8x16xf32>
    %14 = vector.shape_cast %11 : vector<8x16xf32> to vector<1x1x8x16xf32>
    tpu.vector_store %arg15[%c0_14, %c5, %c4_15, %c0_16], %14 {strides = array<i32>} : memref<2x16x16x16xf32, #tpu.memory_space<vmem>>, vector<1x1x8x16xf32>,
    %15 = vector.extract_strided_slice %4 {offsets = [16, 0], sizes = [8, 16], strides = [1, 1]} : vector<128x16xf32> to vector<8x16xf32>
    %c0_17 = arith.constant 0 : index
    %c6 = arith.constant 6 : index
    %c4_18 = arith.constant 4 : index
    %c0_19 = arith.constant 0 : index
    %16 = vector.load %arg15[%c0_17, %c6, %c4_18, %c0_19] : memref<2x16x16x16xf32, #tpu.memory_space<vmem>>, vector<1x1x8x16xf32>
    %17 = vector.shape_cast %16 : vector<1x1x8x16xf32> to vector<8x16xf32>
    %18 = vector.shape_cast %15 : vector<8x16xf32> to vector<1x1x8x16xf32>
    tpu.vector_store %arg15[%c0_17, %c6, %c4_18, %c0_19], %18 {strides = array<i32>} : memref<2x16x16x16xf32, #tpu.memory_space<vmem>>, vector<1x1x8x16xf32>,
    %19 = vector.extract_strided_slice %4 {offsets = [24, 0], sizes = [8, 16], strides = [1, 1]} : vector<128x16xf32> to vector<8x16xf32>
    %c0_20 = arith.constant 0 : index
    %c7 = arith.constant 7 : index
    %c4_21 = arith.constant 4 : index
    %c0_22 = arith.constant 0 : index
    %20 = vector.load %arg15[%c0_20, %c7, %c4_21, %c0_22] : memref<2x16x16x16xf32, #tpu.memory_space<vmem>>, vector<1x1x8x16xf32>
    %21 = vector.shape_cast %20 : vector<1x1x8x16xf32> to vector<8x16xf32>
    %22 = vector.shape_cast %19 : vector<8x16xf32> to vector<1x1x8x16xf32>
    tpu.vector_store %arg15[%c0_20, %c7, %c4_21, %c0_22], %22 {strides = array<i32>} : memref<2x16x16x16xf32, #tpu.memory_space<vmem>>, vector<1x1x8x16xf32>,
    %23 = vector.extract_strided_slice %4 {offsets = [32, 0], sizes = [8, 16], strides = [1, 1]} : vector<128x16xf32> to vector<8x16xf32>
    %c0_23 = arith.constant 0 : index
    %c8 = arith.constant 8 : index
    %c4_24 = arith.constant 4 : index
    %c0_25 = arith.constant 0 : index
    %24 = vector.load %arg15[%c0_23, %c8, %c4_24, %c0_25] : memref<2x16x16x16xf32, #tpu.memory_space<vmem>>, vector<1x1x8x16xf32>
    %25 = vector.shape_cast %24 : vector<1x1x8x16xf32> to vector<8x16xf32>
    %26 = vector.shape_cast %23 : vector<8x16xf32> to vector<1x1x8x16xf32>
    tpu.vector_store %arg15[%c0_23, %c8, %c4_24, %c0_25], %26 {strides = array<i32>} : memref<2x16x16x16xf32, #tpu.memory_space<vmem>>, vector<1x1x8x16xf32>,
    %27 = vector.extract_strided_slice %4 {offsets = [40, 0], sizes = [8, 16], strides = [1, 1]} : vector<128x16xf32> to vector<8x16xf32>
    %c0_26 = arith.constant 0 : index
    %c9 = arith.constant 9 : index
    %c4_27 = arith.constant 4 : index
    %c0_28 = arith.constant 0 : index
    %28 = vector.load %arg15[%c0_26, %c9, %c4_27, %c0_28] : memref<2x16x16x16xf32, #tpu.memory_space<vmem>>, vector<1x1x8x16xf32>
    %29 = vector.shape_cast %28 : vector<1x1x8x16xf32> to vector<8x16xf32>
    %30 = vector.shape_cast %27 : vector<8x16xf32> to vector<1x1x8x16xf32>
    tpu.vector_store %arg15[%c0_26, %c9, %c4_27, %c0_28], %30 {strides = array<i32>} : memref<2x16x16x16xf32, #tpu.memory_space<vmem>>, vector<1x1x8x16xf32>,
    %31 = vector.extract_strided_slice %4 {offsets = [48, 0], sizes = [8, 16], strides = [1, 1]} : vector<128x16xf32> to vector<8x16xf32>
    %c0_29 = arith.constant 0 : index
    %c10 = arith.constant 10 : index
    %c4_30 = arith.constant 4 : index
    %c0_31 = arith.constant 0 : index
    %32 = vector.load %arg15[%c0_29, %c10, %c4_30, %c0_31] : memref<2x16x16x16xf32, #tpu.memory_space<vmem>>, vector<1x1x8x16xf32>
    %33 = vector.shape_cast %32 : vector<1x1x8x16xf32> to vector<8x16xf32>
    %34 = vector.shape_cast %31 : vector<8x16xf32> to vector<1x1x8x16xf32>
    tpu.vector_store %arg15[%c0_29, %c10, %c4_30, %c0_31], %34 {strides = array<i32>} : memref<2x16x16x16xf32, #tpu.memory_space<vmem>>, vector<1x1x8x16xf32>,
    %35 = vector.extract_strided_slice %4 {offsets = [56, 0], sizes = [8, 16], strides = [1, 1]} : vector<128x16xf32> to vector<8x16xf32>
    %c0_32 = arith.constant 0 : index
    %c11 = arith.constant 11 : index
    %c4_33 = arith.constant 4 : index
    %c0_34 = arith.constant 0 : index
    %36 = vector.load %arg15[%c0_32, %c11, %c4_33, %c0_34] : memref<2x16x16x16xf32, #tpu.memory_space<vmem>>, vector<1x1x8x16xf32>
    %37 = vector.shape_cast %36 : vector<1x1x8x16xf32> to vector<8x16xf32>
    %38 = vector.shape_cast %35 : vector<8x16xf32> to vector<1x1x8x16xf32>
    tpu.vector_store %arg15[%c0_32, %c11, %c4_33, %c0_34], %38 {strides = array<i32>} : memref<2x16x16x16xf32, #tpu.memory_space<vmem>>, vector<1x1x8x16xf32>,
    %39 = vector.extract_strided_slice %4 {offsets = [64, 0], sizes = [8, 16], strides = [1, 1]} : vector<128x16xf32> to vector<8x16xf32>
    %c1 = arith.constant 1 : index
    %c4_35 = arith.constant 4 : index
    %c4_36 = arith.constant 4 : index
    %c0_37 = arith.constant 0 : index
    %40 = vector.load %arg15[%c1, %c4_35, %c4_36, %c0_37] : memref<2x16x16x16xf32, #tpu.memory_space<vmem>>, vector<1x1x8x16xf32>
    %41 = vector.shape_cast %40 : vector<1x1x8x16xf32> to vector<8x16xf32>
    %42 = vector.shape_cast %39 : vector<8x16xf32> to vector<1x1x8x16xf32>
    tpu.vector_store %arg15[%c1, %c4_35, %c4_36, %c0_37], %42 {strides = array<i32>} : memref<2x16x16x16xf32, #tpu.memory_space<vmem>>, vector<1x1x8x16xf32>,
    %43 = vector.extract_strided_slice %4 {offsets = [72, 0], sizes = [8, 16], strides = [1, 1]} : vector<128x16xf32> to vector<8x16xf32>
    %c1_38 = arith.constant 1 : index
    %c5_39 = arith.constant 5 : index
    %c4_40 = arith.constant 4 : index
    %c0_41 = arith.constant 0 : index
    %44 = vector.load %arg15[%c1_38, %c5_39, %c4_40, %c0_41] : memref<2x16x16x16xf32, #tpu.memory_space<vmem>>, vector<1x1x8x16xf32>
    %45 = vector.shape_cast %44 : vector<1x1x8x16xf32> to vector<8x16xf32>
    %46 = vector.shape_cast %43 : vector<8x16xf32> to vector<1x1x8x16xf32>
    tpu.vector_store %arg15[%c1_38, %c5_39, %c4_40, %c0_41], %46 {strides = array<i32>} : memref<2x16x16x16xf32, #tpu.memory_space<vmem>>, vector<1x1x8x16xf32>,
    %47 = vector.extract_strided_slice %4 {offsets = [80, 0], sizes = [8, 16], strides = [1, 1]} : vector<128x16xf32> to vector<8x16xf32>
    %c1_42 = arith.constant 1 : index
    %c6_43 = arith.constant 6 : index
    %c4_44 = arith.constant 4 : index
    %c0_45 = arith.constant 0 : index
    %48 = vector.load %arg15[%c1_42, %c6_43, %c4_44, %c0_45] : memref<2x16x16x16xf32, #tpu.memory_space<vmem>>, vector<1x1x8x16xf32>
    %49 = vector.shape_cast %48 : vector<1x1x8x16xf32> to vector<8x16xf32>
    %50 = vector.shape_cast %47 : vector<8x16xf32> to vector<1x1x8x16xf32>
    tpu.vector_store %arg15[%c1_42, %c6_43, %c4_44, %c0_45], %50 {strides = array<i32>} : memref<2x16x16x16xf32, #tpu.memory_space<vmem>>, vector<1x1x8x16xf32>,
    %51 = vector.extract_strided_slice %4 {offsets = [88, 0], sizes = [8, 16], strides = [1, 1]} : vector<128x16xf32> to vector<8x16xf32>
    %c1_46 = arith.constant 1 : index
    %c7_47 = arith.constant 7 : index
    %c4_48 = arith.constant 4 : index
    %c0_49 = arith.constant 0 : index
    %52 = vector.load %arg15[%c1_46, %c7_47, %c4_48, %c0_49] : memref<2x16x16x16xf32, #tpu.memory_space<vmem>>, vector<1x1x8x16xf32>
    %53 = vector.shape_cast %52 : vector<1x1x8x16xf32> to vector<8x16xf32>
    %54 = vector.shape_cast %51 : vector<8x16xf32> to vector<1x1x8x16xf32>
    tpu.vector_store %arg15[%c1_46, %c7_47, %c4_48, %c0_49], %54 {strides = array<i32>} : memref<2x16x16x16xf32, #tpu.memory_space<vmem>>, vector<1x1x8x16xf32>,
    %55 = vector.extract_strided_slice %4 {offsets = [96, 0], sizes = [8, 16], strides = [1, 1]} : vector<128x16xf32> to vector<8x16xf32>
    %c1_50 = arith.constant 1 : index
    %c8_51 = arith.constant 8 : index
    %c4_52 = arith.constant 4 : index
    %c0_53 = arith.constant 0 : index
    %56 = vector.load %arg15[%c1_50, %c8_51, %c4_52, %c0_53] : memref<2x16x16x16xf32, #tpu.memory_space<vmem>>, vector<1x1x8x16xf32>
    %57 = vector.shape_cast %56 : vector<1x1x8x16xf32> to vector<8x16xf32>
    %58 = vector.shape_cast %55 : vector<8x16xf32> to vector<1x1x8x16xf32>
    tpu.vector_store %arg15[%c1_50, %c8_51, %c4_52, %c0_53], %58 {strides = array<i32>} : memref<2x16x16x16xf32, #tpu.memory_space<vmem>>, vector<1x1x8x16xf32>,
    %59 = vector.extract_strided_slice %4 {offsets = [104, 0], sizes = [8, 16], strides = [1, 1]} : vector<128x16xf32> to vector<8x16xf32>
    %c1_54 = arith.constant 1 : index
    %c9_55 = arith.constant 9 : index
    %c4_56 = arith.constant 4 : index
    %c0_57 = arith.constant 0 : index
    %60 = vector.load %arg15[%c1_54, %c9_55, %c4_56, %c0_57] : memref<2x16x16x16xf32, #tpu.memory_space<vmem>>, vector<1x1x8x16xf32>
    %61 = vector.shape_cast %60 : vector<1x1x8x16xf32> to vector<8x16xf32>
    %62 = vector.shape_cast %59 : vector<8x16xf32> to vector<1x1x8x16xf32>
    tpu.vector_store %arg15[%c1_54, %c9_55, %c4_56, %c0_57], %62 {strides = array<i32>} : memref<2x16x16x16xf32, #tpu.memory_space<vmem>>, vector<1x1x8x16xf32>,
    %63 = vector.extract_strided_slice %4 {offsets = [112, 0], sizes = [8, 16], strides = [1, 1]} : vector<128x16xf32> to vector<8x16xf32>
    %c1_58 = arith.constant 1 : index
    %c10_59 = arith.constant 10 : index
    %c4_60 = arith.constant 4 : index
    %c0_61 = arith.constant 0 : index
    %64 = vector.load %arg15[%c1_58, %c10_59, %c4_60, %c0_61] : memref<2x16x16x16xf32, #tpu.memory_space<vmem>>, vector<1x1x8x16xf32>
    %65 = vector.shape_cast %64 : vector<1x1x8x16xf32> to vector<8x16xf32>
    %66 = vector.shape_cast %63 : vector<8x16xf32> to vector<1x1x8x16xf32>
    tpu.vector_store %arg15[%c1_58, %c10_59, %c4_60, %c0_61], %66 {strides = array<i32>} : memref<2x16x16x16xf32, #tpu.memory_space<vmem>>, vector<1x1x8x16xf32>,
    %67 = vector.extract_strided_slice %4 {offsets = [120, 0], sizes = [8, 16], strides = [1, 1]} : vector<128x16xf32> to vector<8x16xf32>
    %c1_62 = arith.constant 1 : index
    %c11_63 = arith.constant 11 : index
    %c4_64 = arith.constant 4 : index
    %c0_65 = arith.constant 0 : index
    %68 = vector.load %arg15[%c1_62, %c11_63, %c4_64, %c0_65] : memref<2x16x16x16xf32, #tpu.memory_space<vmem>>, vector<1x1x8x16xf32>
    %69 = vector.shape_cast %68 : vector<1x1x8x16xf32> to vector<8x16xf32>
    %70 = vector.shape_cast %67 : vector<8x16xf32> to vector<1x1x8x16xf32>
    tpu.vector_store %arg15[%c1_62, %c11_63, %c4_64, %c0_65], %70 {strides = array<i32>} : memref<2x16x16x16xf32, #tpu.memory_space<vmem>>, vector<1x1x8x16xf32>,
    %c0_66 = arith.constant 0 : index
    %c0_67 = arith.constant 0 : index
    %c0_68 = arith.constant 0 : index
    %71 = vector.load %arg4[%c0_66, %c0_67, %c0_68] : memref<9x9x16xf32, #tpu.memory_space<vmem>>, vector<9x9x16xf32>
    %cst_69 = arith.constant 0.000000e+00 : f32
    %72 = vector.broadcast %cst_69 : f32 to vector<2x8x8x16xf32>
    %c0_70 = arith.constant 0 : index
    %c0_71 = arith.constant 0 : index
    %c0_72 = arith.constant 0 : index
    %c0_73 = arith.constant 0 : index
    %73 = vector.load %arg15[%c0_70, %c0_71, %c0_72, %c0_73] : memref<2x16x16x16xf32, #tpu.memory_space<vmem>>, vector<2x8x8x16xf32>
    %74 = vector.extract_strided_slice %71 {offsets = [0, 0, 0], sizes = [1, 1, 16], strides = [1, 1, 1]} : vector<9x9x16xf32> to vector<1x1x16xf32>
    %75 = vector.shape_cast %74 : vector<1x1x16xf32> to vector<16xf32>
    %76 = vector.shape_cast %75 : vector<16xf32> to vector<1x1x1x16xf32>
    %77 = vector.broadcast %76 : vector<1x1x1x16xf32> to vector<2x8x8x16xf32>
    %78 = arith.mulf %73, %77 : vector<2x8x8x16xf32>
    %79 = arith.addf %72, %78 : vector<2x8x8x16xf32>
    %c0_74 = arith.constant 0 : index
    %c0_75 = arith.constant 0 : index
    %c1_76 = arith.constant 1 : index
    %c0_77 = arith.constant 0 : index
    %80 = vector.load %arg15[%c0_74, %c0_75, %c1_76, %c0_77] : memref<2x16x16x16xf32, #tpu.memory_space<vmem>>, vector<2x8x8x16xf32>
    %81 = vector.extract_strided_slice %71 {offsets = [0, 1, 0], sizes = [1, 1, 16], strides = [1, 1, 1]} : vector<9x9x16xf32> to vector<1x1x16xf32>
    %82 = vector.shape_cast %81 : vector<1x1x16xf32> to vector<16xf32>
    %83 = vector.shape_cast %82 : vector<16xf32> to vector<1x1x1x16xf32>
    %84 = vector.broadcast %83 : vector<1x1x1x16xf32> to vector<2x8x8x16xf32>
    %85 = arith.mulf %80, %84 : vector<2x8x8x16xf32>
    %86 = arith.addf %79, %85 : vector<2x8x8x16xf32>
    %c0_78 = arith.constant 0 : index
    %c0_79 = arith.constant 0 : index
    %c2 = arith.constant 2 : index
    %c0_80 = arith.constant 0 : index
    %87 = vector.load %arg15[%c0_78, %c0_79, %c2, %c0_80] : memref<2x16x16x16xf32, #tpu.memory_space<vmem>>, vector<2x8x8x16xf32>
    %88 = vector.extract_strided_slice %71 {offsets = [0, 2, 0], sizes = [1, 1, 16], strides = [1, 1, 1]} : vector<9x9x16xf32> to vector<1x1x16xf32>
    %89 = vector.shape_cast %88 : vector<1x1x16xf32> to vector<16xf32>
    %90 = vector.shape_cast %89 : vector<16xf32> to vector<1x1x1x16xf32>
    %91 = vector.broadcast %90 : vector<1x1x1x16xf32> to vector<2x8x8x16xf32>
    %92 = arith.mulf %87, %91 : vector<2x8x8x16xf32>
    %93 = arith.addf %86, %92 : vector<2x8x8x16xf32>
    %c0_81 = arith.constant 0 : index
    %c0_82 = arith.constant 0 : index
    %c3 = arith.constant 3 : index
    %c0_83 = arith.constant 0 : index
    %94 = vector.load %arg15[%c0_81, %c0_82, %c3, %c0_83] : memref<2x16x16x16xf32, #tpu.memory_space<vmem>>, vector<2x8x8x16xf32>
    %95 = vector.extract_strided_slice %71 {offsets = [0, 3, 0], sizes = [1, 1, 16], strides = [1, 1, 1]} : vector<9x9x16xf32> to vector<1x1x16xf32>
    %96 = vector.shape_cast %95 : vector<1x1x16xf32> to vector<16xf32>
    %97 = vector.shape_cast %96 : vector<16xf32> to vector<1x1x1x16xf32>
    %98 = vector.broadcast %97 : vector<1x1x1x16xf32> to vector<2x8x8x16xf32>
    %99 = arith.mulf %94, %98 : vector<2x8x8x16xf32>
    %100 = arith.addf %93, %99 : vector<2x8x8x16xf32>
    %c0_84 = arith.constant 0 : index
    %c0_85 = arith.constant 0 : index
    %c4_86 = arith.constant 4 : index
    %c0_87 = arith.constant 0 : index
    %101 = vector.load %arg15[%c0_84, %c0_85, %c4_86, %c0_87] : memref<2x16x16x16xf32, #tpu.memory_space<vmem>>, vector<2x8x8x16xf32>
    %102 = vector.extract_strided_slice %71 {offsets = [0, 4, 0], sizes = [1, 1, 16], strides = [1, 1, 1]} : vector<9x9x16xf32> to vector<1x1x16xf32>
    %103 = vector.shape_cast %102 : vector<1x1x16xf32> to vector<16xf32>
    %104 = vector.shape_cast %103 : vector<16xf32> to vector<1x1x1x16xf32>
    %105 = vector.broadcast %104 : vector<1x1x1x16xf32> to vector<2x8x8x16xf32>
    %106 = arith.mulf %101, %105 : vector<2x8x8x16xf32>
    %107 = arith.addf %100, %106 : vector<2x8x8x16xf32>
    %c0_88 = arith.constant 0 : index
    %c0_89 = arith.constant 0 : index
    %c5_90 = arith.constant 5 : index
    %c0_91 = arith.constant 0 : index
    %108 = vector.load %arg15[%c0_88, %c0_89, %c5_90, %c0_91] : memref<2x16x16x16xf32, #tpu.memory_space<vmem>>, vector<2x8x8x16xf32>
    %109 = vector.extract_strided_slice %71 {offsets = [0, 5, 0], sizes = [1, 1, 16], strides = [1, 1, 1]} : vector<9x9x16xf32> to vector<1x1x16xf32>
    %110 = vector.shape_cast %109 : vector<1x1x16xf32> to vector<16xf32>
    %111 = vector.shape_cast %110 : vector<16xf32> to vector<1x1x1x16xf32>
    %112 = vector.broadcast %111 : vector<1x1x1x16xf32> to vector<2x8x8x16xf32>
    %113 = arith.mulf %108, %112 : vector<2x8x8x16xf32>
    %114 = arith.addf %107, %113 : vector<2x8x8x16xf32>
    %c0_92 = arith.constant 0 : index
    %c0_93 = arith.constant 0 : index
    %c6_94 = arith.constant 6 : index
    %c0_95 = arith.constant 0 : index
    %115 = vector.load %arg15[%c0_92, %c0_93, %c6_94, %c0_95] : memref<2x16x16x16xf32, #tpu.memory_space<vmem>>, vector<2x8x8x16xf32>
    %116 = vector.extract_strided_slice %71 {offsets = [0, 6, 0], sizes = [1, 1, 16], strides = [1, 1, 1]} : vector<9x9x16xf32> to vector<1x1x16xf32>
    %117 = vector.shape_cast %116 : vector<1x1x16xf32> to vector<16xf32>
    %118 = vector.shape_cast %117 : vector<16xf32> to vector<1x1x1x16xf32>
    %119 = vector.broadcast %118 : vector<1x1x1x16xf32> to vector<2x8x8x16xf32>
    %120 = arith.mulf %115, %119 : vector<2x8x8x16xf32>
    %121 = arith.addf %114, %120 : vector<2x8x8x16xf32>
    %c0_96 = arith.constant 0 : index
    %c0_97 = arith.constant 0 : index
    %c7_98 = arith.constant 7 : index
    %c0_99 = arith.constant 0 : index
    %122 = vector.load %arg15[%c0_96, %c0_97, %c7_98, %c0_99] : memref<2x16x16x16xf32, #tpu.memory_space<vmem>>, vector<2x8x8x16xf32>
    %123 = vector.extract_strided_slice %71 {offsets = [0, 7, 0], sizes = [1, 1, 16], strides = [1, 1, 1]} : vector<9x9x16xf32> to vector<1x1x16xf32>
    %124 = vector.shape_cast %123 : vector<1x1x16xf32> to vector<16xf32>
    %125 = vector.shape_cast %124 : vector<16xf32> to vector<1x1x1x16xf32>
    %126 = vector.broadcast %125 : vector<1x1x1x16xf32> to vector<2x8x8x16xf32>
    %127 = arith.mulf %122, %126 : vector<2x8x8x16xf32>
    %128 = arith.addf %121, %127 : vector<2x8x8x16xf32>
    %c0_100 = arith.constant 0 : index
    %c0_101 = arith.constant 0 : index
    %c8_102 = arith.constant 8 : index
    %c0_103 = arith.constant 0 : index
    %129 = vector.load %arg15[%c0_100, %c0_101, %c8_102, %c0_103] : memref<2x16x16x16xf32, #tpu.memory_space<vmem>>, vector<2x8x8x16xf32>
    %130 = vector.extract_strided_slice %71 {offsets = [0, 8, 0], sizes = [1, 1, 16], strides = [1, 1, 1]} : vector<9x9x16xf32> to vector<1x1x16xf32>
    %131 = vector.shape_cast %130 : vector<1x1x16xf32> to vector<16xf32>
    %132 = vector.shape_cast %131 : vector<16xf32> to vector<1x1x1x16xf32>
    %133 = vector.broadcast %132 : vector<1x1x1x16xf32> to vector<2x8x8x16xf32>
    %134 = arith.mulf %129, %133 : vector<2x8x8x16xf32>
    %135 = arith.addf %128, %134 : vector<2x8x8x16xf32>
    %c0_104 = arith.constant 0 : index
    %c1_105 = arith.constant 1 : index
    %c0_106 = arith.constant 0 : index
    %c0_107 = arith.constant 0 : index
    %136 = vector.load %arg15[%c0_104, %c1_105, %c0_106, %c0_107] : memref<2x16x16x16xf32, #tpu.memory_space<vmem>>, vector<2x8x8x16xf32>
    %137 = vector.extract_strided_slice %71 {offsets = [1, 0, 0], sizes = [1, 1, 16], strides = [1, 1, 1]} : vector<9x9x16xf32> to vector<1x1x16xf32>
    %138 = vector.shape_cast %137 : vector<1x1x16xf32> to vector<16xf32>
    %139 = vector.shape_cast %138 : vector<16xf32> to vector<1x1x1x16xf32>
    %140 = vector.broadcast %139 : vector<1x1x1x16xf32> to vector<2x8x8x16xf32>
    %141 = arith.mulf %136, %140 : vector<2x8x8x16xf32>
    %142 = arith.addf %135, %141 : vector<2x8x8x16xf32>
    %c0_108 = arith.constant 0 : index
    %c1_109 = arith.constant 1 : index
    %c1_110 = arith.constant 1 : index
    %c0_111 = arith.constant 0 : index
    %143 = vector.load %arg15[%c0_108, %c1_109, %c1_110, %c0_111] : memref<2x16x16x16xf32, #tpu.memory_space<vmem>>, vector<2x8x8x16xf32>
    %144 = vector.extract_strided_slice %71 {offsets = [1, 1, 0], sizes = [1, 1, 16], strides = [1, 1, 1]} : vector<9x9x16xf32> to vector<1x1x16xf32>
    %145 = vector.shape_cast %144 : vector<1x1x16xf32> to vector<16xf32>
    %146 = vector.shape_cast %145 : vector<16xf32> to vector<1x1x1x16xf32>
    %147 = vector.broadcast %146 : vector<1x1x1x16xf32> to vector<2x8x8x16xf32>
    %148 = arith.mulf %143, %147 : vector<2x8x8x16xf32>
    %149 = arith.addf %142, %148 : vector<2x8x8x16xf32>
    %c0_112 = arith.constant 0 : index
    %c1_113 = arith.constant 1 : index
    %c2_114 = arith.constant 2 : index
    %c0_115 = arith.constant 0 : index
    %150 = vector.load %arg15[%c0_112, %c1_113, %c2_114, %c0_115] : memref<2x16x16x16xf32, #tpu.memory_space<vmem>>, vector<2x8x8x16xf32>
    %151 = vector.extract_strided_slice %71 {offsets = [1, 2, 0], sizes = [1, 1, 16], strides = [1, 1, 1]} : vector<9x9x16xf32> to vector<1x1x16xf32>
    %152 = vector.shape_cast %151 : vector<1x1x16xf32> to vector<16xf32>
    %153 = vector.shape_cast %152 : vector<16xf32> to vector<1x1x1x16xf32>
    %154 = vector.broadcast %153 : vector<1x1x1x16xf32> to vector<2x8x8x16xf32>
    %155 = arith.mulf %150, %154 : vector<2x8x8x16xf32>
    %156 = arith.addf %149, %155 : vector<2x8x8x16xf32>
    %c0_116 = arith.constant 0 : index
    %c1_117 = arith.constant 1 : index
    %c3_118 = arith.constant 3 : index
    %c0_119 = arith.constant 0 : index
    %157 = vector.load %arg15[%c0_116, %c1_117, %c3_118, %c0_119] : memref<2x16x16x16xf32, #tpu.memory_space<vmem>>, vector<2x8x8x16xf32>
    %158 = vector.extract_strided_slice %71 {offsets = [1, 3, 0], sizes = [1, 1, 16], strides = [1, 1, 1]} : vector<9x9x16xf32> to vector<1x1x16xf32>
    %159 = vector.shape_cast %158 : vector<1x1x16xf32> to vector<16xf32>
    %160 = vector.shape_cast %159 : vector<16xf32> to vector<1x1x1x16xf32>
    %161 = vector.broadcast %160 : vector<1x1x1x16xf32> to vector<2x8x8x16xf32>
    %162 = arith.mulf %157, %161 : vector<2x8x8x16xf32>
    %163 = arith.addf %156, %162 : vector<2x8x8x16xf32>
    %c0_120 = arith.constant 0 : index
    %c1_121 = arith.constant 1 : index
    %c4_122 = arith.constant 4 : index
    %c0_123 = arith.constant 0 : index
    %164 = vector.load %arg15[%c0_120, %c1_121, %c4_122, %c0_123] : memref<2x16x16x16xf32, #tpu.memory_space<vmem>>, vector<2x8x8x16xf32>
    %165 = vector.extract_strided_slice %71 {offsets = [1, 4, 0], sizes = [1, 1, 16], strides = [1, 1, 1]} : vector<9x9x16xf32> to vector<1x1x16xf32>
    %166 = vector.shape_cast %165 : vector<1x1x16xf32> to vector<16xf32>
    %167 = vector.shape_cast %166 : vector<16xf32> to vector<1x1x1x16xf32>
    %168 = vector.broadcast %167 : vector<1x1x1x16xf32> to vector<2x8x8x16xf32>
    %169 = arith.mulf %164, %168 : vector<2x8x8x16xf32>
    %170 = arith.addf %163, %169 : vector<2x8x8x16xf32>
    %c0_124 = arith.constant 0 : index
    %c1_125 = arith.constant 1 : index
    %c5_126 = arith.constant 5 : index
    %c0_127 = arith.constant 0 : index
    %171 = vector.load %arg15[%c0_124, %c1_125, %c5_126, %c0_127] : memref<2x16x16x16xf32, #tpu.memory_space<vmem>>, vector<2x8x8x16xf32>
    %172 = vector.extract_strided_slice %71 {offsets = [1, 5, 0], sizes = [1, 1, 16], strides = [1, 1, 1]} : vector<9x9x16xf32> to vector<1x1x16xf32>
    %173 = vector.shape_cast %172 : vector<1x1x16xf32> to vector<16xf32>
    %174 = vector.shape_cast %173 : vector<16xf32> to vector<1x1x1x16xf32>
    %175 = vector.broadcast %174 : vector<1x1x1x16xf32> to vector<2x8x8x16xf32>
    %176 = arith.mulf %171, %175 : vector<2x8x8x16xf32>
    %177 = arith.addf %170, %176 : vector<2x8x8x16xf32>
    %c0_128 = arith.constant 0 : index
    %c1_129 = arith.constant 1 : index
    %c6_130 = arith.constant 6 : index
    %c0_131 = arith.constant 0 : index
    %178 = vector.load %arg15[%c0_128, %c1_129, %c6_130, %c0_131] : memref<2x16x16x16xf32, #tpu.memory_space<vmem>>, vector<2x8x8x16xf32>
    %179 = vector.extract_strided_slice %71 {offsets = [1, 6, 0], sizes = [1, 1, 16], strides = [1, 1, 1]} : vector<9x9x16xf32> to vector<1x1x16xf32>
    %180 = vector.shape_cast %179 : vector<1x1x16xf32> to vector<16xf32>
    %181 = vector.shape_cast %180 : vector<16xf32> to vector<1x1x1x16xf32>
    %182 = vector.broadcast %181 : vector<1x1x1x16xf32> to vector<2x8x8x16xf32>
    %183 = arith.mulf %178, %182 : vector<2x8x8x16xf32>
    %184 = arith.addf %177, %183 : vector<2x8x8x16xf32>
    %c0_132 = arith.constant 0 : index
    %c1_133 = arith.constant 1 : index
    %c7_134 = arith.constant 7 : index
    %c0_135 = arith.constant 0 : index
    %185 = vector.load %arg15[%c0_132, %c1_133, %c7_134, %c0_135] : memref<2x16x16x16xf32, #tpu.memory_space<vmem>>, vector<2x8x8x16xf32>
    %186 = vector.extract_strided_slice %71 {offsets = [1, 7, 0], sizes = [1, 1, 16], strides = [1, 1, 1]} : vector<9x9x16xf32> to vector<1x1x16xf32>
    %187 = vector.shape_cast %186 : vector<1x1x16xf32> to vector<16xf32>
    %188 = vector.shape_cast %187 : vector<16xf32> to vector<1x1x1x16xf32>
    %189 = vector.broadcast %188 : vector<1x1x1x16xf32> to vector<2x8x8x16xf32>
    %190 = arith.mulf %185, %189 : vector<2x8x8x16xf32>
    %191 = arith.addf %184, %190 : vector<2x8x8x16xf32>
    %c0_136 = arith.constant 0 : index
    %c1_137 = arith.constant 1 : index
    %c8_138 = arith.constant 8 : index
    %c0_139 = arith.constant 0 : index
    %192 = vector.load %arg15[%c0_136, %c1_137, %c8_138, %c0_139] : memref<2x16x16x16xf32, #tpu.memory_space<vmem>>, vector<2x8x8x16xf32>
    %193 = vector.extract_strided_slice %71 {offsets = [1, 8, 0], sizes = [1, 1, 16], strides = [1, 1, 1]} : vector<9x9x16xf32> to vector<1x1x16xf32>
    %194 = vector.shape_cast %193 : vector<1x1x16xf32> to vector<16xf32>
    %195 = vector.shape_cast %194 : vector<16xf32> to vector<1x1x1x16xf32>
    %196 = vector.broadcast %195 : vector<1x1x1x16xf32> to vector<2x8x8x16xf32>
    %197 = arith.mulf %192, %196 : vector<2x8x8x16xf32>
    %198 = arith.addf %191, %197 : vector<2x8x8x16xf32>
    %c0_140 = arith.constant 0 : index
    %c2_141 = arith.constant 2 : index
    %c0_142 = arith.constant 0 : index
    %c0_143 = arith.constant 0 : index
    %199 = vector.load %arg15[%c0_140, %c2_141, %c0_142, %c0_143] : memref<2x16x16x16xf32, #tpu.memory_space<vmem>>, vector<2x8x8x16xf32>
    %200 = vector.extract_strided_slice %71 {offsets = [2, 0, 0], sizes = [1, 1, 16], strides = [1, 1, 1]} : vector<9x9x16xf32> to vector<1x1x16xf32>
    %201 = vector.shape_cast %200 : vector<1x1x16xf32> to vector<16xf32>
    %202 = vector.shape_cast %201 : vector<16xf32> to vector<1x1x1x16xf32>
    %203 = vector.broadcast %202 : vector<1x1x1x16xf32> to vector<2x8x8x16xf32>
    %204 = arith.mulf %199, %203 : vector<2x8x8x16xf32>
    %205 = arith.addf %198, %204 : vector<2x8x8x16xf32>
    %c0_144 = arith.constant 0 : index
    %c2_145 = arith.constant 2 : index
    %c1_146 = arith.constant 1 : index
    %c0_147 = arith.constant 0 : index
    %206 = vector.load %arg15[%c0_144, %c2_145, %c1_146, %c0_147] : memref<2x16x16x16xf32, #tpu.memory_space<vmem>>, vector<2x8x8x16xf32>
    %207 = vector.extract_strided_slice %71 {offsets = [2, 1, 0], sizes = [1, 1, 16], strides = [1, 1, 1]} : vector<9x9x16xf32> to vector<1x1x16xf32>
    %208 = vector.shape_cast %207 : vector<1x1x16xf32> to vector<16xf32>
    %209 = vector.shape_cast %208 : vector<16xf32> to vector<1x1x1x16xf32>
    %210 = vector.broadcast %209 : vector<1x1x1x16xf32> to vector<2x8x8x16xf32>
    %211 = arith.mulf %206, %210 : vector<2x8x8x16xf32>
    %212 = arith.addf %205, %211 : vector<2x8x8x16xf32>
    %c0_148 = arith.constant 0 : index
    %c2_149 = arith.constant 2 : index
    %c2_150 = arith.constant 2 : index
    %c0_151 = arith.constant 0 : index
    %213 = vector.load %arg15[%c0_148, %c2_149, %c2_150, %c0_151] : memref<2x16x16x16xf32, #tpu.memory_space<vmem>>, vector<2x8x8x16xf32>
    %214 = vector.extract_strided_slice %71 {offsets = [2, 2, 0], sizes = [1, 1, 16], strides = [1, 1, 1]} : vector<9x9x16xf32> to vector<1x1x16xf32>
    %215 = vector.shape_cast %214 : vector<1x1x16xf32> to vector<16xf32>
    %216 = vector.shape_cast %215 : vector<16xf32> to vector<1x1x1x16xf32>
    %217 = vector.broadcast %216 : vector<1x1x1x16xf32> to vector<2x8x8x16xf32>
    %218 = arith.mulf %213, %217 : vector<2x8x8x16xf32>
    %219 = arith.addf %212, %218 : vector<2x8x8x16xf32>
    %c0_152 = arith.constant 0 : index
    %c2_153 = arith.constant 2 : index
    %c3_154 = arith.constant 3 : index
    %c0_155 = arith.constant 0 : index
    %220 = vector.load %arg15[%c0_152, %c2_153, %c3_154, %c0_155] : memref<2x16x16x16xf32, #tpu.memory_space<vmem>>, vector<2x8x8x16xf32>
    %221 = vector.extract_strided_slice %71 {offsets = [2, 3, 0], sizes = [1, 1, 16], strides = [1, 1, 1]} : vector<9x9x16xf32> to vector<1x1x16xf32>
    %222 = vector.shape_cast %221 : vector<1x1x16xf32> to vector<16xf32>
    %223 = vector.shape_cast %222 : vector<16xf32> to vector<1x1x1x16xf32>
    %224 = vector.broadcast %223 : vector<1x1x1x16xf32> to vector<2x8x8x16xf32>
    %225 = arith.mulf %220, %224 : vector<2x8x8x16xf32>
    %226 = arith.addf %219, %225 : vector<2x8x8x16xf32>
    %c0_156 = arith.constant 0 : index
    %c2_157 = arith.constant 2 : index
    %c4_158 = arith.constant 4 : index
    %c0_159 = arith.constant 0 : index
    %227 = vector.load %arg15[%c0_156, %c2_157, %c4_158, %c0_159] : memref<2x16x16x16xf32, #tpu.memory_space<vmem>>, vector<2x8x8x16xf32>
    %228 = vector.extract_strided_slice %71 {offsets = [2, 4, 0], sizes = [1, 1, 16], strides = [1, 1, 1]} : vector<9x9x16xf32> to vector<1x1x16xf32>
    %229 = vector.shape_cast %228 : vector<1x1x16xf32> to vector<16xf32>
    %230 = vector.shape_cast %229 : vector<16xf32> to vector<1x1x1x16xf32>
    %231 = vector.broadcast %230 : vector<1x1x1x16xf32> to vector<2x8x8x16xf32>
    %232 = arith.mulf %227, %231 : vector<2x8x8x16xf32>
    %233 = arith.addf %226, %232 : vector<2x8x8x16xf32>
    %c0_160 = arith.constant 0 : index
    %c2_161 = arith.constant 2 : index
    %c5_162 = arith.constant 5 : index
    %c0_163 = arith.constant 0 : index
    %234 = vector.load %arg15[%c0_160, %c2_161, %c5_162, %c0_163] : memref<2x16x16x16xf32, #tpu.memory_space<vmem>>, vector<2x8x8x16xf32>
    %235 = vector.extract_strided_slice %71 {offsets = [2, 5, 0], sizes = [1, 1, 16], strides = [1, 1, 1]} : vector<9x9x16xf32> to vector<1x1x16xf32>
    %236 = vector.shape_cast %235 : vector<1x1x16xf32> to vector<16xf32>
    %237 = vector.shape_cast %236 : vector<16xf32> to vector<1x1x1x16xf32>
    %238 = vector.broadcast %237 : vector<1x1x1x16xf32> to vector<2x8x8x16xf32>
    %239 = arith.mulf %234, %238 : vector<2x8x8x16xf32>
    %240 = arith.addf %233, %239 : vector<2x8x8x16xf32>
    %c0_164 = arith.constant 0 : index
    %c2_165 = arith.constant 2 : index
    %c6_166 = arith.constant 6 : index
    %c0_167 = arith.constant 0 : index
    %241 = vector.load %arg15[%c0_164, %c2_165, %c6_166, %c0_167] : memref<2x16x16x16xf32, #tpu.memory_space<vmem>>, vector<2x8x8x16xf32>
    %242 = vector.extract_strided_slice %71 {offsets = [2, 6, 0], sizes = [1, 1, 16], strides = [1, 1, 1]} : vector<9x9x16xf32> to vector<1x1x16xf32>
    %243 = vector.shape_cast %242 : vector<1x1x16xf32> to vector<16xf32>
    %244 = vector.shape_cast %243 : vector<16xf32> to vector<1x1x1x16xf32>
    %245 = vector.broadcast %244 : vector<1x1x1x16xf32> to vector<2x8x8x16xf32>
    %246 = arith.mulf %241, %245 : vector<2x8x8x16xf32>
    %247 = arith.addf %240, %246 : vector<2x8x8x16xf32>
    %c0_168 = arith.constant 0 : index
    %c2_169 = arith.constant 2 : index
    %c7_170 = arith.constant 7 : index
    %c0_171 = arith.constant 0 : index
    %248 = vector.load %arg15[%c0_168, %c2_169, %c7_170, %c0_171] : memref<2x16x16x16xf32, #tpu.memory_space<vmem>>, vector<2x8x8x16xf32>
    %249 = vector.extract_strided_slice %71 {offsets = [2, 7, 0], sizes = [1, 1, 16], strides = [1, 1, 1]} : vector<9x9x16xf32> to vector<1x1x16xf32>
    %250 = vector.shape_cast %249 : vector<1x1x16xf32> to vector<16xf32>
    %251 = vector.shape_cast %250 : vector<16xf32> to vector<1x1x1x16xf32>
    %252 = vector.broadcast %251 : vector<1x1x1x16xf32> to vector<2x8x8x16xf32>
    %253 = arith.mulf %248, %252 : vector<2x8x8x16xf32>
    %254 = arith.addf %247, %253 : vector<2x8x8x16xf32>
    %c0_172 = arith.constant 0 : index
    %c2_173 = arith.constant 2 : index
    %c8_174 = arith.constant 8 : index
    %c0_175 = arith.constant 0 : index
    %255 = vector.load %arg15[%c0_172, %c2_173, %c8_174, %c0_175] : memref<2x16x16x16xf32, #tpu.memory_space<vmem>>, vector<2x8x8x16xf32>
    %256 = vector.extract_strided_slice %71 {offsets = [2, 8, 0], sizes = [1, 1, 16], strides = [1, 1, 1]} : vector<9x9x16xf32> to vector<1x1x16xf32>
    %257 = vector.shape_cast %256 : vector<1x1x16xf32> to vector<16xf32>
    %258 = vector.shape_cast %257 : vector<16xf32> to vector<1x1x1x16xf32>
    %259 = vector.broadcast %258 : vector<1x1x1x16xf32> to vector<2x8x8x16xf32>
    %260 = arith.mulf %255, %259 : vector<2x8x8x16xf32>
    %261 = arith.addf %254, %260 : vector<2x8x8x16xf32>
    %c0_176 = arith.constant 0 : index
    %c3_177 = arith.constant 3 : index
    %c0_178 = arith.constant 0 : index
    %c0_179 = arith.constant 0 : index
    %262 = vector.load %arg15[%c0_176, %c3_177, %c0_178, %c0_179] : memref<2x16x16x16xf32, #tpu.memory_space<vmem>>, vector<2x8x8x16xf32>
    %263 = vector.extract_strided_slice %71 {offsets = [3, 0, 0], sizes = [1, 1, 16], strides = [1, 1, 1]} : vector<9x9x16xf32> to vector<1x1x16xf32>
    %264 = vector.shape_cast %263 : vector<1x1x16xf32> to vector<16xf32>
    %265 = vector.shape_cast %264 : vector<16xf32> to vector<1x1x1x16xf32>
    %266 = vector.broadcast %265 : vector<1x1x1x16xf32> to vector<2x8x8x16xf32>
    %267 = arith.mulf %262, %266 : vector<2x8x8x16xf32>
    %268 = arith.addf %261, %267 : vector<2x8x8x16xf32>
    %c0_180 = arith.constant 0 : index
    %c3_181 = arith.constant 3 : index
    %c1_182 = arith.constant 1 : index
    %c0_183 = arith.constant 0 : index
    %269 = vector.load %arg15[%c0_180, %c3_181, %c1_182, %c0_183] : memref<2x16x16x16xf32, #tpu.memory_space<vmem>>, vector<2x8x8x16xf32>
    %270 = vector.extract_strided_slice %71 {offsets = [3, 1, 0], sizes = [1, 1, 16], strides = [1, 1, 1]} : vector<9x9x16xf32> to vector<1x1x16xf32>
    %271 = vector.shape_cast %270 : vector<1x1x16xf32> to vector<16xf32>
    %272 = vector.shape_cast %271 : vector<16xf32> to vector<1x1x1x16xf32>
    %273 = vector.broadcast %272 : vector<1x1x1x16xf32> to vector<2x8x8x16xf32>
    %274 = arith.mulf %269, %273 : vector<2x8x8x16xf32>
    %275 = arith.addf %268, %274 : vector<2x8x8x16xf32>
    %c0_184 = arith.constant 0 : index
    %c3_185 = arith.constant 3 : index
    %c2_186 = arith.constant 2 : index
    %c0_187 = arith.constant 0 : index
    %276 = vector.load %arg15[%c0_184, %c3_185, %c2_186, %c0_187] : memref<2x16x16x16xf32, #tpu.memory_space<vmem>>, vector<2x8x8x16xf32>
    %277 = vector.extract_strided_slice %71 {offsets = [3, 2, 0], sizes = [1, 1, 16], strides = [1, 1, 1]} : vector<9x9x16xf32> to vector<1x1x16xf32>
    %278 = vector.shape_cast %277 : vector<1x1x16xf32> to vector<16xf32>
    %279 = vector.shape_cast %278 : vector<16xf32> to vector<1x1x1x16xf32>
    %280 = vector.broadcast %279 : vector<1x1x1x16xf32> to vector<2x8x8x16xf32>
    %281 = arith.mulf %276, %280 : vector<2x8x8x16xf32>
    %282 = arith.addf %275, %281 : vector<2x8x8x16xf32>
    %c0_188 = arith.constant 0 : index
    %c3_189 = arith.constant 3 : index
    %c3_190 = arith.constant 3 : index
    %c0_191 = arith.constant 0 : index
    %283 = vector.load %arg15[%c0_188, %c3_189, %c3_190, %c0_191] : memref<2x16x16x16xf32, #tpu.memory_space<vmem>>, vector<2x8x8x16xf32>
    %284 = vector.extract_strided_slice %71 {offsets = [3, 3, 0], sizes = [1, 1, 16], strides = [1, 1, 1]} : vector<9x9x16xf32> to vector<1x1x16xf32>
    %285 = vector.shape_cast %284 : vector<1x1x16xf32> to vector<16xf32>
    %286 = vector.shape_cast %285 : vector<16xf32> to vector<1x1x1x16xf32>
    %287 = vector.broadcast %286 : vector<1x1x1x16xf32> to vector<2x8x8x16xf32>
    %288 = arith.mulf %283, %287 : vector<2x8x8x16xf32>
    %289 = arith.addf %282, %288 : vector<2x8x8x16xf32>
    %c0_192 = arith.constant 0 : index
    %c3_193 = arith.constant 3 : index
    %c4_194 = arith.constant 4 : index
    %c0_195 = arith.constant 0 : index
    %290 = vector.load %arg15[%c0_192, %c3_193, %c4_194, %c0_195] : memref<2x16x16x16xf32, #tpu.memory_space<vmem>>, vector<2x8x8x16xf32>
    %291 = vector.extract_strided_slice %71 {offsets = [3, 4, 0], sizes = [1, 1, 16], strides = [1, 1, 1]} : vector<9x9x16xf32> to vector<1x1x16xf32>
    %292 = vector.shape_cast %291 : vector<1x1x16xf32> to vector<16xf32>
    %293 = vector.shape_cast %292 : vector<16xf32> to vector<1x1x1x16xf32>
    %294 = vector.broadcast %293 : vector<1x1x1x16xf32> to vector<2x8x8x16xf32>
    %295 = arith.mulf %290, %294 : vector<2x8x8x16xf32>
    %296 = arith.addf %289, %295 : vector<2x8x8x16xf32>
    %c0_196 = arith.constant 0 : index
    %c3_197 = arith.constant 3 : index
    %c5_198 = arith.constant 5 : index
    %c0_199 = arith.constant 0 : index
    %297 = vector.load %arg15[%c0_196, %c3_197, %c5_198, %c0_199] : memref<2x16x16x16xf32, #tpu.memory_space<vmem>>, vector<2x8x8x16xf32>
    %298 = vector.extract_strided_slice %71 {offsets = [3, 5, 0], sizes = [1, 1, 16], strides = [1, 1, 1]} : vector<9x9x16xf32> to vector<1x1x16xf32>
    %299 = vector.shape_cast %298 : vector<1x1x16xf32> to vector<16xf32>
    %300 = vector.shape_cast %299 : vector<16xf32> to vector<1x1x1x16xf32>
    %301 = vector.broadcast %300 : vector<1x1x1x16xf32> to vector<2x8x8x16xf32>
    %302 = arith.mulf %297, %301 : vector<2x8x8x16xf32>
    %303 = arith.addf %296, %302 : vector<2x8x8x16xf32>
    %c0_200 = arith.constant 0 : index
    %c3_201 = arith.constant 3 : index
    %c6_202 = arith.constant 6 : index
    %c0_203 = arith.constant 0 : index
    %304 = vector.load %arg15[%c0_200, %c3_201, %c6_202, %c0_203] : memref<2x16x16x16xf32, #tpu.memory_space<vmem>>, vector<2x8x8x16xf32>
    %305 = vector.extract_strided_slice %71 {offsets = [3, 6, 0], sizes = [1, 1, 16], strides = [1, 1, 1]} : vector<9x9x16xf32> to vector<1x1x16xf32>
    %306 = vector.shape_cast %305 : vector<1x1x16xf32> to vector<16xf32>
    %307 = vector.shape_cast %306 : vector<16xf32> to vector<1x1x1x16xf32>
    %308 = vector.broadcast %307 : vector<1x1x1x16xf32> to vector<2x8x8x16xf32>
    %309 = arith.mulf %304, %308 : vector<2x8x8x16xf32>
    %310 = arith.addf %303, %309 : vector<2x8x8x16xf32>
    %c0_204 = arith.constant 0 : index
    %c3_205 = arith.constant 3 : index
    %c7_206 = arith.constant 7 : index
    %c0_207 = arith.constant 0 : index
    %311 = vector.load %arg15[%c0_204, %c3_205, %c7_206, %c0_207] : memref<2x16x16x16xf32, #tpu.memory_space<vmem>>, vector<2x8x8x16xf32>
    %312 = vector.extract_strided_slice %71 {offsets = [3, 7, 0], sizes = [1, 1, 16], strides = [1, 1, 1]} : vector<9x9x16xf32> to vector<1x1x16xf32>
    %313 = vector.shape_cast %312 : vector<1x1x16xf32> to vector<16xf32>
    %314 = vector.shape_cast %313 : vector<16xf32> to vector<1x1x1x16xf32>
    %315 = vector.broadcast %314 : vector<1x1x1x16xf32> to vector<2x8x8x16xf32>
    %316 = arith.mulf %311, %315 : vector<2x8x8x16xf32>
    %317 = arith.addf %310, %316 : vector<2x8x8x16xf32>
    %c0_208 = arith.constant 0 : index
    %c3_209 = arith.constant 3 : index
    %c8_210 = arith.constant 8 : index
    %c0_211 = arith.constant 0 : index
    %318 = vector.load %arg15[%c0_208, %c3_209, %c8_210, %c0_211] : memref<2x16x16x16xf32, #tpu.memory_space<vmem>>, vector<2x8x8x16xf32>
    %319 = vector.extract_strided_slice %71 {offsets = [3, 8, 0], sizes = [1, 1, 16], strides = [1, 1, 1]} : vector<9x9x16xf32> to vector<1x1x16xf32>
    %320 = vector.shape_cast %319 : vector<1x1x16xf32> to vector<16xf32>
    %321 = vector.shape_cast %320 : vector<16xf32> to vector<1x1x1x16xf32>
    %322 = vector.broadcast %321 : vector<1x1x1x16xf32> to vector<2x8x8x16xf32>
    %323 = arith.mulf %318, %322 : vector<2x8x8x16xf32>
    %324 = arith.addf %317, %323 : vector<2x8x8x16xf32>
    %c0_212 = arith.constant 0 : index
    %c4_213 = arith.constant 4 : index
    %c0_214 = arith.constant 0 : index
    %c0_215 = arith.constant 0 : index
    %325 = vector.load %arg15[%c0_212, %c4_213, %c0_214, %c0_215] : memref<2x16x16x16xf32, #tpu.memory_space<vmem>>, vector<2x8x8x16xf32>
    %326 = vector.extract_strided_slice %71 {offsets = [4, 0, 0], sizes = [1, 1, 16], strides = [1, 1, 1]} : vector<9x9x16xf32> to vector<1x1x16xf32>
    %327 = vector.shape_cast %326 : vector<1x1x16xf32> to vector<16xf32>
    %328 = vector.shape_cast %327 : vector<16xf32> to vector<1x1x1x16xf32>
    %329 = vector.broadcast %328 : vector<1x1x1x16xf32> to vector<2x8x8x16xf32>
    %330 = arith.mulf %325, %329 : vector<2x8x8x16xf32>
    %331 = arith.addf %324, %330 : vector<2x8x8x16xf32>
    %c0_216 = arith.constant 0 : index
    %c4_217 = arith.constant 4 : index
    %c1_218 = arith.constant 1 : index
    %c0_219 = arith.constant 0 : index
    %332 = vector.load %arg15[%c0_216, %c4_217, %c1_218, %c0_219] : memref<2x16x16x16xf32, #tpu.memory_space<vmem>>, vector<2x8x8x16xf32>
    %333 = vector.extract_strided_slice %71 {offsets = [4, 1, 0], sizes = [1, 1, 16], strides = [1, 1, 1]} : vector<9x9x16xf32> to vector<1x1x16xf32>
    %334 = vector.shape_cast %333 : vector<1x1x16xf32> to vector<16xf32>
    %335 = vector.shape_cast %334 : vector<16xf32> to vector<1x1x1x16xf32>
    %336 = vector.broadcast %335 : vector<1x1x1x16xf32> to vector<2x8x8x16xf32>
    %337 = arith.mulf %332, %336 : vector<2x8x8x16xf32>
    %338 = arith.addf %331, %337 : vector<2x8x8x16xf32>
    %c0_220 = arith.constant 0 : index
    %c4_221 = arith.constant 4 : index
    %c2_222 = arith.constant 2 : index
    %c0_223 = arith.constant 0 : index
    %339 = vector.load %arg15[%c0_220, %c4_221, %c2_222, %c0_223] : memref<2x16x16x16xf32, #tpu.memory_space<vmem>>, vector<2x8x8x16xf32>
    %340 = vector.extract_strided_slice %71 {offsets = [4, 2, 0], sizes = [1, 1, 16], strides = [1, 1, 1]} : vector<9x9x16xf32> to vector<1x1x16xf32>
    %341 = vector.shape_cast %340 : vector<1x1x16xf32> to vector<16xf32>
    %342 = vector.shape_cast %341 : vector<16xf32> to vector<1x1x1x16xf32>
    %343 = vector.broadcast %342 : vector<1x1x1x16xf32> to vector<2x8x8x16xf32>
    %344 = arith.mulf %339, %343 : vector<2x8x8x16xf32>
    %345 = arith.addf %338, %344 : vector<2x8x8x16xf32>
    %c0_224 = arith.constant 0 : index
    %c4_225 = arith.constant 4 : index
    %c3_226 = arith.constant 3 : index
    %c0_227 = arith.constant 0 : index
    %346 = vector.load %arg15[%c0_224, %c4_225, %c3_226, %c0_227] : memref<2x16x16x16xf32, #tpu.memory_space<vmem>>, vector<2x8x8x16xf32>
    %347 = vector.extract_strided_slice %71 {offsets = [4, 3, 0], sizes = [1, 1, 16], strides = [1, 1, 1]} : vector<9x9x16xf32> to vector<1x1x16xf32>
    %348 = vector.shape_cast %347 : vector<1x1x16xf32> to vector<16xf32>
    %349 = vector.shape_cast %348 : vector<16xf32> to vector<1x1x1x16xf32>
    %350 = vector.broadcast %349 : vector<1x1x1x16xf32> to vector<2x8x8x16xf32>
    %351 = arith.mulf %346, %350 : vector<2x8x8x16xf32>
    %352 = arith.addf %345, %351 : vector<2x8x8x16xf32>
    %c0_228 = arith.constant 0 : index
    %c4_229 = arith.constant 4 : index
    %c4_230 = arith.constant 4 : index
    %c0_231 = arith.constant 0 : index
    %353 = vector.load %arg15[%c0_228, %c4_229, %c4_230, %c0_231] : memref<2x16x16x16xf32, #tpu.memory_space<vmem>>, vector<2x8x8x16xf32>
    %354 = vector.extract_strided_slice %71 {offsets = [4, 4, 0], sizes = [1, 1, 16], strides = [1, 1, 1]} : vector<9x9x16xf32> to vector<1x1x16xf32>
    %355 = vector.shape_cast %354 : vector<1x1x16xf32> to vector<16xf32>
    %356 = vector.shape_cast %355 : vector<16xf32> to vector<1x1x1x16xf32>
    %357 = vector.broadcast %356 : vector<1x1x1x16xf32> to vector<2x8x8x16xf32>
    %358 = arith.mulf %353, %357 : vector<2x8x8x16xf32>
    %359 = arith.addf %352, %358 : vector<2x8x8x16xf32>
    %c0_232 = arith.constant 0 : index
    %c4_233 = arith.constant 4 : index
    %c5_234 = arith.constant 5 : index
    %c0_235 = arith.constant 0 : index
    %360 = vector.load %arg15[%c0_232, %c4_233, %c5_234, %c0_235] : memref<2x16x16x16xf32, #tpu.memory_space<vmem>>, vector<2x8x8x16xf32>
    %361 = vector.extract_strided_slice %71 {offsets = [4, 5, 0], sizes = [1, 1, 16], strides = [1, 1, 1]} : vector<9x9x16xf32> to vector<1x1x16xf32>
    %362 = vector.shape_cast %361 : vector<1x1x16xf32> to vector<16xf32>
    %363 = vector.shape_cast %362 : vector<16xf32> to vector<1x1x1x16xf32>
    %364 = vector.broadcast %363 : vector<1x1x1x16xf32> to vector<2x8x8x16xf32>
    %365 = arith.mulf %360, %364 : vector<2x8x8x16xf32>
    %366 = arith.addf %359, %365 : vector<2x8x8x16xf32>
    %c0_236 = arith.constant 0 : index
    %c4_237 = arith.constant 4 : index
    %c6_238 = arith.constant 6 : index
    %c0_239 = arith.constant 0 : index
    %367 = vector.load %arg15[%c0_236, %c4_237, %c6_238, %c0_239] : memref<2x16x16x16xf32, #tpu.memory_space<vmem>>, vector<2x8x8x16xf32>
    %368 = vector.extract_strided_slice %71 {offsets = [4, 6, 0], sizes = [1, 1, 16], strides = [1, 1, 1]} : vector<9x9x16xf32> to vector<1x1x16xf32>
    %369 = vector.shape_cast %368 : vector<1x1x16xf32> to vector<16xf32>
    %370 = vector.shape_cast %369 : vector<16xf32> to vector<1x1x1x16xf32>
    %371 = vector.broadcast %370 : vector<1x1x1x16xf32> to vector<2x8x8x16xf32>
    %372 = arith.mulf %367, %371 : vector<2x8x8x16xf32>
    %373 = arith.addf %366, %372 : vector<2x8x8x16xf32>
    %c0_240 = arith.constant 0 : index
    %c4_241 = arith.constant 4 : index
    %c7_242 = arith.constant 7 : index
    %c0_243 = arith.constant 0 : index
    %374 = vector.load %arg15[%c0_240, %c4_241, %c7_242, %c0_243] : memref<2x16x16x16xf32, #tpu.memory_space<vmem>>, vector<2x8x8x16xf32>
    %375 = vector.extract_strided_slice %71 {offsets = [4, 7, 0], sizes = [1, 1, 16], strides = [1, 1, 1]} : vector<9x9x16xf32> to vector<1x1x16xf32>
    %376 = vector.shape_cast %375 : vector<1x1x16xf32> to vector<16xf32>
    %377 = vector.shape_cast %376 : vector<16xf32> to vector<1x1x1x16xf32>
    %378 = vector.broadcast %377 : vector<1x1x1x16xf32> to vector<2x8x8x16xf32>
    %379 = arith.mulf %374, %378 : vector<2x8x8x16xf32>
    %380 = arith.addf %373, %379 : vector<2x8x8x16xf32>
    %c0_244 = arith.constant 0 : index
    %c4_245 = arith.constant 4 : index
    %c8_246 = arith.constant 8 : index
    %c0_247 = arith.constant 0 : index
    %381 = vector.load %arg15[%c0_244, %c4_245, %c8_246, %c0_247] : memref<2x16x16x16xf32, #tpu.memory_space<vmem>>, vector<2x8x8x16xf32>
    %382 = vector.extract_strided_slice %71 {offsets = [4, 8, 0], sizes = [1, 1, 16], strides = [1, 1, 1]} : vector<9x9x16xf32> to vector<1x1x16xf32>
    %383 = vector.shape_cast %382 : vector<1x1x16xf32> to vector<16xf32>
    %384 = vector.shape_cast %383 : vector<16xf32> to vector<1x1x1x16xf32>
    %385 = vector.broadcast %384 : vector<1x1x1x16xf32> to vector<2x8x8x16xf32>
    %386 = arith.mulf %381, %385 : vector<2x8x8x16xf32>
    %387 = arith.addf %380, %386 : vector<2x8x8x16xf32>
    %c0_248 = arith.constant 0 : index
    %c5_249 = arith.constant 5 : index
    %c0_250 = arith.constant 0 : index
    %c0_251 = arith.constant 0 : index
    %388 = vector.load %arg15[%c0_248, %c5_249, %c0_250, %c0_251] : memref<2x16x16x16xf32, #tpu.memory_space<vmem>>, vector<2x8x8x16xf32>
    %389 = vector.extract_strided_slice %71 {offsets = [5, 0, 0], sizes = [1, 1, 16], strides = [1, 1, 1]} : vector<9x9x16xf32> to vector<1x1x16xf32>
    %390 = vector.shape_cast %389 : vector<1x1x16xf32> to vector<16xf32>
    %391 = vector.shape_cast %390 : vector<16xf32> to vector<1x1x1x16xf32>
    %392 = vector.broadcast %391 : vector<1x1x1x16xf32> to vector<2x8x8x16xf32>
    %393 = arith.mulf %388, %392 : vector<2x8x8x16xf32>
    %394 = arith.addf %387, %393 : vector<2x8x8x16xf32>
    %c0_252 = arith.constant 0 : index
    %c5_253 = arith.constant 5 : index
    %c1_254 = arith.constant 1 : index
    %c0_255 = arith.constant 0 : index
    %395 = vector.load %arg15[%c0_252, %c5_253, %c1_254, %c0_255] : memref<2x16x16x16xf32, #tpu.memory_space<vmem>>, vector<2x8x8x16xf32>
    %396 = vector.extract_strided_slice %71 {offsets = [5, 1, 0], sizes = [1, 1, 16], strides = [1, 1, 1]} : vector<9x9x16xf32> to vector<1x1x16xf32>
    %397 = vector.shape_cast %396 : vector<1x1x16xf32> to vector<16xf32>
    %398 = vector.shape_cast %397 : vector<16xf32> to vector<1x1x1x16xf32>
    %399 = vector.broadcast %398 : vector<1x1x1x16xf32> to vector<2x8x8x16xf32>
    %400 = arith.mulf %395, %399 : vector<2x8x8x16xf32>
    %401 = arith.addf %394, %400 : vector<2x8x8x16xf32>
    %c0_256 = arith.constant 0 : index
    %c5_257 = arith.constant 5 : index
    %c2_258 = arith.constant 2 : index
    %c0_259 = arith.constant 0 : index
    %402 = vector.load %arg15[%c0_256, %c5_257, %c2_258, %c0_259] : memref<2x16x16x16xf32, #tpu.memory_space<vmem>>, vector<2x8x8x16xf32>
    %403 = vector.extract_strided_slice %71 {offsets = [5, 2, 0], sizes = [1, 1, 16], strides = [1, 1, 1]} : vector<9x9x16xf32> to vector<1x1x16xf32>
    %404 = vector.shape_cast %403 : vector<1x1x16xf32> to vector<16xf32>
    %405 = vector.shape_cast %404 : vector<16xf32> to vector<1x1x1x16xf32>
    %406 = vector.broadcast %405 : vector<1x1x1x16xf32> to vector<2x8x8x16xf32>
    %407 = arith.mulf %402, %406 : vector<2x8x8x16xf32>
    %408 = arith.addf %401, %407 : vector<2x8x8x16xf32>
    %c0_260 = arith.constant 0 : index
    %c5_261 = arith.constant 5 : index
    %c3_262 = arith.constant 3 : index
    %c0_263 = arith.constant 0 : index
    %409 = vector.load %arg15[%c0_260, %c5_261, %c3_262, %c0_263] : memref<2x16x16x16xf32, #tpu.memory_space<vmem>>, vector<2x8x8x16xf32>
    %410 = vector.extract_strided_slice %71 {offsets = [5, 3, 0], sizes = [1, 1, 16], strides = [1, 1, 1]} : vector<9x9x16xf32> to vector<1x1x16xf32>
    %411 = vector.shape_cast %410 : vector<1x1x16xf32> to vector<16xf32>
    %412 = vector.shape_cast %411 : vector<16xf32> to vector<1x1x1x16xf32>
    %413 = vector.broadcast %412 : vector<1x1x1x16xf32> to vector<2x8x8x16xf32>
    %414 = arith.mulf %409, %413 : vector<2x8x8x16xf32>
    %415 = arith.addf %408, %414 : vector<2x8x8x16xf32>
    %c0_264 = arith.constant 0 : index
    %c5_265 = arith.constant 5 : index
    %c4_266 = arith.constant 4 : index
    %c0_267 = arith.constant 0 : index
    %416 = vector.load %arg15[%c0_264, %c5_265, %c4_266, %c0_267] : memref<2x16x16x16xf32, #tpu.memory_space<vmem>>, vector<2x8x8x16xf32>
    %417 = vector.extract_strided_slice %71 {offsets = [5, 4, 0], sizes = [1, 1, 16], strides = [1, 1, 1]} : vector<9x9x16xf32> to vector<1x1x16xf32>
    %418 = vector.shape_cast %417 : vector<1x1x16xf32> to vector<16xf32>
    %419 = vector.shape_cast %418 : vector<16xf32> to vector<1x1x1x16xf32>
    %420 = vector.broadcast %419 : vector<1x1x1x16xf32> to vector<2x8x8x16xf32>
    %421 = arith.mulf %416, %420 : vector<2x8x8x16xf32>
    %422 = arith.addf %415, %421 : vector<2x8x8x16xf32>
    %c0_268 = arith.constant 0 : index
    %c5_269 = arith.constant 5 : index
    %c5_270 = arith.constant 5 : index
    %c0_271 = arith.constant 0 : index
    %423 = vector.load %arg15[%c0_268, %c5_269, %c5_270, %c0_271] : memref<2x16x16x16xf32, #tpu.memory_space<vmem>>, vector<2x8x8x16xf32>
    %424 = vector.extract_strided_slice %71 {offsets = [5, 5, 0], sizes = [1, 1, 16], strides = [1, 1, 1]} : vector<9x9x16xf32> to vector<1x1x16xf32>
    %425 = vector.shape_cast %424 : vector<1x1x16xf32> to vector<16xf32>
    %426 = vector.shape_cast %425 : vector<16xf32> to vector<1x1x1x16xf32>
    %427 = vector.broadcast %426 : vector<1x1x1x16xf32> to vector<2x8x8x16xf32>
    %428 = arith.mulf %423, %427 : vector<2x8x8x16xf32>
    %429 = arith.addf %422, %428 : vector<2x8x8x16xf32>
    %c0_272 = arith.constant 0 : index
    %c5_273 = arith.constant 5 : index
    %c6_274 = arith.constant 6 : index
    %c0_275 = arith.constant 0 : index
    %430 = vector.load %arg15[%c0_272, %c5_273, %c6_274, %c0_275] : memref<2x16x16x16xf32, #tpu.memory_space<vmem>>, vector<2x8x8x16xf32>
    %431 = vector.extract_strided_slice %71 {offsets = [5, 6, 0], sizes = [1, 1, 16], strides = [1, 1, 1]} : vector<9x9x16xf32> to vector<1x1x16xf32>
    %432 = vector.shape_cast %431 : vector<1x1x16xf32> to vector<16xf32>
    %433 = vector.shape_cast %432 : vector<16xf32> to vector<1x1x1x16xf32>
    %434 = vector.broadcast %433 : vector<1x1x1x16xf32> to vector<2x8x8x16xf32>
    %435 = arith.mulf %430, %434 : vector<2x8x8x16xf32>
    %436 = arith.addf %429, %435 : vector<2x8x8x16xf32>
    %c0_276 = arith.constant 0 : index
    %c5_277 = arith.constant 5 : index
    %c7_278 = arith.constant 7 : index
    %c0_279 = arith.constant 0 : index
    %437 = vector.load %arg15[%c0_276, %c5_277, %c7_278, %c0_279] : memref<2x16x16x16xf32, #tpu.memory_space<vmem>>, vector<2x8x8x16xf32>
    %438 = vector.extract_strided_slice %71 {offsets = [5, 7, 0], sizes = [1, 1, 16], strides = [1, 1, 1]} : vector<9x9x16xf32> to vector<1x1x16xf32>
    %439 = vector.shape_cast %438 : vector<1x1x16xf32> to vector<16xf32>
    %440 = vector.shape_cast %439 : vector<16xf32> to vector<1x1x1x16xf32>
    %441 = vector.broadcast %440 : vector<1x1x1x16xf32> to vector<2x8x8x16xf32>
    %442 = arith.mulf %437, %441 : vector<2x8x8x16xf32>
    %443 = arith.addf %436, %442 : vector<2x8x8x16xf32>
    %c0_280 = arith.constant 0 : index
    %c5_281 = arith.constant 5 : index
    %c8_282 = arith.constant 8 : index
    %c0_283 = arith.constant 0 : index
    %444 = vector.load %arg15[%c0_280, %c5_281, %c8_282, %c0_283] : memref<2x16x16x16xf32, #tpu.memory_space<vmem>>, vector<2x8x8x16xf32>
    %445 = vector.extract_strided_slice %71 {offsets = [5, 8, 0], sizes = [1, 1, 16], strides = [1, 1, 1]} : vector<9x9x16xf32> to vector<1x1x16xf32>
    %446 = vector.shape_cast %445 : vector<1x1x16xf32> to vector<16xf32>
    %447 = vector.shape_cast %446 : vector<16xf32> to vector<1x1x1x16xf32>
    %448 = vector.broadcast %447 : vector<1x1x1x16xf32> to vector<2x8x8x16xf32>
    %449 = arith.mulf %444, %448 : vector<2x8x8x16xf32>
    %450 = arith.addf %443, %449 : vector<2x8x8x16xf32>
    %c0_284 = arith.constant 0 : index
    %c6_285 = arith.constant 6 : index
    %c0_286 = arith.constant 0 : index
    %c0_287 = arith.constant 0 : index
    %451 = vector.load %arg15[%c0_284, %c6_285, %c0_286, %c0_287] : memref<2x16x16x16xf32, #tpu.memory_space<vmem>>, vector<2x8x8x16xf32>
    %452 = vector.extract_strided_slice %71 {offsets = [6, 0, 0], sizes = [1, 1, 16], strides = [1, 1, 1]} : vector<9x9x16xf32> to vector<1x1x16xf32>
    %453 = vector.shape_cast %452 : vector<1x1x16xf32> to vector<16xf32>
    %454 = vector.shape_cast %453 : vector<16xf32> to vector<1x1x1x16xf32>
    %455 = vector.broadcast %454 : vector<1x1x1x16xf32> to vector<2x8x8x16xf32>
    %456 = arith.mulf %451, %455 : vector<2x8x8x16xf32>
    %457 = arith.addf %450, %456 : vector<2x8x8x16xf32>
    %c0_288 = arith.constant 0 : index
    %c6_289 = arith.constant 6 : index
    %c1_290 = arith.constant 1 : index
    %c0_291 = arith.constant 0 : index
    %458 = vector.load %arg15[%c0_288, %c6_289, %c1_290, %c0_291] : memref<2x16x16x16xf32, #tpu.memory_space<vmem>>, vector<2x8x8x16xf32>
    %459 = vector.extract_strided_slice %71 {offsets = [6, 1, 0], sizes = [1, 1, 16], strides = [1, 1, 1]} : vector<9x9x16xf32> to vector<1x1x16xf32>
    %460 = vector.shape_cast %459 : vector<1x1x16xf32> to vector<16xf32>
    %461 = vector.shape_cast %460 : vector<16xf32> to vector<1x1x1x16xf32>
    %462 = vector.broadcast %461 : vector<1x1x1x16xf32> to vector<2x8x8x16xf32>
    %463 = arith.mulf %458, %462 : vector<2x8x8x16xf32>
    %464 = arith.addf %457, %463 : vector<2x8x8x16xf32>
    %c0_292 = arith.constant 0 : index
    %c6_293 = arith.constant 6 : index
    %c2_294 = arith.constant 2 : index
    %c0_295 = arith.constant 0 : index
    %465 = vector.load %arg15[%c0_292, %c6_293, %c2_294, %c0_295] : memref<2x16x16x16xf32, #tpu.memory_space<vmem>>, vector<2x8x8x16xf32>
    %466 = vector.extract_strided_slice %71 {offsets = [6, 2, 0], sizes = [1, 1, 16], strides = [1, 1, 1]} : vector<9x9x16xf32> to vector<1x1x16xf32>
    %467 = vector.shape_cast %466 : vector<1x1x16xf32> to vector<16xf32>
    %468 = vector.shape_cast %467 : vector<16xf32> to vector<1x1x1x16xf32>
    %469 = vector.broadcast %468 : vector<1x1x1x16xf32> to vector<2x8x8x16xf32>
    %470 = arith.mulf %465, %469 : vector<2x8x8x16xf32>
    %471 = arith.addf %464, %470 : vector<2x8x8x16xf32>
    %c0_296 = arith.constant 0 : index
    %c6_297 = arith.constant 6 : index
    %c3_298 = arith.constant 3 : index
    %c0_299 = arith.constant 0 : index
    %472 = vector.load %arg15[%c0_296, %c6_297, %c3_298, %c0_299] : memref<2x16x16x16xf32, #tpu.memory_space<vmem>>, vector<2x8x8x16xf32>
    %473 = vector.extract_strided_slice %71 {offsets = [6, 3, 0], sizes = [1, 1, 16], strides = [1, 1, 1]} : vector<9x9x16xf32> to vector<1x1x16xf32>
    %474 = vector.shape_cast %473 : vector<1x1x16xf32> to vector<16xf32>
    %475 = vector.shape_cast %474 : vector<16xf32> to vector<1x1x1x16xf32>
    %476 = vector.broadcast %475 : vector<1x1x1x16xf32> to vector<2x8x8x16xf32>
    %477 = arith.mulf %472, %476 : vector<2x8x8x16xf32>
    %478 = arith.addf %471, %477 : vector<2x8x8x16xf32>
    %c0_300 = arith.constant 0 : index
    %c6_301 = arith.constant 6 : index
    %c4_302 = arith.constant 4 : index
    %c0_303 = arith.constant 0 : index
    %479 = vector.load %arg15[%c0_300, %c6_301, %c4_302, %c0_303] : memref<2x16x16x16xf32, #tpu.memory_space<vmem>>, vector<2x8x8x16xf32>
    %480 = vector.extract_strided_slice %71 {offsets = [6, 4, 0], sizes = [1, 1, 16], strides = [1, 1, 1]} : vector<9x9x16xf32> to vector<1x1x16xf32>
    %481 = vector.shape_cast %480 : vector<1x1x16xf32> to vector<16xf32>
    %482 = vector.shape_cast %481 : vector<16xf32> to vector<1x1x1x16xf32>
    %483 = vector.broadcast %482 : vector<1x1x1x16xf32> to vector<2x8x8x16xf32>
    %484 = arith.mulf %479, %483 : vector<2x8x8x16xf32>
    %485 = arith.addf %478, %484 : vector<2x8x8x16xf32>
    %c0_304 = arith.constant 0 : index
    %c6_305 = arith.constant 6 : index
    %c5_306 = arith.constant 5 : index
    %c0_307 = arith.constant 0 : index
    %486 = vector.load %arg15[%c0_304, %c6_305, %c5_306, %c0_307] : memref<2x16x16x16xf32, #tpu.memory_space<vmem>>, vector<2x8x8x16xf32>
    %487 = vector.extract_strided_slice %71 {offsets = [6, 5, 0], sizes = [1, 1, 16], strides = [1, 1, 1]} : vector<9x9x16xf32> to vector<1x1x16xf32>
    %488 = vector.shape_cast %487 : vector<1x1x16xf32> to vector<16xf32>
    %489 = vector.shape_cast %488 : vector<16xf32> to vector<1x1x1x16xf32>
    %490 = vector.broadcast %489 : vector<1x1x1x16xf32> to vector<2x8x8x16xf32>
    %491 = arith.mulf %486, %490 : vector<2x8x8x16xf32>
    %492 = arith.addf %485, %491 : vector<2x8x8x16xf32>
    %c0_308 = arith.constant 0 : index
    %c6_309 = arith.constant 6 : index
    %c6_310 = arith.constant 6 : index
    %c0_311 = arith.constant 0 : index
    %493 = vector.load %arg15[%c0_308, %c6_309, %c6_310, %c0_311] : memref<2x16x16x16xf32, #tpu.memory_space<vmem>>, vector<2x8x8x16xf32>
    %494 = vector.extract_strided_slice %71 {offsets = [6, 6, 0], sizes = [1, 1, 16], strides = [1, 1, 1]} : vector<9x9x16xf32> to vector<1x1x16xf32>
    %495 = vector.shape_cast %494 : vector<1x1x16xf32> to vector<16xf32>
    %496 = vector.shape_cast %495 : vector<16xf32> to vector<1x1x1x16xf32>
    %497 = vector.broadcast %496 : vector<1x1x1x16xf32> to vector<2x8x8x16xf32>
    %498 = arith.mulf %493, %497 : vector<2x8x8x16xf32>
    %499 = arith.addf %492, %498 : vector<2x8x8x16xf32>
    %c0_312 = arith.constant 0 : index
    %c6_313 = arith.constant 6 : index
    %c7_314 = arith.constant 7 : index
    %c0_315 = arith.constant 0 : index
    %500 = vector.load %arg15[%c0_312, %c6_313, %c7_314, %c0_315] : memref<2x16x16x16xf32, #tpu.memory_space<vmem>>, vector<2x8x8x16xf32>
    %501 = vector.extract_strided_slice %71 {offsets = [6, 7, 0], sizes = [1, 1, 16], strides = [1, 1, 1]} : vector<9x9x16xf32> to vector<1x1x16xf32>
    %502 = vector.shape_cast %501 : vector<1x1x16xf32> to vector<16xf32>
    %503 = vector.shape_cast %502 : vector<16xf32> to vector<1x1x1x16xf32>
    %504 = vector.broadcast %503 : vector<1x1x1x16xf32> to vector<2x8x8x16xf32>
    %505 = arith.mulf %500, %504 : vector<2x8x8x16xf32>
    %506 = arith.addf %499, %505 : vector<2x8x8x16xf32>
    %c0_316 = arith.constant 0 : index
    %c6_317 = arith.constant 6 : index
    %c8_318 = arith.constant 8 : index
    %c0_319 = arith.constant 0 : index
    %507 = vector.load %arg15[%c0_316, %c6_317, %c8_318, %c0_319] : memref<2x16x16x16xf32, #tpu.memory_space<vmem>>, vector<2x8x8x16xf32>
    %508 = vector.extract_strided_slice %71 {offsets = [6, 8, 0], sizes = [1, 1, 16], strides = [1, 1, 1]} : vector<9x9x16xf32> to vector<1x1x16xf32>
    %509 = vector.shape_cast %508 : vector<1x1x16xf32> to vector<16xf32>
    %510 = vector.shape_cast %509 : vector<16xf32> to vector<1x1x1x16xf32>
    %511 = vector.broadcast %510 : vector<1x1x1x16xf32> to vector<2x8x8x16xf32>
    %512 = arith.mulf %507, %511 : vector<2x8x8x16xf32>
    %513 = arith.addf %506, %512 : vector<2x8x8x16xf32>
    %c0_320 = arith.constant 0 : index
    %c7_321 = arith.constant 7 : index
    %c0_322 = arith.constant 0 : index
    %c0_323 = arith.constant 0 : index
    %514 = vector.load %arg15[%c0_320, %c7_321, %c0_322, %c0_323] : memref<2x16x16x16xf32, #tpu.memory_space<vmem>>, vector<2x8x8x16xf32>
    %515 = vector.extract_strided_slice %71 {offsets = [7, 0, 0], sizes = [1, 1, 16], strides = [1, 1, 1]} : vector<9x9x16xf32> to vector<1x1x16xf32>
    %516 = vector.shape_cast %515 : vector<1x1x16xf32> to vector<16xf32>
    %517 = vector.shape_cast %516 : vector<16xf32> to vector<1x1x1x16xf32>
    %518 = vector.broadcast %517 : vector<1x1x1x16xf32> to vector<2x8x8x16xf32>
    %519 = arith.mulf %514, %518 : vector<2x8x8x16xf32>
    %520 = arith.addf %513, %519 : vector<2x8x8x16xf32>
    %c0_324 = arith.constant 0 : index
    %c7_325 = arith.constant 7 : index
    %c1_326 = arith.constant 1 : index
    %c0_327 = arith.constant 0 : index
    %521 = vector.load %arg15[%c0_324, %c7_325, %c1_326, %c0_327] : memref<2x16x16x16xf32, #tpu.memory_space<vmem>>, vector<2x8x8x16xf32>
    %522 = vector.extract_strided_slice %71 {offsets = [7, 1, 0], sizes = [1, 1, 16], strides = [1, 1, 1]} : vector<9x9x16xf32> to vector<1x1x16xf32>
    %523 = vector.shape_cast %522 : vector<1x1x16xf32> to vector<16xf32>
    %524 = vector.shape_cast %523 : vector<16xf32> to vector<1x1x1x16xf32>
    %525 = vector.broadcast %524 : vector<1x1x1x16xf32> to vector<2x8x8x16xf32>
    %526 = arith.mulf %521, %525 : vector<2x8x8x16xf32>
    %527 = arith.addf %520, %526 : vector<2x8x8x16xf32>
    %c0_328 = arith.constant 0 : index
    %c7_329 = arith.constant 7 : index
    %c2_330 = arith.constant 2 : index
    %c0_331 = arith.constant 0 : index
    %528 = vector.load %arg15[%c0_328, %c7_329, %c2_330, %c0_331] : memref<2x16x16x16xf32, #tpu.memory_space<vmem>>, vector<2x8x8x16xf32>
    %529 = vector.extract_strided_slice %71 {offsets = [7, 2, 0], sizes = [1, 1, 16], strides = [1, 1, 1]} : vector<9x9x16xf32> to vector<1x1x16xf32>
    %530 = vector.shape_cast %529 : vector<1x1x16xf32> to vector<16xf32>
    %531 = vector.shape_cast %530 : vector<16xf32> to vector<1x1x1x16xf32>
    %532 = vector.broadcast %531 : vector<1x1x1x16xf32> to vector<2x8x8x16xf32>
    %533 = arith.mulf %528, %532 : vector<2x8x8x16xf32>
    %534 = arith.addf %527, %533 : vector<2x8x8x16xf32>
    %c0_332 = arith.constant 0 : index
    %c7_333 = arith.constant 7 : index
    %c3_334 = arith.constant 3 : index
    %c0_335 = arith.constant 0 : index
    %535 = vector.load %arg15[%c0_332, %c7_333, %c3_334, %c0_335] : memref<2x16x16x16xf32, #tpu.memory_space<vmem>>, vector<2x8x8x16xf32>
    %536 = vector.extract_strided_slice %71 {offsets = [7, 3, 0], sizes = [1, 1, 16], strides = [1, 1, 1]} : vector<9x9x16xf32> to vector<1x1x16xf32>
    %537 = vector.shape_cast %536 : vector<1x1x16xf32> to vector<16xf32>
    %538 = vector.shape_cast %537 : vector<16xf32> to vector<1x1x1x16xf32>
    %539 = vector.broadcast %538 : vector<1x1x1x16xf32> to vector<2x8x8x16xf32>
    %540 = arith.mulf %535, %539 : vector<2x8x8x16xf32>
    %541 = arith.addf %534, %540 : vector<2x8x8x16xf32>
    %c0_336 = arith.constant 0 : index
    %c7_337 = arith.constant 7 : index
    %c4_338 = arith.constant 4 : index
    %c0_339 = arith.constant 0 : index
    %542 = vector.load %arg15[%c0_336, %c7_337, %c4_338, %c0_339] : memref<2x16x16x16xf32, #tpu.memory_space<vmem>>, vector<2x8x8x16xf32>
    %543 = vector.extract_strided_slice %71 {offsets = [7, 4, 0], sizes = [1, 1, 16], strides = [1, 1, 1]} : vector<9x9x16xf32> to vector<1x1x16xf32>
    %544 = vector.shape_cast %543 : vector<1x1x16xf32> to vector<16xf32>
    %545 = vector.shape_cast %544 : vector<16xf32> to vector<1x1x1x16xf32>
    %546 = vector.broadcast %545 : vector<1x1x1x16xf32> to vector<2x8x8x16xf32>
    %547 = arith.mulf %542, %546 : vector<2x8x8x16xf32>
    %548 = arith.addf %541, %547 : vector<2x8x8x16xf32>
    %c0_340 = arith.constant 0 : index
    %c7_341 = arith.constant 7 : index
    %c5_342 = arith.constant 5 : index
    %c0_343 = arith.constant 0 : index
    %549 = vector.load %arg15[%c0_340, %c7_341, %c5_342, %c0_343] : memref<2x16x16x16xf32, #tpu.memory_space<vmem>>, vector<2x8x8x16xf32>
    %550 = vector.extract_strided_slice %71 {offsets = [7, 5, 0], sizes = [1, 1, 16], strides = [1, 1, 1]} : vector<9x9x16xf32> to vector<1x1x16xf32>
    %551 = vector.shape_cast %550 : vector<1x1x16xf32> to vector<16xf32>
    %552 = vector.shape_cast %551 : vector<16xf32> to vector<1x1x1x16xf32>
    %553 = vector.broadcast %552 : vector<1x1x1x16xf32> to vector<2x8x8x16xf32>
    %554 = arith.mulf %549, %553 : vector<2x8x8x16xf32>
    %555 = arith.addf %548, %554 : vector<2x8x8x16xf32>
    %c0_344 = arith.constant 0 : index
    %c7_345 = arith.constant 7 : index
    %c6_346 = arith.constant 6 : index
    %c0_347 = arith.constant 0 : index
    %556 = vector.load %arg15[%c0_344, %c7_345, %c6_346, %c0_347] : memref<2x16x16x16xf32, #tpu.memory_space<vmem>>, vector<2x8x8x16xf32>
    %557 = vector.extract_strided_slice %71 {offsets = [7, 6, 0], sizes = [1, 1, 16], strides = [1, 1, 1]} : vector<9x9x16xf32> to vector<1x1x16xf32>
    %558 = vector.shape_cast %557 : vector<1x1x16xf32> to vector<16xf32>
    %559 = vector.shape_cast %558 : vector<16xf32> to vector<1x1x1x16xf32>
    %560 = vector.broadcast %559 : vector<1x1x1x16xf32> to vector<2x8x8x16xf32>
    %561 = arith.mulf %556, %560 : vector<2x8x8x16xf32>
    %562 = arith.addf %555, %561 : vector<2x8x8x16xf32>
    %c0_348 = arith.constant 0 : index
    %c7_349 = arith.constant 7 : index
    %c7_350 = arith.constant 7 : index
    %c0_351 = arith.constant 0 : index
    %563 = vector.load %arg15[%c0_348, %c7_349, %c7_350, %c0_351] : memref<2x16x16x16xf32, #tpu.memory_space<vmem>>, vector<2x8x8x16xf32>
    %564 = vector.extract_strided_slice %71 {offsets = [7, 7, 0], sizes = [1, 1, 16], strides = [1, 1, 1]} : vector<9x9x16xf32> to vector<1x1x16xf32>
    %565 = vector.shape_cast %564 : vector<1x1x16xf32> to vector<16xf32>
    %566 = vector.shape_cast %565 : vector<16xf32> to vector<1x1x1x16xf32>
    %567 = vector.broadcast %566 : vector<1x1x1x16xf32> to vector<2x8x8x16xf32>
    %568 = arith.mulf %563, %567 : vector<2x8x8x16xf32>
    %569 = arith.addf %562, %568 : vector<2x8x8x16xf32>
    %c0_352 = arith.constant 0 : index
    %c7_353 = arith.constant 7 : index
    %c8_354 = arith.constant 8 : index
    %c0_355 = arith.constant 0 : index
    %570 = vector.load %arg15[%c0_352, %c7_353, %c8_354, %c0_355] : memref<2x16x16x16xf32, #tpu.memory_space<vmem>>, vector<2x8x8x16xf32>
    %571 = vector.extract_strided_slice %71 {offsets = [7, 8, 0], sizes = [1, 1, 16], strides = [1, 1, 1]} : vector<9x9x16xf32> to vector<1x1x16xf32>
    %572 = vector.shape_cast %571 : vector<1x1x16xf32> to vector<16xf32>
    %573 = vector.shape_cast %572 : vector<16xf32> to vector<1x1x1x16xf32>
    %574 = vector.broadcast %573 : vector<1x1x1x16xf32> to vector<2x8x8x16xf32>
    %575 = arith.mulf %570, %574 : vector<2x8x8x16xf32>
    %576 = arith.addf %569, %575 : vector<2x8x8x16xf32>
    %c0_356 = arith.constant 0 : index
    %c8_357 = arith.constant 8 : index
    %c0_358 = arith.constant 0 : index
    %c0_359 = arith.constant 0 : index
    %577 = vector.load %arg15[%c0_356, %c8_357, %c0_358, %c0_359] : memref<2x16x16x16xf32, #tpu.memory_space<vmem>>, vector<2x8x8x16xf32>
    %578 = vector.extract_strided_slice %71 {offsets = [8, 0, 0], sizes = [1, 1, 16], strides = [1, 1, 1]} : vector<9x9x16xf32> to vector<1x1x16xf32>
    %579 = vector.shape_cast %578 : vector<1x1x16xf32> to vector<16xf32>
    %580 = vector.shape_cast %579 : vector<16xf32> to vector<1x1x1x16xf32>
    %581 = vector.broadcast %580 : vector<1x1x1x16xf32> to vector<2x8x8x16xf32>
    %582 = arith.mulf %577, %581 : vector<2x8x8x16xf32>
    %583 = arith.addf %576, %582 : vector<2x8x8x16xf32>
    %c0_360 = arith.constant 0 : index
    %c8_361 = arith.constant 8 : index
    %c1_362 = arith.constant 1 : index
    %c0_363 = arith.constant 0 : index
    %584 = vector.load %arg15[%c0_360, %c8_361, %c1_362, %c0_363] : memref<2x16x16x16xf32, #tpu.memory_space<vmem>>, vector<2x8x8x16xf32>
    %585 = vector.extract_strided_slice %71 {offsets = [8, 1, 0], sizes = [1, 1, 16], strides = [1, 1, 1]} : vector<9x9x16xf32> to vector<1x1x16xf32>
    %586 = vector.shape_cast %585 : vector<1x1x16xf32> to vector<16xf32>
    %587 = vector.shape_cast %586 : vector<16xf32> to vector<1x1x1x16xf32>
    %588 = vector.broadcast %587 : vector<1x1x1x16xf32> to vector<2x8x8x16xf32>
    %589 = arith.mulf %584, %588 : vector<2x8x8x16xf32>
    %590 = arith.addf %583, %589 : vector<2x8x8x16xf32>
    %c0_364 = arith.constant 0 : index
    %c8_365 = arith.constant 8 : index
    %c2_366 = arith.constant 2 : index
    %c0_367 = arith.constant 0 : index
    %591 = vector.load %arg15[%c0_364, %c8_365, %c2_366, %c0_367] : memref<2x16x16x16xf32, #tpu.memory_space<vmem>>, vector<2x8x8x16xf32>
    %592 = vector.extract_strided_slice %71 {offsets = [8, 2, 0], sizes = [1, 1, 16], strides = [1, 1, 1]} : vector<9x9x16xf32> to vector<1x1x16xf32>
    %593 = vector.shape_cast %592 : vector<1x1x16xf32> to vector<16xf32>
    %594 = vector.shape_cast %593 : vector<16xf32> to vector<1x1x1x16xf32>
    %595 = vector.broadcast %594 : vector<1x1x1x16xf32> to vector<2x8x8x16xf32>
    %596 = arith.mulf %591, %595 : vector<2x8x8x16xf32>
    %597 = arith.addf %590, %596 : vector<2x8x8x16xf32>
    %c0_368 = arith.constant 0 : index
    %c8_369 = arith.constant 8 : index
    %c3_370 = arith.constant 3 : index
    %c0_371 = arith.constant 0 : index
    %598 = vector.load %arg15[%c0_368, %c8_369, %c3_370, %c0_371] : memref<2x16x16x16xf32, #tpu.memory_space<vmem>>, vector<2x8x8x16xf32>
    %599 = vector.extract_strided_slice %71 {offsets = [8, 3, 0], sizes = [1, 1, 16], strides = [1, 1, 1]} : vector<9x9x16xf32> to vector<1x1x16xf32>
    %600 = vector.shape_cast %599 : vector<1x1x16xf32> to vector<16xf32>
    %601 = vector.shape_cast %600 : vector<16xf32> to vector<1x1x1x16xf32>
    %602 = vector.broadcast %601 : vector<1x1x1x16xf32> to vector<2x8x8x16xf32>
    %603 = arith.mulf %598, %602 : vector<2x8x8x16xf32>
    %604 = arith.addf %597, %603 : vector<2x8x8x16xf32>
    %c0_372 = arith.constant 0 : index
    %c8_373 = arith.constant 8 : index
    %c4_374 = arith.constant 4 : index
    %c0_375 = arith.constant 0 : index
    %605 = vector.load %arg15[%c0_372, %c8_373, %c4_374, %c0_375] : memref<2x16x16x16xf32, #tpu.memory_space<vmem>>, vector<2x8x8x16xf32>
    %606 = vector.extract_strided_slice %71 {offsets = [8, 4, 0], sizes = [1, 1, 16], strides = [1, 1, 1]} : vector<9x9x16xf32> to vector<1x1x16xf32>
    %607 = vector.shape_cast %606 : vector<1x1x16xf32> to vector<16xf32>
    %608 = vector.shape_cast %607 : vector<16xf32> to vector<1x1x1x16xf32>
    %609 = vector.broadcast %608 : vector<1x1x1x16xf32> to vector<2x8x8x16xf32>
    %610 = arith.mulf %605, %609 : vector<2x8x8x16xf32>
    %611 = arith.addf %604, %610 : vector<2x8x8x16xf32>
    %c0_376 = arith.constant 0 : index
    %c8_377 = arith.constant 8 : index
    %c5_378 = arith.constant 5 : index
    %c0_379 = arith.constant 0 : index
    %612 = vector.load %arg15[%c0_376, %c8_377, %c5_378, %c0_379] : memref<2x16x16x16xf32, #tpu.memory_space<vmem>>, vector<2x8x8x16xf32>
    %613 = vector.extract_strided_slice %71 {offsets = [8, 5, 0], sizes = [1, 1, 16], strides = [1, 1, 1]} : vector<9x9x16xf32> to vector<1x1x16xf32>
    %614 = vector.shape_cast %613 : vector<1x1x16xf32> to vector<16xf32>
    %615 = vector.shape_cast %614 : vector<16xf32> to vector<1x1x1x16xf32>
    %616 = vector.broadcast %615 : vector<1x1x1x16xf32> to vector<2x8x8x16xf32>
    %617 = arith.mulf %612, %616 : vector<2x8x8x16xf32>
    %618 = arith.addf %611, %617 : vector<2x8x8x16xf32>
    %c0_380 = arith.constant 0 : index
    %c8_381 = arith.constant 8 : index
    %c6_382 = arith.constant 6 : index
    %c0_383 = arith.constant 0 : index
    %619 = vector.load %arg15[%c0_380, %c8_381, %c6_382, %c0_383] : memref<2x16x16x16xf32, #tpu.memory_space<vmem>>, vector<2x8x8x16xf32>
    %620 = vector.extract_strided_slice %71 {offsets = [8, 6, 0], sizes = [1, 1, 16], strides = [1, 1, 1]} : vector<9x9x16xf32> to vector<1x1x16xf32>
    %621 = vector.shape_cast %620 : vector<1x1x16xf32> to vector<16xf32>
    %622 = vector.shape_cast %621 : vector<16xf32> to vector<1x1x1x16xf32>
    %623 = vector.broadcast %622 : vector<1x1x1x16xf32> to vector<2x8x8x16xf32>
    %624 = arith.mulf %619, %623 : vector<2x8x8x16xf32>
    %625 = arith.addf %618, %624 : vector<2x8x8x16xf32>
    %c0_384 = arith.constant 0 : index
    %c8_385 = arith.constant 8 : index
    %c7_386 = arith.constant 7 : index
    %c0_387 = arith.constant 0 : index
    %626 = vector.load %arg15[%c0_384, %c8_385, %c7_386, %c0_387] : memref<2x16x16x16xf32, #tpu.memory_space<vmem>>, vector<2x8x8x16xf32>
    %627 = vector.extract_strided_slice %71 {offsets = [8, 7, 0], sizes = [1, 1, 16], strides = [1, 1, 1]} : vector<9x9x16xf32> to vector<1x1x16xf32>
    %628 = vector.shape_cast %627 : vector<1x1x16xf32> to vector<16xf32>
    %629 = vector.shape_cast %628 : vector<16xf32> to vector<1x1x1x16xf32>
    %630 = vector.broadcast %629 : vector<1x1x1x16xf32> to vector<2x8x8x16xf32>
    %631 = arith.mulf %626, %630 : vector<2x8x8x16xf32>
    %632 = arith.addf %625, %631 : vector<2x8x8x16xf32>
    %c0_388 = arith.constant 0 : index
    %c8_389 = arith.constant 8 : index
    %c8_390 = arith.constant 8 : index
    %c0_391 = arith.constant 0 : index
    %633 = vector.load %arg15[%c0_388, %c8_389, %c8_390, %c0_391] : memref<2x16x16x16xf32, #tpu.memory_space<vmem>>, vector<2x8x8x16xf32>
    %634 = vector.extract_strided_slice %71 {offsets = [8, 8, 0], sizes = [1, 1, 16], strides = [1, 1, 1]} : vector<9x9x16xf32> to vector<1x1x16xf32>
    %635 = vector.shape_cast %634 : vector<1x1x16xf32> to vector<16xf32>
    %636 = vector.shape_cast %635 : vector<16xf32> to vector<1x1x1x16xf32>
    %637 = vector.broadcast %636 : vector<1x1x1x16xf32> to vector<2x8x8x16xf32>
    %638 = arith.mulf %633, %637 : vector<2x8x8x16xf32>
    %639 = arith.addf %632, %638 : vector<2x8x8x16xf32>
    %c0_392 = arith.constant 0 : index
    %c0_393 = arith.constant 0 : index
    %640 = vector.load %arg5[%c0_392, %c0_393] : memref<1x16xf32, #tpu.memory_space<vmem>>, vector<1x16xf32>
    %641 = vector.shape_cast %640 : vector<1x16xf32> to vector<1x1x1x16xf32>
    %642 = vector.broadcast %641 : vector<1x1x1x16xf32> to vector<2x8x8x16xf32>
    %643 = arith.addf %639, %642 : vector<2x8x8x16xf32>
    %644 = vector.extract_strided_slice %643 {offsets = [0, 0, 0, 0], sizes = [1, 1, 8, 16], strides = [1, 1, 1, 1]} : vector<2x8x8x16xf32> to vector<1x1x8x16xf32>
    %645 = vector.shape_cast %644 : vector<1x1x8x16xf32> to vector<8x16xf32>
    %c0_394 = arith.constant 0 : index
    %c0_395 = arith.constant 0 : index
    %646 = vector.load %arg16[%c0_394, %c0_395] : memref<128x16xf32, #tpu.memory_space<vmem>>, vector<8x16xf32>
    tpu.vector_store %arg16[%c0_394, %c0_395], %645 {strides = array<i32>} : memref<128x16xf32, #tpu.memory_space<vmem>>, vector<8x16xf32>,
    %647 = vector.extract_strided_slice %643 {offsets = [0, 1, 0, 0], sizes = [1, 1, 8, 16], strides = [1, 1, 1, 1]} : vector<2x8x8x16xf32> to vector<1x1x8x16xf32>
    %648 = vector.shape_cast %647 : vector<1x1x8x16xf32> to vector<8x16xf32>
    %c8_396 = arith.constant 8 : index
    %c0_397 = arith.constant 0 : index
    %649 = vector.load %arg16[%c8_396, %c0_397] : memref<128x16xf32, #tpu.memory_space<vmem>>, vector<8x16xf32>
    tpu.vector_store %arg16[%c8_396, %c0_397], %648 {strides = array<i32>} : memref<128x16xf32, #tpu.memory_space<vmem>>, vector<8x16xf32>,
    %650 = vector.extract_strided_slice %643 {offsets = [0, 2, 0, 0], sizes = [1, 1, 8, 16], strides = [1, 1, 1, 1]} : vector<2x8x8x16xf32> to vector<1x1x8x16xf32>
    %651 = vector.shape_cast %650 : vector<1x1x8x16xf32> to vector<8x16xf32>
    %c16 = arith.constant 16 : index
    %c0_398 = arith.constant 0 : index
    %652 = vector.load %arg16[%c16, %c0_398] : memref<128x16xf32, #tpu.memory_space<vmem>>, vector<8x16xf32>
    tpu.vector_store %arg16[%c16, %c0_398], %651 {strides = array<i32>} : memref<128x16xf32, #tpu.memory_space<vmem>>, vector<8x16xf32>,
    %653 = vector.extract_strided_slice %643 {offsets = [0, 3, 0, 0], sizes = [1, 1, 8, 16], strides = [1, 1, 1, 1]} : vector<2x8x8x16xf32> to vector<1x1x8x16xf32>
    %654 = vector.shape_cast %653 : vector<1x1x8x16xf32> to vector<8x16xf32>
    %c24 = arith.constant 24 : index
    %c0_399 = arith.constant 0 : index
    %655 = vector.load %arg16[%c24, %c0_399] : memref<128x16xf32, #tpu.memory_space<vmem>>, vector<8x16xf32>
    tpu.vector_store %arg16[%c24, %c0_399], %654 {strides = array<i32>} : memref<128x16xf32, #tpu.memory_space<vmem>>, vector<8x16xf32>,
    %656 = vector.extract_strided_slice %643 {offsets = [0, 4, 0, 0], sizes = [1, 1, 8, 16], strides = [1, 1, 1, 1]} : vector<2x8x8x16xf32> to vector<1x1x8x16xf32>
    %657 = vector.shape_cast %656 : vector<1x1x8x16xf32> to vector<8x16xf32>
    %c32 = arith.constant 32 : index
    %c0_400 = arith.constant 0 : index
    %658 = vector.load %arg16[%c32, %c0_400] : memref<128x16xf32, #tpu.memory_space<vmem>>, vector<8x16xf32>
    tpu.vector_store %arg16[%c32, %c0_400], %657 {strides = array<i32>} : memref<128x16xf32, #tpu.memory_space<vmem>>, vector<8x16xf32>,
    %659 = vector.extract_strided_slice %643 {offsets = [0, 5, 0, 0], sizes = [1, 1, 8, 16], strides = [1, 1, 1, 1]} : vector<2x8x8x16xf32> to vector<1x1x8x16xf32>
    %660 = vector.shape_cast %659 : vector<1x1x8x16xf32> to vector<8x16xf32>
    %c40 = arith.constant 40 : index
    %c0_401 = arith.constant 0 : index
    %661 = vector.load %arg16[%c40, %c0_401] : memref<128x16xf32, #tpu.memory_space<vmem>>, vector<8x16xf32>
    tpu.vector_store %arg16[%c40, %c0_401], %660 {strides = array<i32>} : memref<128x16xf32, #tpu.memory_space<vmem>>, vector<8x16xf32>,
    %662 = vector.extract_strided_slice %643 {offsets = [0, 6, 0, 0], sizes = [1, 1, 8, 16], strides = [1, 1, 1, 1]} : vector<2x8x8x16xf32> to vector<1x1x8x16xf32>
    %663 = vector.shape_cast %662 : vector<1x1x8x16xf32> to vector<8x16xf32>
    %c48 = arith.constant 48 : index
    %c0_402 = arith.constant 0 : index
    %664 = vector.load %arg16[%c48, %c0_402] : memref<128x16xf32, #tpu.memory_space<vmem>>, vector<8x16xf32>
    tpu.vector_store %arg16[%c48, %c0_402], %663 {strides = array<i32>} : memref<128x16xf32, #tpu.memory_space<vmem>>, vector<8x16xf32>,
    %665 = vector.extract_strided_slice %643 {offsets = [0, 7, 0, 0], sizes = [1, 1, 8, 16], strides = [1, 1, 1, 1]} : vector<2x8x8x16xf32> to vector<1x1x8x16xf32>
    %666 = vector.shape_cast %665 : vector<1x1x8x16xf32> to vector<8x16xf32>
    %c56 = arith.constant 56 : index
    %c0_403 = arith.constant 0 : index
    %667 = vector.load %arg16[%c56, %c0_403] : memref<128x16xf32, #tpu.memory_space<vmem>>, vector<8x16xf32>
    tpu.vector_store %arg16[%c56, %c0_403], %666 {strides = array<i32>} : memref<128x16xf32, #tpu.memory_space<vmem>>, vector<8x16xf32>,
    %668 = vector.extract_strided_slice %643 {offsets = [1, 0, 0, 0], sizes = [1, 1, 8, 16], strides = [1, 1, 1, 1]} : vector<2x8x8x16xf32> to vector<1x1x8x16xf32>
    %669 = vector.shape_cast %668 : vector<1x1x8x16xf32> to vector<8x16xf32>
    %c64 = arith.constant 64 : index
    %c0_404 = arith.constant 0 : index
    %670 = vector.load %arg16[%c64, %c0_404] : memref<128x16xf32, #tpu.memory_space<vmem>>, vector<8x16xf32>
    tpu.vector_store %arg16[%c64, %c0_404], %669 {strides = array<i32>} : memref<128x16xf32, #tpu.memory_space<vmem>>, vector<8x16xf32>,
    %671 = vector.extract_strided_slice %643 {offsets = [1, 1, 0, 0], sizes = [1, 1, 8, 16], strides = [1, 1, 1, 1]} : vector<2x8x8x16xf32> to vector<1x1x8x16xf32>
    %672 = vector.shape_cast %671 : vector<1x1x8x16xf32> to vector<8x16xf32>
    %c72 = arith.constant 72 : index
    %c0_405 = arith.constant 0 : index
    %673 = vector.load %arg16[%c72, %c0_405] : memref<128x16xf32, #tpu.memory_space<vmem>>, vector<8x16xf32>
    tpu.vector_store %arg16[%c72, %c0_405], %672 {strides = array<i32>} : memref<128x16xf32, #tpu.memory_space<vmem>>, vector<8x16xf32>,
    %674 = vector.extract_strided_slice %643 {offsets = [1, 2, 0, 0], sizes = [1, 1, 8, 16], strides = [1, 1, 1, 1]} : vector<2x8x8x16xf32> to vector<1x1x8x16xf32>
    %675 = vector.shape_cast %674 : vector<1x1x8x16xf32> to vector<8x16xf32>
    %c80 = arith.constant 80 : index
    %c0_406 = arith.constant 0 : index
    %676 = vector.load %arg16[%c80, %c0_406] : memref<128x16xf32, #tpu.memory_space<vmem>>, vector<8x16xf32>
    tpu.vector_store %arg16[%c80, %c0_406], %675 {strides = array<i32>} : memref<128x16xf32, #tpu.memory_space<vmem>>, vector<8x16xf32>,
    %677 = vector.extract_strided_slice %643 {offsets = [1, 3, 0, 0], sizes = [1, 1, 8, 16], strides = [1, 1, 1, 1]} : vector<2x8x8x16xf32> to vector<1x1x8x16xf32>
    %678 = vector.shape_cast %677 : vector<1x1x8x16xf32> to vector<8x16xf32>
    %c88 = arith.constant 88 : index
    %c0_407 = arith.constant 0 : index
    %679 = vector.load %arg16[%c88, %c0_407] : memref<128x16xf32, #tpu.memory_space<vmem>>, vector<8x16xf32>
    tpu.vector_store %arg16[%c88, %c0_407], %678 {strides = array<i32>} : memref<128x16xf32, #tpu.memory_space<vmem>>, vector<8x16xf32>,
    %680 = vector.extract_strided_slice %643 {offsets = [1, 4, 0, 0], sizes = [1, 1, 8, 16], strides = [1, 1, 1, 1]} : vector<2x8x8x16xf32> to vector<1x1x8x16xf32>
    %681 = vector.shape_cast %680 : vector<1x1x8x16xf32> to vector<8x16xf32>
    %c96 = arith.constant 96 : index
    %c0_408 = arith.constant 0 : index
    %682 = vector.load %arg16[%c96, %c0_408] : memref<128x16xf32, #tpu.memory_space<vmem>>, vector<8x16xf32>
    tpu.vector_store %arg16[%c96, %c0_408], %681 {strides = array<i32>} : memref<128x16xf32, #tpu.memory_space<vmem>>, vector<8x16xf32>,
    %683 = vector.extract_strided_slice %643 {offsets = [1, 5, 0, 0], sizes = [1, 1, 8, 16], strides = [1, 1, 1, 1]} : vector<2x8x8x16xf32> to vector<1x1x8x16xf32>
    %684 = vector.shape_cast %683 : vector<1x1x8x16xf32> to vector<8x16xf32>
    %c104 = arith.constant 104 : index
    %c0_409 = arith.constant 0 : index
    %685 = vector.load %arg16[%c104, %c0_409] : memref<128x16xf32, #tpu.memory_space<vmem>>, vector<8x16xf32>
    tpu.vector_store %arg16[%c104, %c0_409], %684 {strides = array<i32>} : memref<128x16xf32, #tpu.memory_space<vmem>>, vector<8x16xf32>,
    %686 = vector.extract_strided_slice %643 {offsets = [1, 6, 0, 0], sizes = [1, 1, 8, 16], strides = [1, 1, 1, 1]} : vector<2x8x8x16xf32> to vector<1x1x8x16xf32>
    %687 = vector.shape_cast %686 : vector<1x1x8x16xf32> to vector<8x16xf32>
    %c112 = arith.constant 112 : index
    %c0_410 = arith.constant 0 : index
    %688 = vector.load %arg16[%c112, %c0_410] : memref<128x16xf32, #tpu.memory_space<vmem>>, vector<8x16xf32>
    tpu.vector_store %arg16[%c112, %c0_410], %687 {strides = array<i32>} : memref<128x16xf32, #tpu.memory_space<vmem>>, vector<8x16xf32>,
    %689 = vector.extract_strided_slice %643 {offsets = [1, 7, 0, 0], sizes = [1, 1, 8, 16], strides = [1, 1, 1, 1]} : vector<2x8x8x16xf32> to vector<1x1x8x16xf32>
    %690 = vector.shape_cast %689 : vector<1x1x8x16xf32> to vector<8x16xf32>
    %c120 = arith.constant 120 : index
    %c0_411 = arith.constant 0 : index
    %691 = vector.load %arg16[%c120, %c0_411] : memref<128x16xf32, #tpu.memory_space<vmem>>, vector<8x16xf32>
    tpu.vector_store %arg16[%c120, %c0_411], %690 {strides = array<i32>} : memref<128x16xf32, #tpu.memory_space<vmem>>, vector<8x16xf32>,
    %c0_412 = arith.constant 0 : index
    %c0_413 = arith.constant 0 : index
    %692 = vector.load %arg16[%c0_412, %c0_413] : memref<128x16xf32, #tpu.memory_space<vmem>>, vector<128x16xf32>
    %c0_414 = arith.constant 0 : index
    %c0_415 = arith.constant 0 : index
    %693 = vector.load %arg6[%c0_414, %c0_415] : memref<16x32xf32, #tpu.memory_space<vmem>>, vector<16x32xf32>
    %cst_416 = arith.constant dense<0.000000e+00> : vector<128x32xf32>
    %694 = tpu.matmul %692, %693, %cst_416 {dimension_numbers = #tpu.dot_dimension_numbers<[1], [0], [0], [1], [0, 0, 1, 1], [], []>} : vector<128x16xf32>, vector<16x32xf32>, vector<128x32xf32> -> vector<128x32xf32>
    %c0_417 = arith.constant 0 : index
    %c0_418 = arith.constant 0 : index
    %695 = vector.load %arg7[%c0_417, %c0_418] : memref<1x32xf32, #tpu.memory_space<vmem>>, vector<1x32xf32>
    %696 = vector.broadcast %695 : vector<1x32xf32> to vector<128x32xf32>
    %697 = arith.addf %694, %696 : vector<128x32xf32>
    %cst_419 = arith.constant dense<0.000000e+00> : vector<32xf32>
    %698 = vector.multi_reduction <add>, %697, %cst_419 [0] : vector<128x32xf32> to vector<32xf32>
    %699 = vector.shape_cast %698 : vector<32xf32> to vector<1x32xf32>
    %cst_420 = arith.constant 1.280000e+02 : f32
    %700 = vector.broadcast %cst_420 : f32 to vector<1x32xf32>
    %701 = arith.divf %699, %700 : vector<1x32xf32>
    %702 = vector.broadcast %701 : vector<1x32xf32> to vector<128x32xf32>
    %703 = arith.subf %697, %702 : vector<128x32xf32>
    %704 = arith.mulf %703, %703 : vector<128x32xf32>
    %cst_421 = arith.constant dense<0.000000e+00> : vector<32xf32>
    %705 = vector.multi_reduction <add>, %704, %cst_421 [0] : vector<128x32xf32> to vector<32xf32>
    %706 = vector.shape_cast %705 : vector<32xf32> to vector<1x32xf32>
    %cst_422 = arith.constant 1.280000e+02 : f32
    %707 = vector.broadcast %cst_422 : f32 to vector<1x32xf32>
    %708 = arith.divf %706, %707 : vector<1x32xf32>
    %709 = vector.broadcast %701 : vector<1x32xf32> to vector<128x32xf32>
    %710 = arith.subf %697, %709 : vector<128x32xf32>
    %cst_423 = arith.constant 9.99999974E-6 : f32
    %711 = vector.broadcast %cst_423 : f32 to vector<1x32xf32>
    %712 = arith.addf %708, %711 : vector<1x32xf32>
    %713 = math.rsqrt %712 : vector<1x32xf32>
    %714 = vector.broadcast %713 : vector<1x32xf32> to vector<128x32xf32>
    %715 = arith.mulf %710, %714 : vector<128x32xf32>
    %c0_424 = arith.constant 0 : index
    %c0_425 = arith.constant 0 : index
    %716 = vector.load %arg8[%c0_424, %c0_425] : memref<1x32xf32, #tpu.memory_space<vmem>>, vector<1x32xf32>
    %717 = vector.broadcast %716 : vector<1x32xf32> to vector<128x32xf32>
    %718 = arith.mulf %715, %717 : vector<128x32xf32>
    %c0_426 = arith.constant 0 : index
    %c0_427 = arith.constant 0 : index
    %719 = vector.load %arg9[%c0_426, %c0_427] : memref<1x32xf32, #tpu.memory_space<vmem>>, vector<1x32xf32>
    %720 = vector.broadcast %719 : vector<1x32xf32> to vector<128x32xf32>
    %721 = arith.addf %718, %720 : vector<128x32xf32>
    %cst_428 = arith.constant 5.000000e-01 : f32
    %722 = vector.broadcast %cst_428 : f32 to vector<128x32xf32>
    %723 = arith.mulf %722, %721 : vector<128x32xf32>
    %cst_429 = arith.constant 0.707106769 : f32
    %724 = vector.broadcast %cst_429 : f32 to vector<128x32xf32>
    %725 = arith.mulf %721, %724 : vector<128x32xf32>
    %cst_430 = arith.constant 0.000000e+00 : f32
    %726 = vector.broadcast %cst_430 : f32 to vector<128x32xf32>
    %727 = arith.cmpf oge, %725, %726 : vector<128x32xf32>
    %cst_431 = arith.constant 1.000000e+00 : f32
    %cst_432 = arith.constant -1.000000e+00 : f32
    %728 = vector.broadcast %cst_431 : f32 to vector<128x32xf32>
    %729 = vector.broadcast %cst_432 : f32 to vector<128x32xf32>
    %730 = arith.select %727, %728, %729 : vector<128x32xi1>, vector<128x32xf32>
    %731 = math.absf %725 : vector<128x32xf32>
    %cst_433 = arith.constant 0.327591091 : f32
    %732 = vector.broadcast %cst_433 : f32 to vector<128x32xf32>
    %733 = arith.mulf %732, %731 : vector<128x32xf32>
    %cst_434 = arith.constant 1.000000e+00 : f32
    %734 = vector.broadcast %cst_434 : f32 to vector<128x32xf32>
    %735 = arith.addf %734, %733 : vector<128x32xf32>
    %cst_435 = arith.constant 1.000000e+00 : f32
    %736 = vector.broadcast %cst_435 : f32 to vector<128x32xf32>
    %737 = arith.divf %736, %735 : vector<128x32xf32>
    %cst_436 = arith.constant 1.06140542 : f32
    %738 = vector.broadcast %cst_436 : f32 to vector<128x32xf32>
    %739 = arith.mulf %738, %737 : vector<128x32xf32>
    %cst_437 = arith.constant -1.45315206 : f32
    %740 = vector.broadcast %cst_437 : f32 to vector<128x32xf32>
    %741 = arith.addf %739, %740 : vector<128x32xf32>
    %742 = arith.mulf %741, %737 : vector<128x32xf32>
    %cst_438 = arith.constant 1.42141378 : f32
    %743 = vector.broadcast %cst_438 : f32 to vector<128x32xf32>
    %744 = arith.addf %742, %743 : vector<128x32xf32>
    %745 = arith.mulf %744, %737 : vector<128x32xf32>
    %cst_439 = arith.constant -0.284496725 : f32
    %746 = vector.broadcast %cst_439 : f32 to vector<128x32xf32>
    %747 = arith.addf %745, %746 : vector<128x32xf32>
    %748 = arith.mulf %747, %737 : vector<128x32xf32>
    %cst_440 = arith.constant 0.254829586 : f32
    %749 = vector.broadcast %cst_440 : f32 to vector<128x32xf32>
    %750 = arith.addf %748, %749 : vector<128x32xf32>
    %751 = arith.mulf %750, %737 : vector<128x32xf32>
    %cst_441 = arith.constant 0.000000e+00 : f32
    %752 = vector.broadcast %cst_441 : f32 to vector<128x32xf32>
    %753 = arith.subf %752, %731 : vector<128x32xf32>
    %754 = arith.mulf %753, %731 : vector<128x32xf32>
    %755 = math.exp %754 : vector<128x32xf32>
    %756 = arith.mulf %751, %755 : vector<128x32xf32>
    %cst_442 = arith.constant 1.000000e+00 : f32
    %757 = vector.broadcast %cst_442 : f32 to vector<128x32xf32>
    %758 = arith.subf %757, %756 : vector<128x32xf32>
    %759 = arith.mulf %730, %758 : vector<128x32xf32>
    %cst_443 = arith.constant 1.000000e+00 : f32
    %760 = vector.broadcast %cst_443 : f32 to vector<128x32xf32>
    %761 = arith.addf %760, %759 : vector<128x32xf32>
    %762 = arith.mulf %723, %761 : vector<128x32xf32>
    %c0_444 = arith.constant 0 : index
    %c0_445 = arith.constant 0 : index
    %763 = vector.load %arg10[%c0_444, %c0_445] : memref<32x16xf32, #tpu.memory_space<vmem>>, vector<32x16xf32>
    %cst_446 = arith.constant dense<0.000000e+00> : vector<128x16xf32>
    %764 = tpu.matmul %762, %763, %cst_446 {dimension_numbers = #tpu.dot_dimension_numbers<[1], [0], [0], [1], [0, 0, 1, 1], [], []>} : vector<128x32xf32>, vector<32x16xf32>, vector<128x16xf32> -> vector<128x16xf32>
    %c0_447 = arith.constant 0 : index
    %c0_448 = arith.constant 0 : index
    %765 = vector.load %arg11[%c0_447, %c0_448] : memref<1x16xf32, #tpu.memory_space<vmem>>, vector<1x16xf32>
    %766 = vector.broadcast %765 : vector<1x16xf32> to vector<128x16xf32>
    %767 = arith.addf %764, %766 : vector<128x16xf32>
    %768 = arith.mulf %767, %2 : vector<128x16xf32>
    %c0_449 = arith.constant 0 : index
    %c0_450 = arith.constant 0 : index
    %769 = vector.load %arg12[%c0_449, %c0_450] : memref<16x16xf32, #tpu.memory_space<vmem>>, vector<16x16xf32>
    %cst_451 = arith.constant dense<0.000000e+00> : vector<128x16xf32>
    %770 = tpu.matmul %768, %769, %cst_451 {dimension_numbers = #tpu.dot_dimension_numbers<[1], [0], [0], [1], [0, 0, 1, 1], [], []>} : vector<128x16xf32>, vector<16x16xf32>, vector<128x16xf32> -> vector<128x16xf32>
    %c0_452 = arith.constant 0 : index
    %c0_453 = arith.constant 0 : index
    %771 = vector.load %arg13[%c0_452, %c0_453] : memref<1x16xf32, #tpu.memory_space<vmem>>, vector<1x16xf32>
    %772 = vector.broadcast %771 : vector<1x16xf32> to vector<128x16xf32>
    %773 = arith.addf %770, %772 : vector<128x16xf32>
    %c0_454 = arith.constant 0 : index
    %c0_455 = arith.constant 0 : index
    %774 = vector.load %arg14[%c0_454, %c0_455] : memref<128x16xf32, #tpu.memory_space<vmem>>, vector<128x16xf32>
    tpu.vector_store %arg14[%c0_454, %c0_455], %773 {strides = array<i32>} : memref<128x16xf32, #tpu.memory_space<vmem>>, vector<128x16xf32>,
    return
  }
  func.func @transform_0(%arg0: i32) -> (i32, i32) {
    %c0_i32 = arith.constant 0 : i32
    %c0_i32_0 = arith.constant 0 : i32
    %c0_i32_1 = arith.constant 0 : i32
    return %c0_i32, %c0_i32_0 : i32, i32
  }
  func.func @transform_1(%arg0: i32) -> (i32, i32) {
    %c0_i32 = arith.constant 0 : i32
    %c0_i32_0 = arith.constant 0 : i32
    %c0_i32_1 = arith.constant 0 : i32
    return %c0_i32, %c0_i32_0 : i32, i32
  }
  func.func @transform_2(%arg0: i32) -> (i32, i32) {
    %c0_i32 = arith.constant 0 : i32
    %c0_i32_0 = arith.constant 0 : i32
    %c0_i32_1 = arith.constant 0 : i32
    return %c0_i32, %c0_i32_0 : i32, i32
  }
  func.func @transform_3(%arg0: i32) -> (i32, i32, i32) {
    %c0_i32 = arith.constant 0 : i32
    %c0_i32_0 = arith.constant 0 : i32
    %c0_i32_1 = arith.constant 0 : i32
    %c0_i32_2 = arith.constant 0 : i32
    return %c0_i32, %c0_i32_0, %c0_i32_1 : i32, i32, i32
  }
  func.func @transform_4(%arg0: i32) -> (i32, i32) {
    %c0_i32 = arith.constant 0 : i32
    %c0_i32_0 = arith.constant 0 : i32
    %c0_i32_1 = arith.constant 0 : i32
    return %c0_i32, %c0_i32_0 : i32, i32
  }
  func.func @transform_5(%arg0: i32) -> (i32, i32) {
    %c0_i32 = arith.constant 0 : i32
    %c0_i32_0 = arith.constant 0 : i32
    %c0_i32_1 = arith.constant 0 : i32
    return %c0_i32, %c0_i32_0 : i32, i32
  }
  func.func @transform_6(%arg0: i32) -> (i32, i32) {
    %c0_i32 = arith.constant 0 : i32
    %c0_i32_0 = arith.constant 0 : i32
    %c0_i32_1 = arith.constant 0 : i32
    return %c0_i32, %c0_i32_0 : i32, i32
  }
  func.func @transform_7(%arg0: i32) -> (i32, i32) {
    %c0_i32 = arith.constant 0 : i32
    %c0_i32_0 = arith.constant 0 : i32
    %c0_i32_1 = arith.constant 0 : i32
    return %c0_i32, %c0_i32_0 : i32, i32
  }
  func.func @transform_8(%arg0: i32) -> (i32, i32) {
    %c0_i32 = arith.constant 0 : i32
    %c0_i32_0 = arith.constant 0 : i32
    %c0_i32_1 = arith.constant 0 : i32
    return %c0_i32, %c0_i32_0 : i32, i32
  }
  func.func @transform_9(%arg0: i32) -> (i32, i32) {
    %c0_i32 = arith.constant 0 : i32
    %c0_i32_0 = arith.constant 0 : i32
    %c0_i32_1 = arith.constant 0 : i32
    return %c0_i32, %c0_i32_0 : i32, i32
  }
  func.func @transform_10(%arg0: i32) -> (i32, i32) {
    %c0_i32 = arith.constant 0 : i32
    %c0_i32_0 = arith.constant 0 : i32
    %c0_i32_1 = arith.constant 0 : i32
    return %c0_i32, %c0_i32_0 : i32, i32
  }
  func.func @transform_11(%arg0: i32) -> (i32, i32) {
    %c0_i32 = arith.constant 0 : i32
    %c0_i32_0 = arith.constant 0 : i32
    %c0_i32_1 = arith.constant 0 : i32
    return %c0_i32, %c0_i32_0 : i32, i32
  }
  func.func @transform_12(%arg0: i32) -> (i32, i32) {
    %c0_i32 = arith.constant 0 : i32
    %c0_i32_0 = arith.constant 0 : i32
    %c0_i32_1 = arith.constant 0 : i32
    return %c0_i32, %c0_i32_0 : i32, i32
  }
  func.func @transform_13(%arg0: i32) -> (i32, i32) {
    %c0_i32 = arith.constant 0 : i32
    %c0_i32_0 = arith.constant 0 : i32
    %c0_i32_1 = arith.constant 0 : i32
    return %c0_i32, %c0_i32_0 : i32, i32
  }
}

</mosaic_0001>

<llo_original>
// kernel: tpu_custom_call.1
$region0: #{tpu_custom_call.1}
  #allocation0 [shape = 'u32[]', space=smem, size = 0x4, offset = 0x4, fixed_abs, tag = 'smem constant byte address 0x4 - core index']
  #allocation1 [shape = 'u32[144,128]{1,0:T(1,128)}', space=vmem, size = 0x12000, scoped, tag = 'internal scratch']
  #allocation2 [shape = 'f32[2,16,16,16]{3,2,1,0:T(8,128)}', space=vmem, size = 0x40000, scoped, tag = 'scratch operand']
  #allocation3 [shape = 'f32[128,16]{1,0:T(8,128)}', space=vmem, size = 0x10000, scoped, tag = 'scratch operand']
  %s0 = inlined_call_operand.vmem [shape: f32[128,16], index: 0, kind: input, shape index: {}]
  %s1 = inlined_call_operand.vmem [shape: f32[16,16], index: 1, kind: input, shape index: {}]
  %s2 = inlined_call_operand.vmem [shape: f32[16,16], index: 2, kind: input, shape index: {}]
  %s3 = inlined_call_operand.vmem [shape: f32[9,9,16], index: 3, kind: input, shape index: {}]
  %s4 = inlined_call_operand.hbm [shape: f32[1,16], index: 4, kind: input, shape index: {}]
  %s5 = inlined_call_operand.vmem [shape: f32[16,32], index: 5, kind: input, shape index: {}]
  %s6 = inlined_call_operand.hbm [shape: f32[1,32], index: 6, kind: input, shape index: {}]
  %s7 = inlined_call_operand.hbm [shape: f32[1,32], index: 7, kind: input, shape index: {}]
  %s8 = inlined_call_operand.hbm [shape: f32[1,32], index: 8, kind: input, shape index: {}]
  %s9 = inlined_call_operand.vmem [shape: f32[32,16], index: 9, kind: input, shape index: {}]
  %s10 = inlined_call_operand.vmem [shape: f32[1,16], index: 10, kind: input, shape index: {}]
  %s11 = inlined_call_operand.hbm [shape: f32[16,16], index: 11, kind: input, shape index: {}]
  %s12 = inlined_call_operand.vmem [shape: f32[1,16], index: 12, kind: input, shape index: {}]
  %s13 = inlined_call_operand.vmem [shape: f32[128,16], index: 13, kind: output, shape index: {}]
  %s14 = sld [smem:[#allocation0]]
  $region82: #{tpu_custom_call.1} parent=0
    _
  %s16 = ssub.s32 1, %s14
  %s17 = scalar_select 0, %s16, %s14
  $region1: #{tpu_custom_call.1} parent=0
    #allocation4 [shape = 'u8[512]{0}', space=vmem, size = 0x400, scoped, tag = 'input window, operand 4, single buffered']
    #allocation5 [shape = 's32[1]{0}', space=sflag, size = 0x4, scoped, tag = 'scoped memory for tpu_custom_call.1']
    #allocation6 [shape = 'u8[512]{0}', space=vmem, size = 0x400, scoped, tag = 'input window, operand 6, single buffered']
    #allocation7 [shape = 's32[1]{0}', space=sflag, size = 0x4, scoped, tag = 'scoped memory for tpu_custom_call.1']
    #allocation8 [shape = 'u8[512]{0}', space=vmem, size = 0x400, scoped, tag = 'input window, operand 7, single buffered']
    #allocation9 [shape = 'u8[512]{0}', space=vmem, size = 0x400, scoped, tag = 'input window, operand 8, single buffered']
    #allocation10 [shape = 's32[1]{0}', space=sflag, size = 0x4, scoped, tag = 'scoped memory for tpu_custom_call.1']
    #allocation11 [shape = 'u8[8192]{0}', space=vmem, size = 0x2000, scoped, tag = 'input window, operand 11, single buffered']
    %18 = vsyncpa [#allocation5], 0
    %19 = vsyncpa [#allocation7], 0
    %20 = vsyncpa [#allocation10], 0
    // Predicated region
    $region2: #{tpu_custom_call.1} parent=1 // pred_check
      _
    $region3: #{tpu_custom_call.1} parent=1 // pred_check_branch
      %22 = sbr.rel (0) target = $region5
    $region4: #{tpu_custom_call.1} parent=1 // pred_region
      _
    $region5: #{tpu_custom_call.1} parent=1 // pred_fallthru
      _
    // Predicated region
    $region6: #{tpu_custom_call.1} parent=1 // pred_check
      _
    $region7: #{tpu_custom_call.1} parent=1 // pred_check_branch
      %24 = sbr.rel (0) target = $region9
    $region8: #{tpu_custom_call.1} parent=1 // pred_region
      _
    $region9: #{tpu_custom_call.1} parent=1 // pred_fallthru
      _
    // Predicated region
    $region10: #{tpu_custom_call.1} parent=1 // pred_check
      _
    $region11: #{tpu_custom_call.1} parent=1 // pred_check_branch
      %26 = sbr.rel (0) target = $region13
    $region12: #{tpu_custom_call.1} parent=1 // pred_region
      _
    $region13: #{tpu_custom_call.1} parent=1 // pred_fallthru
      _
    // Predicated region
    $region14: #{tpu_custom_call.1} parent=1 // pred_check
      _
    $region15: #{tpu_custom_call.1} parent=1 // pred_check_branch
      %28 = sbr.rel (0) target = $region17
    $region16: #{tpu_custom_call.1} parent=1 // pred_region
      _
    $region17: #{tpu_custom_call.1} parent=1 // pred_fallthru
      _
    // Predicated region
    $region18: #{tpu_custom_call.1} parent=1 // pred_check
      _
    $region19: #{tpu_custom_call.1} parent=1 // pred_check_branch
      %30 = sbr.rel (0) target = $region21
    $region20: #{tpu_custom_call.1} parent=1 // pred_region
      %s32 = ssub.s32 16, 16
      %33 = vsyncadd [#allocation5], %s32
      %s35 = sshll.u32 [#allocation4], 4
      %s36 = int_to_ptr.vmem [resolvable:$true] %s35
      %38 = dma.hbm_to_vmem [thread:$0]  %s4, 16, %s36, [#allocation5]
    $region21: #{tpu_custom_call.1} parent=1 // pred_fallthru
      _
    // Predicated region
    $region22: #{tpu_custom_call.1} parent=1 // pred_check
      _
    $region23: #{tpu_custom_call.1} parent=1 // pred_check_branch
      %40 = sbr.rel (0) target = $region25
    $region24: #{tpu_custom_call.1} parent=1 // pred_region
      _
    $region25: #{tpu_custom_call.1} parent=1 // pred_fallthru
      _
    // Predicated region
    $region26: #{tpu_custom_call.1} parent=1 // pred_check
      _
    $region27: #{tpu_custom_call.1} parent=1 // pred_check_branch
      %42 = sbr.rel (0) target = $region29
    $region28: #{tpu_custom_call.1} parent=1 // pred_region
      %s44 = ssub.s32 16, 16
      %45 = vsyncadd [#allocation7], %s44
      %s47 = sshll.u32 [#allocation6], 4
      %s48 = int_to_ptr.vmem [resolvable:$true] %s47
      %50 = dma.hbm_to_vmem [thread:$0]  %s6, 16, %s48, [#allocation7]
    $region29: #{tpu_custom_call.1} parent=1 // pred_fallthru
      _
    // Predicated region
    $region30: #{tpu_custom_call.1} parent=1 // pred_check
      _
    $region31: #{tpu_custom_call.1} parent=1 // pred_check_branch
      %52 = sbr.rel (0) target = $region33
    $region32: #{tpu_custom_call.1} parent=1 // pred_region
      %s54 = ssub.s32 16, 16
      %55 = vsyncadd [#allocation7], %s54
      %s57 = sshll.u32 [#allocation8], 4
      %s58 = int_to_ptr.vmem [resolvable:$true] %s57
      %60 = dma.hbm_to_vmem [thread:$0]  %s7, 16, %s58, [#allocation7]
    $region33: #{tpu_custom_call.1} parent=1 // pred_fallthru
      _
    // Predicated region
    $region34: #{tpu_custom_call.1} parent=1 // pred_check
      _
    $region35: #{tpu_custom_call.1} parent=1 // pred_check_branch
      %62 = sbr.rel (0) target = $region37
    $region36: #{tpu_custom_call.1} parent=1 // pred_region
      %s64 = ssub.s32 16, 16
      %65 = vsyncadd [#allocation10], %s64
      %s67 = sshll.u32 [#allocation9], 4
      %s68 = int_to_ptr.vmem [resolvable:$true] %s67
      %70 = dma.hbm_to_vmem [thread:$0]  %s8, 16, %s68, [#allocation10]
    $region37: #{tpu_custom_call.1} parent=1 // pred_fallthru
      _
    // Predicated region
    $region38: #{tpu_custom_call.1} parent=1 // pred_check
      _
    $region39: #{tpu_custom_call.1} parent=1 // pred_check_branch
      %72 = sbr.rel (0) target = $region41
    $region40: #{tpu_custom_call.1} parent=1 // pred_region
      _
    $region41: #{tpu_custom_call.1} parent=1 // pred_fallthru
      _
    // Predicated region
    $region42: #{tpu_custom_call.1} parent=1 // pred_check
      _
    $region43: #{tpu_custom_call.1} parent=1 // pred_check_branch
      %74 = sbr.rel (0) target = $region45
    $region44: #{tpu_custom_call.1} parent=1 // pred_region
      _
    $region45: #{tpu_custom_call.1} parent=1 // pred_fallthru
      _
    // Predicated region
    $region46: #{tpu_custom_call.1} parent=1 // pred_check
      _
    $region47: #{tpu_custom_call.1} parent=1 // pred_check_branch
      %76 = sbr.rel (0) target = $region49
    $region48: #{tpu_custom_call.1} parent=1 // pred_region
      %s78 = ssub.s32 256, 256
      %79 = vsyncadd [#allocation10], %s78
      %s80 = sshll.u32 [#allocation11], 4
      %s81 = int_to_ptr.vmem [resolvable:$true] %s80
      %86 = dma.hbm_to_vmem [thread:$0]  %s11, 256, %s81, [#allocation10], 128, 128, 8
    $region49: #{tpu_custom_call.1} parent=1 // pred_fallthru
      _
    // Predicated region
    $region50: #{tpu_custom_call.1} parent=1 // pred_check
      _
    $region51: #{tpu_custom_call.1} parent=1 // pred_check_branch
      %88 = sbr.rel (0) target = $region53
    $region52: #{tpu_custom_call.1} parent=1 // pred_region
      _
    $region53: #{tpu_custom_call.1} parent=1 // pred_fallthru
      _
    // Predicated region
    $region54: #{tpu_custom_call.1} parent=1 // pred_check
      _
    $region55: #{tpu_custom_call.1} parent=1 // pred_check_branch
      %90 = sbr.rel (0) target = $region57
    $region56: #{tpu_custom_call.1} parent=1 // pred_region
      %91 = dma.done [#allocation5], 16
    $region57: #{tpu_custom_call.1} parent=1 // pred_fallthru
      _
    // Predicated region
    $region58: #{tpu_custom_call.1} parent=1 // pred_check
      _
    $region59: #{tpu_custom_call.1} parent=1 // pred_check_branch
      %93 = sbr.rel (0) target = $region61
    $region60: #{tpu_custom_call.1} parent=1 // pred_region
      %94 = dma.done [#allocation7], 16
    $region61: #{tpu_custom_call.1} parent=1 // pred_fallthru
      _
    // Predicated region
    $region62: #{tpu_custom_call.1} parent=1 // pred_check
      _
    $region63: #{tpu_custom_call.1} parent=1 // pred_check_branch
      %96 = sbr.rel (0) target = $region65
    $region64: #{tpu_custom_call.1} parent=1 // pred_region
      %97 = dma.done [#allocation7], 16
    $region65: #{tpu_custom_call.1} parent=1 // pred_fallthru
      _
    // Predicated region
    $region66: #{tpu_custom_call.1} parent=1 // pred_check
      _
    $region67: #{tpu_custom_call.1} parent=1 // pred_check_branch
      %99 = sbr.rel (0) target = $region69
    $region68: #{tpu_custom_call.1} parent=1 // pred_region
      %100 = dma.done [#allocation10], 16
    $region69: #{tpu_custom_call.1} parent=1 // pred_fallthru
      _
    // Predicated region
    $region70: #{tpu_custom_call.1} parent=1 // pred_check
      _
    $region71: #{tpu_custom_call.1} parent=1 // pred_check_branch
      %102 = sbr.rel (0) target = $region73
    $region72: #{tpu_custom_call.1} parent=1 // pred_region
      %103 = dma.done [#allocation10], 256
    $region73: #{tpu_custom_call.1} parent=1 // pred_fallthru
      _
    %v104 = vld [vmem:[%s0] sm:$0xff]
    %v105 = vld [vmem:[%s0 + $0x8] sm:$0xff]
    %v106 = vld [vmem:[%s0 + $0x10] sm:$0xff]
    %v107 = vld [vmem:[%s0 + $0x18] sm:$0xff]
    %v108 = vld [vmem:[%s0 + $0x20] sm:$0xff]
    %v109 = vld [vmem:[%s0 + $0x28] sm:$0xff]
    %v110 = vld [vmem:[%s0 + $0x30] sm:$0xff]
    %v111 = vld [vmem:[%s0 + $0x38] sm:$0xff]
    %v112 = vld [vmem:[%s0 + $0x40] sm:$0xff]
    %v113 = vld [vmem:[%s0 + $0x48] sm:$0xff]
    %v114 = vld [vmem:[%s0 + $0x50] sm:$0xff]
    %v115 = vld [vmem:[%s0 + $0x58] sm:$0xff]
    %v116 = vld [vmem:[%s0 + $0x60] sm:$0xff]
    %v117 = vld [vmem:[%s0 + $0x68] sm:$0xff]
    %v118 = vld [vmem:[%s0 + $0x70] sm:$0xff]
    %v119 = vld [vmem:[%s0 + $0x78] sm:$0xff]
    %v120 = vld [vmem:[%s1] sm:$0xff]
    %v121 = vld [vmem:[%s1 + $0x8] sm:$0xff]
    %vm122 = vcmask 130048
    %v124 = vsel %vm122, %v104, 0
    %v127 = vsel %vm122, %v105, 0
    %v130 = vsel %vm122, %v106, 0
    %v133 = vsel %vm122, %v107, 0
    %v136 = vsel %vm122, %v108, 0
    %v139 = vsel %vm122, %v109, 0
    %v142 = vsel %vm122, %v110, 0
    %v145 = vsel %vm122, %v111, 0
    %v148 = vsel %vm122, %v112, 0
    %v151 = vsel %vm122, %v113, 0
    %v154 = vsel %vm122, %v114, 0
    %v157 = vsel %vm122, %v115, 0
    %v160 = vsel %vm122, %v116, 0
    %v163 = vsel %vm122, %v117, 0
    %v166 = vsel %vm122, %v118, 0
    %v169 = vsel %vm122, %v119, 0
    %171 = vmatprep.subr.mxu0 0.0
    %172 = vmatpush1.msra.mxu0 0.0
    %173 = vmatprep.subr.mxu0 0.0
    %174 = vmatpush1.msra.mxu0 0.0
    %175 = vmatprep.subr.mxu0 0.0
    %176 = vmatpush1.msra.mxu0 0.0
    %177 = vmatprep.subr.mxu0 0.0
    %178 = vmatpush1.msra.mxu0 0.0
    %179 = vmatprep.subr.mxu0 0.0
    %180 = vmatpush1.msra.mxu0 0.0
    %181 = vmatprep.subr.mxu0 0.0
    %182 = vmatpush1.msra.mxu0 0.0
    %183 = vmatprep.subr.mxu0 0.0
    %184 = vmatpush1.msra.mxu0 0.0
    %185 = vmatprep.subr.mxu0 0.0
    %186 = vmatpush1.msra.mxu0 0.0
    %187 = vmatprep.subr.mxu0 0.0
    %188 = vmatpush1.msra.mxu0 0.0
    %189 = vmatprep.subr.mxu0 0.0
    %190 = vmatpush1.msra.mxu0 0.0
    %191 = vmatprep.subr.mxu0 0.0
    %192 = vmatpush1.msra.mxu0 0.0
    %193 = vmatprep.subr.mxu0 0.0
    %194 = vmatpush1.msra.mxu0 0.0
    %195 = vmatprep.subr.mxu0 0.0
    %196 = vmatpush1.msra.mxu0 0.0
    %197 = vmatprep.subr.mxu0 0.0
    %198 = vmatpush1.msra.mxu0 0.0
    %199 = vmatprep.subr.mxu0 0.0
    %200 = vmatpush1.msra.mxu0 %v121
    %201 = vmatprep.subr.mxu0 0.0
    %202 = vmatpush1.msra.mxu0 %v120
    %203 = vmatprep.subr.mxu0 0.0
    %204 = vmatpush2.msra.mxu0 0.0
    %205 = vmatprep.subr.mxu0 0.0
    %206 = vmatpush2.msra.mxu0 0.0
    %207 = vmatprep.subr.mxu0 0.0
    %208 = vmatpush2.msra.mxu0 0.0
    %209 = vmatprep.subr.mxu0 0.0
    %210 = vmatpush2.msra.mxu0 0.0
    %211 = vmatprep.subr.mxu0 0.0
    %212 = vmatpush2.msra.mxu0 0.0
    %213 = vmatprep.subr.mxu0 0.0
    %214 = vmatpush2.msra.mxu0 0.0
    %215 = vmatprep.subr.mxu0 0.0
    %216 = vmatpush2.msra.mxu0 0.0
    %217 = vmatprep.subr.mxu0 0.0
    %218 = vmatpush2.msra.mxu0 0.0
    %219 = vmatprep.subr.mxu0 0.0
    %220 = vmatpush2.msra.mxu0 0.0
    %221 = vmatprep.subr.mxu0 0.0
    %222 = vmatpush2.msra.mxu0 0.0
    %223 = vmatprep.subr.mxu0 0.0
    %224 = vmatpush2.msra.mxu0 0.0
    %225 = vmatprep.subr.mxu0 0.0
    %226 = vmatpush2.msra.mxu0 0.0
    %227 = vmatprep.subr.mxu0 0.0
    %228 = vmatpush2.msra.mxu0 0.0
    %229 = vmatprep.subr.mxu0 0.0
    %230 = vmatpush2.msra.mxu0 0.0
    %231 = vmatprep.subr.mxu0 0.0
    %232 = vmatpush2.msra.mxu0 0.0
    %233 = vmatprep.subr.mxu0 0.0
    %234 = vmatpush2.msra.mxu0 0.0
    %235 = vmatprep.mubr.f32.mxu0 0.0
    %236 = vmatmul.mubr.f32.gmra.mxu0 %v124
    %v237 = vpop.f32.mrf.mxu0
    %v238 = vadd.f32 0.0, %v237
    %v239 = vpop.f32.mrf.mxu0
    %240 = vmatprep.mubr.f32.mxu0 0.0
    %241 = vmatmul.mubr.f32.gmra.mxu0 %v127
    %v242 = vpop.f32.mrf.mxu0
    %v243 = vadd.f32 0.0, %v242
    %v244 = vpop.f32.mrf.mxu0
    %245 = vmatprep.mubr.f32.mxu0 0.0
    %246 = vmatmul.mubr.f32.gmra.mxu0 %v130
    %v247 = vpop.f32.mrf.mxu0
    %v248 = vadd.f32 0.0, %v247
    %v249 = vpop.f32.mrf.mxu0
    %250 = vmatprep.mubr.f32.mxu0 0.0
    %251 = vmatmul.mubr.f32.gmra.mxu0 %v133
    %v252 = vpop.f32.mrf.mxu0
    %v253 = vadd.f32 0.0, %v252
    %v254 = vpop.f32.mrf.mxu0
    %255 = vmatprep.mubr.f32.mxu0 0.0
    %256 = vmatmul.mubr.f32.gmra.mxu0 %v136
    %v257 = vpop.f32.mrf.mxu0
    %v258 = vadd.f32 0.0, %v257
    %v259 = vpop.f32.mrf.mxu0
    %260 = vmatprep.mubr.f32.mxu0 0.0
    %261 = vmatmul.mubr.f32.gmra.mxu0 %v139
    %v262 = vpop.f32.mrf.mxu0
    %v263 = vadd.f32 0.0, %v262
    %v264 = vpop.f32.mrf.mxu0
    %265 = vmatprep.mubr.f32.mxu0 0.0
    %266 = vmatmul.mubr.f32.gmra.mxu0 %v142
    %v267 = vpop.f32.mrf.mxu0
    %v268 = vadd.f32 0.0, %v267
    %v269 = vpop.f32.mrf.mxu0
    %270 = vmatprep.mubr.f32.mxu0 0.0
    %271 = vmatmul.mubr.f32.gmra.mxu0 %v145
    %v272 = vpop.f32.mrf.mxu0
    %v273 = vadd.f32 0.0, %v272
    %v274 = vpop.f32.mrf.mxu0
    %275 = vmatprep.mubr.f32.mxu0 0.0
    %276 = vmatmul.mubr.f32.gmra.mxu0 %v148
    %v277 = vpop.f32.mrf.mxu0
    %v278 = vadd.f32 0.0, %v277
    %v279 = vpop.f32.mrf.mxu0
    %280 = vmatprep.mubr.f32.mxu0 0.0
    %281 = vmatmul.mubr.f32.gmra.mxu0 %v151
    %v282 = vpop.f32.mrf.mxu0
    %v283 = vadd.f32 0.0, %v282
    %v284 = vpop.f32.mrf.mxu0
    %285 = vmatprep.mubr.f32.mxu0 0.0
    %286 = vmatmul.mubr.f32.gmra.mxu0 %v154
    %v287 = vpop.f32.mrf.mxu0
    %v288 = vadd.f32 0.0, %v287
    %v289 = vpop.f32.mrf.mxu0
    %290 = vmatprep.mubr.f32.mxu0 0.0
    %291 = vmatmul.mubr.f32.gmra.mxu0 %v157
    %v292 = vpop.f32.mrf.mxu0
    %v293 = vadd.f32 0.0, %v292
    %v294 = vpop.f32.mrf.mxu0
    %295 = vmatprep.mubr.f32.mxu0 0.0
    %296 = vmatmul.mubr.f32.gmra.mxu0 %v160
    %v297 = vpop.f32.mrf.mxu0
    %v298 = vadd.f32 0.0, %v297
    %v299 = vpop.f32.mrf.mxu0
    %300 = vmatprep.mubr.f32.mxu0 0.0
    %301 = vmatmul.mubr.f32.gmra.mxu0 %v163
    %v302 = vpop.f32.mrf.mxu0
    %v303 = vadd.f32 0.0, %v302
    %v304 = vpop.f32.mrf.mxu0
    %305 = vmatprep.mubr.f32.mxu0 0.0
    %306 = vmatmul.mubr.f32.gmra.mxu0 %v166
    %v307 = vpop.f32.mrf.mxu0
    %v308 = vadd.f32 0.0, %v307
    %v309 = vpop.f32.mrf.mxu0
    %310 = vmatprep.mubr.f32.mxu0 0.0
    %311 = vmatmul.mubr.f32.gmra.mxu0 %v169
    %v312 = vpop.f32.mrf.mxu0
    %v313 = vadd.f32 0.0, %v312
    %v314 = vpop.f32.mrf.mxu0
    %315 = vdwg.mxu0
    %v316 = vld [vmem:[%s2] sm:$0xff]
    %v317 = vld [vmem:[%s2 + $0x8] sm:$0xff]
    %318 = vmatprep.subr.mxu0 0.0
    %319 = vmatpush1.msra.mxu0 0.0
    %320 = vmatprep.subr.mxu0 0.0
    %321 = vmatpush1.msra.mxu0 0.0
    %322 = vmatprep.subr.mxu0 0.0
    %323 = vmatpush1.msra.mxu0 0.0
    %324 = vmatprep.subr.mxu0 0.0
    %325 = vmatpush1.msra.mxu0 0.0
    %326 = vmatprep.subr.mxu0 0.0
    %327 = vmatpush1.msra.mxu0 0.0
    %328 = vmatprep.subr.mxu0 0.0
    %329 = vmatpush1.msra.mxu0 0.0
    %330 = vmatprep.subr.mxu0 0.0
    %331 = vmatpush1.msra.mxu0 0.0
    %332 = vmatprep.subr.mxu0 0.0
    %333 = vmatpush1.msra.mxu0 0.0
    %334 = vmatprep.subr.mxu0 0.0
    %335 = vmatpush1.msra.mxu0 0.0
    %336 = vmatprep.subr.mxu0 0.0
    %337 = vmatpush1.msra.mxu0 0.0
    %338 = vmatprep.subr.mxu0 0.0
    %339 = vmatpush1.msra.mxu0 0.0
    %340 = vmatprep.subr.mxu0 0.0
    %341 = vmatpush1.msra.mxu0 0.0
    %342 = vmatprep.subr.mxu0 0.0
    %343 = vmatpush1.msra.mxu0 0.0
    %344 = vmatprep.subr.mxu0 0.0
    %345 = vmatpush1.msra.mxu0 0.0
    %346 = vmatprep.subr.mxu0 0.0
    %347 = vmatpush1.msra.mxu0 %v317
    %348 = vmatprep.subr.mxu0 0.0
    %349 = vmatpush1.msra.mxu0 %v316
    %350 = vmatprep.subr.mxu0 0.0
    %351 = vmatpush2.msra.mxu0 0.0
    %352 = vmatprep.subr.mxu0 0.0
    %353 = vmatpush2.msra.mxu0 0.0
    %354 = vmatprep.subr.mxu0 0.0
    %355 = vmatpush2.msra.mxu0 0.0
    %356 = vmatprep.subr.mxu0 0.0
    %357 = vmatpush2.msra.mxu0 0.0
    %358 = vmatprep.subr.mxu0 0.0
    %359 = vmatpush2.msra.mxu0 0.0
    %360 = vmatprep.subr.mxu0 0.0
    %361 = vmatpush2.msra.mxu0 0.0
    %362 = vmatprep.subr.mxu0 0.0
    %363 = vmatpush2.msra.mxu0 0.0
    %364 = vmatprep.subr.mxu0 0.0
    %365 = vmatpush2.msra.mxu0 0.0
    %366 = vmatprep.subr.mxu0 0.0
    %367 = vmatpush2.msra.mxu0 0.0
    %368 = vmatprep.subr.mxu0 0.0
    %369 = vmatpush2.msra.mxu0 0.0
    %370 = vmatprep.subr.mxu0 0.0
    %371 = vmatpush2.msra.mxu0 0.0
    %372 = vmatprep.subr.mxu0 0.0
    %373 = vmatpush2.msra.mxu0 0.0
    %374 = vmatprep.subr.mxu0 0.0
    %375 = vmatpush2.msra.mxu0 0.0
    %376 = vmatprep.subr.mxu0 0.0
    %377 = vmatpush2.msra.mxu0 0.0
    %378 = vmatprep.subr.mxu0 0.0
    %379 = vmatpush2.msra.mxu0 0.0
    %380 = vmatprep.subr.mxu0 0.0
    %381 = vmatpush2.msra.mxu0 0.0
    %382 = vmatprep.mubr.f32.mxu0 0.0
    %383 = vmatmul.mubr.f32.gmra.mxu0 %v124
    %v384 = vpop.f32.mrf.mxu0
    %v385 = vadd.f32 0.0, %v384
    %v386 = vpop.f32.mrf.mxu0
    %387 = vmatprep.mubr.f32.mxu0 0.0
    %388 = vmatmul.mubr.f32.gmra.mxu0 %v127
    %v389 = vpop.f32.mrf.mxu0
    %v390 = vadd.f32 0.0, %v389
    %v391 = vpop.f32.mrf.mxu0
    %392 = vmatprep.mubr.f32.mxu0 0.0
    %393 = vmatmul.mubr.f32.gmra.mxu0 %v130
    %v394 = vpop.f32.mrf.mxu0
    %v395 = vadd.f32 0.0, %v394
    %v396 = vpop.f32.mrf.mxu0
    %397 = vmatprep.mubr.f32.mxu0 0.0
    %398 = vmatmul.mubr.f32.gmra.mxu0 %v133
    %v399 = vpop.f32.mrf.mxu0
    %v400 = vadd.f32 0.0, %v399
    %v401 = vpop.f32.mrf.mxu0
    %402 = vmatprep.mubr.f32.mxu0 0.0
    %403 = vmatmul.mubr.f32.gmra.mxu0 %v136
    %v404 = vpop.f32.mrf.mxu0
    %v405 = vadd.f32 0.0, %v404
    %v406 = vpop.f32.mrf.mxu0
    %407 = vmatprep.mubr.f32.mxu0 0.0
    %408 = vmatmul.mubr.f32.gmra.mxu0 %v139
    %v409 = vpop.f32.mrf.mxu0
    %v410 = vadd.f32 0.0, %v409
    %v411 = vpop.f32.mrf.mxu0
    %412 = vmatprep.mubr.f32.mxu0 0.0
    %413 = vmatmul.mubr.f32.gmra.mxu0 %v142
    %v414 = vpop.f32.mrf.mxu0
    %v415 = vadd.f32 0.0, %v414
    %v416 = vpop.f32.mrf.mxu0
    %417 = vmatprep.mubr.f32.mxu0 0.0
    %418 = vmatmul.mubr.f32.gmra.mxu0 %v145
    %v419 = vpop.f32.mrf.mxu0
    %v420 = vadd.f32 0.0, %v419
    %v421 = vpop.f32.mrf.mxu0
    %422 = vmatprep.mubr.f32.mxu0 0.0
    %423 = vmatmul.mubr.f32.gmra.mxu0 %v148
    %v424 = vpop.f32.mrf.mxu0
    %v425 = vadd.f32 0.0, %v424
    %v426 = vpop.f32.mrf.mxu0
    %427 = vmatprep.mubr.f32.mxu0 0.0
    %428 = vmatmul.mubr.f32.gmra.mxu0 %v151
    %v429 = vpop.f32.mrf.mxu0
    %v430 = vadd.f32 0.0, %v429
    %v431 = vpop.f32.mrf.mxu0
    %432 = vmatprep.mubr.f32.mxu0 0.0
    %433 = vmatmul.mubr.f32.gmra.mxu0 %v154
    %v434 = vpop.f32.mrf.mxu0
    %v435 = vadd.f32 0.0, %v434
    %v436 = vpop.f32.mrf.mxu0
    %437 = vmatprep.mubr.f32.mxu0 0.0
    %438 = vmatmul.mubr.f32.gmra.mxu0 %v157
    %v439 = vpop.f32.mrf.mxu0
    %v440 = vadd.f32 0.0, %v439
    %v441 = vpop.f32.mrf.mxu0
    %442 = vmatprep.mubr.f32.mxu0 0.0
    %443 = vmatmul.mubr.f32.gmra.mxu0 %v160
    %v444 = vpop.f32.mrf.mxu0
    %v445 = vadd.f32 0.0, %v444
    %v446 = vpop.f32.mrf.mxu0
    %447 = vmatprep.mubr.f32.mxu0 0.0
    %448 = vmatmul.mubr.f32.gmra.mxu0 %v163
    %v449 = vpop.f32.mrf.mxu0
    %v450 = vadd.f32 0.0, %v449
    %v451 = vpop.f32.mrf.mxu0
    %452 = vmatprep.mubr.f32.mxu0 0.0
    %453 = vmatmul.mubr.f32.gmra.mxu0 %v166
    %v454 = vpop.f32.mrf.mxu0
    %v455 = vadd.f32 0.0, %v454
    %v456 = vpop.f32.mrf.mxu0
    %457 = vmatprep.mubr.f32.mxu0 0.0
    %458 = vmatmul.mubr.f32.gmra.mxu0 %v169
    %v459 = vpop.f32.mrf.mxu0
    %v460 = vadd.f32 0.0, %v459
    %v461 = vpop.f32.mrf.mxu0
    %462 = vdwg.mxu0
    %463 = vst.msk [vmem:[#allocation2] sm:$0xff] %vm122, 0.0
    %464 = vst.msk [vmem:[#allocation2 + $0x8] sm:$0xff] %vm122, 0.0
    %465 = vst.msk [vmem:[#allocation2 + $0x10] sm:$0xff] %vm122, 0.0
    %466 = vst.msk [vmem:[#allocation2 + $0x18] sm:$0xff] %vm122, 0.0
    %467 = vst.msk [vmem:[#allocation2 + $0x20] sm:$0xff] %vm122, 0.0
    %468 = vst.msk [vmem:[#allocation2 + $0x28] sm:$0xff] %vm122, 0.0
    %469 = vst.msk [vmem:[#allocation2 + $0x30] sm:$0xff] %vm122, 0.0
    %470 = vst.msk [vmem:[#allocation2 + $0x38] sm:$0xff] %vm122, 0.0
    %471 = vst.msk [vmem:[#allocation2 + $0x40] sm:$0xff] %vm122, 0.0
    %472 = vst.msk [vmem:[#allocation2 + $0x48] sm:$0xff] %vm122, 0.0
    %473 = vst.msk [vmem:[#allocation2 + $0x50] sm:$0xff] %vm122, 0.0
    %474 = vst.msk [vmem:[#allocation2 + $0x58] sm:$0xff] %vm122, 0.0
    %475 = vst.msk [vmem:[#allocation2 + $0x60] sm:$0xff] %vm122, 0.0
    %476 = vst.msk [vmem:[#allocation2 + $0x68] sm:$0xff] %vm122, 0.0
    %477 = vst.msk [vmem:[#allocation2 + $0x70] sm:$0xff] %vm122, 0.0
    %478 = vst.msk [vmem:[#allocation2 + $0x78] sm:$0xff] %vm122, 0.0
    %479 = vst.msk [vmem:[#allocation2 + $0x80] sm:$0xff] %vm122, 0.0
    %480 = vst.msk [vmem:[#allocation2 + $0x88] sm:$0xff] %vm122, 0.0
    %481 = vst.msk [vmem:[#allocation2 + $0x90] sm:$0xff] %vm122, 0.0
    %482 = vst.msk [vmem:[#allocation2 + $0x98] sm:$0xff] %vm122, 0.0
    %483 = vst.msk [vmem:[#allocation2 + $0xa0] sm:$0xff] %vm122, 0.0
    %484 = vst.msk [vmem:[#allocation2 + $0xa8] sm:$0xff] %vm122, 0.0
    %485 = vst.msk [vmem:[#allocation2 + $0xb0] sm:$0xff] %vm122, 0.0
    %486 = vst.msk [vmem:[#allocation2 + $0xb8] sm:$0xff] %vm122, 0.0
    %487 = vst.msk [vmem:[#allocation2 + $0xc0] sm:$0xff] %vm122, 0.0
    %488 = vst.msk [vmem:[#allocation2 + $0xc8] sm:$0xff] %vm122, 0.0
    %489 = vst.msk [vmem:[#allocation2 + $0xd0] sm:$0xff] %vm122, 0.0
    %490 = vst.msk [vmem:[#allocation2 + $0xd8] sm:$0xff] %vm122, 0.0
    %491 = vst.msk [vmem:[#allocation2 + $0xe0] sm:$0xff] %vm122, 0.0
    %492 = vst.msk [vmem:[#allocation2 + $0xe8] sm:$0xff] %vm122, 0.0
    %493 = vst.msk [vmem:[#allocation2 + $0xf0] sm:$0xff] %vm122, 0.0
    %494 = vst.msk [vmem:[#allocation2 + $0xf8] sm:$0xff] %vm122, 0.0
    %495 = vst.msk [vmem:[#allocation2 + $0x100] sm:$0xff] %vm122, 0.0
    %496 = vst.msk [vmem:[#allocation2 + $0x108] sm:$0xff] %vm122, 0.0
    %497 = vst.msk [vmem:[#allocation2 + $0x110] sm:$0xff] %vm122, 0.0
    %498 = vst.msk [vmem:[#allocation2 + $0x118] sm:$0xff] %vm122, 0.0
    %499 = vst.msk [vmem:[#allocation2 + $0x120] sm:$0xff] %vm122, 0.0
    %500 = vst.msk [vmem:[#allocation2 + $0x128] sm:$0xff] %vm122, 0.0
    %501 = vst.msk [vmem:[#allocation2 + $0x130] sm:$0xff] %vm122, 0.0
    %502 = vst.msk [vmem:[#allocation2 + $0x138] sm:$0xff] %vm122, 0.0
    %503 = vst.msk [vmem:[#allocation2 + $0x140] sm:$0xff] %vm122, 0.0
    %504 = vst.msk [vmem:[#allocation2 + $0x148] sm:$0xff] %vm122, 0.0
    %505 = vst.msk [vmem:[#allocation2 + $0x150] sm:$0xff] %vm122, 0.0
    %506 = vst.msk [vmem:[#allocation2 + $0x158] sm:$0xff] %vm122, 0.0
    %507 = vst.msk [vmem:[#allocation2 + $0x160] sm:$0xff] %vm122, 0.0
    %508 = vst.msk [vmem:[#allocation2 + $0x168] sm:$0xff] %vm122, 0.0
    %509 = vst.msk [vmem:[#allocation2 + $0x170] sm:$0xff] %vm122, 0.0
    %510 = vst.msk [vmem:[#allocation2 + $0x178] sm:$0xff] %vm122, 0.0
    %511 = vst.msk [vmem:[#allocation2 + $0x180] sm:$0xff] %vm122, 0.0
    %512 = vst.msk [vmem:[#allocation2 + $0x188] sm:$0xff] %vm122, 0.0
    %513 = vst.msk [vmem:[#allocation2 + $0x190] sm:$0xff] %vm122, 0.0
    %514 = vst.msk [vmem:[#allocation2 + $0x198] sm:$0xff] %vm122, 0.0
    %515 = vst.msk [vmem:[#allocation2 + $0x1a0] sm:$0xff] %vm122, 0.0
    %516 = vst.msk [vmem:[#allocation2 + $0x1a8] sm:$0xff] %vm122, 0.0
    %517 = vst.msk [vmem:[#allocation2 + $0x1b0] sm:$0xff] %vm122, 0.0
    %518 = vst.msk [vmem:[#allocation2 + $0x1b8] sm:$0xff] %vm122, 0.0
    %519 = vst.msk [vmem:[#allocation2 + $0x1c0] sm:$0xff] %vm122, 0.0
    %520 = vst.msk [vmem:[#allocation2 + $0x1c8] sm:$0xff] %vm122, 0.0
    %521 = vst.msk [vmem:[#allocation2 + $0x1d0] sm:$0xff] %vm122, 0.0
    %522 = vst.msk [vmem:[#allocation2 + $0x1d8] sm:$0xff] %vm122, 0.0
    %523 = vst.msk [vmem:[#allocation2 + $0x1e0] sm:$0xff] %vm122, 0.0
    %524 = vst.msk [vmem:[#allocation2 + $0x1e8] sm:$0xff] %vm122, 0.0
    %525 = vst.msk [vmem:[#allocation2 + $0x1f0] sm:$0xff] %vm122, 0.0
    %526 = vst.msk [vmem:[#allocation2 + $0x1f8] sm:$0xff] %vm122, 0.0
    %s527 = scalar_lea.vmem [#allocation2], 64
    %528 = vst.msk [vmem:[%s527 + $0x4] sm:$0xff] %vm122, %v385
    %s529 = scalar_lea.vmem [#allocation2], 80
    %530 = vst.msk [vmem:[%s529 + $0x4] sm:$0xff] %vm122, %v390
    %s531 = scalar_lea.vmem [#allocation2], 96
    %532 = vst.msk [vmem:[%s531 + $0x4] sm:$0xff] %vm122, %v395
    %s533 = scalar_lea.vmem [#allocation2], 112
    %534 = vst.msk [vmem:[%s533 + $0x4] sm:$0xff] %vm122, %v400
    %s535 = scalar_lea.vmem [#allocation2], 128
    %536 = vst.msk [vmem:[%s535 + $0x4] sm:$0xff] %vm122, %v405
    %s537 = scalar_lea.vmem [#allocation2], 144
    %538 = vst.msk [vmem:[%s537 + $0x4] sm:$0xff] %vm122, %v410
    %s539 = scalar_lea.vmem [#allocation2], 160
    %540 = vst.msk [vmem:[%s539 + $0x4] sm:$0xff] %vm122, %v415
    %s541 = scalar_lea.vmem [#allocation2], 176
    %542 = vst.msk [vmem:[%s541 + $0x4] sm:$0xff] %vm122, %v420
    %s543 = scalar_lea.vmem [#allocation2], 320
    %544 = vst.msk [vmem:[%s543 + $0x4] sm:$0xff] %vm122, %v425
    %s545 = scalar_lea.vmem [#allocation2], 336
    %546 = vst.msk [vmem:[%s545 + $0x4] sm:$0xff] %vm122, %v430
    %s547 = scalar_lea.vmem [#allocation2], 352
    %548 = vst.msk [vmem:[%s547 + $0x4] sm:$0xff] %vm122, %v435
    %s549 = scalar_lea.vmem [#allocation2], 368
    %550 = vst.msk [vmem:[%s549 + $0x4] sm:$0xff] %vm122, %v440
    %s551 = scalar_lea.vmem [#allocation2], 384
    %552 = vst.msk [vmem:[%s551 + $0x4] sm:$0xff] %vm122, %v445
    %s553 = scalar_lea.vmem [#allocation2], 400
    %554 = vst.msk [vmem:[%s553 + $0x4] sm:$0xff] %vm122, %v450
    %s555 = scalar_lea.vmem [#allocation2], 416
    %556 = vst.msk [vmem:[%s555 + $0x4] sm:$0xff] %vm122, %v455
    %s557 = scalar_lea.vmem [#allocation2], 432
    %558 = vst.msk [vmem:[%s557 + $0x4] sm:$0xff] %vm122, %v460
    %v559 = vld [vmem:[%s3] sm:$0xff]
    %v560 = vld [vmem:[%s3 + $0x8] sm:$0x1]
    %v561 = vld [vmem:[%s3 + $0x10] sm:$0xff]
    %v562 = vld [vmem:[%s3 + $0x18] sm:$0x1]
    %v563 = vld [vmem:[%s3 + $0x20] sm:$0xff]
    %v564 = vld [vmem:[%s3 + $0x28] sm:$0x1]
    %v565 = vld [vmem:[%s3 + $0x30] sm:$0xff]
    %v566 = vld [vmem:[%s3 + $0x38] sm:$0x1]
    %v567 = vld [vmem:[%s3 + $0x40] sm:$0xff]
    %v568 = vld [vmem:[%s3 + $0x48] sm:$0x1]
    %v569 = vld [vmem:[%s3 + $0x50] sm:$0xff]
    %v570 = vld [vmem:[%s3 + $0x58] sm:$0x1]
    %v571 = vld [vmem:[%s3 + $0x60] sm:$0xff]
    %v572 = vld [vmem:[%s3 + $0x68] sm:$0x1]
    %v573 = vld [vmem:[%s3 + $0x70] sm:$0xff]
    %v574 = vld [vmem:[%s3 + $0x78] sm:$0x1]
    %v575 = vld [vmem:[%s3 + $0x80] sm:$0xff]
    %v576 = vld [vmem:[%s3 + $0x88] sm:$0x1]
    %v577 = vld [vmem:[#allocation2] sm:$0xff]
    %v578 = vld [vmem:[#allocation2 + $0x10] sm:$0xff]
    %v579 = vld [vmem:[#allocation2 + $0x20] sm:$0xff]
    %v580 = vld [vmem:[#allocation2 + $0x30] sm:$0xff]
    %v581 = vld [vmem:[#allocation2 + $0x40] sm:$0xff]
    %v582 = vld [vmem:[#allocation2 + $0x50] sm:$0xff]
    %v583 = vld [vmem:[#allocation2 + $0x60] sm:$0xff]
    %v584 = vld [vmem:[#allocation2 + $0x70] sm:$0xff]
    %v585 = vld [vmem:[#allocation2 + $0x100] sm:$0xff]
    %v586 = vld [vmem:[#allocation2 + $0x110] sm:$0xff]
    %v587 = vld [vmem:[#allocation2 + $0x120] sm:$0xff]
    %v588 = vld [vmem:[#allocation2 + $0x130] sm:$0xff]
    %v589 = vld [vmem:[#allocation2 + $0x140] sm:$0xff]
    %v590 = vld [vmem:[#allocation2 + $0x150] sm:$0xff]
    %v591 = vld [vmem:[#allocation2 + $0x160] sm:$0xff]
    %v592 = vld [vmem:[#allocation2 + $0x170] sm:$0xff]
    %v593 = vlaneseq
    %v594 = vshrl.u32 %v593, 7
    %v595 = vsub.s32 0, %v594
    %v596 = vrot.slane %v559, %v595
    %v597 = vmul.f32 %v577, %v596
    %v598 = vmul.f32 %v578, %v596
    %v599 = vmul.f32 %v579, %v596
    %v600 = vmul.f32 %v580, %v596
    %v601 = vmul.f32 %v581, %v596
    %v602 = vmul.f32 %v582, %v596
    %v603 = vmul.f32 %v583, %v596
    %v604 = vmul.f32 %v584, %v596
    %v605 = vmul.f32 %v585, %v596
    %v606 = vmul.f32 %v586, %v596
    %v607 = vmul.f32 %v587, %v596
    %v608 = vmul.f32 %v588, %v596
    %v609 = vmul.f32 %v589, %v596
    %v610 = vmul.f32 %v590, %v596
    %v611 = vmul.f32 %v591, %v596
    %v612 = vmul.f32 %v592, %v596
    %v613 = vadd.f32 %v597, 0.0
    %v614 = vadd.f32 %v598, 0.0
    %v615 = vadd.f32 %v599, 0.0
    %v616 = vadd.f32 %v600, 0.0
    %v617 = vadd.f32 %v601, 0.0
    %v618 = vadd.f32 %v602, 0.0
    %v619 = vadd.f32 %v603, 0.0
    %v620 = vadd.f32 %v604, 0.0
    %v621 = vadd.f32 %v605, 0.0
    %v622 = vadd.f32 %v606, 0.0
    %v623 = vadd.f32 %v607, 0.0
    %v624 = vadd.f32 %v608, 0.0
    %v625 = vadd.f32 %v609, 0.0
    %v626 = vadd.f32 %v610, 0.0
    %v627 = vadd.f32 %v611, 0.0
    %v628 = vadd.f32 %v612, 0.0
    %v629 = vld [vmem:[#allocation2 + $0x1] sm:$0xff]
    %v630 = vld [vmem:[#allocation2 + $0x11] sm:$0xff]
    %v631 = vld [vmem:[#allocation2 + $0x21] sm:$0xff]
    %v632 = vld [vmem:[#allocation2 + $0x31] sm:$0xff]
    %v633 = vld [vmem:[#allocation2 + $0x41] sm:$0xff]
    %v634 = vld [vmem:[#allocation2 + $0x51] sm:$0xff]
    %v635 = vld [vmem:[#allocation2 + $0x61] sm:$0xff]
    %v636 = vld [vmem:[#allocation2 + $0x71] sm:$0xff]
    %v637 = vld [vmem:[#allocation2 + $0x101] sm:$0xff]
    %v638 = vld [vmem:[#allocation2 + $0x111] sm:$0xff]
    %v639 = vld [vmem:[#allocation2 + $0x121] sm:$0xff]
    %v640 = vld [vmem:[#allocation2 + $0x131] sm:$0xff]
    %v641 = vld [vmem:[#allocation2 + $0x141] sm:$0xff]
    %v642 = vld [vmem:[#allocation2 + $0x151] sm:$0xff]
    %v643 = vld [vmem:[#allocation2 + $0x161] sm:$0xff]
    %v644 = vld [vmem:[#allocation2 + $0x171] sm:$0xff]
    %v645 = vlaneseq
    %v646 = vshrl.u32 %v645, 7
    %v647 = vsub.s32 1, %v646
    %v648 = vrot.slane %v559, %v647
    %v649 = vmul.f32 %v629, %v648
    %v650 = vmul.f32 %v630, %v648
    %v651 = vmul.f32 %v631, %v648
    %v652 = vmul.f32 %v632, %v648
    %v653 = vmul.f32 %v633, %v648
    %v654 = vmul.f32 %v634, %v648
    %v655 = vmul.f32 %v635, %v648
    %v656 = vmul.f32 %v636, %v648
    %v657 = vmul.f32 %v637, %v648
    %v658 = vmul.f32 %v638, %v648
    %v659 = vmul.f32 %v639, %v648
    %v660 = vmul.f32 %v640, %v648
    %v661 = vmul.f32 %v641, %v648
    %v662 = vmul.f32 %v642, %v648
    %v663 = vmul.f32 %v643, %v648
    %v664 = vmul.f32 %v644, %v648
    %v665 = vadd.f32 %v613, %v649
    %v666 = vadd.f32 %v614, %v650
    %v667 = vadd.f32 %v615, %v651
    %v668 = vadd.f32 %v616, %v652
    %v669 = vadd.f32 %v617, %v653
    %v670 = vadd.f32 %v618, %v654
    %v671 = vadd.f32 %v619, %v655
    %v672 = vadd.f32 %v620, %v656
    %v673 = vadd.f32 %v621, %v657
    %v674 = vadd.f32 %v622, %v658
    %v675 = vadd.f32 %v623, %v659
    %v676 = vadd.f32 %v624, %v660
    %v677 = vadd.f32 %v625, %v661
    %v678 = vadd.f32 %v626, %v662
    %v679 = vadd.f32 %v627, %v663
    %v680 = vadd.f32 %v628, %v664
    %v681 = vld [vmem:[#allocation2 + $0x2] sm:$0xff]
    %v682 = vld [vmem:[#allocation2 + $0x12] sm:$0xff]
    %v683 = vld [vmem:[#allocation2 + $0x22] sm:$0xff]
    %v684 = vld [vmem:[#allocation2 + $0x32] sm:$0xff]
    %v685 = vld [vmem:[#allocation2 + $0x42] sm:$0xff]
    %v686 = vld [vmem:[#allocation2 + $0x52] sm:$0xff]
    %v687 = vld [vmem:[#allocation2 + $0x62] sm:$0xff]
    %v688 = vld [vmem:[#allocation2 + $0x72] sm:$0xff]
    %v689 = vld [vmem:[#allocation2 + $0x102] sm:$0xff]
    %v690 = vld [vmem:[#allocation2 + $0x112] sm:$0xff]
    %v691 = vld [vmem:[#allocation2 + $0x122] sm:$0xff]
    %v692 = vld [vmem:[#allocation2 + $0x132] sm:$0xff]
    %v693 = vld [vmem:[#allocation2 + $0x142] sm:$0xff]
    %v694 = vld [vmem:[#allocation2 + $0x152] sm:$0xff]
    %v695 = vld [vmem:[#allocation2 + $0x162] sm:$0xff]
    %v696 = vld [vmem:[#allocation2 + $0x172] sm:$0xff]
    %v697 = vlaneseq
    %v698 = vshrl.u32 %v697, 7
    %v699 = vsub.s32 2, %v698
    %v700 = vrot.slane %v559, %v699
    %v701 = vmul.f32 %v681, %v700
    %v702 = vmul.f32 %v682, %v700
    %v703 = vmul.f32 %v683, %v700
    %v704 = vmul.f32 %v684, %v700
    %v705 = vmul.f32 %v685, %v700
    %v706 = vmul.f32 %v686, %v700
    %v707 = vmul.f32 %v687, %v700
    %v708 = vmul.f32 %v688, %v700
    %v709 = vmul.f32 %v689, %v700
    %v710 = vmul.f32 %v690, %v700
    %v711 = vmul.f32 %v691, %v700
    %v712 = vmul.f32 %v692, %v700
    %v713 = vmul.f32 %v693, %v700
    %v714 = vmul.f32 %v694, %v700
    %v715 = vmul.f32 %v695, %v700
    %v716 = vmul.f32 %v696, %v700
    %v717 = vadd.f32 %v665, %v701
    %v718 = vadd.f32 %v666, %v702
    %v719 = vadd.f32 %v667, %v703
    %v720 = vadd.f32 %v668, %v704
    %v721 = vadd.f32 %v669, %v705
    %v722 = vadd.f32 %v670, %v706
    %v723 = vadd.f32 %v671, %v707
    %v724 = vadd.f32 %v672, %v708
    %v725 = vadd.f32 %v673, %v709
    %v726 = vadd.f32 %v674, %v710
    %v727 = vadd.f32 %v675, %v711
    %v728 = vadd.f32 %v676, %v712
    %v729 = vadd.f32 %v677, %v713
    %v730 = vadd.f32 %v678, %v714
    %v731 = vadd.f32 %v679, %v715
    %v732 = vadd.f32 %v680, %v716
    %v733 = vld [vmem:[#allocation2 + $0x3] sm:$0xff]
    %v734 = vld [vmem:[#allocation2 + $0x13] sm:$0xff]
    %v735 = vld [vmem:[#allocation2 + $0x23] sm:$0xff]
    %v736 = vld [vmem:[#allocation2 + $0x33] sm:$0xff]
    %v737 = vld [vmem:[#allocation2 + $0x43] sm:$0xff]
    %v738 = vld [vmem:[#allocation2 + $0x53] sm:$0xff]
    %v739 = vld [vmem:[#allocation2 + $0x63] sm:$0xff]
    %v740 = vld [vmem:[#allocation2 + $0x73] sm:$0xff]
    %v741 = vld [vmem:[#allocation2 + $0x103] sm:$0xff]
    %v742 = vld [vmem:[#allocation2 + $0x113] sm:$0xff]
    %v743 = vld [vmem:[#allocation2 + $0x123] sm:$0xff]
    %v744 = vld [vmem:[#allocation2 + $0x133] sm:$0xff]
    %v745 = vld [vmem:[#allocation2 + $0x143] sm:$0xff]
    %v746 = vld [vmem:[#allocation2 + $0x153] sm:$0xff]
    %v747 = vld [vmem:[#allocation2 + $0x163] sm:$0xff]
    %v748 = vld [vmem:[#allocation2 + $0x173] sm:$0xff]
    %v749 = vlaneseq
    %v750 = vshrl.u32 %v749, 7
    %v751 = vsub.s32 3, %v750
    %v752 = vrot.slane %v559, %v751
    %v753 = vmul.f32 %v733, %v752
    %v754 = vmul.f32 %v734, %v752
    %v755 = vmul.f32 %v735, %v752
    %v756 = vmul.f32 %v736, %v752
    %v757 = vmul.f32 %v737, %v752
    %v758 = vmul.f32 %v738, %v752
    %v759 = vmul.f32 %v739, %v752
    %v760 = vmul.f32 %v740, %v752
    %v761 = vmul.f32 %v741, %v752
    %v762 = vmul.f32 %v742, %v752
    %v763 = vmul.f32 %v743, %v752
    %v764 = vmul.f32 %v744, %v752
    %v765 = vmul.f32 %v745, %v752
    %v766 = vmul.f32 %v746, %v752
    %v767 = vmul.f32 %v747, %v752
    %v768 = vmul.f32 %v748, %v752
    %v769 = vadd.f32 %v717, %v753
    %v770 = vadd.f32 %v718, %v754
    %v771 = vadd.f32 %v719, %v755
    %v772 = vadd.f32 %v720, %v756
    %v773 = vadd.f32 %v721, %v757
    %v774 = vadd.f32 %v722, %v758
    %v775 = vadd.f32 %v723, %v759
    %v776 = vadd.f32 %v724, %v760
    %v777 = vadd.f32 %v725, %v761
    %v778 = vadd.f32 %v726, %v762
    %v779 = vadd.f32 %v727, %v763
    %v780 = vadd.f32 %v728, %v764
    %v781 = vadd.f32 %v729, %v765
    %v782 = vadd.f32 %v730, %v766
    %v783 = vadd.f32 %v731, %v767
    %v784 = vadd.f32 %v732, %v768
    %v785 = vld [vmem:[#allocation2 + $0x4] sm:$0xff]
    %v786 = vld [vmem:[#allocation2 + $0x14] sm:$0xff]
    %v787 = vld [vmem:[#allocation2 + $0x24] sm:$0xff]
    %v788 = vld [vmem:[#allocation2 + $0x34] sm:$0xff]
    %v789 = vld [vmem:[#allocation2 + $0x44] sm:$0xff]
    %v790 = vld [vmem:[#allocation2 + $0x54] sm:$0xff]
    %v791 = vld [vmem:[#allocation2 + $0x64] sm:$0xff]
    %v792 = vld [vmem:[#allocation2 + $0x74] sm:$0xff]
    %v793 = vld [vmem:[#allocation2 + $0x104] sm:$0xff]
    %v794 = vld [vmem:[#allocation2 + $0x114] sm:$0xff]
    %v795 = vld [vmem:[#allocation2 + $0x124] sm:$0xff]
    %v796 = vld [vmem:[#allocation2 + $0x134] sm:$0xff]
    %v797 = vld [vmem:[#allocation2 + $0x144] sm:$0xff]
    %v798 = vld [vmem:[#allocation2 + $0x154] sm:$0xff]
    %v799 = vld [vmem:[#allocation2 + $0x164] sm:$0xff]
    %v800 = vld [vmem:[#allocation2 + $0x174] sm:$0xff]
    %v801 = vlaneseq
    %v802 = vshrl.u32 %v801, 7
    %v803 = vsub.s32 4, %v802
    %v804 = vrot.slane %v559, %v803
    %v805 = vmul.f32 %v785, %v804
    %v806 = vmul.f32 %v786, %v804
    %v807 = vmul.f32 %v787, %v804
    %v808 = vmul.f32 %v788, %v804
    %v809 = vmul.f32 %v789, %v804
    %v810 = vmul.f32 %v790, %v804
    %v811 = vmul.f32 %v791, %v804
    %v812 = vmul.f32 %v792, %v804
    %v813 = vmul.f32 %v793, %v804
    %v814 = vmul.f32 %v794, %v804
    %v815 = vmul.f32 %v795, %v804
    %v816 = vmul.f32 %v796, %v804
    %v817 = vmul.f32 %v797, %v804
    %v818 = vmul.f32 %v798, %v804
    %v819 = vmul.f32 %v799, %v804
    %v820 = vmul.f32 %v800, %v804
    %v821 = vadd.f32 %v769, %v805
    %v822 = vadd.f32 %v770, %v806
    %v823 = vadd.f32 %v771, %v807
    %v824 = vadd.f32 %v772, %v808
    %v825 = vadd.f32 %v773, %v809
    %v826 = vadd.f32 %v774, %v810
    %v827 = vadd.f32 %v775, %v811
    %v828 = vadd.f32 %v776, %v812
    %v829 = vadd.f32 %v777, %v813
    %v830 = vadd.f32 %v778, %v814
    %v831 = vadd.f32 %v779, %v815
    %v832 = vadd.f32 %v780, %v816
    %v833 = vadd.f32 %v781, %v817
    %v834 = vadd.f32 %v782, %v818
    %v835 = vadd.f32 %v783, %v819
    %v836 = vadd.f32 %v784, %v820
    %v837 = vld [vmem:[#allocation2 + $0x5] sm:$0xff]
    %v838 = vld [vmem:[#allocation2 + $0x15] sm:$0xff]
    %v839 = vld [vmem:[#allocation2 + $0x25] sm:$0xff]
    %v840 = vld [vmem:[#allocation2 + $0x35] sm:$0xff]
    %v841 = vld [vmem:[#allocation2 + $0x45] sm:$0xff]
    %v842 = vld [vmem:[#allocation2 + $0x55] sm:$0xff]
    %v843 = vld [vmem:[#allocation2 + $0x65] sm:$0xff]
    %v844 = vld [vmem:[#allocation2 + $0x75] sm:$0xff]
    %v845 = vld [vmem:[#allocation2 + $0x105] sm:$0xff]
    %v846 = vld [vmem:[#allocation2 + $0x115] sm:$0xff]
    %v847 = vld [vmem:[#allocation2 + $0x125] sm:$0xff]
    %v848 = vld [vmem:[#allocation2 + $0x135] sm:$0xff]
    %v849 = vld [vmem:[#allocation2 + $0x145] sm:$0xff]
    %v850 = vld [vmem:[#allocation2 + $0x155] sm:$0xff]
    %v851 = vld [vmem:[#allocation2 + $0x165] sm:$0xff]
    %v852 = vld [vmem:[#allocation2 + $0x175] sm:$0xff]
    %v853 = vlaneseq
    %v854 = vshrl.u32 %v853, 7
    %v855 = vsub.s32 5, %v854
    %v856 = vrot.slane %v559, %v855
    %v857 = vmul.f32 %v837, %v856
    %v858 = vmul.f32 %v838, %v856
    %v859 = vmul.f32 %v839, %v856
    %v860 = vmul.f32 %v840, %v856
    %v861 = vmul.f32 %v841, %v856
    %v862 = vmul.f32 %v842, %v856
    %v863 = vmul.f32 %v843, %v856
    %v864 = vmul.f32 %v844, %v856
    %v865 = vmul.f32 %v845, %v856
    %v866 = vmul.f32 %v846, %v856
    %v867 = vmul.f32 %v847, %v856
    %v868 = vmul.f32 %v848, %v856
    %v869 = vmul.f32 %v849, %v856
    %v870 = vmul.f32 %v850, %v856
    %v871 = vmul.f32 %v851, %v856
    %v872 = vmul.f32 %v852, %v856
    %v873 = vadd.f32 %v821, %v857
    %v874 = vadd.f32 %v822, %v858
    %v875 = vadd.f32 %v823, %v859
    %v876 = vadd.f32 %v824, %v860
    %v877 = vadd.f32 %v825, %v861
    %v878 = vadd.f32 %v826, %v862
    %v879 = vadd.f32 %v827, %v863
    %v880 = vadd.f32 %v828, %v864
    %v881 = vadd.f32 %v829, %v865
    %v882 = vadd.f32 %v830, %v866
    %v883 = vadd.f32 %v831, %v867
    %v884 = vadd.f32 %v832, %v868
    %v885 = vadd.f32 %v833, %v869
    %v886 = vadd.f32 %v834, %v870
    %v887 = vadd.f32 %v835, %v871
    %v888 = vadd.f32 %v836, %v872
    %v889 = vld [vmem:[#allocation2 + $0x6] sm:$0xff]
    %v890 = vld [vmem:[#allocation2 + $0x16] sm:$0xff]
    %v891 = vld [vmem:[#allocation2 + $0x26] sm:$0xff]
    %v892 = vld [vmem:[#allocation2 + $0x36] sm:$0xff]
    %v893 = vld [vmem:[#allocation2 + $0x46] sm:$0xff]
    %v894 = vld [vmem:[#allocation2 + $0x56] sm:$0xff]
    %v895 = vld [vmem:[#allocation2 + $0x66] sm:$0xff]
    %v896 = vld [vmem:[#allocation2 + $0x76] sm:$0xff]
    %v897 = vld [vmem:[#allocation2 + $0x106] sm:$0xff]
    %v898 = vld [vmem:[#allocation2 + $0x116] sm:$0xff]
    %v899 = vld [vmem:[#allocation2 + $0x126] sm:$0xff]
    %v900 = vld [vmem:[#allocation2 + $0x136] sm:$0xff]
    %v901 = vld [vmem:[#allocation2 + $0x146] sm:$0xff]
    %v902 = vld [vmem:[#allocation2 + $0x156] sm:$0xff]
    %v903 = vld [vmem:[#allocation2 + $0x166] sm:$0xff]
    %v904 = vld [vmem:[#allocation2 + $0x176] sm:$0xff]
    %v905 = vlaneseq
    %v906 = vshrl.u32 %v905, 7
    %v907 = vsub.s32 6, %v906
    %v908 = vrot.slane %v559, %v907
    %v909 = vmul.f32 %v889, %v908
    %v910 = vmul.f32 %v890, %v908
    %v911 = vmul.f32 %v891, %v908
    %v912 = vmul.f32 %v892, %v908
    %v913 = vmul.f32 %v893, %v908
    %v914 = vmul.f32 %v894, %v908
    %v915 = vmul.f32 %v895, %v908
    %v916 = vmul.f32 %v896, %v908
    %v917 = vmul.f32 %v897, %v908
    %v918 = vmul.f32 %v898, %v908
    %v919 = vmul.f32 %v899, %v908
    %v920 = vmul.f32 %v900, %v908
    %v921 = vmul.f32 %v901, %v908
    %v922 = vmul.f32 %v902, %v908
    %v923 = vmul.f32 %v903, %v908
    %v924 = vmul.f32 %v904, %v908
    %v925 = vadd.f32 %v873, %v909
    %v926 = vadd.f32 %v874, %v910
    %v927 = vadd.f32 %v875, %v911
    %v928 = vadd.f32 %v876, %v912
    %v929 = vadd.f32 %v877, %v913
    %v930 = vadd.f32 %v878, %v914
    %v931 = vadd.f32 %v879, %v915
    %v932 = vadd.f32 %v880, %v916
    %v933 = vadd.f32 %v881, %v917
    %v934 = vadd.f32 %v882, %v918
    %v935 = vadd.f32 %v883, %v919
    %v936 = vadd.f32 %v884, %v920
    %v937 = vadd.f32 %v885, %v921
    %v938 = vadd.f32 %v886, %v922
    %v939 = vadd.f32 %v887, %v923
    %v940 = vadd.f32 %v888, %v924
    %v941 = vld [vmem:[#allocation2 + $0x7] sm:$0xff]
    %v942 = vld [vmem:[#allocation2 + $0x17] sm:$0xff]
    %v943 = vld [vmem:[#allocation2 + $0x27] sm:$0xff]
    %v944 = vld [vmem:[#allocation2 + $0x37] sm:$0xff]
    %v945 = vld [vmem:[#allocation2 + $0x47] sm:$0xff]
    %v946 = vld [vmem:[#allocation2 + $0x57] sm:$0xff]
    %v947 = vld [vmem:[#allocation2 + $0x67] sm:$0xff]
    %v948 = vld [vmem:[#allocation2 + $0x77] sm:$0xff]
    %v949 = vld [vmem:[#allocation2 + $0x107] sm:$0xff]
    %v950 = vld [vmem:[#allocation2 + $0x117] sm:$0xff]
    %v951 = vld [vmem:[#allocation2 + $0x127] sm:$0xff]
    %v952 = vld [vmem:[#allocation2 + $0x137] sm:$0xff]
    %v953 = vld [vmem:[#allocation2 + $0x147] sm:$0xff]
    %v954 = vld [vmem:[#allocation2 + $0x157] sm:$0xff]
    %v955 = vld [vmem:[#allocation2 + $0x167] sm:$0xff]
    %v956 = vld [vmem:[#allocation2 + $0x177] sm:$0xff]
    %v957 = vlaneseq
    %v958 = vshrl.u32 %v957, 7
    %v959 = vsub.s32 7, %v958
    %v960 = vrot.slane %v559, %v959
    %v961 = vmul.f32 %v941, %v960
    %v962 = vmul.f32 %v942, %v960
    %v963 = vmul.f32 %v943, %v960
    %v964 = vmul.f32 %v944, %v960
    %v965 = vmul.f32 %v945, %v960
    %v966 = vmul.f32 %v946, %v960
    %v967 = vmul.f32 %v947, %v960
    %v968 = vmul.f32 %v948, %v960
    %v969 = vmul.f32 %v949, %v960
    %v970 = vmul.f32 %v950, %v960
    %v971 = vmul.f32 %v951, %v960
    %v972 = vmul.f32 %v952, %v960
    %v973 = vmul.f32 %v953, %v960
    %v974 = vmul.f32 %v954, %v960
    %v975 = vmul.f32 %v955, %v960
    %v976 = vmul.f32 %v956, %v960
    %v977 = vadd.f32 %v925, %v961
    %v978 = vadd.f32 %v926, %v962
    %v979 = vadd.f32 %v927, %v963
    %v980 = vadd.f32 %v928, %v964
    %v981 = vadd.f32 %v929, %v965
    %v982 = vadd.f32 %v930, %v966
    %v983 = vadd.f32 %v931, %v967
    %v984 = vadd.f32 %v932, %v968
    %v985 = vadd.f32 %v933, %v969
    %v986 = vadd.f32 %v934, %v970
    %v987 = vadd.f32 %v935, %v971
    %v988 = vadd.f32 %v936, %v972
    %v989 = vadd.f32 %v937, %v973
    %v990 = vadd.f32 %v938, %v974
    %v991 = vadd.f32 %v939, %v975
    %v992 = vadd.f32 %v940, %v976
    %v993 = vld [vmem:[#allocation2 + $0x8] sm:$0xff]
    %v994 = vld [vmem:[#allocation2 + $0x18] sm:$0xff]
    %v995 = vld [vmem:[#allocation2 + $0x28] sm:$0xff]
    %v996 = vld [vmem:[#allocation2 + $0x38] sm:$0xff]
    %v997 = vld [vmem:[#allocation2 + $0x48] sm:$0xff]
    %v998 = vld [vmem:[#allocation2 + $0x58] sm:$0xff]
    %v999 = vld [vmem:[#allocation2 + $0x68] sm:$0xff]
    %v1000 = vld [vmem:[#allocation2 + $0x78] sm:$0xff]
    %v1001 = vld [vmem:[#allocation2 + $0x108] sm:$0xff]
    %v1002 = vld [vmem:[#allocation2 + $0x118] sm:$0xff]
    %v1003 = vld [vmem:[#allocation2 + $0x128] sm:$0xff]
    %v1004 = vld [vmem:[#allocation2 + $0x138] sm:$0xff]
    %v1005 = vld [vmem:[#allocation2 + $0x148] sm:$0xff]
    %v1006 = vld [vmem:[#allocation2 + $0x158] sm:$0xff]
    %v1007 = vld [vmem:[#allocation2 + $0x168] sm:$0xff]
    %v1008 = vld [vmem:[#allocation2 + $0x178] sm:$0xff]
    %v1009 = vlaneseq
    %v1010 = vshrl.u32 %v1009, 7
    %v1011 = vsub.s32 0, %v1010
    %v1012 = vrot.slane %v560, %v1011
    %v1013 = vmul.f32 %v993, %v1012
    %v1014 = vmul.f32 %v994, %v1012
    %v1015 = vmul.f32 %v995, %v1012
    %v1016 = vmul.f32 %v996, %v1012
    %v1017 = vmul.f32 %v997, %v1012
    %v1018 = vmul.f32 %v998, %v1012
    %v1019 = vmul.f32 %v999, %v1012
    %v1020 = vmul.f32 %v1000, %v1012
    %v1021 = vmul.f32 %v1001, %v1012
    %v1022 = vmul.f32 %v1002, %v1012
    %v1023 = vmul.f32 %v1003, %v1012
    %v1024 = vmul.f32 %v1004, %v1012
    %v1025 = vmul.f32 %v1005, %v1012
    %v1026 = vmul.f32 %v1006, %v1012
    %v1027 = vmul.f32 %v1007, %v1012
    %v1028 = vmul.f32 %v1008, %v1012
    %v1029 = vadd.f32 %v977, %v1013
    %v1030 = vadd.f32 %v978, %v1014
    %v1031 = vadd.f32 %v979, %v1015
    %v1032 = vadd.f32 %v980, %v1016
    %v1033 = vadd.f32 %v981, %v1017
    %v1034 = vadd.f32 %v982, %v1018
    %v1035 = vadd.f32 %v983, %v1019
    %v1036 = vadd.f32 %v984, %v1020
    %v1037 = vadd.f32 %v985, %v1021
    %v1038 = vadd.f32 %v986, %v1022
    %v1039 = vadd.f32 %v987, %v1023
    %v1040 = vadd.f32 %v988, %v1024
    %v1041 = vadd.f32 %v989, %v1025
    %v1042 = vadd.f32 %v990, %v1026
    %v1043 = vadd.f32 %v991, %v1027
    %v1044 = vadd.f32 %v992, %v1028
    %s1045 = scalar_lea.vmem [#allocation2], 16
    %v1046 = vld [vmem:[%s1045] sm:$0xff]
    %v1047 = vld [vmem:[%s1045 + $0x10] sm:$0xff]
    %v1048 = vld [vmem:[%s1045 + $0x20] sm:$0xff]
    %v1049 = vld [vmem:[%s1045 + $0x30] sm:$0xff]
    %v1050 = vld [vmem:[%s1045 + $0x40] sm:$0xff]
    %v1051 = vld [vmem:[%s1045 + $0x50] sm:$0xff]
    %v1052 = vld [vmem:[%s1045 + $0x60] sm:$0xff]
    %v1053 = vld [vmem:[%s1045 + $0x70] sm:$0xff]
    %v1054 = vld [vmem:[%s1045 + $0x100] sm:$0xff]
    %v1055 = vld [vmem:[%s1045 + $0x110] sm:$0xff]
    %v1056 = vld [vmem:[%s1045 + $0x120] sm:$0xff]
    %v1057 = vld [vmem:[%s1045 + $0x130] sm:$0xff]
    %v1058 = vld [vmem:[%s1045 + $0x140] sm:$0xff]
    %v1059 = vld [vmem:[%s1045 + $0x150] sm:$0xff]
    %v1060 = vld [vmem:[%s1045 + $0x160] sm:$0xff]
    %v1061 = vld [vmem:[%s1045 + $0x170] sm:$0xff]
    %v1062 = vlaneseq
    %v1063 = vshrl.u32 %v1062, 7
    %v1064 = vsub.s32 0, %v1063
    %v1065 = vrot.slane %v561, %v1064
    %v1066 = vmul.f32 %v1046, %v1065
    %v1067 = vmul.f32 %v1047, %v1065
    %v1068 = vmul.f32 %v1048, %v1065
    %v1069 = vmul.f32 %v1049, %v1065
    %v1070 = vmul.f32 %v1050, %v1065
    %v1071 = vmul.f32 %v1051, %v1065
    %v1072 = vmul.f32 %v1052, %v1065
    %v1073 = vmul.f32 %v1053, %v1065
    %v1074 = vmul.f32 %v1054, %v1065
    %v1075 = vmul.f32 %v1055, %v1065
    %v1076 = vmul.f32 %v1056, %v1065
    %v1077 = vmul.f32 %v1057, %v1065
    %v1078 = vmul.f32 %v1058, %v1065
    %v1079 = vmul.f32 %v1059, %v1065
    %v1080 = vmul.f32 %v1060, %v1065
    %v1081 = vmul.f32 %v1061, %v1065
    %v1082 = vadd.f32 %v1029, %v1066
    %v1083 = vadd.f32 %v1030, %v1067
    %v1084 = vadd.f32 %v1031, %v1068
    %v1085 = vadd.f32 %v1032, %v1069
    %v1086 = vadd.f32 %v1033, %v1070
    %v1087 = vadd.f32 %v1034, %v1071
    %v1088 = vadd.f32 %v1035, %v1072
    %v1089 = vadd.f32 %v1036, %v1073
    %v1090 = vadd.f32 %v1037, %v1074
    %v1091 = vadd.f32 %v1038, %v1075
    %v1092 = vadd.f32 %v1039, %v1076
    %v1093 = vadd.f32 %v1040, %v1077
    %v1094 = vadd.f32 %v1041, %v1078
    %v1095 = vadd.f32 %v1042, %v1079
    %v1096 = vadd.f32 %v1043, %v1080
    %v1097 = vadd.f32 %v1044, %v1081
    %v1098 = vld [vmem:[%s1045 + $0x1] sm:$0xff]
    %v1099 = vld [vmem:[%s1045 + $0x11] sm:$0xff]
    %v1100 = vld [vmem:[%s1045 + $0x21] sm:$0xff]
    %v1101 = vld [vmem:[%s1045 + $0x31] sm:$0xff]
    %v1102 = vld [vmem:[%s1045 + $0x41] sm:$0xff]
    %v1103 = vld [vmem:[%s1045 + $0x51] sm:$0xff]
    %v1104 = vld [vmem:[%s1045 + $0x61] sm:$0xff]
    %v1105 = vld [vmem:[%s1045 + $0x71] sm:$0xff]
    %v1106 = vld [vmem:[%s1045 + $0x101] sm:$0xff]
    %v1107 = vld [vmem:[%s1045 + $0x111] sm:$0xff]
    %v1108 = vld [vmem:[%s1045 + $0x121] sm:$0xff]
    %v1109 = vld [vmem:[%s1045 + $0x131] sm:$0xff]
    %v1110 = vld [vmem:[%s1045 + $0x141] sm:$0xff]
    %v1111 = vld [vmem:[%s1045 + $0x151] sm:$0xff]
    %v1112 = vld [vmem:[%s1045 + $0x161] sm:$0xff]
    %v1113 = vld [vmem:[%s1045 + $0x171] sm:$0xff]
    %v1114 = vlaneseq
    %v1115 = vshrl.u32 %v1114, 7
    %v1116 = vsub.s32 1, %v1115
    %v1117 = vrot.slane %v561, %v1116
    %v1118 = vmul.f32 %v1098, %v1117
    %v1119 = vmul.f32 %v1099, %v1117
    %v1120 = vmul.f32 %v1100, %v1117
    %v1121 = vmul.f32 %v1101, %v1117
    %v1122 = vmul.f32 %v1102, %v1117
    %v1123 = vmul.f32 %v1103, %v1117
    %v1124 = vmul.f32 %v1104, %v1117
    %v1125 = vmul.f32 %v1105, %v1117
    %v1126 = vmul.f32 %v1106, %v1117
    %v1127 = vmul.f32 %v1107, %v1117
    %v1128 = vmul.f32 %v1108, %v1117
    %v1129 = vmul.f32 %v1109, %v1117
    %v1130 = vmul.f32 %v1110, %v1117
    %v1131 = vmul.f32 %v1111, %v1117
    %v1132 = vmul.f32 %v1112, %v1117
    %v1133 = vmul.f32 %v1113, %v1117
    %v1134 = vadd.f32 %v1082, %v1118
    %v1135 = vadd.f32 %v1083, %v1119
    %v1136 = vadd.f32 %v1084, %v1120
    %v1137 = vadd.f32 %v1085, %v1121
    %v1138 = vadd.f32 %v1086, %v1122
    %v1139 = vadd.f32 %v1087, %v1123
    %v1140 = vadd.f32 %v1088, %v1124
    %v1141 = vadd.f32 %v1089, %v1125
    %v1142 = vadd.f32 %v1090, %v1126
    %v1143 = vadd.f32 %v1091, %v1127
    %v1144 = vadd.f32 %v1092, %v1128
    %v1145 = vadd.f32 %v1093, %v1129
    %v1146 = vadd.f32 %v1094, %v1130
    %v1147 = vadd.f32 %v1095, %v1131
    %v1148 = vadd.f32 %v1096, %v1132
    %v1149 = vadd.f32 %v1097, %v1133
    %v1150 = vld [vmem:[%s1045 + $0x2] sm:$0xff]
    %v1151 = vld [vmem:[%s1045 + $0x12] sm:$0xff]
    %v1152 = vld [vmem:[%s1045 + $0x22] sm:$0xff]
    %v1153 = vld [vmem:[%s1045 + $0x32] sm:$0xff]
    %v1154 = vld [vmem:[%s1045 + $0x42] sm:$0xff]
    %v1155 = vld [vmem:[%s1045 + $0x52] sm:$0xff]
    %v1156 = vld [vmem:[%s1045 + $0x62] sm:$0xff]
    %v1157 = vld [vmem:[%s1045 + $0x72] sm:$0xff]
    %v1158 = vld [vmem:[%s1045 + $0x102] sm:$0xff]
    %v1159 = vld [vmem:[%s1045 + $0x112] sm:$0xff]
    %v1160 = vld [vmem:[%s1045 + $0x122] sm:$0xff]
    %v1161 = vld [vmem:[%s1045 + $0x132] sm:$0xff]
    %v1162 = vld [vmem:[%s1045 + $0x142] sm:$0xff]
    %v1163 = vld [vmem:[%s1045 + $0x152] sm:$0xff]
    %v1164 = vld [vmem:[%s1045 + $0x162] sm:$0xff]
    %v1165 = vld [vmem:[%s1045 + $0x172] sm:$0xff]
    %v1166 = vlaneseq
    %v1167 = vshrl.u32 %v1166, 7
    %v1168 = vsub.s32 2, %v1167
    %v1169 = vrot.slane %v561, %v1168
    %v1170 = vmul.f32 %v1150, %v1169
    %v1171 = vmul.f32 %v1151, %v1169
    %v1172 = vmul.f32 %v1152, %v1169
    %v1173 = vmul.f32 %v1153, %v1169
    %v1174 = vmul.f32 %v1154, %v1169
    %v1175 = vmul.f32 %v1155, %v1169
    %v1176 = vmul.f32 %v1156, %v1169
    %v1177 = vmul.f32 %v1157, %v1169
    %v1178 = vmul.f32 %v1158, %v1169
    %v1179 = vmul.f32 %v1159, %v1169
    %v1180 = vmul.f32 %v1160, %v1169
    %v1181 = vmul.f32 %v1161, %v1169
    %v1182 = vmul.f32 %v1162, %v1169
    %v1183 = vmul.f32 %v1163, %v1169
    %v1184 = vmul.f32 %v1164, %v1169
    %v1185 = vmul.f32 %v1165, %v1169
    %v1186 = vadd.f32 %v1134, %v1170
    %v1187 = vadd.f32 %v1135, %v1171
    %v1188 = vadd.f32 %v1136, %v1172
    %v1189 = vadd.f32 %v1137, %v1173
    %v1190 = vadd.f32 %v1138, %v1174
    %v1191 = vadd.f32 %v1139, %v1175
    %v1192 = vadd.f32 %v1140, %v1176
    %v1193 = vadd.f32 %v1141, %v1177
    %v1194 = vadd.f32 %v1142, %v1178
    %v1195 = vadd.f32 %v1143, %v1179
    %v1196 = vadd.f32 %v1144, %v1180
    %v1197 = vadd.f32 %v1145, %v1181
    %v1198 = vadd.f32 %v1146, %v1182
    %v1199 = vadd.f32 %v1147, %v1183
    %v1200 = vadd.f32 %v1148, %v1184
    %v1201 = vadd.f32 %v1149, %v1185
    %v1202 = vld [vmem:[%s1045 + $0x3] sm:$0xff]
    %v1203 = vld [vmem:[%s1045 + $0x13] sm:$0xff]
    %v1204 = vld [vmem:[%s1045 + $0x23] sm:$0xff]
    %v1205 = vld [vmem:[%s1045 + $0x33] sm:$0xff]
    %v1206 = vld [vmem:[%s1045 + $0x43] sm:$0xff]
    %v1207 = vld [vmem:[%s1045 + $0x53] sm:$0xff]
    %v1208 = vld [vmem:[%s1045 + $0x63] sm:$0xff]
    %v1209 = vld [vmem:[%s1045 + $0x73] sm:$0xff]
    %v1210 = vld [vmem:[%s1045 + $0x103] sm:$0xff]
    %v1211 = vld [vmem:[%s1045 + $0x113] sm:$0xff]
    %v1212 = vld [vmem:[%s1045 + $0x123] sm:$0xff]
    %v1213 = vld [vmem:[%s1045 + $0x133] sm:$0xff]
    %v1214 = vld [vmem:[%s1045 + $0x143] sm:$0xff]
    %v1215 = vld [vmem:[%s1045 + $0x153] sm:$0xff]
    %v1216 = vld [vmem:[%s1045 + $0x163] sm:$0xff]
    %v1217 = vld [vmem:[%s1045 + $0x173] sm:$0xff]
    %v1218 = vlaneseq
    %v1219 = vshrl.u32 %v1218, 7
    %v1220 = vsub.s32 3, %v1219
    %v1221 = vrot.slane %v561, %v1220
    %v1222 = vmul.f32 %v1202, %v1221
    %v1223 = vmul.f32 %v1203, %v1221
    %v1224 = vmul.f32 %v1204, %v1221
    %v1225 = vmul.f32 %v1205, %v1221
    %v1226 = vmul.f32 %v1206, %v1221
    %v1227 = vmul.f32 %v1207, %v1221
    %v1228 = vmul.f32 %v1208, %v1221
    %v1229 = vmul.f32 %v1209, %v1221
    %v1230 = vmul.f32 %v1210, %v1221
    %v1231 = vmul.f32 %v1211, %v1221
    %v1232 = vmul.f32 %v1212, %v1221
    %v1233 = vmul.f32 %v1213, %v1221
    %v1234 = vmul.f32 %v1214, %v1221
    %v1235 = vmul.f32 %v1215, %v1221
    %v1236 = vmul.f32 %v1216, %v1221
    %v1237 = vmul.f32 %v1217, %v1221
    %v1238 = vadd.f32 %v1186, %v1222
    %v1239 = vadd.f32 %v1187, %v1223
    %v1240 = vadd.f32 %v1188, %v1224
    %v1241 = vadd.f32 %v1189, %v1225
    %v1242 = vadd.f32 %v1190, %v1226
    %v1243 = vadd.f32 %v1191, %v1227
    %v1244 = vadd.f32 %v1192, %v1228
    %v1245 = vadd.f32 %v1193, %v1229
    %v1246 = vadd.f32 %v1194, %v1230
    %v1247 = vadd.f32 %v1195, %v1231
    %v1248 = vadd.f32 %v1196, %v1232
    %v1249 = vadd.f32 %v1197, %v1233
    %v1250 = vadd.f32 %v1198, %v1234
    %v1251 = vadd.f32 %v1199, %v1235
    %v1252 = vadd.f32 %v1200, %v1236
    %v1253 = vadd.f32 %v1201, %v1237
    %v1254 = vld [vmem:[%s1045 + $0x4] sm:$0xff]
    %v1255 = vld [vmem:[%s1045 + $0x14] sm:$0xff]
    %v1256 = vld [vmem:[%s1045 + $0x24] sm:$0xff]
    %v1257 = vld [vmem:[%s1045 + $0x34] sm:$0xff]
    %v1258 = vld [vmem:[%s1045 + $0x44] sm:$0xff]
    %v1259 = vld [vmem:[%s1045 + $0x54] sm:$0xff]
    %v1260 = vld [vmem:[%s1045 + $0x64] sm:$0xff]
    %v1261 = vld [vmem:[%s1045 + $0x74] sm:$0xff]
    %v1262 = vld [vmem:[%s1045 + $0x104] sm:$0xff]
    %v1263 = vld [vmem:[%s1045 + $0x114] sm:$0xff]
    %v1264 = vld [vmem:[%s1045 + $0x124] sm:$0xff]
    %v1265 = vld [vmem:[%s1045 + $0x134] sm:$0xff]
    %v1266 = vld [vmem:[%s1045 + $0x144] sm:$0xff]
    %v1267 = vld [vmem:[%s1045 + $0x154] sm:$0xff]
    %v1268 = vld [vmem:[%s1045 + $0x164] sm:$0xff]
    %v1269 = vld [vmem:[%s1045 + $0x174] sm:$0xff]
    %v1270 = vlaneseq
    %v1271 = vshrl.u32 %v1270, 7
    %v1272 = vsub.s32 4, %v1271
    %v1273 = vrot.slane %v561, %v1272
    %v1274 = vmul.f32 %v1254, %v1273
    %v1275 = vmul.f32 %v1255, %v1273
    %v1276 = vmul.f32 %v1256, %v1273
    %v1277 = vmul.f32 %v1257, %v1273
    %v1278 = vmul.f32 %v1258, %v1273
    %v1279 = vmul.f32 %v1259, %v1273
    %v1280 = vmul.f32 %v1260, %v1273
    %v1281 = vmul.f32 %v1261, %v1273
    %v1282 = vmul.f32 %v1262, %v1273
    %v1283 = vmul.f32 %v1263, %v1273
    %v1284 = vmul.f32 %v1264, %v1273
    %v1285 = vmul.f32 %v1265, %v1273
    %v1286 = vmul.f32 %v1266, %v1273
    %v1287 = vmul.f32 %v1267, %v1273
    %v1288 = vmul.f32 %v1268, %v1273
    %v1289 = vmul.f32 %v1269, %v1273
    %v1290 = vadd.f32 %v1238, %v1274
    %v1291 = vadd.f32 %v1239, %v1275
    %v1292 = vadd.f32 %v1240, %v1276
    %v1293 = vadd.f32 %v1241, %v1277
    %v1294 = vadd.f32 %v1242, %v1278
    %v1295 = vadd.f32 %v1243, %v1279
    %v1296 = vadd.f32 %v1244, %v1280
    %v1297 = vadd.f32 %v1245, %v1281
    %v1298 = vadd.f32 %v1246, %v1282
    %v1299 = vadd.f32 %v1247, %v1283
    %v1300 = vadd.f32 %v1248, %v1284
    %v1301 = vadd.f32 %v1249, %v1285
    %v1302 = vadd.f32 %v1250, %v1286
    %v1303 = vadd.f32 %v1251, %v1287
    %v1304 = vadd.f32 %v1252, %v1288
    %v1305 = vadd.f32 %v1253, %v1289
    %v1306 = vld [vmem:[%s1045 + $0x5] sm:$0xff]
    %v1307 = vld [vmem:[%s1045 + $0x15] sm:$0xff]
    %v1308 = vld [vmem:[%s1045 + $0x25] sm:$0xff]
    %v1309 = vld [vmem:[%s1045 + $0x35] sm:$0xff]
    %v1310 = vld [vmem:[%s1045 + $0x45] sm:$0xff]
    %v1311 = vld [vmem:[%s1045 + $0x55] sm:$0xff]
    %v1312 = vld [vmem:[%s1045 + $0x65] sm:$0xff]
    %v1313 = vld [vmem:[%s1045 + $0x75] sm:$0xff]
    %v1314 = vld [vmem:[%s1045 + $0x105] sm:$0xff]
    %v1315 = vld [vmem:[%s1045 + $0x115] sm:$0xff]
    %v1316 = vld [vmem:[%s1045 + $0x125] sm:$0xff]
    %v1317 = vld [vmem:[%s1045 + $0x135] sm:$0xff]
    %v1318 = vld [vmem:[%s1045 + $0x145] sm:$0xff]
    %v1319 = vld [vmem:[%s1045 + $0x155] sm:$0xff]
    %v1320 = vld [vmem:[%s1045 + $0x165] sm:$0xff]
    %v1321 = vld [vmem:[%s1045 + $0x175] sm:$0xff]
    %v1322 = vlaneseq
    %v1323 = vshrl.u32 %v1322, 7
    %v1324 = vsub.s32 5, %v1323
    %v1325 = vrot.slane %v561, %v1324
    %v1326 = vmul.f32 %v1306, %v1325
    %v1327 = vmul.f32 %v1307, %v1325
    %v1328 = vmul.f32 %v1308, %v1325
    %v1329 = vmul.f32 %v1309, %v1325
    %v1330 = vmul.f32 %v1310, %v1325
    %v1331 = vmul.f32 %v1311, %v1325
    %v1332 = vmul.f32 %v1312, %v1325
    %v1333 = vmul.f32 %v1313, %v1325
    %v1334 = vmul.f32 %v1314, %v1325
    %v1335 = vmul.f32 %v1315, %v1325
    %v1336 = vmul.f32 %v1316, %v1325
    %v1337 = vmul.f32 %v1317, %v1325
    %v1338 = vmul.f32 %v1318, %v1325
    %v1339 = vmul.f32 %v1319, %v1325
    %v1340 = vmul.f32 %v1320, %v1325
    %v1341 = vmul.f32 %v1321, %v1325
    %v1342 = vadd.f32 %v1290, %v1326
    %v1343 = vadd.f32 %v1291, %v1327
    %v1344 = vadd.f32 %v1292, %v1328
    %v1345 = vadd.f32 %v1293, %v1329
    %v1346 = vadd.f32 %v1294, %v1330
    %v1347 = vadd.f32 %v1295, %v1331
    %v1348 = vadd.f32 %v1296, %v1332
    %v1349 = vadd.f32 %v1297, %v1333
    %v1350 = vadd.f32 %v1298, %v1334
    %v1351 = vadd.f32 %v1299, %v1335
    %v1352 = vadd.f32 %v1300, %v1336
    %v1353 = vadd.f32 %v1301, %v1337
    %v1354 = vadd.f32 %v1302, %v1338
    %v1355 = vadd.f32 %v1303, %v1339
    %v1356 = vadd.f32 %v1304, %v1340
    %v1357 = vadd.f32 %v1305, %v1341
    %v1358 = vld [vmem:[%s1045 + $0x6] sm:$0xff]
    %v1359 = vld [vmem:[%s1045 + $0x16] sm:$0xff]
    %v1360 = vld [vmem:[%s1045 + $0x26] sm:$0xff]
    %v1361 = vld [vmem:[%s1045 + $0x36] sm:$0xff]
    %v1362 = vld [vmem:[%s1045 + $0x46] sm:$0xff]
    %v1363 = vld [vmem:[%s1045 + $0x56] sm:$0xff]
    %v1364 = vld [vmem:[%s1045 + $0x66] sm:$0xff]
    %v1365 = vld [vmem:[%s1045 + $0x76] sm:$0xff]
    %v1366 = vld [vmem:[%s1045 + $0x106] sm:$0xff]
    %v1367 = vld [vmem:[%s1045 + $0x116] sm:$0xff]
    %v1368 = vld [vmem:[%s1045 + $0x126] sm:$0xff]
    %v1369 = vld [vmem:[%s1045 + $0x136] sm:$0xff]
    %v1370 = vld [vmem:[%s1045 + $0x146] sm:$0xff]
    %v1371 = vld [vmem:[%s1045 + $0x156] sm:$0xff]
    %v1372 = vld [vmem:[%s1045 + $0x166] sm:$0xff]
    %v1373 = vld [vmem:[%s1045 + $0x176] sm:$0xff]
    %v1374 = vlaneseq
    %v1375 = vshrl.u32 %v1374, 7
    %v1376 = vsub.s32 6, %v1375
    %v1377 = vrot.slane %v561, %v1376
    %v1378 = vmul.f32 %v1358, %v1377
    %v1379 = vmul.f32 %v1359, %v1377
    %v1380 = vmul.f32 %v1360, %v1377
    %v1381 = vmul.f32 %v1361, %v1377
    %v1382 = vmul.f32 %v1362, %v1377
    %v1383 = vmul.f32 %v1363, %v1377
    %v1384 = vmul.f32 %v1364, %v1377
    %v1385 = vmul.f32 %v1365, %v1377
    %v1386 = vmul.f32 %v1366, %v1377
    %v1387 = vmul.f32 %v1367, %v1377
    %v1388 = vmul.f32 %v1368, %v1377
    %v1389 = vmul.f32 %v1369, %v1377
    %v1390 = vmul.f32 %v1370, %v1377
    %v1391 = vmul.f32 %v1371, %v1377
    %v1392 = vmul.f32 %v1372, %v1377
    %v1393 = vmul.f32 %v1373, %v1377
    %v1394 = vadd.f32 %v1342, %v1378
    %v1395 = vadd.f32 %v1343, %v1379
    %v1396 = vadd.f32 %v1344, %v1380
    %v1397 = vadd.f32 %v1345, %v1381
    %v1398 = vadd.f32 %v1346, %v1382
    %v1399 = vadd.f32 %v1347, %v1383
    %v1400 = vadd.f32 %v1348, %v1384
    %v1401 = vadd.f32 %v1349, %v1385
    %v1402 = vadd.f32 %v1350, %v1386
    %v1403 = vadd.f32 %v1351, %v1387
    %v1404 = vadd.f32 %v1352, %v1388
    %v1405 = vadd.f32 %v1353, %v1389
    %v1406 = vadd.f32 %v1354, %v1390
    %v1407 = vadd.f32 %v1355, %v1391
    %v1408 = vadd.f32 %v1356, %v1392
    %v1409 = vadd.f32 %v1357, %v1393
    %v1410 = vld [vmem:[%s1045 + $0x7] sm:$0xff]
    %v1411 = vld [vmem:[%s1045 + $0x17] sm:$0xff]
    %v1412 = vld [vmem:[%s1045 + $0x27] sm:$0xff]
    %v1413 = vld [vmem:[%s1045 + $0x37] sm:$0xff]
    %v1414 = vld [vmem:[%s1045 + $0x47] sm:$0xff]
    %v1415 = vld [vmem:[%s1045 + $0x57] sm:$0xff]
    %v1416 = vld [vmem:[%s1045 + $0x67] sm:$0xff]
    %v1417 = vld [vmem:[%s1045 + $0x77] sm:$0xff]
    %v1418 = vld [vmem:[%s1045 + $0x107] sm:$0xff]
    %v1419 = vld [vmem:[%s1045 + $0x117] sm:$0xff]
    %v1420 = vld [vmem:[%s1045 + $0x127] sm:$0xff]
    %v1421 = vld [vmem:[%s1045 + $0x137] sm:$0xff]
    %v1422 = vld [vmem:[%s1045 + $0x147] sm:$0xff]
    %v1423 = vld [vmem:[%s1045 + $0x157] sm:$0xff]
    %v1424 = vld [vmem:[%s1045 + $0x167] sm:$0xff]
    %v1425 = vld [vmem:[%s1045 + $0x177] sm:$0xff]
    %v1426 = vlaneseq
    %v1427 = vshrl.u32 %v1426, 7
    %v1428 = vsub.s32 7, %v1427
    %v1429 = vrot.slane %v561, %v1428
    %v1430 = vmul.f32 %v1410, %v1429
    %v1431 = vmul.f32 %v1411, %v1429
    %v1432 = vmul.f32 %v1412, %v1429
    %v1433 = vmul.f32 %v1413, %v1429
    %v1434 = vmul.f32 %v1414, %v1429
    %v1435 = vmul.f32 %v1415, %v1429
    %v1436 = vmul.f32 %v1416, %v1429
    %v1437 = vmul.f32 %v1417, %v1429
    %v1438 = vmul.f32 %v1418, %v1429
    %v1439 = vmul.f32 %v1419, %v1429
    %v1440 = vmul.f32 %v1420, %v1429
    %v1441 = vmul.f32 %v1421, %v1429
    %v1442 = vmul.f32 %v1422, %v1429
    %v1443 = vmul.f32 %v1423, %v1429
    %v1444 = vmul.f32 %v1424, %v1429
    %v1445 = vmul.f32 %v1425, %v1429
    %v1446 = vadd.f32 %v1394, %v1430
    %v1447 = vadd.f32 %v1395, %v1431
    %v1448 = vadd.f32 %v1396, %v1432
    %v1449 = vadd.f32 %v1397, %v1433
    %v1450 = vadd.f32 %v1398, %v1434
    %v1451 = vadd.f32 %v1399, %v1435
    %v1452 = vadd.f32 %v1400, %v1436
    %v1453 = vadd.f32 %v1401, %v1437
    %v1454 = vadd.f32 %v1402, %v1438
    %v1455 = vadd.f32 %v1403, %v1439
    %v1456 = vadd.f32 %v1404, %v1440
    %v1457 = vadd.f32 %v1405, %v1441
    %v1458 = vadd.f32 %v1406, %v1442
    %v1459 = vadd.f32 %v1407, %v1443
    %v1460 = vadd.f32 %v1408, %v1444
    %v1461 = vadd.f32 %v1409, %v1445
    %v1462 = vld [vmem:[%s1045 + $0x8] sm:$0xff]
    %v1463 = vld [vmem:[%s1045 + $0x18] sm:$0xff]
    %v1464 = vld [vmem:[%s1045 + $0x28] sm:$0xff]
    %v1465 = vld [vmem:[%s1045 + $0x38] sm:$0xff]
    %v1466 = vld [vmem:[%s1045 + $0x48] sm:$0xff]
    %v1467 = vld [vmem:[%s1045 + $0x58] sm:$0xff]
    %v1468 = vld [vmem:[%s1045 + $0x68] sm:$0xff]
    %v1469 = vld [vmem:[%s1045 + $0x78] sm:$0xff]
    %v1470 = vld [vmem:[%s1045 + $0x108] sm:$0xff]
    %v1471 = vld [vmem:[%s1045 + $0x118] sm:$0xff]
    %v1472 = vld [vmem:[%s1045 + $0x128] sm:$0xff]
    %v1473 = vld [vmem:[%s1045 + $0x138] sm:$0xff]
    %v1474 = vld [vmem:[%s1045 + $0x148] sm:$0xff]
    %v1475 = vld [vmem:[%s1045 + $0x158] sm:$0xff]
    %v1476 = vld [vmem:[%s1045 + $0x168] sm:$0xff]
    %v1477 = vld [vmem:[%s1045 + $0x178] sm:$0xff]
    %v1478 = vlaneseq
    %v1479 = vshrl.u32 %v1478, 7
    %v1480 = vsub.s32 0, %v1479
    %v1481 = vrot.slane %v562, %v1480
    %v1482 = vmul.f32 %v1462, %v1481
    %v1483 = vmul.f32 %v1463, %v1481
    %v1484 = vmul.f32 %v1464, %v1481
    %v1485 = vmul.f32 %v1465, %v1481
    %v1486 = vmul.f32 %v1466, %v1481
    %v1487 = vmul.f32 %v1467, %v1481
    %v1488 = vmul.f32 %v1468, %v1481
    %v1489 = vmul.f32 %v1469, %v1481
    %v1490 = vmul.f32 %v1470, %v1481
    %v1491 = vmul.f32 %v1471, %v1481
    %v1492 = vmul.f32 %v1472, %v1481
    %v1493 = vmul.f32 %v1473, %v1481
    %v1494 = vmul.f32 %v1474, %v1481
    %v1495 = vmul.f32 %v1475, %v1481
    %v1496 = vmul.f32 %v1476, %v1481
    %v1497 = vmul.f32 %v1477, %v1481
    %v1498 = vadd.f32 %v1446, %v1482
    %v1499 = vadd.f32 %v1447, %v1483
    %v1500 = vadd.f32 %v1448, %v1484
    %v1501 = vadd.f32 %v1449, %v1485
    %v1502 = vadd.f32 %v1450, %v1486
    %v1503 = vadd.f32 %v1451, %v1487
    %v1504 = vadd.f32 %v1452, %v1488
    %v1505 = vadd.f32 %v1453, %v1489
    %v1506 = vadd.f32 %v1454, %v1490
    %v1507 = vadd.f32 %v1455, %v1491
    %v1508 = vadd.f32 %v1456, %v1492
    %v1509 = vadd.f32 %v1457, %v1493
    %v1510 = vadd.f32 %v1458, %v1494
    %v1511 = vadd.f32 %v1459, %v1495
    %v1512 = vadd.f32 %v1460, %v1496
    %v1513 = vadd.f32 %v1461, %v1497
    %s1514 = scalar_lea.vmem [#allocation2], 32
    %v1515 = vld [vmem:[%s1514] sm:$0xff]
    %v1516 = vld [vmem:[%s1514 + $0x10] sm:$0xff]
    %v1517 = vld [vmem:[%s1514 + $0x20] sm:$0xff]
    %v1518 = vld [vmem:[%s1514 + $0x30] sm:$0xff]
    %v1519 = vld [vmem:[%s1514 + $0x40] sm:$0xff]
    %v1520 = vld [vmem:[%s1514 + $0x50] sm:$0xff]
    %v1521 = vld [vmem:[%s1514 + $0x60] sm:$0xff]
    %v1522 = vld [vmem:[%s1514 + $0x70] sm:$0xff]
    %v1523 = vld [vmem:[%s1514 + $0x100] sm:$0xff]
    %v1524 = vld [vmem:[%s1514 + $0x110] sm:$0xff]
    %v1525 = vld [vmem:[%s1514 + $0x120] sm:$0xff]
    %v1526 = vld [vmem:[%s1514 + $0x130] sm:$0xff]
    %v1527 = vld [vmem:[%s1514 + $0x140] sm:$0xff]
    %v1528 = vld [vmem:[%s1514 + $0x150] sm:$0xff]
    %v1529 = vld [vmem:[%s1514 + $0x160] sm:$0xff]
    %v1530 = vld [vmem:[%s1514 + $0x170] sm:$0xff]
    %v1531 = vlaneseq
    %v1532 = vshrl.u32 %v1531, 7
    %v1533 = vsub.s32 0, %v1532
    %v1534 = vrot.slane %v563, %v1533
    %v1535 = vmul.f32 %v1515, %v1534
    %v1536 = vmul.f32 %v1516, %v1534
    %v1537 = vmul.f32 %v1517, %v1534
    %v1538 = vmul.f32 %v1518, %v1534
    %v1539 = vmul.f32 %v1519, %v1534
    %v1540 = vmul.f32 %v1520, %v1534
    %v1541 = vmul.f32 %v1521, %v1534
    %v1542 = vmul.f32 %v1522, %v1534
    %v1543 = vmul.f32 %v1523, %v1534
    %v1544 = vmul.f32 %v1524, %v1534
    %v1545 = vmul.f32 %v1525, %v1534
    %v1546 = vmul.f32 %v1526, %v1534
    %v1547 = vmul.f32 %v1527, %v1534
    %v1548 = vmul.f32 %v1528, %v1534
    %v1549 = vmul.f32 %v1529, %v1534
    %v1550 = vmul.f32 %v1530, %v1534
    %v1551 = vadd.f32 %v1498, %v1535
    %v1552 = vadd.f32 %v1499, %v1536
    %v1553 = vadd.f32 %v1500, %v1537
    %v1554 = vadd.f32 %v1501, %v1538
    %v1555 = vadd.f32 %v1502, %v1539
    %v1556 = vadd.f32 %v1503, %v1540
    %v1557 = vadd.f32 %v1504, %v1541
    %v1558 = vadd.f32 %v1505, %v1542
    %v1559 = vadd.f32 %v1506, %v1543
    %v1560 = vadd.f32 %v1507, %v1544
    %v1561 = vadd.f32 %v1508, %v1545
    %v1562 = vadd.f32 %v1509, %v1546
    %v1563 = vadd.f32 %v1510, %v1547
    %v1564 = vadd.f32 %v1511, %v1548
    %v1565 = vadd.f32 %v1512, %v1549
    %v1566 = vadd.f32 %v1513, %v1550
    %v1567 = vld [vmem:[%s1514 + $0x1] sm:$0xff]
    %v1568 = vld [vmem:[%s1514 + $0x11] sm:$0xff]
    %v1569 = vld [vmem:[%s1514 + $0x21] sm:$0xff]
    %v1570 = vld [vmem:[%s1514 + $0x31] sm:$0xff]
    %v1571 = vld [vmem:[%s1514 + $0x41] sm:$0xff]
    %v1572 = vld [vmem:[%s1514 + $0x51] sm:$0xff]
    %v1573 = vld [vmem:[%s1514 + $0x61] sm:$0xff]
    %v1574 = vld [vmem:[%s1514 + $0x71] sm:$0xff]
    %v1575 = vld [vmem:[%s1514 + $0x101] sm:$0xff]
    %v1576 = vld [vmem:[%s1514 + $0x111] sm:$0xff]
    %v1577 = vld [vmem:[%s1514 + $0x121] sm:$0xff]
    %v1578 = vld [vmem:[%s1514 + $0x131] sm:$0xff]
    %v1579 = vld [vmem:[%s1514 + $0x141] sm:$0xff]
    %v1580 = vld [vmem:[%s1514 + $0x151] sm:$0xff]
    %v1581 = vld [vmem:[%s1514 + $0x161] sm:$0xff]
    %v1582 = vld [vmem:[%s1514 + $0x171] sm:$0xff]
    %v1583 = vlaneseq
    %v1584 = vshrl.u32 %v1583, 7
    %v1585 = vsub.s32 1, %v1584
    %v1586 = vrot.slane %v563, %v1585
    %v1587 = vmul.f32 %v1567, %v1586
    %v1588 = vmul.f32 %v1568, %v1586
    %v1589 = vmul.f32 %v1569, %v1586
    %v1590 = vmul.f32 %v1570, %v1586
    %v1591 = vmul.f32 %v1571, %v1586
    %v1592 = vmul.f32 %v1572, %v1586
    %v1593 = vmul.f32 %v1573, %v1586
    %v1594 = vmul.f32 %v1574, %v1586
    %v1595 = vmul.f32 %v1575, %v1586
    %v1596 = vmul.f32 %v1576, %v1586
    %v1597 = vmul.f32 %v1577, %v1586
    %v1598 = vmul.f32 %v1578, %v1586
    %v1599 = vmul.f32 %v1579, %v1586
    %v1600 = vmul.f32 %v1580, %v1586
    %v1601 = vmul.f32 %v1581, %v1586
    %v1602 = vmul.f32 %v1582, %v1586
    %v1603 = vadd.f32 %v1551, %v1587
    %v1604 = vadd.f32 %v1552, %v1588
    %v1605 = vadd.f32 %v1553, %v1589
    %v1606 = vadd.f32 %v1554, %v1590
    %v1607 = vadd.f32 %v1555, %v1591
    %v1608 = vadd.f32 %v1556, %v1592
    %v1609 = vadd.f32 %v1557, %v1593
    %v1610 = vadd.f32 %v1558, %v1594
    %v1611 = vadd.f32 %v1559, %v1595
    %v1612 = vadd.f32 %v1560, %v1596
    %v1613 = vadd.f32 %v1561, %v1597
    %v1614 = vadd.f32 %v1562, %v1598
    %v1615 = vadd.f32 %v1563, %v1599
    %v1616 = vadd.f32 %v1564, %v1600
    %v1617 = vadd.f32 %v1565, %v1601
    %v1618 = vadd.f32 %v1566, %v1602
    %v1619 = vld [vmem:[%s1514 + $0x2] sm:$0xff]
    %v1620 = vld [vmem:[%s1514 + $0x12] sm:$0xff]
    %v1621 = vld [vmem:[%s1514 + $0x22] sm:$0xff]
    %v1622 = vld [vmem:[%s1514 + $0x32] sm:$0xff]
    %v1623 = vld [vmem:[%s1514 + $0x42] sm:$0xff]
    %v1624 = vld [vmem:[%s1514 + $0x52] sm:$0xff]
    %v1625 = vld [vmem:[%s1514 + $0x62] sm:$0xff]
    %v1626 = vld [vmem:[%s1514 + $0x72] sm:$0xff]
    %v1627 = vld [vmem:[%s1514 + $0x102] sm:$0xff]
    %v1628 = vld [vmem:[%s1514 + $0x112] sm:$0xff]
    %v1629 = vld [vmem:[%s1514 + $0x122] sm:$0xff]
    %v1630 = vld [vmem:[%s1514 + $0x132] sm:$0xff]
    %v1631 = vld [vmem:[%s1514 + $0x142] sm:$0xff]
    %v1632 = vld [vmem:[%s1514 + $0x152] sm:$0xff]
    %v1633 = vld [vmem:[%s1514 + $0x162] sm:$0xff]
    %v1634 = vld [vmem:[%s1514 + $0x172] sm:$0xff]
    %v1635 = vlaneseq
    %v1636 = vshrl.u32 %v1635, 7
    %v1637 = vsub.s32 2, %v1636
    %v1638 = vrot.slane %v563, %v1637
    %v1639 = vmul.f32 %v1619, %v1638
    %v1640 = vmul.f32 %v1620, %v1638
    %v1641 = vmul.f32 %v1621, %v1638
    %v1642 = vmul.f32 %v1622, %v1638
    %v1643 = vmul.f32 %v1623, %v1638
    %v1644 = vmul.f32 %v1624, %v1638
    %v1645 = vmul.f32 %v1625, %v1638
    %v1646 = vmul.f32 %v1626, %v1638
    %v1647 = vmul.f32 %v1627, %v1638
    %v1648 = vmul.f32 %v1628, %v1638
    %v1649 = vmul.f32 %v1629, %v1638
    %v1650 = vmul.f32 %v1630, %v1638
    %v1651 = vmul.f32 %v1631, %v1638
    %v1652 = vmul.f32 %v1632, %v1638
    %v1653 = vmul.f32 %v1633, %v1638
    %v1654 = vmul.f32 %v1634, %v1638
    %v1655 = vadd.f32 %v1603, %v1639
    %v1656 = vadd.f32 %v1604, %v1640
    %v1657 = vadd.f32 %v1605, %v1641
    %v1658 = vadd.f32 %v1606, %v1642
    %v1659 = vadd.f32 %v1607, %v1643
    %v1660 = vadd.f32 %v1608, %v1644
    %v1661 = vadd.f32 %v1609, %v1645
    %v1662 = vadd.f32 %v1610, %v1646
    %v1663 = vadd.f32 %v1611, %v1647
    %v1664 = vadd.f32 %v1612, %v1648
    %v1665 = vadd.f32 %v1613, %v1649
    %v1666 = vadd.f32 %v1614, %v1650
    %v1667 = vadd.f32 %v1615, %v1651
    %v1668 = vadd.f32 %v1616, %v1652
    %v1669 = vadd.f32 %v1617, %v1653
    %v1670 = vadd.f32 %v1618, %v1654
    %v1671 = vld [vmem:[%s1514 + $0x3] sm:$0xff]
    %v1672 = vld [vmem:[%s1514 + $0x13] sm:$0xff]
    %v1673 = vld [vmem:[%s1514 + $0x23] sm:$0xff]
    %v1674 = vld [vmem:[%s1514 + $0x33] sm:$0xff]
    %v1675 = vld [vmem:[%s1514 + $0x43] sm:$0xff]
    %v1676 = vld [vmem:[%s1514 + $0x53] sm:$0xff]
    %v1677 = vld [vmem:[%s1514 + $0x63] sm:$0xff]
    %v1678 = vld [vmem:[%s1514 + $0x73] sm:$0xff]
    %v1679 = vld [vmem:[%s1514 + $0x103] sm:$0xff]
    %v1680 = vld [vmem:[%s1514 + $0x113] sm:$0xff]
    %v1681 = vld [vmem:[%s1514 + $0x123] sm:$0xff]
    %v1682 = vld [vmem:[%s1514 + $0x133] sm:$0xff]
    %v1683 = vld [vmem:[%s1514 + $0x143] sm:$0xff]
    %v1684 = vld [vmem:[%s1514 + $0x153] sm:$0xff]
    %v1685 = vld [vmem:[%s1514 + $0x163] sm:$0xff]
    %v1686 = vld [vmem:[%s1514 + $0x173] sm:$0xff]
    %v1687 = vlaneseq
    %v1688 = vshrl.u32 %v1687, 7
    %v1689 = vsub.s32 3, %v1688
    %v1690 = vrot.slane %v563, %v1689
    %v1691 = vmul.f32 %v1671, %v1690
    %v1692 = vmul.f32 %v1672, %v1690
    %v1693 = vmul.f32 %v1673, %v1690
    %v1694 = vmul.f32 %v1674, %v1690
    %v1695 = vmul.f32 %v1675, %v1690
    %v1696 = vmul.f32 %v1676, %v1690
    %v1697 = vmul.f32 %v1677, %v1690
    %v1698 = vmul.f32 %v1678, %v1690
    %v1699 = vmul.f32 %v1679, %v1690
    %v1700 = vmul.f32 %v1680, %v1690
    %v1701 = vmul.f32 %v1681, %v1690
    %v1702 = vmul.f32 %v1682, %v1690
    %v1703 = vmul.f32 %v1683, %v1690
    %v1704 = vmul.f32 %v1684, %v1690
    %v1705 = vmul.f32 %v1685, %v1690
    %v1706 = vmul.f32 %v1686, %v1690
    %v1707 = vadd.f32 %v1655, %v1691
    %v1708 = vadd.f32 %v1656, %v1692
    %v1709 = vadd.f32 %v1657, %v1693
    %v1710 = vadd.f32 %v1658, %v1694
    %v1711 = vadd.f32 %v1659, %v1695
    %v1712 = vadd.f32 %v1660, %v1696
    %v1713 = vadd.f32 %v1661, %v1697
    %v1714 = vadd.f32 %v1662, %v1698
    %v1715 = vadd.f32 %v1663, %v1699
    %v1716 = vadd.f32 %v1664, %v1700
    %v1717 = vadd.f32 %v1665, %v1701
    %v1718 = vadd.f32 %v1666, %v1702
    %v1719 = vadd.f32 %v1667, %v1703
    %v1720 = vadd.f32 %v1668, %v1704
    %v1721 = vadd.f32 %v1669, %v1705
    %v1722 = vadd.f32 %v1670, %v1706
    %v1723 = vld [vmem:[%s1514 + $0x4] sm:$0xff]
    %v1724 = vld [vmem:[%s1514 + $0x14] sm:$0xff]
    %v1725 = vld [vmem:[%s1514 + $0x24] sm:$0xff]
    %v1726 = vld [vmem:[%s1514 + $0x34] sm:$0xff]
    %v1727 = vld [vmem:[%s1514 + $0x44] sm:$0xff]
    %v1728 = vld [vmem:[%s1514 + $0x54] sm:$0xff]
    %v1729 = vld [vmem:[%s1514 + $0x64] sm:$0xff]
    %v1730 = vld [vmem:[%s1514 + $0x74] sm:$0xff]
    %v1731 = vld [vmem:[%s1514 + $0x104] sm:$0xff]
    %v1732 = vld [vmem:[%s1514 + $0x114] sm:$0xff]
    %v1733 = vld [vmem:[%s1514 + $0x124] sm:$0xff]
    %v1734 = vld [vmem:[%s1514 + $0x134] sm:$0xff]
    %v1735 = vld [vmem:[%s1514 + $0x144] sm:$0xff]
    %v1736 = vld [vmem:[%s1514 + $0x154] sm:$0xff]
    %v1737 = vld [vmem:[%s1514 + $0x164] sm:$0xff]
    %v1738 = vld [vmem:[%s1514 + $0x174] sm:$0xff]
    %v1739 = vlaneseq
    %v1740 = vshrl.u32 %v1739, 7
    %v1741 = vsub.s32 4, %v1740
    %v1742 = vrot.slane %v563, %v1741
    %v1743 = vmul.f32 %v1723, %v1742
    %v1744 = vmul.f32 %v1724, %v1742
    %v1745 = vmul.f32 %v1725, %v1742
    %v1746 = vmul.f32 %v1726, %v1742
    %v1747 = vmul.f32 %v1727, %v1742
    %v1748 = vmul.f32 %v1728, %v1742
    %v1749 = vmul.f32 %v1729, %v1742
    %v1750 = vmul.f32 %v1730, %v1742
    %v1751 = vmul.f32 %v1731, %v1742
    %v1752 = vmul.f32 %v1732, %v1742
    %v1753 = vmul.f32 %v1733, %v1742
    %v1754 = vmul.f32 %v1734, %v1742
    %v1755 = vmul.f32 %v1735, %v1742
    %v1756 = vmul.f32 %v1736, %v1742
    %v1757 = vmul.f32 %v1737, %v1742
    %v1758 = vmul.f32 %v1738, %v1742
    %v1759 = vadd.f32 %v1707, %v1743
    %v1760 = vadd.f32 %v1708, %v1744
    %v1761 = vadd.f32 %v1709, %v1745
    %v1762 = vadd.f32 %v1710, %v1746
    %v1763 = vadd.f32 %v1711, %v1747
    %v1764 = vadd.f32 %v1712, %v1748
    %v1765 = vadd.f32 %v1713, %v1749
    %v1766 = vadd.f32 %v1714, %v1750
    %v1767 = vadd.f32 %v1715, %v1751
    %v1768 = vadd.f32 %v1716, %v1752
    %v1769 = vadd.f32 %v1717, %v1753
    %v1770 = vadd.f32 %v1718, %v1754
    %v1771 = vadd.f32 %v1719, %v1755
    %v1772 = vadd.f32 %v1720, %v1756
    %v1773 = vadd.f32 %v1721, %v1757
    %v1774 = vadd.f32 %v1722, %v1758
    %v1775 = vld [vmem:[%s1514 + $0x5] sm:$0xff]
    %v1776 = vld [vmem:[%s1514 + $0x15] sm:$0xff]
    %v1777 = vld [vmem:[%s1514 + $0x25] sm:$0xff]
    %v1778 = vld [vmem:[%s1514 + $0x35] sm:$0xff]
    %v1779 = vld [vmem:[%s1514 + $0x45] sm:$0xff]
    %v1780 = vld [vmem:[%s1514 + $0x55] sm:$0xff]
    %v1781 = vld [vmem:[%s1514 + $0x65] sm:$0xff]
    %v1782 = vld [vmem:[%s1514 + $0x75] sm:$0xff]
    %v1783 = vld [vmem:[%s1514 + $0x105] sm:$0xff]
    %v1784 = vld [vmem:[%s1514 + $0x115] sm:$0xff]
    %v1785 = vld [vmem:[%s1514 + $0x125] sm:$0xff]
    %v1786 = vld [vmem:[%s1514 + $0x135] sm:$0xff]
    %v1787 = vld [vmem:[%s1514 + $0x145] sm:$0xff]
    %v1788 = vld [vmem:[%s1514 + $0x155] sm:$0xff]
    %v1789 = vld [vmem:[%s1514 + $0x165] sm:$0xff]
    %v1790 = vld [vmem:[%s1514 + $0x175] sm:$0xff]
    %v1791 = vlaneseq
    %v1792 = vshrl.u32 %v1791, 7
    %v1793 = vsub.s32 5, %v1792
    %v1794 = vrot.slane %v563, %v1793
    %v1795 = vmul.f32 %v1775, %v1794
    %v1796 = vmul.f32 %v1776, %v1794
    %v1797 = vmul.f32 %v1777, %v1794
    %v1798 = vmul.f32 %v1778, %v1794
    %v1799 = vmul.f32 %v1779, %v1794
    %v1800 = vmul.f32 %v1780, %v1794
    %v1801 = vmul.f32 %v1781, %v1794
    %v1802 = vmul.f32 %v1782, %v1794
    %v1803 = vmul.f32 %v1783, %v1794
    %v1804 = vmul.f32 %v1784, %v1794
    %v1805 = vmul.f32 %v1785, %v1794
    %v1806 = vmul.f32 %v1786, %v1794
    %v1807 = vmul.f32 %v1787, %v1794
    %v1808 = vmul.f32 %v1788, %v1794
    %v1809 = vmul.f32 %v1789, %v1794
    %v1810 = vmul.f32 %v1790, %v1794
    %v1811 = vadd.f32 %v1759, %v1795
    %v1812 = vadd.f32 %v1760, %v1796
    %v1813 = vadd.f32 %v1761, %v1797
    %v1814 = vadd.f32 %v1762, %v1798
    %v1815 = vadd.f32 %v1763, %v1799
    %v1816 = vadd.f32 %v1764, %v1800
    %v1817 = vadd.f32 %v1765, %v1801
    %v1818 = vadd.f32 %v1766, %v1802
    %v1819 = vadd.f32 %v1767, %v1803
    %v1820 = vadd.f32 %v1768, %v1804
    %v1821 = vadd.f32 %v1769, %v1805
    %v1822 = vadd.f32 %v1770, %v1806
    %v1823 = vadd.f32 %v1771, %v1807
    %v1824 = vadd.f32 %v1772, %v1808
    %v1825 = vadd.f32 %v1773, %v1809
    %v1826 = vadd.f32 %v1774, %v1810
    %v1827 = vld [vmem:[%s1514 + $0x6] sm:$0xff]
    %v1828 = vld [vmem:[%s1514 + $0x16] sm:$0xff]
    %v1829 = vld [vmem:[%s1514 + $0x26] sm:$0xff]
    %v1830 = vld [vmem:[%s1514 + $0x36] sm:$0xff]
    %v1831 = vld [vmem:[%s1514 + $0x46] sm:$0xff]
    %v1832 = vld [vmem:[%s1514 + $0x56] sm:$0xff]
    %v1833 = vld [vmem:[%s1514 + $0x66] sm:$0xff]
    %v1834 = vld [vmem:[%s1514 + $0x76] sm:$0xff]
    %v1835 = vld [vmem:[%s1514 + $0x106] sm:$0xff]
    %v1836 = vld [vmem:[%s1514 + $0x116] sm:$0xff]
    %v1837 = vld [vmem:[%s1514 + $0x126] sm:$0xff]
    %v1838 = vld [vmem:[%s1514 + $0x136] sm:$0xff]
    %v1839 = vld [vmem:[%s1514 + $0x146] sm:$0xff]
    %v1840 = vld [vmem:[%s1514 + $0x156] sm:$0xff]
    %v1841 = vld [vmem:[%s1514 + $0x166] sm:$0xff]
    %v1842 = vld [vmem:[%s1514 + $0x176] sm:$0xff]
    %v1843 = vlaneseq
    %v1844 = vshrl.u32 %v1843, 7
    %v1845 = vsub.s32 6, %v1844
    %v1846 = vrot.slane %v563, %v1845
    %v1847 = vmul.f32 %v1827, %v1846
    %v1848 = vmul.f32 %v1828, %v1846
    %v1849 = vmul.f32 %v1829, %v1846
    %v1850 = vmul.f32 %v1830, %v1846
    %v1851 = vmul.f32 %v1831, %v1846
    %v1852 = vmul.f32 %v1832, %v1846
    %v1853 = vmul.f32 %v1833, %v1846
    %v1854 = vmul.f32 %v1834, %v1846
    %v1855 = vmul.f32 %v1835, %v1846
    %v1856 = vmul.f32 %v1836, %v1846
    %v1857 = vmul.f32 %v1837, %v1846
    %v1858 = vmul.f32 %v1838, %v1846
    %v1859 = vmul.f32 %v1839, %v1846
    %v1860 = vmul.f32 %v1840, %v1846
    %v1861 = vmul.f32 %v1841, %v1846
    %v1862 = vmul.f32 %v1842, %v1846
    %v1863 = vadd.f32 %v1811, %v1847
    %v1864 = vadd.f32 %v1812, %v1848
    %v1865 = vadd.f32 %v1813, %v1849
    %v1866 = vadd.f32 %v1814, %v1850
    %v1867 = vadd.f32 %v1815, %v1851
    %v1868 = vadd.f32 %v1816, %v1852
    %v1869 = vadd.f32 %v1817, %v1853
    %v1870 = vadd.f32 %v1818, %v1854
    %v1871 = vadd.f32 %v1819, %v1855
    %v1872 = vadd.f32 %v1820, %v1856
    %v1873 = vadd.f32 %v1821, %v1857
    %v1874 = vadd.f32 %v1822, %v1858
    %v1875 = vadd.f32 %v1823, %v1859
    %v1876 = vadd.f32 %v1824, %v1860
    %v1877 = vadd.f32 %v1825, %v1861
    %v1878 = vadd.f32 %v1826, %v1862
    %v1879 = vld [vmem:[%s1514 + $0x7] sm:$0xff]
    %v1880 = vld [vmem:[%s1514 + $0x17] sm:$0xff]
    %v1881 = vld [vmem:[%s1514 + $0x27] sm:$0xff]
    %v1882 = vld [vmem:[%s1514 + $0x37] sm:$0xff]
    %v1883 = vld [vmem:[%s1514 + $0x47] sm:$0xff]
    %v1884 = vld [vmem:[%s1514 + $0x57] sm:$0xff]
    %v1885 = vld [vmem:[%s1514 + $0x67] sm:$0xff]
    %v1886 = vld [vmem:[%s1514 + $0x77] sm:$0xff]
    %v1887 = vld [vmem:[%s1514 + $0x107] sm:$0xff]
    %v1888 = vld [vmem:[%s1514 + $0x117] sm:$0xff]
    %v1889 = vld [vmem:[%s1514 + $0x127] sm:$0xff]
    %v1890 = vld [vmem:[%s1514 + $0x137] sm:$0xff]
    %v1891 = vld [vmem:[%s1514 + $0x147] sm:$0xff]
    %v1892 = vld [vmem:[%s1514 + $0x157] sm:$0xff]
    %v1893 = vld [vmem:[%s1514 + $0x167] sm:$0xff]
    %v1894 = vld [vmem:[%s1514 + $0x177] sm:$0xff]
    %v1895 = vlaneseq
    %v1896 = vshrl.u32 %v1895, 7
    %v1897 = vsub.s32 7, %v1896
    %v1898 = vrot.slane %v563, %v1897
    %v1899 = vmul.f32 %v1879, %v1898
    %v1900 = vmul.f32 %v1880, %v1898
    %v1901 = vmul.f32 %v1881, %v1898
    %v1902 = vmul.f32 %v1882, %v1898
    %v1903 = vmul.f32 %v1883, %v1898
    %v1904 = vmul.f32 %v1884, %v1898
    %v1905 = vmul.f32 %v1885, %v1898
    %v1906 = vmul.f32 %v1886, %v1898
    %v1907 = vmul.f32 %v1887, %v1898
    %v1908 = vmul.f32 %v1888, %v1898
    %v1909 = vmul.f32 %v1889, %v1898
    %v1910 = vmul.f32 %v1890, %v1898
    %v1911 = vmul.f32 %v1891, %v1898
    %v1912 = vmul.f32 %v1892, %v1898
    %v1913 = vmul.f32 %v1893, %v1898
    %v1914 = vmul.f32 %v1894, %v1898
    %v1915 = vadd.f32 %v1863, %v1899
    %v1916 = vadd.f32 %v1864, %v1900
    %v1917 = vadd.f32 %v1865, %v1901
    %v1918 = vadd.f32 %v1866, %v1902
    %v1919 = vadd.f32 %v1867, %v1903
    %v1920 = vadd.f32 %v1868, %v1904
    %v1921 = vadd.f32 %v1869, %v1905
    %v1922 = vadd.f32 %v1870, %v1906
    %v1923 = vadd.f32 %v1871, %v1907
    %v1924 = vadd.f32 %v1872, %v1908
    %v1925 = vadd.f32 %v1873, %v1909
    %v1926 = vadd.f32 %v1874, %v1910
    %v1927 = vadd.f32 %v1875, %v1911
    %v1928 = vadd.f32 %v1876, %v1912
    %v1929 = vadd.f32 %v1877, %v1913
    %v1930 = vadd.f32 %v1878, %v1914
    %v1931 = vld [vmem:[%s1514 + $0x8] sm:$0xff]
    %v1932 = vld [vmem:[%s1514 + $0x18] sm:$0xff]
    %v1933 = vld [vmem:[%s1514 + $0x28] sm:$0xff]
    %v1934 = vld [vmem:[%s1514 + $0x38] sm:$0xff]
    %v1935 = vld [vmem:[%s1514 + $0x48] sm:$0xff]
    %v1936 = vld [vmem:[%s1514 + $0x58] sm:$0xff]
    %v1937 = vld [vmem:[%s1514 + $0x68] sm:$0xff]
    %v1938 = vld [vmem:[%s1514 + $0x78] sm:$0xff]
    %v1939 = vld [vmem:[%s1514 + $0x108] sm:$0xff]
    %v1940 = vld [vmem:[%s1514 + $0x118] sm:$0xff]
    %v1941 = vld [vmem:[%s1514 + $0x128] sm:$0xff]
    %v1942 = vld [vmem:[%s1514 + $0x138] sm:$0xff]
    %v1943 = vld [vmem:[%s1514 + $0x148] sm:$0xff]
    %v1944 = vld [vmem:[%s1514 + $0x158] sm:$0xff]
    %v1945 = vld [vmem:[%s1514 + $0x168] sm:$0xff]
    %v1946 = vld [vmem:[%s1514 + $0x178] sm:$0xff]
    %v1947 = vlaneseq
    %v1948 = vshrl.u32 %v1947, 7
    %v1949 = vsub.s32 0, %v1948
    %v1950 = vrot.slane %v564, %v1949
    %v1951 = vmul.f32 %v1931, %v1950
    %v1952 = vmul.f32 %v1932, %v1950
    %v1953 = vmul.f32 %v1933, %v1950
    %v1954 = vmul.f32 %v1934, %v1950
    %v1955 = vmul.f32 %v1935, %v1950
    %v1956 = vmul.f32 %v1936, %v1950
    %v1957 = vmul.f32 %v1937, %v1950
    %v1958 = vmul.f32 %v1938, %v1950
    %v1959 = vmul.f32 %v1939, %v1950
    %v1960 = vmul.f32 %v1940, %v1950
    %v1961 = vmul.f32 %v1941, %v1950
    %v1962 = vmul.f32 %v1942, %v1950
    %v1963 = vmul.f32 %v1943, %v1950
    %v1964 = vmul.f32 %v1944, %v1950
    %v1965 = vmul.f32 %v1945, %v1950
    %v1966 = vmul.f32 %v1946, %v1950
    %v1967 = vadd.f32 %v1915, %v1951
    %v1968 = vadd.f32 %v1916, %v1952
    %v1969 = vadd.f32 %v1917, %v1953
    %v1970 = vadd.f32 %v1918, %v1954
    %v1971 = vadd.f32 %v1919, %v1955
    %v1972 = vadd.f32 %v1920, %v1956
    %v1973 = vadd.f32 %v1921, %v1957
    %v1974 = vadd.f32 %v1922, %v1958
    %v1975 = vadd.f32 %v1923, %v1959
    %v1976 = vadd.f32 %v1924, %v1960
    %v1977 = vadd.f32 %v1925, %v1961
    %v1978 = vadd.f32 %v1926, %v1962
    %v1979 = vadd.f32 %v1927, %v1963
    %v1980 = vadd.f32 %v1928, %v1964
    %v1981 = vadd.f32 %v1929, %v1965
    %v1982 = vadd.f32 %v1930, %v1966
    %s1983 = scalar_lea.vmem [#allocation2], 48
    %v1984 = vld [vmem:[%s1983] sm:$0xff]
    %v1985 = vld [vmem:[%s1983 + $0x10] sm:$0xff]
    %v1986 = vld [vmem:[%s1983 + $0x20] sm:$0xff]
    %v1987 = vld [vmem:[%s1983 + $0x30] sm:$0xff]
    %v1988 = vld [vmem:[%s1983 + $0x40] sm:$0xff]
    %v1989 = vld [vmem:[%s1983 + $0x50] sm:$0xff]
    %v1990 = vld [vmem:[%s1983 + $0x60] sm:$0xff]
    %v1991 = vld [vmem:[%s1983 + $0x70] sm:$0xff]
    %v1992 = vld [vmem:[%s1983 + $0x100] sm:$0xff]
    %v1993 = vld [vmem:[%s1983 + $0x110] sm:$0xff]
    %v1994 = vld [vmem:[%s1983 + $0x120] sm:$0xff]
    %v1995 = vld [vmem:[%s1983 + $0x130] sm:$0xff]
    %v1996 = vld [vmem:[%s1983 + $0x140] sm:$0xff]
    %v1997 = vld [vmem:[%s1983 + $0x150] sm:$0xff]
    %v1998 = vld [vmem:[%s1983 + $0x160] sm:$0xff]
    %v1999 = vld [vmem:[%s1983 + $0x170] sm:$0xff]
    %v2000 = vlaneseq
    %v2001 = vshrl.u32 %v2000, 7
    %v2002 = vsub.s32 0, %v2001
    %v2003 = vrot.slane %v565, %v2002
    %v2004 = vmul.f32 %v1984, %v2003
    %v2005 = vmul.f32 %v1985, %v2003
    %v2006 = vmul.f32 %v1986, %v2003
    %v2007 = vmul.f32 %v1987, %v2003
    %v2008 = vmul.f32 %v1988, %v2003
    %v2009 = vmul.f32 %v1989, %v2003
    %v2010 = vmul.f32 %v1990, %v2003
    %v2011 = vmul.f32 %v1991, %v2003
    %v2012 = vmul.f32 %v1992, %v2003
    %v2013 = vmul.f32 %v1993, %v2003
    %v2014 = vmul.f32 %v1994, %v2003
    %v2015 = vmul.f32 %v1995, %v2003
    %v2016 = vmul.f32 %v1996, %v2003
    %v2017 = vmul.f32 %v1997, %v2003
    %v2018 = vmul.f32 %v1998, %v2003
    %v2019 = vmul.f32 %v1999, %v2003
    %v2020 = vadd.f32 %v1967, %v2004
    %v2021 = vadd.f32 %v1968, %v2005
    %v2022 = vadd.f32 %v1969, %v2006
    %v2023 = vadd.f32 %v1970, %v2007
    %v2024 = vadd.f32 %v1971, %v2008
    %v2025 = vadd.f32 %v1972, %v2009
    %v2026 = vadd.f32 %v1973, %v2010
    %v2027 = vadd.f32 %v1974, %v2011
    %v2028 = vadd.f32 %v1975, %v2012
    %v2029 = vadd.f32 %v1976, %v2013
    %v2030 = vadd.f32 %v1977, %v2014
    %v2031 = vadd.f32 %v1978, %v2015
    %v2032 = vadd.f32 %v1979, %v2016
    %v2033 = vadd.f32 %v1980, %v2017
    %v2034 = vadd.f32 %v1981, %v2018
    %v2035 = vadd.f32 %v1982, %v2019
    %v2036 = vld [vmem:[%s1983 + $0x1] sm:$0xff]
    %v2037 = vld [vmem:[%s1983 + $0x11] sm:$0xff]
    %v2038 = vld [vmem:[%s1983 + $0x21] sm:$0xff]
    %v2039 = vld [vmem:[%s1983 + $0x31] sm:$0xff]
    %v2040 = vld [vmem:[%s1983 + $0x41] sm:$0xff]
    %v2041 = vld [vmem:[%s1983 + $0x51] sm:$0xff]
    %v2042 = vld [vmem:[%s1983 + $0x61] sm:$0xff]
    %v2043 = vld [vmem:[%s1983 + $0x71] sm:$0xff]
    %v2044 = vld [vmem:[%s1983 + $0x101] sm:$0xff]
    %v2045 = vld [vmem:[%s1983 + $0x111] sm:$0xff]
    %v2046 = vld [vmem:[%s1983 + $0x121] sm:$0xff]
    %v2047 = vld [vmem:[%s1983 + $0x131] sm:$0xff]
    %v2048 = vld [vmem:[%s1983 + $0x141] sm:$0xff]
    %v2049 = vld [vmem:[%s1983 + $0x151] sm:$0xff]
    %v2050 = vld [vmem:[%s1983 + $0x161] sm:$0xff]
    %v2051 = vld [vmem:[%s1983 + $0x171] sm:$0xff]
    %v2052 = vlaneseq
    %v2053 = vshrl.u32 %v2052, 7
    %v2054 = vsub.s32 1, %v2053
    %v2055 = vrot.slane %v565, %v2054
    %v2056 = vmul.f32 %v2036, %v2055
    %v2057 = vmul.f32 %v2037, %v2055
    %v2058 = vmul.f32 %v2038, %v2055
    %v2059 = vmul.f32 %v2039, %v2055
    %v2060 = vmul.f32 %v2040, %v2055
    %v2061 = vmul.f32 %v2041, %v2055
    %v2062 = vmul.f32 %v2042, %v2055
    %v2063 = vmul.f32 %v2043, %v2055
    %v2064 = vmul.f32 %v2044, %v2055
    %v2065 = vmul.f32 %v2045, %v2055
    %v2066 = vmul.f32 %v2046, %v2055
    %v2067 = vmul.f32 %v2047, %v2055
    %v2068 = vmul.f32 %v2048, %v2055
    %v2069 = vmul.f32 %v2049, %v2055
    %v2070 = vmul.f32 %v2050, %v2055
    %v2071 = vmul.f32 %v2051, %v2055
    %v2072 = vadd.f32 %v2020, %v2056
    %v2073 = vadd.f32 %v2021, %v2057
    %v2074 = vadd.f32 %v2022, %v2058
    %v2075 = vadd.f32 %v2023, %v2059
    %v2076 = vadd.f32 %v2024, %v2060
    %v2077 = vadd.f32 %v2025, %v2061
    %v2078 = vadd.f32 %v2026, %v2062
    %v2079 = vadd.f32 %v2027, %v2063
    %v2080 = vadd.f32 %v2028, %v2064
    %v2081 = vadd.f32 %v2029, %v2065
    %v2082 = vadd.f32 %v2030, %v2066
    %v2083 = vadd.f32 %v2031, %v2067
    %v2084 = vadd.f32 %v2032, %v2068
    %v2085 = vadd.f32 %v2033, %v2069
    %v2086 = vadd.f32 %v2034, %v2070
    %v2087 = vadd.f32 %v2035, %v2071
    %v2088 = vld [vmem:[%s1983 + $0x2] sm:$0xff]
    %v2089 = vld [vmem:[%s1983 + $0x12] sm:$0xff]
    %v2090 = vld [vmem:[%s1983 + $0x22] sm:$0xff]
    %v2091 = vld [vmem:[%s1983 + $0x32] sm:$0xff]
    %v2092 = vld [vmem:[%s1983 + $0x42] sm:$0xff]
    %v2093 = vld [vmem:[%s1983 + $0x52] sm:$0xff]
    %v2094 = vld [vmem:[%s1983 + $0x62] sm:$0xff]
    %v2095 = vld [vmem:[%s1983 + $0x72] sm:$0xff]
    %v2096 = vld [vmem:[%s1983 + $0x102] sm:$0xff]
    %v2097 = vld [vmem:[%s1983 + $0x112] sm:$0xff]
    %v2098 = vld [vmem:[%s1983 + $0x122] sm:$0xff]
    %v2099 = vld [vmem:[%s1983 + $0x132] sm:$0xff]
    %v2100 = vld [vmem:[%s1983 + $0x142] sm:$0xff]
    %v2101 = vld [vmem:[%s1983 + $0x152] sm:$0xff]
    %v2102 = vld [vmem:[%s1983 + $0x162] sm:$0xff]
    %v2103 = vld [vmem:[%s1983 + $0x172] sm:$0xff]
    %v2104 = vlaneseq
    %v2105 = vshrl.u32 %v2104, 7
    %v2106 = vsub.s32 2, %v2105
    %v2107 = vrot.slane %v565, %v2106
    %v2108 = vmul.f32 %v2088, %v2107
    %v2109 = vmul.f32 %v2089, %v2107
    %v2110 = vmul.f32 %v2090, %v2107
    %v2111 = vmul.f32 %v2091, %v2107
    %v2112 = vmul.f32 %v2092, %v2107
    %v2113 = vmul.f32 %v2093, %v2107
    %v2114 = vmul.f32 %v2094, %v2107
    %v2115 = vmul.f32 %v2095, %v2107
    %v2116 = vmul.f32 %v2096, %v2107
    %v2117 = vmul.f32 %v2097, %v2107
    %v2118 = vmul.f32 %v2098, %v2107
    %v2119 = vmul.f32 %v2099, %v2107
    %v2120 = vmul.f32 %v2100, %v2107
    %v2121 = vmul.f32 %v2101, %v2107
    %v2122 = vmul.f32 %v2102, %v2107
    %v2123 = vmul.f32 %v2103, %v2107
    %v2124 = vadd.f32 %v2072, %v2108
    %v2125 = vadd.f32 %v2073, %v2109
    %v2126 = vadd.f32 %v2074, %v2110
    %v2127 = vadd.f32 %v2075, %v2111
    %v2128 = vadd.f32 %v2076, %v2112
    %v2129 = vadd.f32 %v2077, %v2113
    %v2130 = vadd.f32 %v2078, %v2114
    %v2131 = vadd.f32 %v2079, %v2115
    %v2132 = vadd.f32 %v2080, %v2116
    %v2133 = vadd.f32 %v2081, %v2117
    %v2134 = vadd.f32 %v2082, %v2118
    %v2135 = vadd.f32 %v2083, %v2119
    %v2136 = vadd.f32 %v2084, %v2120
    %v2137 = vadd.f32 %v2085, %v2121
    %v2138 = vadd.f32 %v2086, %v2122
    %v2139 = vadd.f32 %v2087, %v2123
    %v2140 = vld [vmem:[%s1983 + $0x3] sm:$0xff]
    %v2141 = vld [vmem:[%s1983 + $0x13] sm:$0xff]
    %v2142 = vld [vmem:[%s1983 + $0x23] sm:$0xff]
    %v2143 = vld [vmem:[%s1983 + $0x33] sm:$0xff]
    %v2144 = vld [vmem:[%s1983 + $0x43] sm:$0xff]
    %v2145 = vld [vmem:[%s1983 + $0x53] sm:$0xff]
    %v2146 = vld [vmem:[%s1983 + $0x63] sm:$0xff]
    %v2147 = vld [vmem:[%s1983 + $0x73] sm:$0xff]
    %v2148 = vld [vmem:[%s1983 + $0x103] sm:$0xff]
    %v2149 = vld [vmem:[%s1983 + $0x113] sm:$0xff]
    %v2150 = vld [vmem:[%s1983 + $0x123] sm:$0xff]
    %v2151 = vld [vmem:[%s1983 + $0x133] sm:$0xff]
    %v2152 = vld [vmem:[%s1983 + $0x143] sm:$0xff]
    %v2153 = vld [vmem:[%s1983 + $0x153] sm:$0xff]
    %v2154 = vld [vmem:[%s1983 + $0x163] sm:$0xff]
    %v2155 = vld [vmem:[%s1983 + $0x173] sm:$0xff]
    %v2156 = vlaneseq
    %v2157 = vshrl.u32 %v2156, 7
    %v2158 = vsub.s32 3, %v2157
    %v2159 = vrot.slane %v565, %v2158
    %v2160 = vmul.f32 %v2140, %v2159
    %v2161 = vmul.f32 %v2141, %v2159
    %v2162 = vmul.f32 %v2142, %v2159
    %v2163 = vmul.f32 %v2143, %v2159
    %v2164 = vmul.f32 %v2144, %v2159
    %v2165 = vmul.f32 %v2145, %v2159
    %v2166 = vmul.f32 %v2146, %v2159
    %v2167 = vmul.f32 %v2147, %v2159
    %v2168 = vmul.f32 %v2148, %v2159
    %v2169 = vmul.f32 %v2149, %v2159
    %v2170 = vmul.f32 %v2150, %v2159
    %v2171 = vmul.f32 %v2151, %v2159
    %v2172 = vmul.f32 %v2152, %v2159
    %v2173 = vmul.f32 %v2153, %v2159
    %v2174 = vmul.f32 %v2154, %v2159
    %v2175 = vmul.f32 %v2155, %v2159
    %v2176 = vadd.f32 %v2124, %v2160
    %v2177 = vadd.f32 %v2125, %v2161
    %v2178 = vadd.f32 %v2126, %v2162
    %v2179 = vadd.f32 %v2127, %v2163
    %v2180 = vadd.f32 %v2128, %v2164
    %v2181 = vadd.f32 %v2129, %v2165
    %v2182 = vadd.f32 %v2130, %v2166
    %v2183 = vadd.f32 %v2131, %v2167
    %v2184 = vadd.f32 %v2132, %v2168
    %v2185 = vadd.f32 %v2133, %v2169
    %v2186 = vadd.f32 %v2134, %v2170
    %v2187 = vadd.f32 %v2135, %v2171
    %v2188 = vadd.f32 %v2136, %v2172
    %v2189 = vadd.f32 %v2137, %v2173
    %v2190 = vadd.f32 %v2138, %v2174
    %v2191 = vadd.f32 %v2139, %v2175
    %v2192 = vld [vmem:[%s1983 + $0x4] sm:$0xff]
    %v2193 = vld [vmem:[%s1983 + $0x14] sm:$0xff]
    %v2194 = vld [vmem:[%s1983 + $0x24] sm:$0xff]
    %v2195 = vld [vmem:[%s1983 + $0x34] sm:$0xff]
    %v2196 = vld [vmem:[%s1983 + $0x44] sm:$0xff]
    %v2197 = vld [vmem:[%s1983 + $0x54] sm:$0xff]
    %v2198 = vld [vmem:[%s1983 + $0x64] sm:$0xff]
    %v2199 = vld [vmem:[%s1983 + $0x74] sm:$0xff]
    %v2200 = vld [vmem:[%s1983 + $0x104] sm:$0xff]
    %v2201 = vld [vmem:[%s1983 + $0x114] sm:$0xff]
    %v2202 = vld [vmem:[%s1983 + $0x124] sm:$0xff]
    %v2203 = vld [vmem:[%s1983 + $0x134] sm:$0xff]
    %v2204 = vld [vmem:[%s1983 + $0x144] sm:$0xff]
    %v2205 = vld [vmem:[%s1983 + $0x154] sm:$0xff]
    %v2206 = vld [vmem:[%s1983 + $0x164] sm:$0xff]
    %v2207 = vld [vmem:[%s1983 + $0x174] sm:$0xff]
    %v2208 = vlaneseq
    %v2209 = vshrl.u32 %v2208, 7
    %v2210 = vsub.s32 4, %v2209
    %v2211 = vrot.slane %v565, %v2210
    %v2212 = vmul.f32 %v2192, %v2211
    %v2213 = vmul.f32 %v2193, %v2211
    %v2214 = vmul.f32 %v2194, %v2211
    %v2215 = vmul.f32 %v2195, %v2211
    %v2216 = vmul.f32 %v2196, %v2211
    %v2217 = vmul.f32 %v2197, %v2211
    %v2218 = vmul.f32 %v2198, %v2211
    %v2219 = vmul.f32 %v2199, %v2211
    %v2220 = vmul.f32 %v2200, %v2211
    %v2221 = vmul.f32 %v2201, %v2211
    %v2222 = vmul.f32 %v2202, %v2211
    %v2223 = vmul.f32 %v2203, %v2211
    %v2224 = vmul.f32 %v2204, %v2211
    %v2225 = vmul.f32 %v2205, %v2211
    %v2226 = vmul.f32 %v2206, %v2211
    %v2227 = vmul.f32 %v2207, %v2211
    %v2228 = vadd.f32 %v2176, %v2212
    %v2229 = vadd.f32 %v2177, %v2213
    %v2230 = vadd.f32 %v2178, %v2214
    %v2231 = vadd.f32 %v2179, %v2215
    %v2232 = vadd.f32 %v2180, %v2216
    %v2233 = vadd.f32 %v2181, %v2217
    %v2234 = vadd.f32 %v2182, %v2218
    %v2235 = vadd.f32 %v2183, %v2219
    %v2236 = vadd.f32 %v2184, %v2220
    %v2237 = vadd.f32 %v2185, %v2221
    %v2238 = vadd.f32 %v2186, %v2222
    %v2239 = vadd.f32 %v2187, %v2223
    %v2240 = vadd.f32 %v2188, %v2224
    %v2241 = vadd.f32 %v2189, %v2225
    %v2242 = vadd.f32 %v2190, %v2226
    %v2243 = vadd.f32 %v2191, %v2227
    %v2244 = vld [vmem:[%s1983 + $0x5] sm:$0xff]
    %v2245 = vld [vmem:[%s1983 + $0x15] sm:$0xff]
    %v2246 = vld [vmem:[%s1983 + $0x25] sm:$0xff]
    %v2247 = vld [vmem:[%s1983 + $0x35] sm:$0xff]
    %v2248 = vld [vmem:[%s1983 + $0x45] sm:$0xff]
    %v2249 = vld [vmem:[%s1983 + $0x55] sm:$0xff]
    %v2250 = vld [vmem:[%s1983 + $0x65] sm:$0xff]
    %v2251 = vld [vmem:[%s1983 + $0x75] sm:$0xff]
    %v2252 = vld [vmem:[%s1983 + $0x105] sm:$0xff]
    %v2253 = vld [vmem:[%s1983 + $0x115] sm:$0xff]
    %v2254 = vld [vmem:[%s1983 + $0x125] sm:$0xff]
    %v2255 = vld [vmem:[%s1983 + $0x135] sm:$0xff]
    %v2256 = vld [vmem:[%s1983 + $0x145] sm:$0xff]
    %v2257 = vld [vmem:[%s1983 + $0x155] sm:$0xff]
    %v2258 = vld [vmem:[%s1983 + $0x165] sm:$0xff]
    %v2259 = vld [vmem:[%s1983 + $0x175] sm:$0xff]
    %v2260 = vlaneseq
    %v2261 = vshrl.u32 %v2260, 7
    %v2262 = vsub.s32 5, %v2261
    %v2263 = vrot.slane %v565, %v2262
    %v2264 = vmul.f32 %v2244, %v2263
    %v2265 = vmul.f32 %v2245, %v2263
    %v2266 = vmul.f32 %v2246, %v2263
    %v2267 = vmul.f32 %v2247, %v2263
    %v2268 = vmul.f32 %v2248, %v2263
    %v2269 = vmul.f32 %v2249, %v2263
    %v2270 = vmul.f32 %v2250, %v2263
    %v2271 = vmul.f32 %v2251, %v2263
    %v2272 = vmul.f32 %v2252, %v2263
    %v2273 = vmul.f32 %v2253, %v2263
    %v2274 = vmul.f32 %v2254, %v2263
    %v2275 = vmul.f32 %v2255, %v2263
    %v2276 = vmul.f32 %v2256, %v2263
    %v2277 = vmul.f32 %v2257, %v2263
    %v2278 = vmul.f32 %v2258, %v2263
    %v2279 = vmul.f32 %v2259, %v2263
    %v2280 = vadd.f32 %v2228, %v2264
    %v2281 = vadd.f32 %v2229, %v2265
    %v2282 = vadd.f32 %v2230, %v2266
    %v2283 = vadd.f32 %v2231, %v2267
    %v2284 = vadd.f32 %v2232, %v2268
    %v2285 = vadd.f32 %v2233, %v2269
    %v2286 = vadd.f32 %v2234, %v2270
    %v2287 = vadd.f32 %v2235, %v2271
    %v2288 = vadd.f32 %v2236, %v2272
    %v2289 = vadd.f32 %v2237, %v2273
    %v2290 = vadd.f32 %v2238, %v2274
    %v2291 = vadd.f32 %v2239, %v2275
    %v2292 = vadd.f32 %v2240, %v2276
    %v2293 = vadd.f32 %v2241, %v2277
    %v2294 = vadd.f32 %v2242, %v2278
    %v2295 = vadd.f32 %v2243, %v2279
    %v2296 = vld [vmem:[%s1983 + $0x6] sm:$0xff]
    %v2297 = vld [vmem:[%s1983 + $0x16] sm:$0xff]
    %v2298 = vld [vmem:[%s1983 + $0x26] sm:$0xff]
    %v2299 = vld [vmem:[%s1983 + $0x36] sm:$0xff]
    %v2300 = vld [vmem:[%s1983 + $0x46] sm:$0xff]
    %v2301 = vld [vmem:[%s1983 + $0x56] sm:$0xff]
    %v2302 = vld [vmem:[%s1983 + $0x66] sm:$0xff]
    %v2303 = vld [vmem:[%s1983 + $0x76] sm:$0xff]
    %v2304 = vld [vmem:[%s1983 + $0x106] sm:$0xff]
    %v2305 = vld [vmem:[%s1983 + $0x116] sm:$0xff]
    %v2306 = vld [vmem:[%s1983 + $0x126] sm:$0xff]
    %v2307 = vld [vmem:[%s1983 + $0x136] sm:$0xff]
    %v2308 = vld [vmem:[%s1983 + $0x146] sm:$0xff]
    %v2309 = vld [vmem:[%s1983 + $0x156] sm:$0xff]
    %v2310 = vld [vmem:[%s1983 + $0x166] sm:$0xff]
    %v2311 = vld [vmem:[%s1983 + $0x176] sm:$0xff]
    %v2312 = vlaneseq
    %v2313 = vshrl.u32 %v2312, 7
    %v2314 = vsub.s32 6, %v2313
    %v2315 = vrot.slane %v565, %v2314
    %v2316 = vmul.f32 %v2296, %v2315
    %v2317 = vmul.f32 %v2297, %v2315
    %v2318 = vmul.f32 %v2298, %v2315
    %v2319 = vmul.f32 %v2299, %v2315
    %v2320 = vmul.f32 %v2300, %v2315
    %v2321 = vmul.f32 %v2301, %v2315
    %v2322 = vmul.f32 %v2302, %v2315
    %v2323 = vmul.f32 %v2303, %v2315
    %v2324 = vmul.f32 %v2304, %v2315
    %v2325 = vmul.f32 %v2305, %v2315
    %v2326 = vmul.f32 %v2306, %v2315
    %v2327 = vmul.f32 %v2307, %v2315
    %v2328 = vmul.f32 %v2308, %v2315
    %v2329 = vmul.f32 %v2309, %v2315
    %v2330 = vmul.f32 %v2310, %v2315
    %v2331 = vmul.f32 %v2311, %v2315
    %v2332 = vadd.f32 %v2280, %v2316
    %v2333 = vadd.f32 %v2281, %v2317
    %v2334 = vadd.f32 %v2282, %v2318
    %v2335 = vadd.f32 %v2283, %v2319
    %v2336 = vadd.f32 %v2284, %v2320
    %v2337 = vadd.f32 %v2285, %v2321
    %v2338 = vadd.f32 %v2286, %v2322
    %v2339 = vadd.f32 %v2287, %v2323
    %v2340 = vadd.f32 %v2288, %v2324
    %v2341 = vadd.f32 %v2289, %v2325
    %v2342 = vadd.f32 %v2290, %v2326
    %v2343 = vadd.f32 %v2291, %v2327
    %v2344 = vadd.f32 %v2292, %v2328
    %v2345 = vadd.f32 %v2293, %v2329
    %v2346 = vadd.f32 %v2294, %v2330
    %v2347 = vadd.f32 %v2295, %v2331
    %v2348 = vld [vmem:[%s1983 + $0x7] sm:$0xff]
    %v2349 = vld [vmem:[%s1983 + $0x17] sm:$0xff]
    %v2350 = vld [vmem:[%s1983 + $0x27] sm:$0xff]
    %v2351 = vld [vmem:[%s1983 + $0x37] sm:$0xff]
    %v2352 = vld [vmem:[%s1983 + $0x47] sm:$0xff]
    %v2353 = vld [vmem:[%s1983 + $0x57] sm:$0xff]
    %v2354 = vld [vmem:[%s1983 + $0x67] sm:$0xff]
    %v2355 = vld [vmem:[%s1983 + $0x77] sm:$0xff]
    %v2356 = vld [vmem:[%s1983 + $0x107] sm:$0xff]
    %v2357 = vld [vmem:[%s1983 + $0x117] sm:$0xff]
    %v2358 = vld [vmem:[%s1983 + $0x127] sm:$0xff]
    %v2359 = vld [vmem:[%s1983 + $0x137] sm:$0xff]
    %v2360 = vld [vmem:[%s1983 + $0x147] sm:$0xff]
    %v2361 = vld [vmem:[%s1983 + $0x157] sm:$0xff]
    %v2362 = vld [vmem:[%s1983 + $0x167] sm:$0xff]
    %v2363 = vld [vmem:[%s1983 + $0x177] sm:$0xff]
    %v2364 = vlaneseq
    %v2365 = vshrl.u32 %v2364, 7
    %v2366 = vsub.s32 7, %v2365
    %v2367 = vrot.slane %v565, %v2366
    %v2368 = vmul.f32 %v2348, %v2367
    %v2369 = vmul.f32 %v2349, %v2367
    %v2370 = vmul.f32 %v2350, %v2367
    %v2371 = vmul.f32 %v2351, %v2367
    %v2372 = vmul.f32 %v2352, %v2367
    %v2373 = vmul.f32 %v2353, %v2367
    %v2374 = vmul.f32 %v2354, %v2367
    %v2375 = vmul.f32 %v2355, %v2367
    %v2376 = vmul.f32 %v2356, %v2367
    %v2377 = vmul.f32 %v2357, %v2367
    %v2378 = vmul.f32 %v2358, %v2367
    %v2379 = vmul.f32 %v2359, %v2367
    %v2380 = vmul.f32 %v2360, %v2367
    %v2381 = vmul.f32 %v2361, %v2367
    %v2382 = vmul.f32 %v2362, %v2367
    %v2383 = vmul.f32 %v2363, %v2367
    %v2384 = vadd.f32 %v2332, %v2368
    %v2385 = vadd.f32 %v2333, %v2369
    %v2386 = vadd.f32 %v2334, %v2370
    %v2387 = vadd.f32 %v2335, %v2371
    %v2388 = vadd.f32 %v2336, %v2372
    %v2389 = vadd.f32 %v2337, %v2373
    %v2390 = vadd.f32 %v2338, %v2374
    %v2391 = vadd.f32 %v2339, %v2375
    %v2392 = vadd.f32 %v2340, %v2376
    %v2393 = vadd.f32 %v2341, %v2377
    %v2394 = vadd.f32 %v2342, %v2378
    %v2395 = vadd.f32 %v2343, %v2379
    %v2396 = vadd.f32 %v2344, %v2380
    %v2397 = vadd.f32 %v2345, %v2381
    %v2398 = vadd.f32 %v2346, %v2382
    %v2399 = vadd.f32 %v2347, %v2383
    %v2400 = vld [vmem:[%s1983 + $0x8] sm:$0xff]
    %v2401 = vld [vmem:[%s1983 + $0x18] sm:$0xff]
    %v2402 = vld [vmem:[%s1983 + $0x28] sm:$0xff]
    %v2403 = vld [vmem:[%s1983 + $0x38] sm:$0xff]
    %v2404 = vld [vmem:[%s1983 + $0x48] sm:$0xff]
    %v2405 = vld [vmem:[%s1983 + $0x58] sm:$0xff]
    %v2406 = vld [vmem:[%s1983 + $0x68] sm:$0xff]
    %v2407 = vld [vmem:[%s1983 + $0x78] sm:$0xff]
    %v2408 = vld [vmem:[%s1983 + $0x108] sm:$0xff]
    %v2409 = vld [vmem:[%s1983 + $0x118] sm:$0xff]
    %v2410 = vld [vmem:[%s1983 + $0x128] sm:$0xff]
    %v2411 = vld [vmem:[%s1983 + $0x138] sm:$0xff]
    %v2412 = vld [vmem:[%s1983 + $0x148] sm:$0xff]
    %v2413 = vld [vmem:[%s1983 + $0x158] sm:$0xff]
    %v2414 = vld [vmem:[%s1983 + $0x168] sm:$0xff]
    %v2415 = vld [vmem:[%s1983 + $0x178] sm:$0xff]
    %v2416 = vlaneseq
    %v2417 = vshrl.u32 %v2416, 7
    %v2418 = vsub.s32 0, %v2417
    %v2419 = vrot.slane %v566, %v2418
    %v2420 = vmul.f32 %v2400, %v2419
    %v2421 = vmul.f32 %v2401, %v2419
    %v2422 = vmul.f32 %v2402, %v2419
    %v2423 = vmul.f32 %v2403, %v2419
    %v2424 = vmul.f32 %v2404, %v2419
    %v2425 = vmul.f32 %v2405, %v2419
    %v2426 = vmul.f32 %v2406, %v2419
    %v2427 = vmul.f32 %v2407, %v2419
    %v2428 = vmul.f32 %v2408, %v2419
    %v2429 = vmul.f32 %v2409, %v2419
    %v2430 = vmul.f32 %v2410, %v2419
    %v2431 = vmul.f32 %v2411, %v2419
    %v2432 = vmul.f32 %v2412, %v2419
    %v2433 = vmul.f32 %v2413, %v2419
    %v2434 = vmul.f32 %v2414, %v2419
    %v2435 = vmul.f32 %v2415, %v2419
    %v2436 = vadd.f32 %v2384, %v2420
    %v2437 = vadd.f32 %v2385, %v2421
    %v2438 = vadd.f32 %v2386, %v2422
    %v2439 = vadd.f32 %v2387, %v2423
    %v2440 = vadd.f32 %v2388, %v2424
    %v2441 = vadd.f32 %v2389, %v2425
    %v2442 = vadd.f32 %v2390, %v2426
    %v2443 = vadd.f32 %v2391, %v2427
    %v2444 = vadd.f32 %v2392, %v2428
    %v2445 = vadd.f32 %v2393, %v2429
    %v2446 = vadd.f32 %v2394, %v2430
    %v2447 = vadd.f32 %v2395, %v2431
    %v2448 = vadd.f32 %v2396, %v2432
    %v2449 = vadd.f32 %v2397, %v2433
    %v2450 = vadd.f32 %v2398, %v2434
    %v2451 = vadd.f32 %v2399, %v2435
    %v2452 = vld [vmem:[%s527] sm:$0xff]
    %v2453 = vld [vmem:[%s527 + $0x10] sm:$0xff]
    %v2454 = vld [vmem:[%s527 + $0x20] sm:$0xff]
    %v2455 = vld [vmem:[%s527 + $0x30] sm:$0xff]
    %v2456 = vld [vmem:[%s527 + $0x40] sm:$0xff]
    %v2457 = vld [vmem:[%s527 + $0x50] sm:$0xff]
    %v2458 = vld [vmem:[%s527 + $0x60] sm:$0xff]
    %v2459 = vld [vmem:[%s527 + $0x70] sm:$0xff]
    %v2460 = vld [vmem:[%s527 + $0x100] sm:$0xff]
    %v2461 = vld [vmem:[%s527 + $0x110] sm:$0xff]
    %v2462 = vld [vmem:[%s527 + $0x120] sm:$0xff]
    %v2463 = vld [vmem:[%s527 + $0x130] sm:$0xff]
    %v2464 = vld [vmem:[%s527 + $0x140] sm:$0xff]
    %v2465 = vld [vmem:[%s527 + $0x150] sm:$0xff]
    %v2466 = vld [vmem:[%s527 + $0x160] sm:$0xff]
    %v2467 = vld [vmem:[%s527 + $0x170] sm:$0xff]
    %v2468 = vlaneseq
    %v2469 = vshrl.u32 %v2468, 7
    %v2470 = vsub.s32 0, %v2469
    %v2471 = vrot.slane %v567, %v2470
    %v2472 = vmul.f32 %v2452, %v2471
    %v2473 = vmul.f32 %v2453, %v2471
    %v2474 = vmul.f32 %v2454, %v2471
    %v2475 = vmul.f32 %v2455, %v2471
    %v2476 = vmul.f32 %v2456, %v2471
    %v2477 = vmul.f32 %v2457, %v2471
    %v2478 = vmul.f32 %v2458, %v2471
    %v2479 = vmul.f32 %v2459, %v2471
    %v2480 = vmul.f32 %v2460, %v2471
    %v2481 = vmul.f32 %v2461, %v2471
    %v2482 = vmul.f32 %v2462, %v2471
    %v2483 = vmul.f32 %v2463, %v2471
    %v2484 = vmul.f32 %v2464, %v2471
    %v2485 = vmul.f32 %v2465, %v2471
    %v2486 = vmul.f32 %v2466, %v2471
    %v2487 = vmul.f32 %v2467, %v2471
    %v2488 = vadd.f32 %v2436, %v2472
    %v2489 = vadd.f32 %v2437, %v2473
    %v2490 = vadd.f32 %v2438, %v2474
    %v2491 = vadd.f32 %v2439, %v2475
    %v2492 = vadd.f32 %v2440, %v2476
    %v2493 = vadd.f32 %v2441, %v2477
    %v2494 = vadd.f32 %v2442, %v2478
    %v2495 = vadd.f32 %v2443, %v2479
    %v2496 = vadd.f32 %v2444, %v2480
    %v2497 = vadd.f32 %v2445, %v2481
    %v2498 = vadd.f32 %v2446, %v2482
    %v2499 = vadd.f32 %v2447, %v2483
    %v2500 = vadd.f32 %v2448, %v2484
    %v2501 = vadd.f32 %v2449, %v2485
    %v2502 = vadd.f32 %v2450, %v2486
    %v2503 = vadd.f32 %v2451, %v2487
    %v2504 = vld [vmem:[%s527 + $0x1] sm:$0xff]
    %v2505 = vld [vmem:[%s527 + $0x11] sm:$0xff]
    %v2506 = vld [vmem:[%s527 + $0x21] sm:$0xff]
    %v2507 = vld [vmem:[%s527 + $0x31] sm:$0xff]
    %v2508 = vld [vmem:[%s527 + $0x41] sm:$0xff]
    %v2509 = vld [vmem:[%s527 + $0x51] sm:$0xff]
    %v2510 = vld [vmem:[%s527 + $0x61] sm:$0xff]
    %v2511 = vld [vmem:[%s527 + $0x71] sm:$0xff]
    %v2512 = vld [vmem:[%s527 + $0x101] sm:$0xff]
    %v2513 = vld [vmem:[%s527 + $0x111] sm:$0xff]
    %v2514 = vld [vmem:[%s527 + $0x121] sm:$0xff]
    %v2515 = vld [vmem:[%s527 + $0x131] sm:$0xff]
    %v2516 = vld [vmem:[%s527 + $0x141] sm:$0xff]
    %v2517 = vld [vmem:[%s527 + $0x151] sm:$0xff]
    %v2518 = vld [vmem:[%s527 + $0x161] sm:$0xff]
    %v2519 = vld [vmem:[%s527 + $0x171] sm:$0xff]
    %v2520 = vlaneseq
    %v2521 = vshrl.u32 %v2520, 7
    %v2522 = vsub.s32 1, %v2521
    %v2523 = vrot.slane %v567, %v2522
    %v2524 = vmul.f32 %v2504, %v2523
    %v2525 = vmul.f32 %v2505, %v2523
    %v2526 = vmul.f32 %v2506, %v2523
    %v2527 = vmul.f32 %v2507, %v2523
    %v2528 = vmul.f32 %v2508, %v2523
    %v2529 = vmul.f32 %v2509, %v2523
    %v2530 = vmul.f32 %v2510, %v2523
    %v2531 = vmul.f32 %v2511, %v2523
    %v2532 = vmul.f32 %v2512, %v2523
    %v2533 = vmul.f32 %v2513, %v2523
    %v2534 = vmul.f32 %v2514, %v2523
    %v2535 = vmul.f32 %v2515, %v2523
    %v2536 = vmul.f32 %v2516, %v2523
    %v2537 = vmul.f32 %v2517, %v2523
    %v2538 = vmul.f32 %v2518, %v2523
    %v2539 = vmul.f32 %v2519, %v2523
    %v2540 = vadd.f32 %v2488, %v2524
    %v2541 = vadd.f32 %v2489, %v2525
    %v2542 = vadd.f32 %v2490, %v2526
    %v2543 = vadd.f32 %v2491, %v2527
    %v2544 = vadd.f32 %v2492, %v2528
    %v2545 = vadd.f32 %v2493, %v2529
    %v2546 = vadd.f32 %v2494, %v2530
    %v2547 = vadd.f32 %v2495, %v2531
    %v2548 = vadd.f32 %v2496, %v2532
    %v2549 = vadd.f32 %v2497, %v2533
    %v2550 = vadd.f32 %v2498, %v2534
    %v2551 = vadd.f32 %v2499, %v2535
    %v2552 = vadd.f32 %v2500, %v2536
    %v2553 = vadd.f32 %v2501, %v2537
    %v2554 = vadd.f32 %v2502, %v2538
    %v2555 = vadd.f32 %v2503, %v2539
    %v2556 = vld [vmem:[%s527 + $0x2] sm:$0xff]
    %v2557 = vld [vmem:[%s527 + $0x12] sm:$0xff]
    %v2558 = vld [vmem:[%s527 + $0x22] sm:$0xff]
    %v2559 = vld [vmem:[%s527 + $0x32] sm:$0xff]
    %v2560 = vld [vmem:[%s527 + $0x42] sm:$0xff]
    %v2561 = vld [vmem:[%s527 + $0x52] sm:$0xff]
    %v2562 = vld [vmem:[%s527 + $0x62] sm:$0xff]
    %v2563 = vld [vmem:[%s527 + $0x72] sm:$0xff]
    %v2564 = vld [vmem:[%s527 + $0x102] sm:$0xff]
    %v2565 = vld [vmem:[%s527 + $0x112] sm:$0xff]
    %v2566 = vld [vmem:[%s527 + $0x122] sm:$0xff]
    %v2567 = vld [vmem:[%s527 + $0x132] sm:$0xff]
    %v2568 = vld [vmem:[%s527 + $0x142] sm:$0xff]
    %v2569 = vld [vmem:[%s527 + $0x152] sm:$0xff]
    %v2570 = vld [vmem:[%s527 + $0x162] sm:$0xff]
    %v2571 = vld [vmem:[%s527 + $0x172] sm:$0xff]
    %v2572 = vlaneseq
    %v2573 = vshrl.u32 %v2572, 7
    %v2574 = vsub.s32 2, %v2573
    %v2575 = vrot.slane %v567, %v2574
    %v2576 = vmul.f32 %v2556, %v2575
    %v2577 = vmul.f32 %v2557, %v2575
    %v2578 = vmul.f32 %v2558, %v2575
    %v2579 = vmul.f32 %v2559, %v2575
    %v2580 = vmul.f32 %v2560, %v2575
    %v2581 = vmul.f32 %v2561, %v2575
    %v2582 = vmul.f32 %v2562, %v2575
    %v2583 = vmul.f32 %v2563, %v2575
    %v2584 = vmul.f32 %v2564, %v2575
    %v2585 = vmul.f32 %v2565, %v2575
    %v2586 = vmul.f32 %v2566, %v2575
    %v2587 = vmul.f32 %v2567, %v2575
    %v2588 = vmul.f32 %v2568, %v2575
    %v2589 = vmul.f32 %v2569, %v2575
    %v2590 = vmul.f32 %v2570, %v2575
    %v2591 = vmul.f32 %v2571, %v2575
    %v2592 = vadd.f32 %v2540, %v2576
    %v2593 = vadd.f32 %v2541, %v2577
    %v2594 = vadd.f32 %v2542, %v2578
    %v2595 = vadd.f32 %v2543, %v2579
    %v2596 = vadd.f32 %v2544, %v2580
    %v2597 = vadd.f32 %v2545, %v2581
    %v2598 = vadd.f32 %v2546, %v2582
    %v2599 = vadd.f32 %v2547, %v2583
    %v2600 = vadd.f32 %v2548, %v2584
    %v2601 = vadd.f32 %v2549, %v2585
    %v2602 = vadd.f32 %v2550, %v2586
    %v2603 = vadd.f32 %v2551, %v2587
    %v2604 = vadd.f32 %v2552, %v2588
    %v2605 = vadd.f32 %v2553, %v2589
    %v2606 = vadd.f32 %v2554, %v2590
    %v2607 = vadd.f32 %v2555, %v2591
    %v2608 = vld [vmem:[%s527 + $0x3] sm:$0xff]
    %v2609 = vld [vmem:[%s527 + $0x13] sm:$0xff]
    %v2610 = vld [vmem:[%s527 + $0x23] sm:$0xff]
    %v2611 = vld [vmem:[%s527 + $0x33] sm:$0xff]
    %v2612 = vld [vmem:[%s527 + $0x43] sm:$0xff]
    %v2613 = vld [vmem:[%s527 + $0x53] sm:$0xff]
    %v2614 = vld [vmem:[%s527 + $0x63] sm:$0xff]
    %v2615 = vld [vmem:[%s527 + $0x73] sm:$0xff]
    %v2616 = vld [vmem:[%s527 + $0x103] sm:$0xff]
    %v2617 = vld [vmem:[%s527 + $0x113] sm:$0xff]
    %v2618 = vld [vmem:[%s527 + $0x123] sm:$0xff]
    %v2619 = vld [vmem:[%s527 + $0x133] sm:$0xff]
    %v2620 = vld [vmem:[%s527 + $0x143] sm:$0xff]
    %v2621 = vld [vmem:[%s527 + $0x153] sm:$0xff]
    %v2622 = vld [vmem:[%s527 + $0x163] sm:$0xff]
    %v2623 = vld [vmem:[%s527 + $0x173] sm:$0xff]
    %v2624 = vlaneseq
    %v2625 = vshrl.u32 %v2624, 7
    %v2626 = vsub.s32 3, %v2625
    %v2627 = vrot.slane %v567, %v2626
    %v2628 = vmul.f32 %v2608, %v2627
    %v2629 = vmul.f32 %v2609, %v2627
    %v2630 = vmul.f32 %v2610, %v2627
    %v2631 = vmul.f32 %v2611, %v2627
    %v2632 = vmul.f32 %v2612, %v2627
    %v2633 = vmul.f32 %v2613, %v2627
    %v2634 = vmul.f32 %v2614, %v2627
    %v2635 = vmul.f32 %v2615, %v2627
    %v2636 = vmul.f32 %v2616, %v2627
    %v2637 = vmul.f32 %v2617, %v2627
    %v2638 = vmul.f32 %v2618, %v2627
    %v2639 = vmul.f32 %v2619, %v2627
    %v2640 = vmul.f32 %v2620, %v2627
    %v2641 = vmul.f32 %v2621, %v2627
    %v2642 = vmul.f32 %v2622, %v2627
    %v2643 = vmul.f32 %v2623, %v2627
    %v2644 = vadd.f32 %v2592, %v2628
    %v2645 = vadd.f32 %v2593, %v2629
    %v2646 = vadd.f32 %v2594, %v2630
    %v2647 = vadd.f32 %v2595, %v2631
    %v2648 = vadd.f32 %v2596, %v2632
    %v2649 = vadd.f32 %v2597, %v2633
    %v2650 = vadd.f32 %v2598, %v2634
    %v2651 = vadd.f32 %v2599, %v2635
    %v2652 = vadd.f32 %v2600, %v2636
    %v2653 = vadd.f32 %v2601, %v2637
    %v2654 = vadd.f32 %v2602, %v2638
    %v2655 = vadd.f32 %v2603, %v2639
    %v2656 = vadd.f32 %v2604, %v2640
    %v2657 = vadd.f32 %v2605, %v2641
    %v2658 = vadd.f32 %v2606, %v2642
    %v2659 = vadd.f32 %v2607, %v2643
    %v2660 = vld [vmem:[%s527 + $0x4] sm:$0xff]
    %v2661 = vld [vmem:[%s527 + $0x14] sm:$0xff]
    %v2662 = vld [vmem:[%s527 + $0x24] sm:$0xff]
    %v2663 = vld [vmem:[%s527 + $0x34] sm:$0xff]
    %v2664 = vld [vmem:[%s527 + $0x44] sm:$0xff]
    %v2665 = vld [vmem:[%s527 + $0x54] sm:$0xff]
    %v2666 = vld [vmem:[%s527 + $0x64] sm:$0xff]
    %v2667 = vld [vmem:[%s527 + $0x74] sm:$0xff]
    %v2668 = vld [vmem:[%s527 + $0x104] sm:$0xff]
    %v2669 = vld [vmem:[%s527 + $0x114] sm:$0xff]
    %v2670 = vld [vmem:[%s527 + $0x124] sm:$0xff]
    %v2671 = vld [vmem:[%s527 + $0x134] sm:$0xff]
    %v2672 = vld [vmem:[%s527 + $0x144] sm:$0xff]
    %v2673 = vld [vmem:[%s527 + $0x154] sm:$0xff]
    %v2674 = vld [vmem:[%s527 + $0x164] sm:$0xff]
    %v2675 = vld [vmem:[%s527 + $0x174] sm:$0xff]
    %v2676 = vlaneseq
    %v2677 = vshrl.u32 %v2676, 7
    %v2678 = vsub.s32 4, %v2677
    %v2679 = vrot.slane %v567, %v2678
    %v2680 = vmul.f32 %v2660, %v2679
    %v2681 = vmul.f32 %v2661, %v2679
    %v2682 = vmul.f32 %v2662, %v2679
    %v2683 = vmul.f32 %v2663, %v2679
    %v2684 = vmul.f32 %v2664, %v2679
    %v2685 = vmul.f32 %v2665, %v2679
    %v2686 = vmul.f32 %v2666, %v2679
    %v2687 = vmul.f32 %v2667, %v2679
    %v2688 = vmul.f32 %v2668, %v2679
    %v2689 = vmul.f32 %v2669, %v2679
    %v2690 = vmul.f32 %v2670, %v2679
    %v2691 = vmul.f32 %v2671, %v2679
    %v2692 = vmul.f32 %v2672, %v2679
    %v2693 = vmul.f32 %v2673, %v2679
    %v2694 = vmul.f32 %v2674, %v2679
    %v2695 = vmul.f32 %v2675, %v2679
    %v2696 = vadd.f32 %v2644, %v2680
    %v2697 = vadd.f32 %v2645, %v2681
    %v2698 = vadd.f32 %v2646, %v2682
    %v2699 = vadd.f32 %v2647, %v2683
    %v2700 = vadd.f32 %v2648, %v2684
    %v2701 = vadd.f32 %v2649, %v2685
    %v2702 = vadd.f32 %v2650, %v2686
    %v2703 = vadd.f32 %v2651, %v2687
    %v2704 = vadd.f32 %v2652, %v2688
    %v2705 = vadd.f32 %v2653, %v2689
    %v2706 = vadd.f32 %v2654, %v2690
    %v2707 = vadd.f32 %v2655, %v2691
    %v2708 = vadd.f32 %v2656, %v2692
    %v2709 = vadd.f32 %v2657, %v2693
    %v2710 = vadd.f32 %v2658, %v2694
    %v2711 = vadd.f32 %v2659, %v2695
    %v2712 = vld [vmem:[%s527 + $0x5] sm:$0xff]
    %v2713 = vld [vmem:[%s527 + $0x15] sm:$0xff]
    %v2714 = vld [vmem:[%s527 + $0x25] sm:$0xff]
    %v2715 = vld [vmem:[%s527 + $0x35] sm:$0xff]
    %v2716 = vld [vmem:[%s527 + $0x45] sm:$0xff]
    %v2717 = vld [vmem:[%s527 + $0x55] sm:$0xff]
    %v2718 = vld [vmem:[%s527 + $0x65] sm:$0xff]
    %v2719 = vld [vmem:[%s527 + $0x75] sm:$0xff]
    %v2720 = vld [vmem:[%s527 + $0x105] sm:$0xff]
    %v2721 = vld [vmem:[%s527 + $0x115] sm:$0xff]
    %v2722 = vld [vmem:[%s527 + $0x125] sm:$0xff]
    %v2723 = vld [vmem:[%s527 + $0x135] sm:$0xff]
    %v2724 = vld [vmem:[%s527 + $0x145] sm:$0xff]
    %v2725 = vld [vmem:[%s527 + $0x155] sm:$0xff]
    %v2726 = vld [vmem:[%s527 + $0x165] sm:$0xff]
    %v2727 = vld [vmem:[%s527 + $0x175] sm:$0xff]
    %v2728 = vlaneseq
    %v2729 = vshrl.u32 %v2728, 7
    %v2730 = vsub.s32 5, %v2729
    %v2731 = vrot.slane %v567, %v2730
    %v2732 = vmul.f32 %v2712, %v2731
    %v2733 = vmul.f32 %v2713, %v2731
    %v2734 = vmul.f32 %v2714, %v2731
    %v2735 = vmul.f32 %v2715, %v2731
    %v2736 = vmul.f32 %v2716, %v2731
    %v2737 = vmul.f32 %v2717, %v2731
    %v2738 = vmul.f32 %v2718, %v2731
    %v2739 = vmul.f32 %v2719, %v2731
    %v2740 = vmul.f32 %v2720, %v2731
    %v2741 = vmul.f32 %v2721, %v2731
    %v2742 = vmul.f32 %v2722, %v2731
    %v2743 = vmul.f32 %v2723, %v2731
    %v2744 = vmul.f32 %v2724, %v2731
    %v2745 = vmul.f32 %v2725, %v2731
    %v2746 = vmul.f32 %v2726, %v2731
    %v2747 = vmul.f32 %v2727, %v2731
    %v2748 = vadd.f32 %v2696, %v2732
    %v2749 = vadd.f32 %v2697, %v2733
    %v2750 = vadd.f32 %v2698, %v2734
    %v2751 = vadd.f32 %v2699, %v2735
    %v2752 = vadd.f32 %v2700, %v2736
    %v2753 = vadd.f32 %v2701, %v2737
    %v2754 = vadd.f32 %v2702, %v2738
    %v2755 = vadd.f32 %v2703, %v2739
    %v2756 = vadd.f32 %v2704, %v2740
    %v2757 = vadd.f32 %v2705, %v2741
    %v2758 = vadd.f32 %v2706, %v2742
    %v2759 = vadd.f32 %v2707, %v2743
    %v2760 = vadd.f32 %v2708, %v2744
    %v2761 = vadd.f32 %v2709, %v2745
    %v2762 = vadd.f32 %v2710, %v2746
    %v2763 = vadd.f32 %v2711, %v2747
    %v2764 = vld [vmem:[%s527 + $0x6] sm:$0xff]
    %v2765 = vld [vmem:[%s527 + $0x16] sm:$0xff]
    %v2766 = vld [vmem:[%s527 + $0x26] sm:$0xff]
    %v2767 = vld [vmem:[%s527 + $0x36] sm:$0xff]
    %v2768 = vld [vmem:[%s527 + $0x46] sm:$0xff]
    %v2769 = vld [vmem:[%s527 + $0x56] sm:$0xff]
    %v2770 = vld [vmem:[%s527 + $0x66] sm:$0xff]
    %v2771 = vld [vmem:[%s527 + $0x76] sm:$0xff]
    %v2772 = vld [vmem:[%s527 + $0x106] sm:$0xff]
    %v2773 = vld [vmem:[%s527 + $0x116] sm:$0xff]
    %v2774 = vld [vmem:[%s527 + $0x126] sm:$0xff]
    %v2775 = vld [vmem:[%s527 + $0x136] sm:$0xff]
    %v2776 = vld [vmem:[%s527 + $0x146] sm:$0xff]
    %v2777 = vld [vmem:[%s527 + $0x156] sm:$0xff]
    %v2778 = vld [vmem:[%s527 + $0x166] sm:$0xff]
    %v2779 = vld [vmem:[%s527 + $0x176] sm:$0xff]
    %v2780 = vlaneseq
    %v2781 = vshrl.u32 %v2780, 7
    %v2782 = vsub.s32 6, %v2781
    %v2783 = vrot.slane %v567, %v2782
    %v2784 = vmul.f32 %v2764, %v2783
    %v2785 = vmul.f32 %v2765, %v2783
    %v2786 = vmul.f32 %v2766, %v2783
    %v2787 = vmul.f32 %v2767, %v2783
    %v2788 = vmul.f32 %v2768, %v2783
    %v2789 = vmul.f32 %v2769, %v2783
    %v2790 = vmul.f32 %v2770, %v2783
    %v2791 = vmul.f32 %v2771, %v2783
    %v2792 = vmul.f32 %v2772, %v2783
    %v2793 = vmul.f32 %v2773, %v2783
    %v2794 = vmul.f32 %v2774, %v2783
    %v2795 = vmul.f32 %v2775, %v2783
    %v2796 = vmul.f32 %v2776, %v2783
    %v2797 = vmul.f32 %v2777, %v2783
    %v2798 = vmul.f32 %v2778, %v2783
    %v2799 = vmul.f32 %v2779, %v2783
    %v2800 = vadd.f32 %v2748, %v2784
    %v2801 = vadd.f32 %v2749, %v2785
    %v2802 = vadd.f32 %v2750, %v2786
    %v2803 = vadd.f32 %v2751, %v2787
    %v2804 = vadd.f32 %v2752, %v2788
    %v2805 = vadd.f32 %v2753, %v2789
    %v2806 = vadd.f32 %v2754, %v2790
    %v2807 = vadd.f32 %v2755, %v2791
    %v2808 = vadd.f32 %v2756, %v2792
    %v2809 = vadd.f32 %v2757, %v2793
    %v2810 = vadd.f32 %v2758, %v2794
    %v2811 = vadd.f32 %v2759, %v2795
    %v2812 = vadd.f32 %v2760, %v2796
    %v2813 = vadd.f32 %v2761, %v2797
    %v2814 = vadd.f32 %v2762, %v2798
    %v2815 = vadd.f32 %v2763, %v2799
    %v2816 = vld [vmem:[%s527 + $0x7] sm:$0xff]
    %v2817 = vld [vmem:[%s527 + $0x17] sm:$0xff]
    %v2818 = vld [vmem:[%s527 + $0x27] sm:$0xff]
    %v2819 = vld [vmem:[%s527 + $0x37] sm:$0xff]
    %v2820 = vld [vmem:[%s527 + $0x47] sm:$0xff]
    %v2821 = vld [vmem:[%s527 + $0x57] sm:$0xff]
    %v2822 = vld [vmem:[%s527 + $0x67] sm:$0xff]
    %v2823 = vld [vmem:[%s527 + $0x77] sm:$0xff]
    %v2824 = vld [vmem:[%s527 + $0x107] sm:$0xff]
    %v2825 = vld [vmem:[%s527 + $0x117] sm:$0xff]
    %v2826 = vld [vmem:[%s527 + $0x127] sm:$0xff]
    %v2827 = vld [vmem:[%s527 + $0x137] sm:$0xff]
    %v2828 = vld [vmem:[%s527 + $0x147] sm:$0xff]
    %v2829 = vld [vmem:[%s527 + $0x157] sm:$0xff]
    %v2830 = vld [vmem:[%s527 + $0x167] sm:$0xff]
    %v2831 = vld [vmem:[%s527 + $0x177] sm:$0xff]
    %v2832 = vlaneseq
    %v2833 = vshrl.u32 %v2832, 7
    %v2834 = vsub.s32 7, %v2833
    %v2835 = vrot.slane %v567, %v2834
    %v2836 = vmul.f32 %v2816, %v2835
    %v2837 = vmul.f32 %v2817, %v2835
    %v2838 = vmul.f32 %v2818, %v2835
    %v2839 = vmul.f32 %v2819, %v2835
    %v2840 = vmul.f32 %v2820, %v2835
    %v2841 = vmul.f32 %v2821, %v2835
    %v2842 = vmul.f32 %v2822, %v2835
    %v2843 = vmul.f32 %v2823, %v2835
    %v2844 = vmul.f32 %v2824, %v2835
    %v2845 = vmul.f32 %v2825, %v2835
    %v2846 = vmul.f32 %v2826, %v2835
    %v2847 = vmul.f32 %v2827, %v2835
    %v2848 = vmul.f32 %v2828, %v2835
    %v2849 = vmul.f32 %v2829, %v2835
    %v2850 = vmul.f32 %v2830, %v2835
    %v2851 = vmul.f32 %v2831, %v2835
    %v2852 = vadd.f32 %v2800, %v2836
    %v2853 = vadd.f32 %v2801, %v2837
    %v2854 = vadd.f32 %v2802, %v2838
    %v2855 = vadd.f32 %v2803, %v2839
    %v2856 = vadd.f32 %v2804, %v2840
    %v2857 = vadd.f32 %v2805, %v2841
    %v2858 = vadd.f32 %v2806, %v2842
    %v2859 = vadd.f32 %v2807, %v2843
    %v2860 = vadd.f32 %v2808, %v2844
    %v2861 = vadd.f32 %v2809, %v2845
    %v2862 = vadd.f32 %v2810, %v2846
    %v2863 = vadd.f32 %v2811, %v2847
    %v2864 = vadd.f32 %v2812, %v2848
    %v2865 = vadd.f32 %v2813, %v2849
    %v2866 = vadd.f32 %v2814, %v2850
    %v2867 = vadd.f32 %v2815, %v2851
    %v2868 = vld [vmem:[%s527 + $0x8] sm:$0xff]
    %v2869 = vld [vmem:[%s527 + $0x18] sm:$0xff]
    %v2870 = vld [vmem:[%s527 + $0x28] sm:$0xff]
    %v2871 = vld [vmem:[%s527 + $0x38] sm:$0xff]
    %v2872 = vld [vmem:[%s527 + $0x48] sm:$0xff]
    %v2873 = vld [vmem:[%s527 + $0x58] sm:$0xff]
    %v2874 = vld [vmem:[%s527 + $0x68] sm:$0xff]
    %v2875 = vld [vmem:[%s527 + $0x78] sm:$0xff]
    %v2876 = vld [vmem:[%s527 + $0x108] sm:$0xff]
    %v2877 = vld [vmem:[%s527 + $0x118] sm:$0xff]
    %v2878 = vld [vmem:[%s527 + $0x128] sm:$0xff]
    %v2879 = vld [vmem:[%s527 + $0x138] sm:$0xff]
    %v2880 = vld [vmem:[%s527 + $0x148] sm:$0xff]
    %v2881 = vld [vmem:[%s527 + $0x158] sm:$0xff]
    %v2882 = vld [vmem:[%s527 + $0x168] sm:$0xff]
    %v2883 = vld [vmem:[%s527 + $0x178] sm:$0xff]
    %v2884 = vlaneseq
    %v2885 = vshrl.u32 %v2884, 7
    %v2886 = vsub.s32 0, %v2885
    %v2887 = vrot.slane %v568, %v2886
    %v2888 = vmul.f32 %v2868, %v2887
    %v2889 = vmul.f32 %v2869, %v2887
    %v2890 = vmul.f32 %v2870, %v2887
    %v2891 = vmul.f32 %v2871, %v2887
    %v2892 = vmul.f32 %v2872, %v2887
    %v2893 = vmul.f32 %v2873, %v2887
    %v2894 = vmul.f32 %v2874, %v2887
    %v2895 = vmul.f32 %v2875, %v2887
    %v2896 = vmul.f32 %v2876, %v2887
    %v2897 = vmul.f32 %v2877, %v2887
    %v2898 = vmul.f32 %v2878, %v2887
    %v2899 = vmul.f32 %v2879, %v2887
    %v2900 = vmul.f32 %v2880, %v2887
    %v2901 = vmul.f32 %v2881, %v2887
    %v2902 = vmul.f32 %v2882, %v2887
    %v2903 = vmul.f32 %v2883, %v2887
    %v2904 = vadd.f32 %v2852, %v2888
    %v2905 = vadd.f32 %v2853, %v2889
    %v2906 = vadd.f32 %v2854, %v2890
    %v2907 = vadd.f32 %v2855, %v2891
    %v2908 = vadd.f32 %v2856, %v2892
    %v2909 = vadd.f32 %v2857, %v2893
    %v2910 = vadd.f32 %v2858, %v2894
    %v2911 = vadd.f32 %v2859, %v2895
    %v2912 = vadd.f32 %v2860, %v2896
    %v2913 = vadd.f32 %v2861, %v2897
    %v2914 = vadd.f32 %v2862, %v2898
    %v2915 = vadd.f32 %v2863, %v2899
    %v2916 = vadd.f32 %v2864, %v2900
    %v2917 = vadd.f32 %v2865, %v2901
    %v2918 = vadd.f32 %v2866, %v2902
    %v2919 = vadd.f32 %v2867, %v2903
    %v2920 = vld [vmem:[%s529] sm:$0xff]
    %v2921 = vld [vmem:[%s529 + $0x10] sm:$0xff]
    %v2922 = vld [vmem:[%s529 + $0x20] sm:$0xff]
    %v2923 = vld [vmem:[%s529 + $0x30] sm:$0xff]
    %v2924 = vld [vmem:[%s529 + $0x40] sm:$0xff]
    %v2925 = vld [vmem:[%s529 + $0x50] sm:$0xff]
    %v2926 = vld [vmem:[%s529 + $0x60] sm:$0xff]
    %v2927 = vld [vmem:[%s529 + $0x70] sm:$0xff]
    %v2928 = vld [vmem:[%s529 + $0x100] sm:$0xff]
    %v2929 = vld [vmem:[%s529 + $0x110] sm:$0xff]
    %v2930 = vld [vmem:[%s529 + $0x120] sm:$0xff]
    %v2931 = vld [vmem:[%s529 + $0x130] sm:$0xff]
    %v2932 = vld [vmem:[%s529 + $0x140] sm:$0xff]
    %v2933 = vld [vmem:[%s529 + $0x150] sm:$0xff]
    %v2934 = vld [vmem:[%s529 + $0x160] sm:$0xff]
    %v2935 = vld [vmem:[%s529 + $0x170] sm:$0xff]
    %v2936 = vlaneseq
    %v2937 = vshrl.u32 %v2936, 7
    %v2938 = vsub.s32 0, %v2937
    %v2939 = vrot.slane %v569, %v2938
    %v2940 = vmul.f32 %v2920, %v2939
    %v2941 = vmul.f32 %v2921, %v2939
    %v2942 = vmul.f32 %v2922, %v2939
    %v2943 = vmul.f32 %v2923, %v2939
    %v2944 = vmul.f32 %v2924, %v2939
    %v2945 = vmul.f32 %v2925, %v2939
    %v2946 = vmul.f32 %v2926, %v2939
    %v2947 = vmul.f32 %v2927, %v2939
    %v2948 = vmul.f32 %v2928, %v2939
    %v2949 = vmul.f32 %v2929, %v2939
    %v2950 = vmul.f32 %v2930, %v2939
    %v2951 = vmul.f32 %v2931, %v2939
    %v2952 = vmul.f32 %v2932, %v2939
    %v2953 = vmul.f32 %v2933, %v2939
    %v2954 = vmul.f32 %v2934, %v2939
    %v2955 = vmul.f32 %v2935, %v2939
    %v2956 = vadd.f32 %v2904, %v2940
    %v2957 = vadd.f32 %v2905, %v2941
    %v2958 = vadd.f32 %v2906, %v2942
    %v2959 = vadd.f32 %v2907, %v2943
    %v2960 = vadd.f32 %v2908, %v2944
    %v2961 = vadd.f32 %v2909, %v2945
    %v2962 = vadd.f32 %v2910, %v2946
    %v2963 = vadd.f32 %v2911, %v2947
    %v2964 = vadd.f32 %v2912, %v2948
    %v2965 = vadd.f32 %v2913, %v2949
    %v2966 = vadd.f32 %v2914, %v2950
    %v2967 = vadd.f32 %v2915, %v2951
    %v2968 = vadd.f32 %v2916, %v2952
    %v2969 = vadd.f32 %v2917, %v2953
    %v2970 = vadd.f32 %v2918, %v2954
    %v2971 = vadd.f32 %v2919, %v2955
    %v2972 = vld [vmem:[%s529 + $0x1] sm:$0xff]
    %v2973 = vld [vmem:[%s529 + $0x11] sm:$0xff]
    %v2974 = vld [vmem:[%s529 + $0x21] sm:$0xff]
    %v2975 = vld [vmem:[%s529 + $0x31] sm:$0xff]
    %v2976 = vld [vmem:[%s529 + $0x41] sm:$0xff]
    %v2977 = vld [vmem:[%s529 + $0x51] sm:$0xff]
    %v2978 = vld [vmem:[%s529 + $0x61] sm:$0xff]
    %v2979 = vld [vmem:[%s529 + $0x71] sm:$0xff]
    %v2980 = vld [vmem:[%s529 + $0x101] sm:$0xff]
    %v2981 = vld [vmem:[%s529 + $0x111] sm:$0xff]
    %v2982 = vld [vmem:[%s529 + $0x121] sm:$0xff]
    %v2983 = vld [vmem:[%s529 + $0x131] sm:$0xff]
    %v2984 = vld [vmem:[%s529 + $0x141] sm:$0xff]
    %v2985 = vld [vmem:[%s529 + $0x151] sm:$0xff]
    %v2986 = vld [vmem:[%s529 + $0x161] sm:$0xff]
    %v2987 = vld [vmem:[%s529 + $0x171] sm:$0xff]
    %v2988 = vlaneseq
    %v2989 = vshrl.u32 %v2988, 7
    %v2990 = vsub.s32 1, %v2989
    %v2991 = vrot.slane %v569, %v2990
    %v2992 = vmul.f32 %v2972, %v2991
    %v2993 = vmul.f32 %v2973, %v2991
    %v2994 = vmul.f32 %v2974, %v2991
    %v2995 = vmul.f32 %v2975, %v2991
    %v2996 = vmul.f32 %v2976, %v2991
    %v2997 = vmul.f32 %v2977, %v2991
    %v2998 = vmul.f32 %v2978, %v2991
    %v2999 = vmul.f32 %v2979, %v2991
    %v3000 = vmul.f32 %v2980, %v2991
    %v3001 = vmul.f32 %v2981, %v2991
    %v3002 = vmul.f32 %v2982, %v2991
    %v3003 = vmul.f32 %v2983, %v2991
    %v3004 = vmul.f32 %v2984, %v2991
    %v3005 = vmul.f32 %v2985, %v2991
    %v3006 = vmul.f32 %v2986, %v2991
    %v3007 = vmul.f32 %v2987, %v2991
    %v3008 = vadd.f32 %v2956, %v2992
    %v3009 = vadd.f32 %v2957, %v2993
    %v3010 = vadd.f32 %v2958, %v2994
    %v3011 = vadd.f32 %v2959, %v2995
    %v3012 = vadd.f32 %v2960, %v2996
    %v3013 = vadd.f32 %v2961, %v2997
    %v3014 = vadd.f32 %v2962, %v2998
    %v3015 = vadd.f32 %v2963, %v2999
    %v3016 = vadd.f32 %v2964, %v3000
    %v3017 = vadd.f32 %v2965, %v3001
    %v3018 = vadd.f32 %v2966, %v3002
    %v3019 = vadd.f32 %v2967, %v3003
    %v3020 = vadd.f32 %v2968, %v3004
    %v3021 = vadd.f32 %v2969, %v3005
    %v3022 = vadd.f32 %v2970, %v3006
    %v3023 = vadd.f32 %v2971, %v3007
    %v3024 = vld [vmem:[%s529 + $0x2] sm:$0xff]
    %v3025 = vld [vmem:[%s529 + $0x12] sm:$0xff]
    %v3026 = vld [vmem:[%s529 + $0x22] sm:$0xff]
    %v3027 = vld [vmem:[%s529 + $0x32] sm:$0xff]
    %v3028 = vld [vmem:[%s529 + $0x42] sm:$0xff]
    %v3029 = vld [vmem:[%s529 + $0x52] sm:$0xff]
    %v3030 = vld [vmem:[%s529 + $0x62] sm:$0xff]
    %v3031 = vld [vmem:[%s529 + $0x72] sm:$0xff]
    %v3032 = vld [vmem:[%s529 + $0x102] sm:$0xff]
    %v3033 = vld [vmem:[%s529 + $0x112] sm:$0xff]
    %v3034 = vld [vmem:[%s529 + $0x122] sm:$0xff]
    %v3035 = vld [vmem:[%s529 + $0x132] sm:$0xff]
    %v3036 = vld [vmem:[%s529 + $0x142] sm:$0xff]
    %v3037 = vld [vmem:[%s529 + $0x152] sm:$0xff]
    %v3038 = vld [vmem:[%s529 + $0x162] sm:$0xff]
    %v3039 = vld [vmem:[%s529 + $0x172] sm:$0xff]
    %v3040 = vlaneseq
    %v3041 = vshrl.u32 %v3040, 7
    %v3042 = vsub.s32 2, %v3041
    %v3043 = vrot.slane %v569, %v3042
    %v3044 = vmul.f32 %v3024, %v3043
    %v3045 = vmul.f32 %v3025, %v3043
    %v3046 = vmul.f32 %v3026, %v3043
    %v3047 = vmul.f32 %v3027, %v3043
    %v3048 = vmul.f32 %v3028, %v3043
    %v3049 = vmul.f32 %v3029, %v3043
    %v3050 = vmul.f32 %v3030, %v3043
    %v3051 = vmul.f32 %v3031, %v3043
    %v3052 = vmul.f32 %v3032, %v3043
    %v3053 = vmul.f32 %v3033, %v3043
    %v3054 = vmul.f32 %v3034, %v3043
    %v3055 = vmul.f32 %v3035, %v3043
    %v3056 = vmul.f32 %v3036, %v3043
    %v3057 = vmul.f32 %v3037, %v3043
    %v3058 = vmul.f32 %v3038, %v3043
    %v3059 = vmul.f32 %v3039, %v3043
    %v3060 = vadd.f32 %v3008, %v3044
    %v3061 = vadd.f32 %v3009, %v3045
    %v3062 = vadd.f32 %v3010, %v3046
    %v3063 = vadd.f32 %v3011, %v3047
    %v3064 = vadd.f32 %v3012, %v3048
    %v3065 = vadd.f32 %v3013, %v3049
    %v3066 = vadd.f32 %v3014, %v3050
    %v3067 = vadd.f32 %v3015, %v3051
    %v3068 = vadd.f32 %v3016, %v3052
    %v3069 = vadd.f32 %v3017, %v3053
    %v3070 = vadd.f32 %v3018, %v3054
    %v3071 = vadd.f32 %v3019, %v3055
    %v3072 = vadd.f32 %v3020, %v3056
    %v3073 = vadd.f32 %v3021, %v3057
    %v3074 = vadd.f32 %v3022, %v3058
    %v3075 = vadd.f32 %v3023, %v3059
    %v3076 = vld [vmem:[%s529 + $0x3] sm:$0xff]
    %v3077 = vld [vmem:[%s529 + $0x13] sm:$0xff]
    %v3078 = vld [vmem:[%s529 + $0x23] sm:$0xff]
    %v3079 = vld [vmem:[%s529 + $0x33] sm:$0xff]
    %v3080 = vld [vmem:[%s529 + $0x43] sm:$0xff]
    %v3081 = vld [vmem:[%s529 + $0x53] sm:$0xff]
    %v3082 = vld [vmem:[%s529 + $0x63] sm:$0xff]
    %v3083 = vld [vmem:[%s529 + $0x73] sm:$0xff]
    %v3084 = vld [vmem:[%s529 + $0x103] sm:$0xff]
    %v3085 = vld [vmem:[%s529 + $0x113] sm:$0xff]
    %v3086 = vld [vmem:[%s529 + $0x123] sm:$0xff]
    %v3087 = vld [vmem:[%s529 + $0x133] sm:$0xff]
    %v3088 = vld [vmem:[%s529 + $0x143] sm:$0xff]
    %v3089 = vld [vmem:[%s529 + $0x153] sm:$0xff]
    %v3090 = vld [vmem:[%s529 + $0x163] sm:$0xff]
    %v3091 = vld [vmem:[%s529 + $0x173] sm:$0xff]
    %v3092 = vlaneseq
    %v3093 = vshrl.u32 %v3092, 7
    %v3094 = vsub.s32 3, %v3093
    %v3095 = vrot.slane %v569, %v3094
    %v3096 = vmul.f32 %v3076, %v3095
    %v3097 = vmul.f32 %v3077, %v3095
    %v3098 = vmul.f32 %v3078, %v3095
    %v3099 = vmul.f32 %v3079, %v3095
    %v3100 = vmul.f32 %v3080, %v3095
    %v3101 = vmul.f32 %v3081, %v3095
    %v3102 = vmul.f32 %v3082, %v3095
    %v3103 = vmul.f32 %v3083, %v3095
    %v3104 = vmul.f32 %v3084, %v3095
    %v3105 = vmul.f32 %v3085, %v3095
    %v3106 = vmul.f32 %v3086, %v3095
    %v3107 = vmul.f32 %v3087, %v3095
    %v3108 = vmul.f32 %v3088, %v3095
    %v3109 = vmul.f32 %v3089, %v3095
    %v3110 = vmul.f32 %v3090, %v3095
    %v3111 = vmul.f32 %v3091, %v3095
    %v3112 = vadd.f32 %v3060, %v3096
    %v3113 = vadd.f32 %v3061, %v3097
    %v3114 = vadd.f32 %v3062, %v3098
    %v3115 = vadd.f32 %v3063, %v3099
    %v3116 = vadd.f32 %v3064, %v3100
    %v3117 = vadd.f32 %v3065, %v3101
    %v3118 = vadd.f32 %v3066, %v3102
    %v3119 = vadd.f32 %v3067, %v3103
    %v3120 = vadd.f32 %v3068, %v3104
    %v3121 = vadd.f32 %v3069, %v3105
    %v3122 = vadd.f32 %v3070, %v3106
    %v3123 = vadd.f32 %v3071, %v3107
    %v3124 = vadd.f32 %v3072, %v3108
    %v3125 = vadd.f32 %v3073, %v3109
    %v3126 = vadd.f32 %v3074, %v3110
    %v3127 = vadd.f32 %v3075, %v3111
    %v3128 = vld [vmem:[%s529 + $0x4] sm:$0xff]
    %v3129 = vld [vmem:[%s529 + $0x14] sm:$0xff]
    %v3130 = vld [vmem:[%s529 + $0x24] sm:$0xff]
    %v3131 = vld [vmem:[%s529 + $0x34] sm:$0xff]
    %v3132 = vld [vmem:[%s529 + $0x44] sm:$0xff]
    %v3133 = vld [vmem:[%s529 + $0x54] sm:$0xff]
    %v3134 = vld [vmem:[%s529 + $0x64] sm:$0xff]
    %v3135 = vld [vmem:[%s529 + $0x74] sm:$0xff]
    %v3136 = vld [vmem:[%s529 + $0x104] sm:$0xff]
    %v3137 = vld [vmem:[%s529 + $0x114] sm:$0xff]
    %v3138 = vld [vmem:[%s529 + $0x124] sm:$0xff]
    %v3139 = vld [vmem:[%s529 + $0x134] sm:$0xff]
    %v3140 = vld [vmem:[%s529 + $0x144] sm:$0xff]
    %v3141 = vld [vmem:[%s529 + $0x154] sm:$0xff]
    %v3142 = vld [vmem:[%s529 + $0x164] sm:$0xff]
    %v3143 = vld [vmem:[%s529 + $0x174] sm:$0xff]
    %v3144 = vlaneseq
    %v3145 = vshrl.u32 %v3144, 7
    %v3146 = vsub.s32 4, %v3145
    %v3147 = vrot.slane %v569, %v3146
    %v3148 = vmul.f32 %v3128, %v3147
    %v3149 = vmul.f32 %v3129, %v3147
    %v3150 = vmul.f32 %v3130, %v3147
    %v3151 = vmul.f32 %v3131, %v3147
    %v3152 = vmul.f32 %v3132, %v3147
    %v3153 = vmul.f32 %v3133, %v3147
    %v3154 = vmul.f32 %v3134, %v3147
    %v3155 = vmul.f32 %v3135, %v3147
    %v3156 = vmul.f32 %v3136, %v3147
    %v3157 = vmul.f32 %v3137, %v3147
    %v3158 = vmul.f32 %v3138, %v3147
    %v3159 = vmul.f32 %v3139, %v3147
    %v3160 = vmul.f32 %v3140, %v3147
    %v3161 = vmul.f32 %v3141, %v3147
    %v3162 = vmul.f32 %v3142, %v3147
    %v3163 = vmul.f32 %v3143, %v3147
    %v3164 = vadd.f32 %v3112, %v3148
    %v3165 = vadd.f32 %v3113, %v3149
    %v3166 = vadd.f32 %v3114, %v3150
    %v3167 = vadd.f32 %v3115, %v3151
    %v3168 = vadd.f32 %v3116, %v3152
    %v3169 = vadd.f32 %v3117, %v3153
    %v3170 = vadd.f32 %v3118, %v3154
    %v3171 = vadd.f32 %v3119, %v3155
    %v3172 = vadd.f32 %v3120, %v3156
    %v3173 = vadd.f32 %v3121, %v3157
    %v3174 = vadd.f32 %v3122, %v3158
    %v3175 = vadd.f32 %v3123, %v3159
    %v3176 = vadd.f32 %v3124, %v3160
    %v3177 = vadd.f32 %v3125, %v3161
    %v3178 = vadd.f32 %v3126, %v3162
    %v3179 = vadd.f32 %v3127, %v3163
    %v3180 = vld [vmem:[%s529 + $0x5] sm:$0xff]
    %v3181 = vld [vmem:[%s529 + $0x15] sm:$0xff]
    %v3182 = vld [vmem:[%s529 + $0x25] sm:$0xff]
    %v3183 = vld [vmem:[%s529 + $0x35] sm:$0xff]
    %v3184 = vld [vmem:[%s529 + $0x45] sm:$0xff]
    %v3185 = vld [vmem:[%s529 + $0x55] sm:$0xff]
    %v3186 = vld [vmem:[%s529 + $0x65] sm:$0xff]
    %v3187 = vld [vmem:[%s529 + $0x75] sm:$0xff]
    %v3188 = vld [vmem:[%s529 + $0x105] sm:$0xff]
    %v3189 = vld [vmem:[%s529 + $0x115] sm:$0xff]
    %v3190 = vld [vmem:[%s529 + $0x125] sm:$0xff]
    %v3191 = vld [vmem:[%s529 + $0x135] sm:$0xff]
    %v3192 = vld [vmem:[%s529 + $0x145] sm:$0xff]
    %v3193 = vld [vmem:[%s529 + $0x155] sm:$0xff]
    %v3194 = vld [vmem:[%s529 + $0x165] sm:$0xff]
    %v3195 = vld [vmem:[%s529 + $0x175] sm:$0xff]
    %v3196 = vlaneseq
    %v3197 = vshrl.u32 %v3196, 7
    %v3198 = vsub.s32 5, %v3197
    %v3199 = vrot.slane %v569, %v3198
    %v3200 = vmul.f32 %v3180, %v3199
    %v3201 = vmul.f32 %v3181, %v3199
    %v3202 = vmul.f32 %v3182, %v3199
    %v3203 = vmul.f32 %v3183, %v3199
    %v3204 = vmul.f32 %v3184, %v3199
    %v3205 = vmul.f32 %v3185, %v3199
    %v3206 = vmul.f32 %v3186, %v3199
    %v3207 = vmul.f32 %v3187, %v3199
    %v3208 = vmul.f32 %v3188, %v3199
    %v3209 = vmul.f32 %v3189, %v3199
    %v3210 = vmul.f32 %v3190, %v3199
    %v3211 = vmul.f32 %v3191, %v3199
    %v3212 = vmul.f32 %v3192, %v3199
    %v3213 = vmul.f32 %v3193, %v3199
    %v3214 = vmul.f32 %v3194, %v3199
    %v3215 = vmul.f32 %v3195, %v3199
    %v3216 = vadd.f32 %v3164, %v3200
    %v3217 = vadd.f32 %v3165, %v3201
    %v3218 = vadd.f32 %v3166, %v3202
    %v3219 = vadd.f32 %v3167, %v3203
    %v3220 = vadd.f32 %v3168, %v3204
    %v3221 = vadd.f32 %v3169, %v3205
    %v3222 = vadd.f32 %v3170, %v3206
    %v3223 = vadd.f32 %v3171, %v3207
    %v3224 = vadd.f32 %v3172, %v3208
    %v3225 = vadd.f32 %v3173, %v3209
    %v3226 = vadd.f32 %v3174, %v3210
    %v3227 = vadd.f32 %v3175, %v3211
    %v3228 = vadd.f32 %v3176, %v3212
    %v3229 = vadd.f32 %v3177, %v3213
    %v3230 = vadd.f32 %v3178, %v3214
    %v3231 = vadd.f32 %v3179, %v3215
    %v3232 = vld [vmem:[%s529 + $0x6] sm:$0xff]
    %v3233 = vld [vmem:[%s529 + $0x16] sm:$0xff]
    %v3234 = vld [vmem:[%s529 + $0x26] sm:$0xff]
    %v3235 = vld [vmem:[%s529 + $0x36] sm:$0xff]
    %v3236 = vld [vmem:[%s529 + $0x46] sm:$0xff]
    %v3237 = vld [vmem:[%s529 + $0x56] sm:$0xff]
    %v3238 = vld [vmem:[%s529 + $0x66] sm:$0xff]
    %v3239 = vld [vmem:[%s529 + $0x76] sm:$0xff]
    %v3240 = vld [vmem:[%s529 + $0x106] sm:$0xff]
    %v3241 = vld [vmem:[%s529 + $0x116] sm:$0xff]
    %v3242 = vld [vmem:[%s529 + $0x126] sm:$0xff]
    %v3243 = vld [vmem:[%s529 + $0x136] sm:$0xff]
    %v3244 = vld [vmem:[%s529 + $0x146] sm:$0xff]
    %v3245 = vld [vmem:[%s529 + $0x156] sm:$0xff]
    %v3246 = vld [vmem:[%s529 + $0x166] sm:$0xff]
    %v3247 = vld [vmem:[%s529 + $0x176] sm:$0xff]
    %v3248 = vlaneseq
    %v3249 = vshrl.u32 %v3248, 7
    %v3250 = vsub.s32 6, %v3249
    %v3251 = vrot.slane %v569, %v3250
    %v3252 = vmul.f32 %v3232, %v3251
    %v3253 = vmul.f32 %v3233, %v3251
    %v3254 = vmul.f32 %v3234, %v3251
    %v3255 = vmul.f32 %v3235, %v3251
    %v3256 = vmul.f32 %v3236, %v3251
    %v3257 = vmul.f32 %v3237, %v3251
    %v3258 = vmul.f32 %v3238, %v3251
    %v3259 = vmul.f32 %v3239, %v3251
    %v3260 = vmul.f32 %v3240, %v3251
    %v3261 = vmul.f32 %v3241, %v3251
    %v3262 = vmul.f32 %v3242, %v3251
    %v3263 = vmul.f32 %v3243, %v3251
    %v3264 = vmul.f32 %v3244, %v3251
    %v3265 = vmul.f32 %v3245, %v3251
    %v3266 = vmul.f32 %v3246, %v3251
    %v3267 = vmul.f32 %v3247, %v3251
    %v3268 = vadd.f32 %v3216, %v3252
    %v3269 = vadd.f32 %v3217, %v3253
    %v3270 = vadd.f32 %v3218, %v3254
    %v3271 = vadd.f32 %v3219, %v3255
    %v3272 = vadd.f32 %v3220, %v3256
    %v3273 = vadd.f32 %v3221, %v3257
    %v3274 = vadd.f32 %v3222, %v3258
    %v3275 = vadd.f32 %v3223, %v3259
    %v3276 = vadd.f32 %v3224, %v3260
    %v3277 = vadd.f32 %v3225, %v3261
    %v3278 = vadd.f32 %v3226, %v3262
    %v3279 = vadd.f32 %v3227, %v3263
    %v3280 = vadd.f32 %v3228, %v3264
    %v3281 = vadd.f32 %v3229, %v3265
    %v3282 = vadd.f32 %v3230, %v3266
    %v3283 = vadd.f32 %v3231, %v3267
    %v3284 = vld [vmem:[%s529 + $0x7] sm:$0xff]
    %v3285 = vld [vmem:[%s529 + $0x17] sm:$0xff]
    %v3286 = vld [vmem:[%s529 + $0x27] sm:$0xff]
    %v3287 = vld [vmem:[%s529 + $0x37] sm:$0xff]
    %v3288 = vld [vmem:[%s529 + $0x47] sm:$0xff]
    %v3289 = vld [vmem:[%s529 + $0x57] sm:$0xff]
    %v3290 = vld [vmem:[%s529 + $0x67] sm:$0xff]
    %v3291 = vld [vmem:[%s529 + $0x77] sm:$0xff]
    %v3292 = vld [vmem:[%s529 + $0x107] sm:$0xff]
    %v3293 = vld [vmem:[%s529 + $0x117] sm:$0xff]
    %v3294 = vld [vmem:[%s529 + $0x127] sm:$0xff]
    %v3295 = vld [vmem:[%s529 + $0x137] sm:$0xff]
    %v3296 = vld [vmem:[%s529 + $0x147] sm:$0xff]
    %v3297 = vld [vmem:[%s529 + $0x157] sm:$0xff]
    %v3298 = vld [vmem:[%s529 + $0x167] sm:$0xff]
    %v3299 = vld [vmem:[%s529 + $0x177] sm:$0xff]
    %v3300 = vlaneseq
    %v3301 = vshrl.u32 %v3300, 7
    %v3302 = vsub.s32 7, %v3301
    %v3303 = vrot.slane %v569, %v3302
    %v3304 = vmul.f32 %v3284, %v3303
    %v3305 = vmul.f32 %v3285, %v3303
    %v3306 = vmul.f32 %v3286, %v3303
    %v3307 = vmul.f32 %v3287, %v3303
    %v3308 = vmul.f32 %v3288, %v3303
    %v3309 = vmul.f32 %v3289, %v3303
    %v3310 = vmul.f32 %v3290, %v3303
    %v3311 = vmul.f32 %v3291, %v3303
    %v3312 = vmul.f32 %v3292, %v3303
    %v3313 = vmul.f32 %v3293, %v3303
    %v3314 = vmul.f32 %v3294, %v3303
    %v3315 = vmul.f32 %v3295, %v3303
    %v3316 = vmul.f32 %v3296, %v3303
    %v3317 = vmul.f32 %v3297, %v3303
    %v3318 = vmul.f32 %v3298, %v3303
    %v3319 = vmul.f32 %v3299, %v3303
    %v3320 = vadd.f32 %v3268, %v3304
    %v3321 = vadd.f32 %v3269, %v3305
    %v3322 = vadd.f32 %v3270, %v3306
    %v3323 = vadd.f32 %v3271, %v3307
    %v3324 = vadd.f32 %v3272, %v3308
    %v3325 = vadd.f32 %v3273, %v3309
    %v3326 = vadd.f32 %v3274, %v3310
    %v3327 = vadd.f32 %v3275, %v3311
    %v3328 = vadd.f32 %v3276, %v3312
    %v3329 = vadd.f32 %v3277, %v3313
    %v3330 = vadd.f32 %v3278, %v3314
    %v3331 = vadd.f32 %v3279, %v3315
    %v3332 = vadd.f32 %v3280, %v3316
    %v3333 = vadd.f32 %v3281, %v3317
    %v3334 = vadd.f32 %v3282, %v3318
    %v3335 = vadd.f32 %v3283, %v3319
    %v3336 = vld [vmem:[%s529 + $0x8] sm:$0xff]
    %v3337 = vld [vmem:[%s529 + $0x18] sm:$0xff]
    %v3338 = vld [vmem:[%s529 + $0x28] sm:$0xff]
    %v3339 = vld [vmem:[%s529 + $0x38] sm:$0xff]
    %v3340 = vld [vmem:[%s529 + $0x48] sm:$0xff]
    %v3341 = vld [vmem:[%s529 + $0x58] sm:$0xff]
    %v3342 = vld [vmem:[%s529 + $0x68] sm:$0xff]
    %v3343 = vld [vmem:[%s529 + $0x78] sm:$0xff]
    %v3344 = vld [vmem:[%s529 + $0x108] sm:$0xff]
    %v3345 = vld [vmem:[%s529 + $0x118] sm:$0xff]
    %v3346 = vld [vmem:[%s529 + $0x128] sm:$0xff]
    %v3347 = vld [vmem:[%s529 + $0x138] sm:$0xff]
    %v3348 = vld [vmem:[%s529 + $0x148] sm:$0xff]
    %v3349 = vld [vmem:[%s529 + $0x158] sm:$0xff]
    %v3350 = vld [vmem:[%s529 + $0x168] sm:$0xff]
    %v3351 = vld [vmem:[%s529 + $0x178] sm:$0xff]
    %v3352 = vlaneseq
    %v3353 = vshrl.u32 %v3352, 7
    %v3354 = vsub.s32 0, %v3353
    %v3355 = vrot.slane %v570, %v3354
    %v3356 = vmul.f32 %v3336, %v3355
    %v3357 = vmul.f32 %v3337, %v3355
    %v3358 = vmul.f32 %v3338, %v3355
    %v3359 = vmul.f32 %v3339, %v3355
    %v3360 = vmul.f32 %v3340, %v3355
    %v3361 = vmul.f32 %v3341, %v3355
    %v3362 = vmul.f32 %v3342, %v3355
    %v3363 = vmul.f32 %v3343, %v3355
    %v3364 = vmul.f32 %v3344, %v3355
    %v3365 = vmul.f32 %v3345, %v3355
    %v3366 = vmul.f32 %v3346, %v3355
    %v3367 = vmul.f32 %v3347, %v3355
    %v3368 = vmul.f32 %v3348, %v3355
    %v3369 = vmul.f32 %v3349, %v3355
    %v3370 = vmul.f32 %v3350, %v3355
    %v3371 = vmul.f32 %v3351, %v3355
    %v3372 = vadd.f32 %v3320, %v3356
    %v3373 = vadd.f32 %v3321, %v3357
    %v3374 = vadd.f32 %v3322, %v3358
    %v3375 = vadd.f32 %v3323, %v3359
    %v3376 = vadd.f32 %v3324, %v3360
    %v3377 = vadd.f32 %v3325, %v3361
    %v3378 = vadd.f32 %v3326, %v3362
    %v3379 = vadd.f32 %v3327, %v3363
    %v3380 = vadd.f32 %v3328, %v3364
    %v3381 = vadd.f32 %v3329, %v3365
    %v3382 = vadd.f32 %v3330, %v3366
    %v3383 = vadd.f32 %v3331, %v3367
    %v3384 = vadd.f32 %v3332, %v3368
    %v3385 = vadd.f32 %v3333, %v3369
    %v3386 = vadd.f32 %v3334, %v3370
    %v3387 = vadd.f32 %v3335, %v3371
    %v3388 = vld [vmem:[%s531] sm:$0xff]
    %v3389 = vld [vmem:[%s531 + $0x10] sm:$0xff]
    %v3390 = vld [vmem:[%s531 + $0x20] sm:$0xff]
    %v3391 = vld [vmem:[%s531 + $0x30] sm:$0xff]
    %v3392 = vld [vmem:[%s531 + $0x40] sm:$0xff]
    %v3393 = vld [vmem:[%s531 + $0x50] sm:$0xff]
    %v3394 = vld [vmem:[%s531 + $0x60] sm:$0xff]
    %v3395 = vld [vmem:[%s531 + $0x70] sm:$0xff]
    %v3396 = vld [vmem:[%s531 + $0x100] sm:$0xff]
    %v3397 = vld [vmem:[%s531 + $0x110] sm:$0xff]
    %v3398 = vld [vmem:[%s531 + $0x120] sm:$0xff]
    %v3399 = vld [vmem:[%s531 + $0x130] sm:$0xff]
    %v3400 = vld [vmem:[%s531 + $0x140] sm:$0xff]
    %v3401 = vld [vmem:[%s531 + $0x150] sm:$0xff]
    %v3402 = vld [vmem:[%s531 + $0x160] sm:$0xff]
    %v3403 = vld [vmem:[%s531 + $0x170] sm:$0xff]
    %v3404 = vlaneseq
    %v3405 = vshrl.u32 %v3404, 7
    %v3406 = vsub.s32 0, %v3405
    %v3407 = vrot.slane %v571, %v3406
    %v3408 = vmul.f32 %v3388, %v3407
    %v3409 = vmul.f32 %v3389, %v3407
    %v3410 = vmul.f32 %v3390, %v3407
    %v3411 = vmul.f32 %v3391, %v3407
    %v3412 = vmul.f32 %v3392, %v3407
    %v3413 = vmul.f32 %v3393, %v3407
    %v3414 = vmul.f32 %v3394, %v3407
    %v3415 = vmul.f32 %v3395, %v3407
    %v3416 = vmul.f32 %v3396, %v3407
    %v3417 = vmul.f32 %v3397, %v3407
    %v3418 = vmul.f32 %v3398, %v3407
    %v3419 = vmul.f32 %v3399, %v3407
    %v3420 = vmul.f32 %v3400, %v3407
    %v3421 = vmul.f32 %v3401, %v3407
    %v3422 = vmul.f32 %v3402, %v3407
    %v3423 = vmul.f32 %v3403, %v3407
    %v3424 = vadd.f32 %v3372, %v3408
    %v3425 = vadd.f32 %v3373, %v3409
    %v3426 = vadd.f32 %v3374, %v3410
    %v3427 = vadd.f32 %v3375, %v3411
    %v3428 = vadd.f32 %v3376, %v3412
    %v3429 = vadd.f32 %v3377, %v3413
    %v3430 = vadd.f32 %v3378, %v3414
    %v3431 = vadd.f32 %v3379, %v3415
    %v3432 = vadd.f32 %v3380, %v3416
    %v3433 = vadd.f32 %v3381, %v3417
    %v3434 = vadd.f32 %v3382, %v3418
    %v3435 = vadd.f32 %v3383, %v3419
    %v3436 = vadd.f32 %v3384, %v3420
    %v3437 = vadd.f32 %v3385, %v3421
    %v3438 = vadd.f32 %v3386, %v3422
    %v3439 = vadd.f32 %v3387, %v3423
    %v3440 = vld [vmem:[%s531 + $0x1] sm:$0xff]
    %v3441 = vld [vmem:[%s531 + $0x11] sm:$0xff]
    %v3442 = vld [vmem:[%s531 + $0x21] sm:$0xff]
    %v3443 = vld [vmem:[%s531 + $0x31] sm:$0xff]
    %v3444 = vld [vmem:[%s531 + $0x41] sm:$0xff]
    %v3445 = vld [vmem:[%s531 + $0x51] sm:$0xff]
    %v3446 = vld [vmem:[%s531 + $0x61] sm:$0xff]
    %v3447 = vld [vmem:[%s531 + $0x71] sm:$0xff]
    %v3448 = vld [vmem:[%s531 + $0x101] sm:$0xff]
    %v3449 = vld [vmem:[%s531 + $0x111] sm:$0xff]
    %v3450 = vld [vmem:[%s531 + $0x121] sm:$0xff]
    %v3451 = vld [vmem:[%s531 + $0x131] sm:$0xff]
    %v3452 = vld [vmem:[%s531 + $0x141] sm:$0xff]
    %v3453 = vld [vmem:[%s531 + $0x151] sm:$0xff]
    %v3454 = vld [vmem:[%s531 + $0x161] sm:$0xff]
    %v3455 = vld [vmem:[%s531 + $0x171] sm:$0xff]
    %v3456 = vlaneseq
    %v3457 = vshrl.u32 %v3456, 7
    %v3458 = vsub.s32 1, %v3457
    %v3459 = vrot.slane %v571, %v3458
    %v3460 = vmul.f32 %v3440, %v3459
    %v3461 = vmul.f32 %v3441, %v3459
    %v3462 = vmul.f32 %v3442, %v3459
    %v3463 = vmul.f32 %v3443, %v3459
    %v3464 = vmul.f32 %v3444, %v3459
    %v3465 = vmul.f32 %v3445, %v3459
    %v3466 = vmul.f32 %v3446, %v3459
    %v3467 = vmul.f32 %v3447, %v3459
    %v3468 = vmul.f32 %v3448, %v3459
    %v3469 = vmul.f32 %v3449, %v3459
    %v3470 = vmul.f32 %v3450, %v3459
    %v3471 = vmul.f32 %v3451, %v3459
    %v3472 = vmul.f32 %v3452, %v3459
    %v3473 = vmul.f32 %v3453, %v3459
    %v3474 = vmul.f32 %v3454, %v3459
    %v3475 = vmul.f32 %v3455, %v3459
    %v3476 = vadd.f32 %v3424, %v3460
    %v3477 = vadd.f32 %v3425, %v3461
    %v3478 = vadd.f32 %v3426, %v3462
    %v3479 = vadd.f32 %v3427, %v3463
    %v3480 = vadd.f32 %v3428, %v3464
    %v3481 = vadd.f32 %v3429, %v3465
    %v3482 = vadd.f32 %v3430, %v3466
    %v3483 = vadd.f32 %v3431, %v3467
    %v3484 = vadd.f32 %v3432, %v3468
    %v3485 = vadd.f32 %v3433, %v3469
    %v3486 = vadd.f32 %v3434, %v3470
    %v3487 = vadd.f32 %v3435, %v3471
    %v3488 = vadd.f32 %v3436, %v3472
    %v3489 = vadd.f32 %v3437, %v3473
    %v3490 = vadd.f32 %v3438, %v3474
    %v3491 = vadd.f32 %v3439, %v3475
    %v3492 = vld [vmem:[%s531 + $0x2] sm:$0xff]
    %v3493 = vld [vmem:[%s531 + $0x12] sm:$0xff]
    %v3494 = vld [vmem:[%s531 + $0x22] sm:$0xff]
    %v3495 = vld [vmem:[%s531 + $0x32] sm:$0xff]
    %v3496 = vld [vmem:[%s531 + $0x42] sm:$0xff]
    %v3497 = vld [vmem:[%s531 + $0x52] sm:$0xff]
    %v3498 = vld [vmem:[%s531 + $0x62] sm:$0xff]
    %v3499 = vld [vmem:[%s531 + $0x72] sm:$0xff]
    %v3500 = vld [vmem:[%s531 + $0x102] sm:$0xff]
    %v3501 = vld [vmem:[%s531 + $0x112] sm:$0xff]
    %v3502 = vld [vmem:[%s531 + $0x122] sm:$0xff]
    %v3503 = vld [vmem:[%s531 + $0x132] sm:$0xff]
    %v3504 = vld [vmem:[%s531 + $0x142] sm:$0xff]
    %v3505 = vld [vmem:[%s531 + $0x152] sm:$0xff]
    %v3506 = vld [vmem:[%s531 + $0x162] sm:$0xff]
    %v3507 = vld [vmem:[%s531 + $0x172] sm:$0xff]
    %v3508 = vlaneseq
    %v3509 = vshrl.u32 %v3508, 7
    %v3510 = vsub.s32 2, %v3509
    %v3511 = vrot.slane %v571, %v3510
    %v3512 = vmul.f32 %v3492, %v3511
    %v3513 = vmul.f32 %v3493, %v3511
    %v3514 = vmul.f32 %v3494, %v3511
    %v3515 = vmul.f32 %v3495, %v3511
    %v3516 = vmul.f32 %v3496, %v3511
    %v3517 = vmul.f32 %v3497, %v3511
    %v3518 = vmul.f32 %v3498, %v3511
    %v3519 = vmul.f32 %v3499, %v3511
    %v3520 = vmul.f32 %v3500, %v3511
    %v3521 = vmul.f32 %v3501, %v3511
    %v3522 = vmul.f32 %v3502, %v3511
    %v3523 = vmul.f32 %v3503, %v3511
    %v3524 = vmul.f32 %v3504, %v3511
    %v3525 = vmul.f32 %v3505, %v3511
    %v3526 = vmul.f32 %v3506, %v3511
    %v3527 = vmul.f32 %v3507, %v3511
    %v3528 = vadd.f32 %v3476, %v3512
    %v3529 = vadd.f32 %v3477, %v3513
    %v3530 = vadd.f32 %v3478, %v3514
    %v3531 = vadd.f32 %v3479, %v3515
    %v3532 = vadd.f32 %v3480, %v3516
    %v3533 = vadd.f32 %v3481, %v3517
    %v3534 = vadd.f32 %v3482, %v3518
    %v3535 = vadd.f32 %v3483, %v3519
    %v3536 = vadd.f32 %v3484, %v3520
    %v3537 = vadd.f32 %v3485, %v3521
    %v3538 = vadd.f32 %v3486, %v3522
    %v3539 = vadd.f32 %v3487, %v3523
    %v3540 = vadd.f32 %v3488, %v3524
    %v3541 = vadd.f32 %v3489, %v3525
    %v3542 = vadd.f32 %v3490, %v3526
    %v3543 = vadd.f32 %v3491, %v3527
    %v3544 = vld [vmem:[%s531 + $0x3] sm:$0xff]
    %v3545 = vld [vmem:[%s531 + $0x13] sm:$0xff]
    %v3546 = vld [vmem:[%s531 + $0x23] sm:$0xff]
    %v3547 = vld [vmem:[%s531 + $0x33] sm:$0xff]
    %v3548 = vld [vmem:[%s531 + $0x43] sm:$0xff]
    %v3549 = vld [vmem:[%s531 + $0x53] sm:$0xff]
    %v3550 = vld [vmem:[%s531 + $0x63] sm:$0xff]
    %v3551 = vld [vmem:[%s531 + $0x73] sm:$0xff]
    %v3552 = vld [vmem:[%s531 + $0x103] sm:$0xff]
    %v3553 = vld [vmem:[%s531 + $0x113] sm:$0xff]
    %v3554 = vld [vmem:[%s531 + $0x123] sm:$0xff]
    %v3555 = vld [vmem:[%s531 + $0x133] sm:$0xff]
    %v3556 = vld [vmem:[%s531 + $0x143] sm:$0xff]
    %v3557 = vld [vmem:[%s531 + $0x153] sm:$0xff]
    %v3558 = vld [vmem:[%s531 + $0x163] sm:$0xff]
    %v3559 = vld [vmem:[%s531 + $0x173] sm:$0xff]
    %v3560 = vlaneseq
    %v3561 = vshrl.u32 %v3560, 7
    %v3562 = vsub.s32 3, %v3561
    %v3563 = vrot.slane %v571, %v3562
    %v3564 = vmul.f32 %v3544, %v3563
    %v3565 = vmul.f32 %v3545, %v3563
    %v3566 = vmul.f32 %v3546, %v3563
    %v3567 = vmul.f32 %v3547, %v3563
    %v3568 = vmul.f32 %v3548, %v3563
    %v3569 = vmul.f32 %v3549, %v3563
    %v3570 = vmul.f32 %v3550, %v3563
    %v3571 = vmul.f32 %v3551, %v3563
    %v3572 = vmul.f32 %v3552, %v3563
    %v3573 = vmul.f32 %v3553, %v3563
    %v3574 = vmul.f32 %v3554, %v3563
    %v3575 = vmul.f32 %v3555, %v3563
    %v3576 = vmul.f32 %v3556, %v3563
    %v3577 = vmul.f32 %v3557, %v3563
    %v3578 = vmul.f32 %v3558, %v3563
    %v3579 = vmul.f32 %v3559, %v3563
    %v3580 = vadd.f32 %v3528, %v3564
    %v3581 = vadd.f32 %v3529, %v3565
    %v3582 = vadd.f32 %v3530, %v3566
    %v3583 = vadd.f32 %v3531, %v3567
    %v3584 = vadd.f32 %v3532, %v3568
    %v3585 = vadd.f32 %v3533, %v3569
    %v3586 = vadd.f32 %v3534, %v3570
    %v3587 = vadd.f32 %v3535, %v3571
    %v3588 = vadd.f32 %v3536, %v3572
    %v3589 = vadd.f32 %v3537, %v3573
    %v3590 = vadd.f32 %v3538, %v3574
    %v3591 = vadd.f32 %v3539, %v3575
    %v3592 = vadd.f32 %v3540, %v3576
    %v3593 = vadd.f32 %v3541, %v3577
    %v3594 = vadd.f32 %v3542, %v3578
    %v3595 = vadd.f32 %v3543, %v3579
    %v3596 = vld [vmem:[%s531 + $0x4] sm:$0xff]
    %v3597 = vld [vmem:[%s531 + $0x14] sm:$0xff]
    %v3598 = vld [vmem:[%s531 + $0x24] sm:$0xff]
    %v3599 = vld [vmem:[%s531 + $0x34] sm:$0xff]
    %v3600 = vld [vmem:[%s531 + $0x44] sm:$0xff]
    %v3601 = vld [vmem:[%s531 + $0x54] sm:$0xff]
    %v3602 = vld [vmem:[%s531 + $0x64] sm:$0xff]
    %v3603 = vld [vmem:[%s531 + $0x74] sm:$0xff]
    %v3604 = vld [vmem:[%s531 + $0x104] sm:$0xff]
    %v3605 = vld [vmem:[%s531 + $0x114] sm:$0xff]
    %v3606 = vld [vmem:[%s531 + $0x124] sm:$0xff]
    %v3607 = vld [vmem:[%s531 + $0x134] sm:$0xff]
    %v3608 = vld [vmem:[%s531 + $0x144] sm:$0xff]
    %v3609 = vld [vmem:[%s531 + $0x154] sm:$0xff]
    %v3610 = vld [vmem:[%s531 + $0x164] sm:$0xff]
    %v3611 = vld [vmem:[%s531 + $0x174] sm:$0xff]
    %v3612 = vlaneseq
    %v3613 = vshrl.u32 %v3612, 7
    %v3614 = vsub.s32 4, %v3613
    %v3615 = vrot.slane %v571, %v3614
    %v3616 = vmul.f32 %v3596, %v3615
    %v3617 = vmul.f32 %v3597, %v3615
    %v3618 = vmul.f32 %v3598, %v3615
    %v3619 = vmul.f32 %v3599, %v3615
    %v3620 = vmul.f32 %v3600, %v3615
    %v3621 = vmul.f32 %v3601, %v3615
    %v3622 = vmul.f32 %v3602, %v3615
    %v3623 = vmul.f32 %v3603, %v3615
    %v3624 = vmul.f32 %v3604, %v3615
    %v3625 = vmul.f32 %v3605, %v3615
    %v3626 = vmul.f32 %v3606, %v3615
    %v3627 = vmul.f32 %v3607, %v3615
    %v3628 = vmul.f32 %v3608, %v3615
    %v3629 = vmul.f32 %v3609, %v3615
    %v3630 = vmul.f32 %v3610, %v3615
    %v3631 = vmul.f32 %v3611, %v3615
    %v3632 = vadd.f32 %v3580, %v3616
    %v3633 = vadd.f32 %v3581, %v3617
    %v3634 = vadd.f32 %v3582, %v3618
    %v3635 = vadd.f32 %v3583, %v3619
    %v3636 = vadd.f32 %v3584, %v3620
    %v3637 = vadd.f32 %v3585, %v3621
    %v3638 = vadd.f32 %v3586, %v3622
    %v3639 = vadd.f32 %v3587, %v3623
    %v3640 = vadd.f32 %v3588, %v3624
    %v3641 = vadd.f32 %v3589, %v3625
    %v3642 = vadd.f32 %v3590, %v3626
    %v3643 = vadd.f32 %v3591, %v3627
    %v3644 = vadd.f32 %v3592, %v3628
    %v3645 = vadd.f32 %v3593, %v3629
    %v3646 = vadd.f32 %v3594, %v3630
    %v3647 = vadd.f32 %v3595, %v3631
    %v3648 = vld [vmem:[%s531 + $0x5] sm:$0xff]
    %v3649 = vld [vmem:[%s531 + $0x15] sm:$0xff]
    %v3650 = vld [vmem:[%s531 + $0x25] sm:$0xff]
    %v3651 = vld [vmem:[%s531 + $0x35] sm:$0xff]
    %v3652 = vld [vmem:[%s531 + $0x45] sm:$0xff]
    %v3653 = vld [vmem:[%s531 + $0x55] sm:$0xff]
    %v3654 = vld [vmem:[%s531 + $0x65] sm:$0xff]
    %v3655 = vld [vmem:[%s531 + $0x75] sm:$0xff]
    %v3656 = vld [vmem:[%s531 + $0x105] sm:$0xff]
    %v3657 = vld [vmem:[%s531 + $0x115] sm:$0xff]
    %v3658 = vld [vmem:[%s531 + $0x125] sm:$0xff]
    %v3659 = vld [vmem:[%s531 + $0x135] sm:$0xff]
    %v3660 = vld [vmem:[%s531 + $0x145] sm:$0xff]
    %v3661 = vld [vmem:[%s531 + $0x155] sm:$0xff]
    %v3662 = vld [vmem:[%s531 + $0x165] sm:$0xff]
    %v3663 = vld [vmem:[%s531 + $0x175] sm:$0xff]
    %v3664 = vlaneseq
    %v3665 = vshrl.u32 %v3664, 7
    %v3666 = vsub.s32 5, %v3665
    %v3667 = vrot.slane %v571, %v3666
    %v3668 = vmul.f32 %v3648, %v3667
    %v3669 = vmul.f32 %v3649, %v3667
    %v3670 = vmul.f32 %v3650, %v3667
    %v3671 = vmul.f32 %v3651, %v3667
    %v3672 = vmul.f32 %v3652, %v3667
    %v3673 = vmul.f32 %v3653, %v3667
    %v3674 = vmul.f32 %v3654, %v3667
    %v3675 = vmul.f32 %v3655, %v3667
    %v3676 = vmul.f32 %v3656, %v3667
    %v3677 = vmul.f32 %v3657, %v3667
    %v3678 = vmul.f32 %v3658, %v3667
    %v3679 = vmul.f32 %v3659, %v3667
    %v3680 = vmul.f32 %v3660, %v3667
    %v3681 = vmul.f32 %v3661, %v3667
    %v3682 = vmul.f32 %v3662, %v3667
    %v3683 = vmul.f32 %v3663, %v3667
    %v3684 = vadd.f32 %v3632, %v3668
    %v3685 = vadd.f32 %v3633, %v3669
    %v3686 = vadd.f32 %v3634, %v3670
    %v3687 = vadd.f32 %v3635, %v3671
    %v3688 = vadd.f32 %v3636, %v3672
    %v3689 = vadd.f32 %v3637, %v3673
    %v3690 = vadd.f32 %v3638, %v3674
    %v3691 = vadd.f32 %v3639, %v3675
    %v3692 = vadd.f32 %v3640, %v3676
    %v3693 = vadd.f32 %v3641, %v3677
    %v3694 = vadd.f32 %v3642, %v3678
    %v3695 = vadd.f32 %v3643, %v3679
    %v3696 = vadd.f32 %v3644, %v3680
    %v3697 = vadd.f32 %v3645, %v3681
    %v3698 = vadd.f32 %v3646, %v3682
    %v3699 = vadd.f32 %v3647, %v3683
    %v3700 = vld [vmem:[%s531 + $0x6] sm:$0xff]
    %v3701 = vld [vmem:[%s531 + $0x16] sm:$0xff]
    %v3702 = vld [vmem:[%s531 + $0x26] sm:$0xff]
    %v3703 = vld [vmem:[%s531 + $0x36] sm:$0xff]
    %v3704 = vld [vmem:[%s531 + $0x46] sm:$0xff]
    %v3705 = vld [vmem:[%s531 + $0x56] sm:$0xff]
    %v3706 = vld [vmem:[%s531 + $0x66] sm:$0xff]
    %v3707 = vld [vmem:[%s531 + $0x76] sm:$0xff]
    %v3708 = vld [vmem:[%s531 + $0x106] sm:$0xff]
    %v3709 = vld [vmem:[%s531 + $0x116] sm:$0xff]
    %v3710 = vld [vmem:[%s531 + $0x126] sm:$0xff]
    %v3711 = vld [vmem:[%s531 + $0x136] sm:$0xff]
    %v3712 = vld [vmem:[%s531 + $0x146] sm:$0xff]
    %v3713 = vld [vmem:[%s531 + $0x156] sm:$0xff]
    %v3714 = vld [vmem:[%s531 + $0x166] sm:$0xff]
    %v3715 = vld [vmem:[%s531 + $0x176] sm:$0xff]
    %v3716 = vlaneseq
    %v3717 = vshrl.u32 %v3716, 7
    %v3718 = vsub.s32 6, %v3717
    %v3719 = vrot.slane %v571, %v3718
    %v3720 = vmul.f32 %v3700, %v3719
    %v3721 = vmul.f32 %v3701, %v3719
    %v3722 = vmul.f32 %v3702, %v3719
    %v3723 = vmul.f32 %v3703, %v3719
    %v3724 = vmul.f32 %v3704, %v3719
    %v3725 = vmul.f32 %v3705, %v3719
    %v3726 = vmul.f32 %v3706, %v3719
    %v3727 = vmul.f32 %v3707, %v3719
    %v3728 = vmul.f32 %v3708, %v3719
    %v3729 = vmul.f32 %v3709, %v3719
    %v3730 = vmul.f32 %v3710, %v3719
    %v3731 = vmul.f32 %v3711, %v3719
    %v3732 = vmul.f32 %v3712, %v3719
    %v3733 = vmul.f32 %v3713, %v3719
    %v3734 = vmul.f32 %v3714, %v3719
    %v3735 = vmul.f32 %v3715, %v3719
    %v3736 = vadd.f32 %v3684, %v3720
    %v3737 = vadd.f32 %v3685, %v3721
    %v3738 = vadd.f32 %v3686, %v3722
    %v3739 = vadd.f32 %v3687, %v3723
    %v3740 = vadd.f32 %v3688, %v3724
    %v3741 = vadd.f32 %v3689, %v3725
    %v3742 = vadd.f32 %v3690, %v3726
    %v3743 = vadd.f32 %v3691, %v3727
    %v3744 = vadd.f32 %v3692, %v3728
    %v3745 = vadd.f32 %v3693, %v3729
    %v3746 = vadd.f32 %v3694, %v3730
    %v3747 = vadd.f32 %v3695, %v3731
    %v3748 = vadd.f32 %v3696, %v3732
    %v3749 = vadd.f32 %v3697, %v3733
    %v3750 = vadd.f32 %v3698, %v3734
    %v3751 = vadd.f32 %v3699, %v3735
    %v3752 = vld [vmem:[%s531 + $0x7] sm:$0xff]
    %v3753 = vld [vmem:[%s531 + $0x17] sm:$0xff]
    %v3754 = vld [vmem:[%s531 + $0x27] sm:$0xff]
    %v3755 = vld [vmem:[%s531 + $0x37] sm:$0xff]
    %v3756 = vld [vmem:[%s531 + $0x47] sm:$0xff]
    %v3757 = vld [vmem:[%s531 + $0x57] sm:$0xff]
    %v3758 = vld [vmem:[%s531 + $0x67] sm:$0xff]
    %v3759 = vld [vmem:[%s531 + $0x77] sm:$0xff]
    %v3760 = vld [vmem:[%s531 + $0x107] sm:$0xff]
    %v3761 = vld [vmem:[%s531 + $0x117] sm:$0xff]
    %v3762 = vld [vmem:[%s531 + $0x127] sm:$0xff]
    %v3763 = vld [vmem:[%s531 + $0x137] sm:$0xff]
    %v3764 = vld [vmem:[%s531 + $0x147] sm:$0xff]
    %v3765 = vld [vmem:[%s531 + $0x157] sm:$0xff]
    %v3766 = vld [vmem:[%s531 + $0x167] sm:$0xff]
    %v3767 = vld [vmem:[%s531 + $0x177] sm:$0xff]
    %v3768 = vlaneseq
    %v3769 = vshrl.u32 %v3768, 7
    %v3770 = vsub.s32 7, %v3769
    %v3771 = vrot.slane %v571, %v3770
    %v3772 = vmul.f32 %v3752, %v3771
    %v3773 = vmul.f32 %v3753, %v3771
    %v3774 = vmul.f32 %v3754, %v3771
    %v3775 = vmul.f32 %v3755, %v3771
    %v3776 = vmul.f32 %v3756, %v3771
    %v3777 = vmul.f32 %v3757, %v3771
    %v3778 = vmul.f32 %v3758, %v3771
    %v3779 = vmul.f32 %v3759, %v3771
    %v3780 = vmul.f32 %v3760, %v3771
    %v3781 = vmul.f32 %v3761, %v3771
    %v3782 = vmul.f32 %v3762, %v3771
    %v3783 = vmul.f32 %v3763, %v3771
    %v3784 = vmul.f32 %v3764, %v3771
    %v3785 = vmul.f32 %v3765, %v3771
    %v3786 = vmul.f32 %v3766, %v3771
    %v3787 = vmul.f32 %v3767, %v3771
    %v3788 = vadd.f32 %v3736, %v3772
    %v3789 = vadd.f32 %v3737, %v3773
    %v3790 = vadd.f32 %v3738, %v3774
    %v3791 = vadd.f32 %v3739, %v3775
    %v3792 = vadd.f32 %v3740, %v3776
    %v3793 = vadd.f32 %v3741, %v3777
    %v3794 = vadd.f32 %v3742, %v3778
    %v3795 = vadd.f32 %v3743, %v3779
    %v3796 = vadd.f32 %v3744, %v3780
    %v3797 = vadd.f32 %v3745, %v3781
    %v3798 = vadd.f32 %v3746, %v3782
    %v3799 = vadd.f32 %v3747, %v3783
    %v3800 = vadd.f32 %v3748, %v3784
    %v3801 = vadd.f32 %v3749, %v3785
    %v3802 = vadd.f32 %v3750, %v3786
    %v3803 = vadd.f32 %v3751, %v3787
    %v3804 = vld [vmem:[%s531 + $0x8] sm:$0xff]
    %v3805 = vld [vmem:[%s531 + $0x18] sm:$0xff]
    %v3806 = vld [vmem:[%s531 + $0x28] sm:$0xff]
    %v3807 = vld [vmem:[%s531 + $0x38] sm:$0xff]
    %v3808 = vld [vmem:[%s531 + $0x48] sm:$0xff]
    %v3809 = vld [vmem:[%s531 + $0x58] sm:$0xff]
    %v3810 = vld [vmem:[%s531 + $0x68] sm:$0xff]
    %v3811 = vld [vmem:[%s531 + $0x78] sm:$0xff]
    %v3812 = vld [vmem:[%s531 + $0x108] sm:$0xff]
    %v3813 = vld [vmem:[%s531 + $0x118] sm:$0xff]
    %v3814 = vld [vmem:[%s531 + $0x128] sm:$0xff]
    %v3815 = vld [vmem:[%s531 + $0x138] sm:$0xff]
    %v3816 = vld [vmem:[%s531 + $0x148] sm:$0xff]
    %v3817 = vld [vmem:[%s531 + $0x158] sm:$0xff]
    %v3818 = vld [vmem:[%s531 + $0x168] sm:$0xff]
    %v3819 = vld [vmem:[%s531 + $0x178] sm:$0xff]
    %v3820 = vlaneseq
    %v3821 = vshrl.u32 %v3820, 7
    %v3822 = vsub.s32 0, %v3821
    %v3823 = vrot.slane %v572, %v3822
    %v3824 = vmul.f32 %v3804, %v3823
    %v3825 = vmul.f32 %v3805, %v3823
    %v3826 = vmul.f32 %v3806, %v3823
    %v3827 = vmul.f32 %v3807, %v3823
    %v3828 = vmul.f32 %v3808, %v3823
    %v3829 = vmul.f32 %v3809, %v3823
    %v3830 = vmul.f32 %v3810, %v3823
    %v3831 = vmul.f32 %v3811, %v3823
    %v3832 = vmul.f32 %v3812, %v3823
    %v3833 = vmul.f32 %v3813, %v3823
    %v3834 = vmul.f32 %v3814, %v3823
    %v3835 = vmul.f32 %v3815, %v3823
    %v3836 = vmul.f32 %v3816, %v3823
    %v3837 = vmul.f32 %v3817, %v3823
    %v3838 = vmul.f32 %v3818, %v3823
    %v3839 = vmul.f32 %v3819, %v3823
    %v3840 = vadd.f32 %v3788, %v3824
    %v3841 = vadd.f32 %v3789, %v3825
    %v3842 = vadd.f32 %v3790, %v3826
    %v3843 = vadd.f32 %v3791, %v3827
    %v3844 = vadd.f32 %v3792, %v3828
    %v3845 = vadd.f32 %v3793, %v3829
    %v3846 = vadd.f32 %v3794, %v3830
    %v3847 = vadd.f32 %v3795, %v3831
    %v3848 = vadd.f32 %v3796, %v3832
    %v3849 = vadd.f32 %v3797, %v3833
    %v3850 = vadd.f32 %v3798, %v3834
    %v3851 = vadd.f32 %v3799, %v3835
    %v3852 = vadd.f32 %v3800, %v3836
    %v3853 = vadd.f32 %v3801, %v3837
    %v3854 = vadd.f32 %v3802, %v3838
    %v3855 = vadd.f32 %v3803, %v3839
    %v3856 = vld [vmem:[%s533] sm:$0xff]
    %v3857 = vld [vmem:[%s533 + $0x10] sm:$0xff]
    %v3858 = vld [vmem:[%s533 + $0x20] sm:$0xff]
    %v3859 = vld [vmem:[%s533 + $0x30] sm:$0xff]
    %v3860 = vld [vmem:[%s533 + $0x40] sm:$0xff]
    %v3861 = vld [vmem:[%s533 + $0x50] sm:$0xff]
    %v3862 = vld [vmem:[%s533 + $0x60] sm:$0xff]
    %v3863 = vld [vmem:[%s533 + $0x70] sm:$0xff]
    %v3864 = vld [vmem:[%s533 + $0x100] sm:$0xff]
    %v3865 = vld [vmem:[%s533 + $0x110] sm:$0xff]
    %v3866 = vld [vmem:[%s533 + $0x120] sm:$0xff]
    %v3867 = vld [vmem:[%s533 + $0x130] sm:$0xff]
    %v3868 = vld [vmem:[%s533 + $0x140] sm:$0xff]
    %v3869 = vld [vmem:[%s533 + $0x150] sm:$0xff]
    %v3870 = vld [vmem:[%s533 + $0x160] sm:$0xff]
    %v3871 = vld [vmem:[%s533 + $0x170] sm:$0xff]
    %v3872 = vlaneseq
    %v3873 = vshrl.u32 %v3872, 7
    %v3874 = vsub.s32 0, %v3873
    %v3875 = vrot.slane %v573, %v3874
    %v3876 = vmul.f32 %v3856, %v3875
    %v3877 = vmul.f32 %v3857, %v3875
    %v3878 = vmul.f32 %v3858, %v3875
    %v3879 = vmul.f32 %v3859, %v3875
    %v3880 = vmul.f32 %v3860, %v3875
    %v3881 = vmul.f32 %v3861, %v3875
    %v3882 = vmul.f32 %v3862, %v3875
    %v3883 = vmul.f32 %v3863, %v3875
    %v3884 = vmul.f32 %v3864, %v3875
    %v3885 = vmul.f32 %v3865, %v3875
    %v3886 = vmul.f32 %v3866, %v3875
    %v3887 = vmul.f32 %v3867, %v3875
    %v3888 = vmul.f32 %v3868, %v3875
    %v3889 = vmul.f32 %v3869, %v3875
    %v3890 = vmul.f32 %v3870, %v3875
    %v3891 = vmul.f32 %v3871, %v3875
    %v3892 = vadd.f32 %v3840, %v3876
    %v3893 = vadd.f32 %v3841, %v3877
    %v3894 = vadd.f32 %v3842, %v3878
    %v3895 = vadd.f32 %v3843, %v3879
    %v3896 = vadd.f32 %v3844, %v3880
    %v3897 = vadd.f32 %v3845, %v3881
    %v3898 = vadd.f32 %v3846, %v3882
    %v3899 = vadd.f32 %v3847, %v3883
    %v3900 = vadd.f32 %v3848, %v3884
    %v3901 = vadd.f32 %v3849, %v3885
    %v3902 = vadd.f32 %v3850, %v3886
    %v3903 = vadd.f32 %v3851, %v3887
    %v3904 = vadd.f32 %v3852, %v3888
    %v3905 = vadd.f32 %v3853, %v3889
    %v3906 = vadd.f32 %v3854, %v3890
    %v3907 = vadd.f32 %v3855, %v3891
    %v3908 = vld [vmem:[%s533 + $0x1] sm:$0xff]
    %v3909 = vld [vmem:[%s533 + $0x11] sm:$0xff]
    %v3910 = vld [vmem:[%s533 + $0x21] sm:$0xff]
    %v3911 = vld [vmem:[%s533 + $0x31] sm:$0xff]
    %v3912 = vld [vmem:[%s533 + $0x41] sm:$0xff]
    %v3913 = vld [vmem:[%s533 + $0x51] sm:$0xff]
    %v3914 = vld [vmem:[%s533 + $0x61] sm:$0xff]
    %v3915 = vld [vmem:[%s533 + $0x71] sm:$0xff]
    %v3916 = vld [vmem:[%s533 + $0x101] sm:$0xff]
    %v3917 = vld [vmem:[%s533 + $0x111] sm:$0xff]
    %v3918 = vld [vmem:[%s533 + $0x121] sm:$0xff]
    %v3919 = vld [vmem:[%s533 + $0x131] sm:$0xff]
    %v3920 = vld [vmem:[%s533 + $0x141] sm:$0xff]
    %v3921 = vld [vmem:[%s533 + $0x151] sm:$0xff]
    %v3922 = vld [vmem:[%s533 + $0x161] sm:$0xff]
    %v3923 = vld [vmem:[%s533 + $0x171] sm:$0xff]
    %v3924 = vlaneseq
    %v3925 = vshrl.u32 %v3924, 7
    %v3926 = vsub.s32 1, %v3925
    %v3927 = vrot.slane %v573, %v3926
    %v3928 = vmul.f32 %v3908, %v3927
    %v3929 = vmul.f32 %v3909, %v3927
    %v3930 = vmul.f32 %v3910, %v3927
    %v3931 = vmul.f32 %v3911, %v3927
    %v3932 = vmul.f32 %v3912, %v3927
    %v3933 = vmul.f32 %v3913, %v3927
    %v3934 = vmul.f32 %v3914, %v3927
    %v3935 = vmul.f32 %v3915, %v3927
    %v3936 = vmul.f32 %v3916, %v3927
    %v3937 = vmul.f32 %v3917, %v3927
    %v3938 = vmul.f32 %v3918, %v3927
    %v3939 = vmul.f32 %v3919, %v3927
    %v3940 = vmul.f32 %v3920, %v3927
    %v3941 = vmul.f32 %v3921, %v3927
    %v3942 = vmul.f32 %v3922, %v3927
    %v3943 = vmul.f32 %v3923, %v3927
    %v3944 = vadd.f32 %v3892, %v3928
    %v3945 = vadd.f32 %v3893, %v3929
    %v3946 = vadd.f32 %v3894, %v3930
    %v3947 = vadd.f32 %v3895, %v3931
    %v3948 = vadd.f32 %v3896, %v3932
    %v3949 = vadd.f32 %v3897, %v3933
    %v3950 = vadd.f32 %v3898, %v3934
    %v3951 = vadd.f32 %v3899, %v3935
    %v3952 = vadd.f32 %v3900, %v3936
    %v3953 = vadd.f32 %v3901, %v3937
    %v3954 = vadd.f32 %v3902, %v3938
    %v3955 = vadd.f32 %v3903, %v3939
    %v3956 = vadd.f32 %v3904, %v3940
    %v3957 = vadd.f32 %v3905, %v3941
    %v3958 = vadd.f32 %v3906, %v3942
    %v3959 = vadd.f32 %v3907, %v3943
    %v3960 = vld [vmem:[%s533 + $0x2] sm:$0xff]
    %v3961 = vld [vmem:[%s533 + $0x12] sm:$0xff]
    %v3962 = vld [vmem:[%s533 + $0x22] sm:$0xff]
    %v3963 = vld [vmem:[%s533 + $0x32] sm:$0xff]
    %v3964 = vld [vmem:[%s533 + $0x42] sm:$0xff]
    %v3965 = vld [vmem:[%s533 + $0x52] sm:$0xff]
    %v3966 = vld [vmem:[%s533 + $0x62] sm:$0xff]
    %v3967 = vld [vmem:[%s533 + $0x72] sm:$0xff]
    %v3968 = vld [vmem:[%s533 + $0x102] sm:$0xff]
    %v3969 = vld [vmem:[%s533 + $0x112] sm:$0xff]
    %v3970 = vld [vmem:[%s533 + $0x122] sm:$0xff]
    %v3971 = vld [vmem:[%s533 + $0x132] sm:$0xff]
    %v3972 = vld [vmem:[%s533 + $0x142] sm:$0xff]
    %v3973 = vld [vmem:[%s533 + $0x152] sm:$0xff]
    %v3974 = vld [vmem:[%s533 + $0x162] sm:$0xff]
    %v3975 = vld [vmem:[%s533 + $0x172] sm:$0xff]
    %v3976 = vlaneseq
    %v3977 = vshrl.u32 %v3976, 7
    %v3978 = vsub.s32 2, %v3977
    %v3979 = vrot.slane %v573, %v3978
    %v3980 = vmul.f32 %v3960, %v3979
    %v3981 = vmul.f32 %v3961, %v3979
    %v3982 = vmul.f32 %v3962, %v3979
    %v3983 = vmul.f32 %v3963, %v3979
    %v3984 = vmul.f32 %v3964, %v3979
    %v3985 = vmul.f32 %v3965, %v3979
    %v3986 = vmul.f32 %v3966, %v3979
    %v3987 = vmul.f32 %v3967, %v3979
    %v3988 = vmul.f32 %v3968, %v3979
    %v3989 = vmul.f32 %v3969, %v3979
    %v3990 = vmul.f32 %v3970, %v3979
    %v3991 = vmul.f32 %v3971, %v3979
    %v3992 = vmul.f32 %v3972, %v3979
    %v3993 = vmul.f32 %v3973, %v3979
    %v3994 = vmul.f32 %v3974, %v3979
    %v3995 = vmul.f32 %v3975, %v3979
    %v3996 = vadd.f32 %v3944, %v3980
    %v3997 = vadd.f32 %v3945, %v3981
    %v3998 = vadd.f32 %v3946, %v3982
    %v3999 = vadd.f32 %v3947, %v3983
    %v4000 = vadd.f32 %v3948, %v3984
    %v4001 = vadd.f32 %v3949, %v3985
    %v4002 = vadd.f32 %v3950, %v3986
    %v4003 = vadd.f32 %v3951, %v3987
    %v4004 = vadd.f32 %v3952, %v3988
    %v4005 = vadd.f32 %v3953, %v3989
    %v4006 = vadd.f32 %v3954, %v3990
    %v4007 = vadd.f32 %v3955, %v3991
    %v4008 = vadd.f32 %v3956, %v3992
    %v4009 = vadd.f32 %v3957, %v3993
    %v4010 = vadd.f32 %v3958, %v3994
    %v4011 = vadd.f32 %v3959, %v3995
    %v4012 = vld [vmem:[%s533 + $0x3] sm:$0xff]
    %v4013 = vld [vmem:[%s533 + $0x13] sm:$0xff]
    %v4014 = vld [vmem:[%s533 + $0x23] sm:$0xff]
    %v4015 = vld [vmem:[%s533 + $0x33] sm:$0xff]
    %v4016 = vld [vmem:[%s533 + $0x43] sm:$0xff]
    %v4017 = vld [vmem:[%s533 + $0x53] sm:$0xff]
    %v4018 = vld [vmem:[%s533 + $0x63] sm:$0xff]
    %v4019 = vld [vmem:[%s533 + $0x73] sm:$0xff]
    %v4020 = vld [vmem:[%s533 + $0x103] sm:$0xff]
    %v4021 = vld [vmem:[%s533 + $0x113] sm:$0xff]
    %v4022 = vld [vmem:[%s533 + $0x123] sm:$0xff]
    %v4023 = vld [vmem:[%s533 + $0x133] sm:$0xff]
    %v4024 = vld [vmem:[%s533 + $0x143] sm:$0xff]
    %v4025 = vld [vmem:[%s533 + $0x153] sm:$0xff]
    %v4026 = vld [vmem:[%s533 + $0x163] sm:$0xff]
    %v4027 = vld [vmem:[%s533 + $0x173] sm:$0xff]
    %v4028 = vlaneseq
    %v4029 = vshrl.u32 %v4028, 7
    %v4030 = vsub.s32 3, %v4029
    %v4031 = vrot.slane %v573, %v4030
    %v4032 = vmul.f32 %v4012, %v4031
    %v4033 = vmul.f32 %v4013, %v4031
    %v4034 = vmul.f32 %v4014, %v4031
    %v4035 = vmul.f32 %v4015, %v4031
    %v4036 = vmul.f32 %v4016, %v4031
    %v4037 = vmul.f32 %v4017, %v4031
    %v4038 = vmul.f32 %v4018, %v4031
    %v4039 = vmul.f32 %v4019, %v4031
    %v4040 = vmul.f32 %v4020, %v4031
    %v4041 = vmul.f32 %v4021, %v4031
    %v4042 = vmul.f32 %v4022, %v4031
    %v4043 = vmul.f32 %v4023, %v4031
    %v4044 = vmul.f32 %v4024, %v4031
    %v4045 = vmul.f32 %v4025, %v4031
    %v4046 = vmul.f32 %v4026, %v4031
    %v4047 = vmul.f32 %v4027, %v4031
    %v4048 = vadd.f32 %v3996, %v4032
    %v4049 = vadd.f32 %v3997, %v4033
    %v4050 = vadd.f32 %v3998, %v4034
    %v4051 = vadd.f32 %v3999, %v4035
    %v4052 = vadd.f32 %v4000, %v4036
    %v4053 = vadd.f32 %v4001, %v4037
    %v4054 = vadd.f32 %v4002, %v4038
    %v4055 = vadd.f32 %v4003, %v4039
    %v4056 = vadd.f32 %v4004, %v4040
    %v4057 = vadd.f32 %v4005, %v4041
    %v4058 = vadd.f32 %v4006, %v4042
    %v4059 = vadd.f32 %v4007, %v4043
    %v4060 = vadd.f32 %v4008, %v4044
    %v4061 = vadd.f32 %v4009, %v4045
    %v4062 = vadd.f32 %v4010, %v4046
    %v4063 = vadd.f32 %v4011, %v4047
    %v4064 = vld [vmem:[%s533 + $0x4] sm:$0xff]
    %v4065 = vld [vmem:[%s533 + $0x14] sm:$0xff]
    %v4066 = vld [vmem:[%s533 + $0x24] sm:$0xff]
    %v4067 = vld [vmem:[%s533 + $0x34] sm:$0xff]
    %v4068 = vld [vmem:[%s533 + $0x44] sm:$0xff]
    %v4069 = vld [vmem:[%s533 + $0x54] sm:$0xff]
    %v4070 = vld [vmem:[%s533 + $0x64] sm:$0xff]
    %v4071 = vld [vmem:[%s533 + $0x74] sm:$0xff]
    %v4072 = vld [vmem:[%s533 + $0x104] sm:$0xff]
    %v4073 = vld [vmem:[%s533 + $0x114] sm:$0xff]
    %v4074 = vld [vmem:[%s533 + $0x124] sm:$0xff]
    %v4075 = vld [vmem:[%s533 + $0x134] sm:$0xff]
    %v4076 = vld [vmem:[%s533 + $0x144] sm:$0xff]
    %v4077 = vld [vmem:[%s533 + $0x154] sm:$0xff]
    %v4078 = vld [vmem:[%s533 + $0x164] sm:$0xff]
    %v4079 = vld [vmem:[%s533 + $0x174] sm:$0xff]
    %v4080 = vlaneseq
    %v4081 = vshrl.u32 %v4080, 7
    %v4082 = vsub.s32 4, %v4081
    %v4083 = vrot.slane %v573, %v4082
    %v4084 = vmul.f32 %v4064, %v4083
    %v4085 = vmul.f32 %v4065, %v4083
    %v4086 = vmul.f32 %v4066, %v4083
    %v4087 = vmul.f32 %v4067, %v4083
    %v4088 = vmul.f32 %v4068, %v4083
    %v4089 = vmul.f32 %v4069, %v4083
    %v4090 = vmul.f32 %v4070, %v4083
    %v4091 = vmul.f32 %v4071, %v4083
    %v4092 = vmul.f32 %v4072, %v4083
    %v4093 = vmul.f32 %v4073, %v4083
    %v4094 = vmul.f32 %v4074, %v4083
    %v4095 = vmul.f32 %v4075, %v4083
    %v4096 = vmul.f32 %v4076, %v4083
    %v4097 = vmul.f32 %v4077, %v4083
    %v4098 = vmul.f32 %v4078, %v4083
    %v4099 = vmul.f32 %v4079, %v4083
    %v4100 = vadd.f32 %v4048, %v4084
    %v4101 = vadd.f32 %v4049, %v4085
    %v4102 = vadd.f32 %v4050, %v4086
    %v4103 = vadd.f32 %v4051, %v4087
    %v4104 = vadd.f32 %v4052, %v4088
    %v4105 = vadd.f32 %v4053, %v4089
    %v4106 = vadd.f32 %v4054, %v4090
    %v4107 = vadd.f32 %v4055, %v4091
    %v4108 = vadd.f32 %v4056, %v4092
    %v4109 = vadd.f32 %v4057, %v4093
    %v4110 = vadd.f32 %v4058, %v4094
    %v4111 = vadd.f32 %v4059, %v4095
    %v4112 = vadd.f32 %v4060, %v4096
    %v4113 = vadd.f32 %v4061, %v4097
    %v4114 = vadd.f32 %v4062, %v4098
    %v4115 = vadd.f32 %v4063, %v4099
    %v4116 = vld [vmem:[%s533 + $0x5] sm:$0xff]
    %v4117 = vld [vmem:[%s533 + $0x15] sm:$0xff]
    %v4118 = vld [vmem:[%s533 + $0x25] sm:$0xff]
    %v4119 = vld [vmem:[%s533 + $0x35] sm:$0xff]
    %v4120 = vld [vmem:[%s533 + $0x45] sm:$0xff]
    %v4121 = vld [vmem:[%s533 + $0x55] sm:$0xff]
    %v4122 = vld [vmem:[%s533 + $0x65] sm:$0xff]
    %v4123 = vld [vmem:[%s533 + $0x75] sm:$0xff]
    %v4124 = vld [vmem:[%s533 + $0x105] sm:$0xff]
    %v4125 = vld [vmem:[%s533 + $0x115] sm:$0xff]
    %v4126 = vld [vmem:[%s533 + $0x125] sm:$0xff]
    %v4127 = vld [vmem:[%s533 + $0x135] sm:$0xff]
    %v4128 = vld [vmem:[%s533 + $0x145] sm:$0xff]
    %v4129 = vld [vmem:[%s533 + $0x155] sm:$0xff]
    %v4130 = vld [vmem:[%s533 + $0x165] sm:$0xff]
    %v4131 = vld [vmem:[%s533 + $0x175] sm:$0xff]
    %v4132 = vlaneseq
    %v4133 = vshrl.u32 %v4132, 7
    %v4134 = vsub.s32 5, %v4133
    %v4135 = vrot.slane %v573, %v4134
    %v4136 = vmul.f32 %v4116, %v4135
    %v4137 = vmul.f32 %v4117, %v4135
    %v4138 = vmul.f32 %v4118, %v4135
    %v4139 = vmul.f32 %v4119, %v4135
    %v4140 = vmul.f32 %v4120, %v4135
    %v4141 = vmul.f32 %v4121, %v4135
    %v4142 = vmul.f32 %v4122, %v4135
    %v4143 = vmul.f32 %v4123, %v4135
    %v4144 = vmul.f32 %v4124, %v4135
    %v4145 = vmul.f32 %v4125, %v4135
    %v4146 = vmul.f32 %v4126, %v4135
    %v4147 = vmul.f32 %v4127, %v4135
    %v4148 = vmul.f32 %v4128, %v4135
    %v4149 = vmul.f32 %v4129, %v4135
    %v4150 = vmul.f32 %v4130, %v4135
    %v4151 = vmul.f32 %v4131, %v4135
    %v4152 = vadd.f32 %v4100, %v4136
    %v4153 = vadd.f32 %v4101, %v4137
    %v4154 = vadd.f32 %v4102, %v4138
    %v4155 = vadd.f32 %v4103, %v4139
    %v4156 = vadd.f32 %v4104, %v4140
    %v4157 = vadd.f32 %v4105, %v4141
    %v4158 = vadd.f32 %v4106, %v4142
    %v4159 = vadd.f32 %v4107, %v4143
    %v4160 = vadd.f32 %v4108, %v4144
    %v4161 = vadd.f32 %v4109, %v4145
    %v4162 = vadd.f32 %v4110, %v4146
    %v4163 = vadd.f32 %v4111, %v4147
    %v4164 = vadd.f32 %v4112, %v4148
    %v4165 = vadd.f32 %v4113, %v4149
    %v4166 = vadd.f32 %v4114, %v4150
    %v4167 = vadd.f32 %v4115, %v4151
    %v4168 = vld [vmem:[%s533 + $0x6] sm:$0xff]
    %v4169 = vld [vmem:[%s533 + $0x16] sm:$0xff]
    %v4170 = vld [vmem:[%s533 + $0x26] sm:$0xff]
    %v4171 = vld [vmem:[%s533 + $0x36] sm:$0xff]
    %v4172 = vld [vmem:[%s533 + $0x46] sm:$0xff]
    %v4173 = vld [vmem:[%s533 + $0x56] sm:$0xff]
    %v4174 = vld [vmem:[%s533 + $0x66] sm:$0xff]
    %v4175 = vld [vmem:[%s533 + $0x76] sm:$0xff]
    %v4176 = vld [vmem:[%s533 + $0x106] sm:$0xff]
    %v4177 = vld [vmem:[%s533 + $0x116] sm:$0xff]
    %v4178 = vld [vmem:[%s533 + $0x126] sm:$0xff]
    %v4179 = vld [vmem:[%s533 + $0x136] sm:$0xff]
    %v4180 = vld [vmem:[%s533 + $0x146] sm:$0xff]
    %v4181 = vld [vmem:[%s533 + $0x156] sm:$0xff]
    %v4182 = vld [vmem:[%s533 + $0x166] sm:$0xff]
    %v4183 = vld [vmem:[%s533 + $0x176] sm:$0xff]
    %v4184 = vlaneseq
    %v4185 = vshrl.u32 %v4184, 7
    %v4186 = vsub.s32 6, %v4185
    %v4187 = vrot.slane %v573, %v4186
    %v4188 = vmul.f32 %v4168, %v4187
    %v4189 = vmul.f32 %v4169, %v4187
    %v4190 = vmul.f32 %v4170, %v4187
    %v4191 = vmul.f32 %v4171, %v4187
    %v4192 = vmul.f32 %v4172, %v4187
    %v4193 = vmul.f32 %v4173, %v4187
    %v4194 = vmul.f32 %v4174, %v4187
    %v4195 = vmul.f32 %v4175, %v4187
    %v4196 = vmul.f32 %v4176, %v4187
    %v4197 = vmul.f32 %v4177, %v4187
    %v4198 = vmul.f32 %v4178, %v4187
    %v4199 = vmul.f32 %v4179, %v4187
    %v4200 = vmul.f32 %v4180, %v4187
    %v4201 = vmul.f32 %v4181, %v4187
    %v4202 = vmul.f32 %v4182, %v4187
    %v4203 = vmul.f32 %v4183, %v4187
    %v4204 = vadd.f32 %v4152, %v4188
    %v4205 = vadd.f32 %v4153, %v4189
    %v4206 = vadd.f32 %v4154, %v4190
    %v4207 = vadd.f32 %v4155, %v4191
    %v4208 = vadd.f32 %v4156, %v4192
    %v4209 = vadd.f32 %v4157, %v4193
    %v4210 = vadd.f32 %v4158, %v4194
    %v4211 = vadd.f32 %v4159, %v4195
    %v4212 = vadd.f32 %v4160, %v4196
    %v4213 = vadd.f32 %v4161, %v4197
    %v4214 = vadd.f32 %v4162, %v4198
    %v4215 = vadd.f32 %v4163, %v4199
    %v4216 = vadd.f32 %v4164, %v4200
    %v4217 = vadd.f32 %v4165, %v4201
    %v4218 = vadd.f32 %v4166, %v4202
    %v4219 = vadd.f32 %v4167, %v4203
    %v4220 = vld [vmem:[%s533 + $0x7] sm:$0xff]
    %v4221 = vld [vmem:[%s533 + $0x17] sm:$0xff]
    %v4222 = vld [vmem:[%s533 + $0x27] sm:$0xff]
    %v4223 = vld [vmem:[%s533 + $0x37] sm:$0xff]
    %v4224 = vld [vmem:[%s533 + $0x47] sm:$0xff]
    %v4225 = vld [vmem:[%s533 + $0x57] sm:$0xff]
    %v4226 = vld [vmem:[%s533 + $0x67] sm:$0xff]
    %v4227 = vld [vmem:[%s533 + $0x77] sm:$0xff]
    %v4228 = vld [vmem:[%s533 + $0x107] sm:$0xff]
    %v4229 = vld [vmem:[%s533 + $0x117] sm:$0xff]
    %v4230 = vld [vmem:[%s533 + $0x127] sm:$0xff]
    %v4231 = vld [vmem:[%s533 + $0x137] sm:$0xff]
    %v4232 = vld [vmem:[%s533 + $0x147] sm:$0xff]
    %v4233 = vld [vmem:[%s533 + $0x157] sm:$0xff]
    %v4234 = vld [vmem:[%s533 + $0x167] sm:$0xff]
    %v4235 = vld [vmem:[%s533 + $0x177] sm:$0xff]
    %v4236 = vlaneseq
    %v4237 = vshrl.u32 %v4236, 7
    %v4238 = vsub.s32 7, %v4237
    %v4239 = vrot.slane %v573, %v4238
    %v4240 = vmul.f32 %v4220, %v4239
    %v4241 = vmul.f32 %v4221, %v4239
    %v4242 = vmul.f32 %v4222, %v4239
    %v4243 = vmul.f32 %v4223, %v4239
    %v4244 = vmul.f32 %v4224, %v4239
    %v4245 = vmul.f32 %v4225, %v4239
    %v4246 = vmul.f32 %v4226, %v4239
    %v4247 = vmul.f32 %v4227, %v4239
    %v4248 = vmul.f32 %v4228, %v4239
    %v4249 = vmul.f32 %v4229, %v4239
    %v4250 = vmul.f32 %v4230, %v4239
    %v4251 = vmul.f32 %v4231, %v4239
    %v4252 = vmul.f32 %v4232, %v4239
    %v4253 = vmul.f32 %v4233, %v4239
    %v4254 = vmul.f32 %v4234, %v4239
    %v4255 = vmul.f32 %v4235, %v4239
    %v4256 = vadd.f32 %v4204, %v4240
    %v4257 = vadd.f32 %v4205, %v4241
    %v4258 = vadd.f32 %v4206, %v4242
    %v4259 = vadd.f32 %v4207, %v4243
    %v4260 = vadd.f32 %v4208, %v4244
    %v4261 = vadd.f32 %v4209, %v4245
    %v4262 = vadd.f32 %v4210, %v4246
    %v4263 = vadd.f32 %v4211, %v4247
    %v4264 = vadd.f32 %v4212, %v4248
    %v4265 = vadd.f32 %v4213, %v4249
    %v4266 = vadd.f32 %v4214, %v4250
    %v4267 = vadd.f32 %v4215, %v4251
    %v4268 = vadd.f32 %v4216, %v4252
    %v4269 = vadd.f32 %v4217, %v4253
    %v4270 = vadd.f32 %v4218, %v4254
    %v4271 = vadd.f32 %v4219, %v4255
    %v4272 = vld [vmem:[%s533 + $0x8] sm:$0xff]
    %v4273 = vld [vmem:[%s533 + $0x18] sm:$0xff]
    %v4274 = vld [vmem:[%s533 + $0x28] sm:$0xff]
    %v4275 = vld [vmem:[%s533 + $0x38] sm:$0xff]
    %v4276 = vld [vmem:[%s533 + $0x48] sm:$0xff]
    %v4277 = vld [vmem:[%s533 + $0x58] sm:$0xff]
    %v4278 = vld [vmem:[%s533 + $0x68] sm:$0xff]
    %v4279 = vld [vmem:[%s533 + $0x78] sm:$0xff]
    %v4280 = vld [vmem:[%s533 + $0x108] sm:$0xff]
    %v4281 = vld [vmem:[%s533 + $0x118] sm:$0xff]
    %v4282 = vld [vmem:[%s533 + $0x128] sm:$0xff]
    %v4283 = vld [vmem:[%s533 + $0x138] sm:$0xff]
    %v4284 = vld [vmem:[%s533 + $0x148] sm:$0xff]
    %v4285 = vld [vmem:[%s533 + $0x158] sm:$0xff]
    %v4286 = vld [vmem:[%s533 + $0x168] sm:$0xff]
    %v4287 = vld [vmem:[%s533 + $0x178] sm:$0xff]
    %v4288 = vlaneseq
    %v4289 = vshrl.u32 %v4288, 7
    %v4290 = vsub.s32 0, %v4289
    %v4291 = vrot.slane %v574, %v4290
    %v4292 = vmul.f32 %v4272, %v4291
    %v4293 = vmul.f32 %v4273, %v4291
    %v4294 = vmul.f32 %v4274, %v4291
    %v4295 = vmul.f32 %v4275, %v4291
    %v4296 = vmul.f32 %v4276, %v4291
    %v4297 = vmul.f32 %v4277, %v4291
    %v4298 = vmul.f32 %v4278, %v4291
    %v4299 = vmul.f32 %v4279, %v4291
    %v4300 = vmul.f32 %v4280, %v4291
    %v4301 = vmul.f32 %v4281, %v4291
    %v4302 = vmul.f32 %v4282, %v4291
    %v4303 = vmul.f32 %v4283, %v4291
    %v4304 = vmul.f32 %v4284, %v4291
    %v4305 = vmul.f32 %v4285, %v4291
    %v4306 = vmul.f32 %v4286, %v4291
    %v4307 = vmul.f32 %v4287, %v4291
    %v4308 = vadd.f32 %v4256, %v4292
    %v4309 = vadd.f32 %v4257, %v4293
    %v4310 = vadd.f32 %v4258, %v4294
    %v4311 = vadd.f32 %v4259, %v4295
    %v4312 = vadd.f32 %v4260, %v4296
    %v4313 = vadd.f32 %v4261, %v4297
    %v4314 = vadd.f32 %v4262, %v4298
    %v4315 = vadd.f32 %v4263, %v4299
    %v4316 = vadd.f32 %v4264, %v4300
    %v4317 = vadd.f32 %v4265, %v4301
    %v4318 = vadd.f32 %v4266, %v4302
    %v4319 = vadd.f32 %v4267, %v4303
    %v4320 = vadd.f32 %v4268, %v4304
    %v4321 = vadd.f32 %v4269, %v4305
    %v4322 = vadd.f32 %v4270, %v4306
    %v4323 = vadd.f32 %v4271, %v4307
    %v4324 = vld [vmem:[%s535] sm:$0xff]
    %v4325 = vld [vmem:[%s535 + $0x10] sm:$0xff]
    %v4326 = vld [vmem:[%s535 + $0x20] sm:$0xff]
    %v4327 = vld [vmem:[%s535 + $0x30] sm:$0xff]
    %v4328 = vld [vmem:[%s535 + $0x40] sm:$0xff]
    %v4329 = vld [vmem:[%s535 + $0x50] sm:$0xff]
    %v4330 = vld [vmem:[%s535 + $0x60] sm:$0xff]
    %v4331 = vld [vmem:[%s535 + $0x70] sm:$0xff]
    %v4332 = vld [vmem:[%s535 + $0x100] sm:$0xff]
    %v4333 = vld [vmem:[%s535 + $0x110] sm:$0xff]
    %v4334 = vld [vmem:[%s535 + $0x120] sm:$0xff]
    %v4335 = vld [vmem:[%s535 + $0x130] sm:$0xff]
    %v4336 = vld [vmem:[%s535 + $0x140] sm:$0xff]
    %v4337 = vld [vmem:[%s535 + $0x150] sm:$0xff]
    %v4338 = vld [vmem:[%s535 + $0x160] sm:$0xff]
    %v4339 = vld [vmem:[%s535 + $0x170] sm:$0xff]
    %v4340 = vlaneseq
    %v4341 = vshrl.u32 %v4340, 7
    %v4342 = vsub.s32 0, %v4341
    %v4343 = vrot.slane %v575, %v4342
    %v4344 = vmul.f32 %v4324, %v4343
    %v4345 = vmul.f32 %v4325, %v4343
    %v4346 = vmul.f32 %v4326, %v4343
    %v4347 = vmul.f32 %v4327, %v4343
    %v4348 = vmul.f32 %v4328, %v4343
    %v4349 = vmul.f32 %v4329, %v4343
    %v4350 = vmul.f32 %v4330, %v4343
    %v4351 = vmul.f32 %v4331, %v4343
    %v4352 = vmul.f32 %v4332, %v4343
    %v4353 = vmul.f32 %v4333, %v4343
    %v4354 = vmul.f32 %v4334, %v4343
    %v4355 = vmul.f32 %v4335, %v4343
    %v4356 = vmul.f32 %v4336, %v4343
    %v4357 = vmul.f32 %v4337, %v4343
    %v4358 = vmul.f32 %v4338, %v4343
    %v4359 = vmul.f32 %v4339, %v4343
    %v4360 = vadd.f32 %v4308, %v4344
    %v4361 = vadd.f32 %v4309, %v4345
    %v4362 = vadd.f32 %v4310, %v4346
    %v4363 = vadd.f32 %v4311, %v4347
    %v4364 = vadd.f32 %v4312, %v4348
    %v4365 = vadd.f32 %v4313, %v4349
    %v4366 = vadd.f32 %v4314, %v4350
    %v4367 = vadd.f32 %v4315, %v4351
    %v4368 = vadd.f32 %v4316, %v4352
    %v4369 = vadd.f32 %v4317, %v4353
    %v4370 = vadd.f32 %v4318, %v4354
    %v4371 = vadd.f32 %v4319, %v4355
    %v4372 = vadd.f32 %v4320, %v4356
    %v4373 = vadd.f32 %v4321, %v4357
    %v4374 = vadd.f32 %v4322, %v4358
    %v4375 = vadd.f32 %v4323, %v4359
    %v4376 = vld [vmem:[%s535 + $0x1] sm:$0xff]
    %v4377 = vld [vmem:[%s535 + $0x11] sm:$0xff]
    %v4378 = vld [vmem:[%s535 + $0x21] sm:$0xff]
    %v4379 = vld [vmem:[%s535 + $0x31] sm:$0xff]
    %v4380 = vld [vmem:[%s535 + $0x41] sm:$0xff]
    %v4381 = vld [vmem:[%s535 + $0x51] sm:$0xff]
    %v4382 = vld [vmem:[%s535 + $0x61] sm:$0xff]
    %v4383 = vld [vmem:[%s535 + $0x71] sm:$0xff]
    %v4384 = vld [vmem:[%s535 + $0x101] sm:$0xff]
    %v4385 = vld [vmem:[%s535 + $0x111] sm:$0xff]
    %v4386 = vld [vmem:[%s535 + $0x121] sm:$0xff]
    %v4387 = vld [vmem:[%s535 + $0x131] sm:$0xff]
    %v4388 = vld [vmem:[%s535 + $0x141] sm:$0xff]
    %v4389 = vld [vmem:[%s535 + $0x151] sm:$0xff]
    %v4390 = vld [vmem:[%s535 + $0x161] sm:$0xff]
    %v4391 = vld [vmem:[%s535 + $0x171] sm:$0xff]
    %v4392 = vlaneseq
    %v4393 = vshrl.u32 %v4392, 7
    %v4394 = vsub.s32 1, %v4393
    %v4395 = vrot.slane %v575, %v4394
    %v4396 = vmul.f32 %v4376, %v4395
    %v4397 = vmul.f32 %v4377, %v4395
    %v4398 = vmul.f32 %v4378, %v4395
    %v4399 = vmul.f32 %v4379, %v4395
    %v4400 = vmul.f32 %v4380, %v4395
    %v4401 = vmul.f32 %v4381, %v4395
    %v4402 = vmul.f32 %v4382, %v4395
    %v4403 = vmul.f32 %v4383, %v4395
    %v4404 = vmul.f32 %v4384, %v4395
    %v4405 = vmul.f32 %v4385, %v4395
    %v4406 = vmul.f32 %v4386, %v4395
    %v4407 = vmul.f32 %v4387, %v4395
    %v4408 = vmul.f32 %v4388, %v4395
    %v4409 = vmul.f32 %v4389, %v4395
    %v4410 = vmul.f32 %v4390, %v4395
    %v4411 = vmul.f32 %v4391, %v4395
    %v4412 = vadd.f32 %v4360, %v4396
    %v4413 = vadd.f32 %v4361, %v4397
    %v4414 = vadd.f32 %v4362, %v4398
    %v4415 = vadd.f32 %v4363, %v4399
    %v4416 = vadd.f32 %v4364, %v4400
    %v4417 = vadd.f32 %v4365, %v4401
    %v4418 = vadd.f32 %v4366, %v4402
    %v4419 = vadd.f32 %v4367, %v4403
    %v4420 = vadd.f32 %v4368, %v4404
    %v4421 = vadd.f32 %v4369, %v4405
    %v4422 = vadd.f32 %v4370, %v4406
    %v4423 = vadd.f32 %v4371, %v4407
    %v4424 = vadd.f32 %v4372, %v4408
    %v4425 = vadd.f32 %v4373, %v4409
    %v4426 = vadd.f32 %v4374, %v4410
    %v4427 = vadd.f32 %v4375, %v4411
    %v4428 = vld [vmem:[%s535 + $0x2] sm:$0xff]
    %v4429 = vld [vmem:[%s535 + $0x12] sm:$0xff]
    %v4430 = vld [vmem:[%s535 + $0x22] sm:$0xff]
    %v4431 = vld [vmem:[%s535 + $0x32] sm:$0xff]
    %v4432 = vld [vmem:[%s535 + $0x42] sm:$0xff]
    %v4433 = vld [vmem:[%s535 + $0x52] sm:$0xff]
    %v4434 = vld [vmem:[%s535 + $0x62] sm:$0xff]
    %v4435 = vld [vmem:[%s535 + $0x72] sm:$0xff]
    %v4436 = vld [vmem:[%s535 + $0x102] sm:$0xff]
    %v4437 = vld [vmem:[%s535 + $0x112] sm:$0xff]
    %v4438 = vld [vmem:[%s535 + $0x122] sm:$0xff]
    %v4439 = vld [vmem:[%s535 + $0x132] sm:$0xff]
    %v4440 = vld [vmem:[%s535 + $0x142] sm:$0xff]
    %v4441 = vld [vmem:[%s535 + $0x152] sm:$0xff]
    %v4442 = vld [vmem:[%s535 + $0x162] sm:$0xff]
    %v4443 = vld [vmem:[%s535 + $0x172] sm:$0xff]
    %v4444 = vlaneseq
    %v4445 = vshrl.u32 %v4444, 7
    %v4446 = vsub.s32 2, %v4445
    %v4447 = vrot.slane %v575, %v4446
    %v4448 = vmul.f32 %v4428, %v4447
    %v4449 = vmul.f32 %v4429, %v4447
    %v4450 = vmul.f32 %v4430, %v4447
    %v4451 = vmul.f32 %v4431, %v4447
    %v4452 = vmul.f32 %v4432, %v4447
    %v4453 = vmul.f32 %v4433, %v4447
    %v4454 = vmul.f32 %v4434, %v4447
    %v4455 = vmul.f32 %v4435, %v4447
    %v4456 = vmul.f32 %v4436, %v4447
    %v4457 = vmul.f32 %v4437, %v4447
    %v4458 = vmul.f32 %v4438, %v4447
    %v4459 = vmul.f32 %v4439, %v4447
    %v4460 = vmul.f32 %v4440, %v4447
    %v4461 = vmul.f32 %v4441, %v4447
    %v4462 = vmul.f32 %v4442, %v4447
    %v4463 = vmul.f32 %v4443, %v4447
    %v4464 = vadd.f32 %v4412, %v4448
    %v4465 = vadd.f32 %v4413, %v4449
    %v4466 = vadd.f32 %v4414, %v4450
    %v4467 = vadd.f32 %v4415, %v4451
    %v4468 = vadd.f32 %v4416, %v4452
    %v4469 = vadd.f32 %v4417, %v4453
    %v4470 = vadd.f32 %v4418, %v4454
    %v4471 = vadd.f32 %v4419, %v4455
    %v4472 = vadd.f32 %v4420, %v4456
    %v4473 = vadd.f32 %v4421, %v4457
    %v4474 = vadd.f32 %v4422, %v4458
    %v4475 = vadd.f32 %v4423, %v4459
    %v4476 = vadd.f32 %v4424, %v4460
    %v4477 = vadd.f32 %v4425, %v4461
    %v4478 = vadd.f32 %v4426, %v4462
    %v4479 = vadd.f32 %v4427, %v4463
    %v4480 = vld [vmem:[%s535 + $0x3] sm:$0xff]
    %v4481 = vld [vmem:[%s535 + $0x13] sm:$0xff]
    %v4482 = vld [vmem:[%s535 + $0x23] sm:$0xff]
    %v4483 = vld [vmem:[%s535 + $0x33] sm:$0xff]
    %v4484 = vld [vmem:[%s535 + $0x43] sm:$0xff]
    %v4485 = vld [vmem:[%s535 + $0x53] sm:$0xff]
    %v4486 = vld [vmem:[%s535 + $0x63] sm:$0xff]
    %v4487 = vld [vmem:[%s535 + $0x73] sm:$0xff]
    %v4488 = vld [vmem:[%s535 + $0x103] sm:$0xff]
    %v4489 = vld [vmem:[%s535 + $0x113] sm:$0xff]
    %v4490 = vld [vmem:[%s535 + $0x123] sm:$0xff]
    %v4491 = vld [vmem:[%s535 + $0x133] sm:$0xff]
    %v4492 = vld [vmem:[%s535 + $0x143] sm:$0xff]
    %v4493 = vld [vmem:[%s535 + $0x153] sm:$0xff]
    %v4494 = vld [vmem:[%s535 + $0x163] sm:$0xff]
    %v4495 = vld [vmem:[%s535 + $0x173] sm:$0xff]
    %v4496 = vlaneseq
    %v4497 = vshrl.u32 %v4496, 7
    %v4498 = vsub.s32 3, %v4497
    %v4499 = vrot.slane %v575, %v4498
    %v4500 = vmul.f32 %v4480, %v4499
    %v4501 = vmul.f32 %v4481, %v4499
    %v4502 = vmul.f32 %v4482, %v4499
    %v4503 = vmul.f32 %v4483, %v4499
    %v4504 = vmul.f32 %v4484, %v4499
    %v4505 = vmul.f32 %v4485, %v4499
    %v4506 = vmul.f32 %v4486, %v4499
    %v4507 = vmul.f32 %v4487, %v4499
    %v4508 = vmul.f32 %v4488, %v4499
    %v4509 = vmul.f32 %v4489, %v4499
    %v4510 = vmul.f32 %v4490, %v4499
    %v4511 = vmul.f32 %v4491, %v4499
    %v4512 = vmul.f32 %v4492, %v4499
    %v4513 = vmul.f32 %v4493, %v4499
    %v4514 = vmul.f32 %v4494, %v4499
    %v4515 = vmul.f32 %v4495, %v4499
    %v4516 = vadd.f32 %v4464, %v4500
    %v4517 = vadd.f32 %v4465, %v4501
    %v4518 = vadd.f32 %v4466, %v4502
    %v4519 = vadd.f32 %v4467, %v4503
    %v4520 = vadd.f32 %v4468, %v4504
    %v4521 = vadd.f32 %v4469, %v4505
    %v4522 = vadd.f32 %v4470, %v4506
    %v4523 = vadd.f32 %v4471, %v4507
    %v4524 = vadd.f32 %v4472, %v4508
    %v4525 = vadd.f32 %v4473, %v4509
    %v4526 = vadd.f32 %v4474, %v4510
    %v4527 = vadd.f32 %v4475, %v4511
    %v4528 = vadd.f32 %v4476, %v4512
    %v4529 = vadd.f32 %v4477, %v4513
    %v4530 = vadd.f32 %v4478, %v4514
    %v4531 = vadd.f32 %v4479, %v4515
    %v4532 = vld [vmem:[%s535 + $0x4] sm:$0xff]
    %v4533 = vld [vmem:[%s535 + $0x14] sm:$0xff]
    %v4534 = vld [vmem:[%s535 + $0x24] sm:$0xff]
    %v4535 = vld [vmem:[%s535 + $0x34] sm:$0xff]
    %v4536 = vld [vmem:[%s535 + $0x44] sm:$0xff]
    %v4537 = vld [vmem:[%s535 + $0x54] sm:$0xff]
    %v4538 = vld [vmem:[%s535 + $0x64] sm:$0xff]
    %v4539 = vld [vmem:[%s535 + $0x74] sm:$0xff]
    %v4540 = vld [vmem:[%s535 + $0x104] sm:$0xff]
    %v4541 = vld [vmem:[%s535 + $0x114] sm:$0xff]
    %v4542 = vld [vmem:[%s535 + $0x124] sm:$0xff]
    %v4543 = vld [vmem:[%s535 + $0x134] sm:$0xff]
    %v4544 = vld [vmem:[%s535 + $0x144] sm:$0xff]
    %v4545 = vld [vmem:[%s535 + $0x154] sm:$0xff]
    %v4546 = vld [vmem:[%s535 + $0x164] sm:$0xff]
    %v4547 = vld [vmem:[%s535 + $0x174] sm:$0xff]
    %v4548 = vlaneseq
    %v4549 = vshrl.u32 %v4548, 7
    %v4550 = vsub.s32 4, %v4549
    %v4551 = vrot.slane %v575, %v4550
    %v4552 = vmul.f32 %v4532, %v4551
    %v4553 = vmul.f32 %v4533, %v4551
    %v4554 = vmul.f32 %v4534, %v4551
    %v4555 = vmul.f32 %v4535, %v4551
    %v4556 = vmul.f32 %v4536, %v4551
    %v4557 = vmul.f32 %v4537, %v4551
    %v4558 = vmul.f32 %v4538, %v4551
    %v4559 = vmul.f32 %v4539, %v4551
    %v4560 = vmul.f32 %v4540, %v4551
    %v4561 = vmul.f32 %v4541, %v4551
    %v4562 = vmul.f32 %v4542, %v4551
    %v4563 = vmul.f32 %v4543, %v4551
    %v4564 = vmul.f32 %v4544, %v4551
    %v4565 = vmul.f32 %v4545, %v4551
    %v4566 = vmul.f32 %v4546, %v4551
    %v4567 = vmul.f32 %v4547, %v4551
    %v4568 = vadd.f32 %v4516, %v4552
    %v4569 = vadd.f32 %v4517, %v4553
    %v4570 = vadd.f32 %v4518, %v4554
    %v4571 = vadd.f32 %v4519, %v4555
    %v4572 = vadd.f32 %v4520, %v4556
    %v4573 = vadd.f32 %v4521, %v4557
    %v4574 = vadd.f32 %v4522, %v4558
    %v4575 = vadd.f32 %v4523, %v4559
    %v4576 = vadd.f32 %v4524, %v4560
    %v4577 = vadd.f32 %v4525, %v4561
    %v4578 = vadd.f32 %v4526, %v4562
    %v4579 = vadd.f32 %v4527, %v4563
    %v4580 = vadd.f32 %v4528, %v4564
    %v4581 = vadd.f32 %v4529, %v4565
    %v4582 = vadd.f32 %v4530, %v4566
    %v4583 = vadd.f32 %v4531, %v4567
    %v4584 = vld [vmem:[%s535 + $0x5] sm:$0xff]
    %v4585 = vld [vmem:[%s535 + $0x15] sm:$0xff]
    %v4586 = vld [vmem:[%s535 + $0x25] sm:$0xff]
    %v4587 = vld [vmem:[%s535 + $0x35] sm:$0xff]
    %v4588 = vld [vmem:[%s535 + $0x45] sm:$0xff]
    %v4589 = vld [vmem:[%s535 + $0x55] sm:$0xff]
    %v4590 = vld [vmem:[%s535 + $0x65] sm:$0xff]
    %v4591 = vld [vmem:[%s535 + $0x75] sm:$0xff]
    %v4592 = vld [vmem:[%s535 + $0x105] sm:$0xff]
    %v4593 = vld [vmem:[%s535 + $0x115] sm:$0xff]
    %v4594 = vld [vmem:[%s535 + $0x125] sm:$0xff]
    %v4595 = vld [vmem:[%s535 + $0x135] sm:$0xff]
    %v4596 = vld [vmem:[%s535 + $0x145] sm:$0xff]
    %v4597 = vld [vmem:[%s535 + $0x155] sm:$0xff]
    %v4598 = vld [vmem:[%s535 + $0x165] sm:$0xff]
    %v4599 = vld [vmem:[%s535 + $0x175] sm:$0xff]
    %v4600 = vlaneseq
    %v4601 = vshrl.u32 %v4600, 7
    %v4602 = vsub.s32 5, %v4601
    %v4603 = vrot.slane %v575, %v4602
    %v4604 = vmul.f32 %v4584, %v4603
    %v4605 = vmul.f32 %v4585, %v4603
    %v4606 = vmul.f32 %v4586, %v4603
    %v4607 = vmul.f32 %v4587, %v4603
    %v4608 = vmul.f32 %v4588, %v4603
    %v4609 = vmul.f32 %v4589, %v4603
    %v4610 = vmul.f32 %v4590, %v4603
    %v4611 = vmul.f32 %v4591, %v4603
    %v4612 = vmul.f32 %v4592, %v4603
    %v4613 = vmul.f32 %v4593, %v4603
    %v4614 = vmul.f32 %v4594, %v4603
    %v4615 = vmul.f32 %v4595, %v4603
    %v4616 = vmul.f32 %v4596, %v4603
    %v4617 = vmul.f32 %v4597, %v4603
    %v4618 = vmul.f32 %v4598, %v4603
    %v4619 = vmul.f32 %v4599, %v4603
    %v4620 = vadd.f32 %v4568, %v4604
    %v4621 = vadd.f32 %v4569, %v4605
    %v4622 = vadd.f32 %v4570, %v4606
    %v4623 = vadd.f32 %v4571, %v4607
    %v4624 = vadd.f32 %v4572, %v4608
    %v4625 = vadd.f32 %v4573, %v4609
    %v4626 = vadd.f32 %v4574, %v4610
    %v4627 = vadd.f32 %v4575, %v4611
    %v4628 = vadd.f32 %v4576, %v4612
    %v4629 = vadd.f32 %v4577, %v4613
    %v4630 = vadd.f32 %v4578, %v4614
    %v4631 = vadd.f32 %v4579, %v4615
    %v4632 = vadd.f32 %v4580, %v4616
    %v4633 = vadd.f32 %v4581, %v4617
    %v4634 = vadd.f32 %v4582, %v4618
    %v4635 = vadd.f32 %v4583, %v4619
    %v4636 = vld [vmem:[%s535 + $0x6] sm:$0xff]
    %v4637 = vld [vmem:[%s535 + $0x16] sm:$0xff]
    %v4638 = vld [vmem:[%s535 + $0x26] sm:$0xff]
    %v4639 = vld [vmem:[%s535 + $0x36] sm:$0xff]
    %v4640 = vld [vmem:[%s535 + $0x46] sm:$0xff]
    %v4641 = vld [vmem:[%s535 + $0x56] sm:$0xff]
    %v4642 = vld [vmem:[%s535 + $0x66] sm:$0xff]
    %v4643 = vld [vmem:[%s535 + $0x76] sm:$0xff]
    %v4644 = vld [vmem:[%s535 + $0x106] sm:$0xff]
    %v4645 = vld [vmem:[%s535 + $0x116] sm:$0xff]
    %v4646 = vld [vmem:[%s535 + $0x126] sm:$0xff]
    %v4647 = vld [vmem:[%s535 + $0x136] sm:$0xff]
    %v4648 = vld [vmem:[%s535 + $0x146] sm:$0xff]
    %v4649 = vld [vmem:[%s535 + $0x156] sm:$0xff]
    %v4650 = vld [vmem:[%s535 + $0x166] sm:$0xff]
    %v4651 = vld [vmem:[%s535 + $0x176] sm:$0xff]
    %v4652 = vlaneseq
    %v4653 = vshrl.u32 %v4652, 7
    %v4654 = vsub.s32 6, %v4653
    %v4655 = vrot.slane %v575, %v4654
    %v4656 = vmul.f32 %v4636, %v4655
    %v4657 = vmul.f32 %v4637, %v4655
    %v4658 = vmul.f32 %v4638, %v4655
    %v4659 = vmul.f32 %v4639, %v4655
    %v4660 = vmul.f32 %v4640, %v4655
    %v4661 = vmul.f32 %v4641, %v4655
    %v4662 = vmul.f32 %v4642, %v4655
    %v4663 = vmul.f32 %v4643, %v4655
    %v4664 = vmul.f32 %v4644, %v4655
    %v4665 = vmul.f32 %v4645, %v4655
    %v4666 = vmul.f32 %v4646, %v4655
    %v4667 = vmul.f32 %v4647, %v4655
    %v4668 = vmul.f32 %v4648, %v4655
    %v4669 = vmul.f32 %v4649, %v4655
    %v4670 = vmul.f32 %v4650, %v4655
    %v4671 = vmul.f32 %v4651, %v4655
    %v4672 = vadd.f32 %v4620, %v4656
    %v4673 = vadd.f32 %v4621, %v4657
    %v4674 = vadd.f32 %v4622, %v4658
    %v4675 = vadd.f32 %v4623, %v4659
    %v4676 = vadd.f32 %v4624, %v4660
    %v4677 = vadd.f32 %v4625, %v4661
    %v4678 = vadd.f32 %v4626, %v4662
    %v4679 = vadd.f32 %v4627, %v4663
    %v4680 = vadd.f32 %v4628, %v4664
    %v4681 = vadd.f32 %v4629, %v4665
    %v4682 = vadd.f32 %v4630, %v4666
    %v4683 = vadd.f32 %v4631, %v4667
    %v4684 = vadd.f32 %v4632, %v4668
    %v4685 = vadd.f32 %v4633, %v4669
    %v4686 = vadd.f32 %v4634, %v4670
    %v4687 = vadd.f32 %v4635, %v4671
    %v4688 = vld [vmem:[%s535 + $0x7] sm:$0xff]
    %v4689 = vld [vmem:[%s535 + $0x17] sm:$0xff]
    %v4690 = vld [vmem:[%s535 + $0x27] sm:$0xff]
    %v4691 = vld [vmem:[%s535 + $0x37] sm:$0xff]
    %v4692 = vld [vmem:[%s535 + $0x47] sm:$0xff]
    %v4693 = vld [vmem:[%s535 + $0x57] sm:$0xff]
    %v4694 = vld [vmem:[%s535 + $0x67] sm:$0xff]
    %v4695 = vld [vmem:[%s535 + $0x77] sm:$0xff]
    %v4696 = vld [vmem:[%s535 + $0x107] sm:$0xff]
    %v4697 = vld [vmem:[%s535 + $0x117] sm:$0xff]
    %v4698 = vld [vmem:[%s535 + $0x127] sm:$0xff]
    %v4699 = vld [vmem:[%s535 + $0x137] sm:$0xff]
    %v4700 = vld [vmem:[%s535 + $0x147] sm:$0xff]
    %v4701 = vld [vmem:[%s535 + $0x157] sm:$0xff]
    %v4702 = vld [vmem:[%s535 + $0x167] sm:$0xff]
    %v4703 = vld [vmem:[%s535 + $0x177] sm:$0xff]
    %v4704 = vlaneseq
    %v4705 = vshrl.u32 %v4704, 7
    %v4706 = vsub.s32 7, %v4705
    %v4707 = vrot.slane %v575, %v4706
    %v4708 = vmul.f32 %v4688, %v4707
    %v4709 = vmul.f32 %v4689, %v4707
    %v4710 = vmul.f32 %v4690, %v4707
    %v4711 = vmul.f32 %v4691, %v4707
    %v4712 = vmul.f32 %v4692, %v4707
    %v4713 = vmul.f32 %v4693, %v4707
    %v4714 = vmul.f32 %v4694, %v4707
    %v4715 = vmul.f32 %v4695, %v4707
    %v4716 = vmul.f32 %v4696, %v4707
    %v4717 = vmul.f32 %v4697, %v4707
    %v4718 = vmul.f32 %v4698, %v4707
    %v4719 = vmul.f32 %v4699, %v4707
    %v4720 = vmul.f32 %v4700, %v4707
    %v4721 = vmul.f32 %v4701, %v4707
    %v4722 = vmul.f32 %v4702, %v4707
    %v4723 = vmul.f32 %v4703, %v4707
    %v4724 = vadd.f32 %v4672, %v4708
    %v4725 = vadd.f32 %v4673, %v4709
    %v4726 = vadd.f32 %v4674, %v4710
    %v4727 = vadd.f32 %v4675, %v4711
    %v4728 = vadd.f32 %v4676, %v4712
    %v4729 = vadd.f32 %v4677, %v4713
    %v4730 = vadd.f32 %v4678, %v4714
    %v4731 = vadd.f32 %v4679, %v4715
    %v4732 = vadd.f32 %v4680, %v4716
    %v4733 = vadd.f32 %v4681, %v4717
    %v4734 = vadd.f32 %v4682, %v4718
    %v4735 = vadd.f32 %v4683, %v4719
    %v4736 = vadd.f32 %v4684, %v4720
    %v4737 = vadd.f32 %v4685, %v4721
    %v4738 = vadd.f32 %v4686, %v4722
    %v4739 = vadd.f32 %v4687, %v4723
    %v4740 = vld [vmem:[%s535 + $0x8] sm:$0xff]
    %v4741 = vld [vmem:[%s535 + $0x18] sm:$0xff]
    %v4742 = vld [vmem:[%s535 + $0x28] sm:$0xff]
    %v4743 = vld [vmem:[%s535 + $0x38] sm:$0xff]
    %v4744 = vld [vmem:[%s535 + $0x48] sm:$0xff]
    %v4745 = vld [vmem:[%s535 + $0x58] sm:$0xff]
    %v4746 = vld [vmem:[%s535 + $0x68] sm:$0xff]
    %v4747 = vld [vmem:[%s535 + $0x78] sm:$0xff]
    %v4748 = vld [vmem:[%s535 + $0x108] sm:$0xff]
    %v4749 = vld [vmem:[%s535 + $0x118] sm:$0xff]
    %v4750 = vld [vmem:[%s535 + $0x128] sm:$0xff]
    %v4751 = vld [vmem:[%s535 + $0x138] sm:$0xff]
    %v4752 = vld [vmem:[%s535 + $0x148] sm:$0xff]
    %v4753 = vld [vmem:[%s535 + $0x158] sm:$0xff]
    %v4754 = vld [vmem:[%s535 + $0x168] sm:$0xff]
    %v4755 = vld [vmem:[%s535 + $0x178] sm:$0xff]
    %v4756 = vlaneseq
    %v4757 = vshrl.u32 %v4756, 7
    %v4758 = vsub.s32 0, %v4757
    %v4759 = vrot.slane %v576, %v4758
    %v4760 = vmul.f32 %v4740, %v4759
    %v4761 = vmul.f32 %v4741, %v4759
    %v4762 = vmul.f32 %v4742, %v4759
    %v4763 = vmul.f32 %v4743, %v4759
    %v4764 = vmul.f32 %v4744, %v4759
    %v4765 = vmul.f32 %v4745, %v4759
    %v4766 = vmul.f32 %v4746, %v4759
    %v4767 = vmul.f32 %v4747, %v4759
    %v4768 = vmul.f32 %v4748, %v4759
    %v4769 = vmul.f32 %v4749, %v4759
    %v4770 = vmul.f32 %v4750, %v4759
    %v4771 = vmul.f32 %v4751, %v4759
    %v4772 = vmul.f32 %v4752, %v4759
    %v4773 = vmul.f32 %v4753, %v4759
    %v4774 = vmul.f32 %v4754, %v4759
    %v4775 = vmul.f32 %v4755, %v4759
    %v4776 = vadd.f32 %v4724, %v4760
    %v4777 = vadd.f32 %v4725, %v4761
    %v4778 = vadd.f32 %v4726, %v4762
    %v4779 = vadd.f32 %v4727, %v4763
    %v4780 = vadd.f32 %v4728, %v4764
    %v4781 = vadd.f32 %v4729, %v4765
    %v4782 = vadd.f32 %v4730, %v4766
    %v4783 = vadd.f32 %v4731, %v4767
    %v4784 = vadd.f32 %v4732, %v4768
    %v4785 = vadd.f32 %v4733, %v4769
    %v4786 = vadd.f32 %v4734, %v4770
    %v4787 = vadd.f32 %v4735, %v4771
    %v4788 = vadd.f32 %v4736, %v4772
    %v4789 = vadd.f32 %v4737, %v4773
    %v4790 = vadd.f32 %v4738, %v4774
    %v4791 = vadd.f32 %v4739, %v4775
    %v4792 = vld [vmem:[#allocation4] sm:$0x1]
    %v4794 = vlaneseq
    %v4795 = vshrl.u32 %v4794, 7
    %v4796 = vsub.s32 0, %v4795
    %v4797 = vrot.slane %v4792, %v4796
    %v4799 = vadd.f32 %v4776, %v4797
    %v4800 = vadd.f32 %v4777, %v4797
    %v4801 = vadd.f32 %v4778, %v4797
    %v4802 = vadd.f32 %v4779, %v4797
    %v4803 = vadd.f32 %v4780, %v4797
    %v4804 = vadd.f32 %v4781, %v4797
    %v4805 = vadd.f32 %v4782, %v4797
    %v4806 = vadd.f32 %v4783, %v4797
    %v4807 = vadd.f32 %v4784, %v4797
    %v4808 = vadd.f32 %v4785, %v4797
    %v4809 = vadd.f32 %v4786, %v4797
    %v4810 = vadd.f32 %v4787, %v4797
    %v4811 = vadd.f32 %v4788, %v4797
    %v4812 = vadd.f32 %v4789, %v4797
    %v4813 = vadd.f32 %v4790, %v4797
    %v4814 = vadd.f32 %v4791, %v4797
    %4815 = vst.msk [vmem:[#allocation3] sm:$0xff] %vm122, %v4799
    %4816 = vst.msk [vmem:[#allocation3 + $0x8] sm:$0xff] %vm122, %v4800
    %4817 = vst.msk [vmem:[#allocation3 + $0x10] sm:$0xff] %vm122, %v4801
    %4818 = vst.msk [vmem:[#allocation3 + $0x18] sm:$0xff] %vm122, %v4802
    %4819 = vst.msk [vmem:[#allocation3 + $0x20] sm:$0xff] %vm122, %v4803
    %4820 = vst.msk [vmem:[#allocation3 + $0x28] sm:$0xff] %vm122, %v4804
    %4821 = vst.msk [vmem:[#allocation3 + $0x30] sm:$0xff] %vm122, %v4805
    %4822 = vst.msk [vmem:[#allocation3 + $0x38] sm:$0xff] %vm122, %v4806
    %4823 = vst.msk [vmem:[#allocation3 + $0x40] sm:$0xff] %vm122, %v4807
    %4824 = vst.msk [vmem:[#allocation3 + $0x48] sm:$0xff] %vm122, %v4808
    %4825 = vst.msk [vmem:[#allocation3 + $0x50] sm:$0xff] %vm122, %v4809
    %4826 = vst.msk [vmem:[#allocation3 + $0x58] sm:$0xff] %vm122, %v4810
    %4827 = vst.msk [vmem:[#allocation3 + $0x60] sm:$0xff] %vm122, %v4811
    %4828 = vst.msk [vmem:[#allocation3 + $0x68] sm:$0xff] %vm122, %v4812
    %4829 = vst.msk [vmem:[#allocation3 + $0x70] sm:$0xff] %vm122, %v4813
    %4830 = vst.msk [vmem:[#allocation3 + $0x78] sm:$0xff] %vm122, %v4814
    %v4831 = vld [vmem:[#allocation3] sm:$0xff]
    %v4832 = vld [vmem:[#allocation3 + $0x8] sm:$0xff]
    %v4833 = vld [vmem:[#allocation3 + $0x10] sm:$0xff]
    %v4834 = vld [vmem:[#allocation3 + $0x18] sm:$0xff]
    %v4835 = vld [vmem:[#allocation3 + $0x20] sm:$0xff]
    %v4836 = vld [vmem:[#allocation3 + $0x28] sm:$0xff]
    %v4837 = vld [vmem:[#allocation3 + $0x30] sm:$0xff]
    %v4838 = vld [vmem:[#allocation3 + $0x38] sm:$0xff]
    %v4839 = vld [vmem:[#allocation3 + $0x40] sm:$0xff]
    %v4840 = vld [vmem:[#allocation3 + $0x48] sm:$0xff]
    %v4841 = vld [vmem:[#allocation3 + $0x50] sm:$0xff]
    %v4842 = vld [vmem:[#allocation3 + $0x58] sm:$0xff]
    %v4843 = vld [vmem:[#allocation3 + $0x60] sm:$0xff]
    %v4844 = vld [vmem:[#allocation3 + $0x68] sm:$0xff]
    %v4845 = vld [vmem:[#allocation3 + $0x70] sm:$0xff]
    %v4846 = vld [vmem:[#allocation3 + $0x78] sm:$0xff]
    %v4847 = vld [vmem:[%s5] sm:$0xff]
    %v4848 = vld [vmem:[%s5 + $0x8] sm:$0xff]
    %v4849 = vld [vmem:[#allocation6] sm:$0x1]
    %v4851 = vlaneseq
    %v4852 = vshrl.u32 %v4851, 7
    %v4853 = vsub.s32 0, %v4852
    %v4854 = vrot.slane %v4849, %v4853
    %v4857 = vsel %vm122, %v4831, 0
    %v4860 = vsel %vm122, %v4832, 0
    %v4863 = vsel %vm122, %v4833, 0
    %v4866 = vsel %vm122, %v4834, 0
    %v4869 = vsel %vm122, %v4835, 0
    %v4872 = vsel %vm122, %v4836, 0
    %v4875 = vsel %vm122, %v4837, 0
    %v4878 = vsel %vm122, %v4838, 0
    %v4881 = vsel %vm122, %v4839, 0
    %v4884 = vsel %vm122, %v4840, 0
    %v4887 = vsel %vm122, %v4841, 0
    %v4890 = vsel %vm122, %v4842, 0
    %v4893 = vsel %vm122, %v4843, 0
    %v4896 = vsel %vm122, %v4844, 0
    %v4899 = vsel %vm122, %v4845, 0
    %v4902 = vsel %vm122, %v4846, 0
    %4904 = vmatprep.subr.mxu0 0.0
    %4905 = vmatpush1.msra.mxu0 0.0
    %4906 = vmatprep.subr.mxu0 0.0
    %4907 = vmatpush1.msra.mxu0 0.0
    %4908 = vmatprep.subr.mxu0 0.0
    %4909 = vmatpush1.msra.mxu0 0.0
    %4910 = vmatprep.subr.mxu0 0.0
    %4911 = vmatpush1.msra.mxu0 0.0
    %4912 = vmatprep.subr.mxu0 0.0
    %4913 = vmatpush1.msra.mxu0 0.0
    %4914 = vmatprep.subr.mxu0 0.0
    %4915 = vmatpush1.msra.mxu0 0.0
    %4916 = vmatprep.subr.mxu0 0.0
    %4917 = vmatpush1.msra.mxu0 0.0
    %4918 = vmatprep.subr.mxu0 0.0
    %4919 = vmatpush1.msra.mxu0 0.0
    %4920 = vmatprep.subr.mxu0 0.0
    %4921 = vmatpush1.msra.mxu0 0.0
    %4922 = vmatprep.subr.mxu0 0.0
    %4923 = vmatpush1.msra.mxu0 0.0
    %4924 = vmatprep.subr.mxu0 0.0
    %4925 = vmatpush1.msra.mxu0 0.0
    %4926 = vmatprep.subr.mxu0 0.0
    %4927 = vmatpush1.msra.mxu0 0.0
    %4928 = vmatprep.subr.mxu0 0.0
    %4929 = vmatpush1.msra.mxu0 0.0
    %4930 = vmatprep.subr.mxu0 0.0
    %4931 = vmatpush1.msra.mxu0 0.0
    %4932 = vmatprep.subr.mxu0 0.0
    %4933 = vmatpush1.msra.mxu0 %v4848
    %4934 = vmatprep.subr.mxu0 0.0
    %4935 = vmatpush1.msra.mxu0 %v4847
    %4936 = vmatprep.subr.mxu0 0.0
    %4937 = vmatpush2.msra.mxu0 0.0
    %4938 = vmatprep.subr.mxu0 0.0
    %4939 = vmatpush2.msra.mxu0 0.0
    %4940 = vmatprep.subr.mxu0 0.0
    %4941 = vmatpush2.msra.mxu0 0.0
    %4942 = vmatprep.subr.mxu0 0.0
    %4943 = vmatpush2.msra.mxu0 0.0
    %4944 = vmatprep.subr.mxu0 0.0
    %4945 = vmatpush2.msra.mxu0 0.0
    %4946 = vmatprep.subr.mxu0 0.0
    %4947 = vmatpush2.msra.mxu0 0.0
    %4948 = vmatprep.subr.mxu0 0.0
    %4949 = vmatpush2.msra.mxu0 0.0
    %4950 = vmatprep.subr.mxu0 0.0
    %4951 = vmatpush2.msra.mxu0 0.0
    %4952 = vmatprep.subr.mxu0 0.0
    %4953 = vmatpush2.msra.mxu0 0.0
    %4954 = vmatprep.subr.mxu0 0.0
    %4955 = vmatpush2.msra.mxu0 0.0
    %4956 = vmatprep.subr.mxu0 0.0
    %4957 = vmatpush2.msra.mxu0 0.0
    %4958 = vmatprep.subr.mxu0 0.0
    %4959 = vmatpush2.msra.mxu0 0.0
    %4960 = vmatprep.subr.mxu0 0.0
    %4961 = vmatpush2.msra.mxu0 0.0
    %4962 = vmatprep.subr.mxu0 0.0
    %4963 = vmatpush2.msra.mxu0 0.0
    %4964 = vmatprep.subr.mxu0 0.0
    %4965 = vmatpush2.msra.mxu0 0.0
    %4966 = vmatprep.subr.mxu0 0.0
    %4967 = vmatpush2.msra.mxu0 0.0
    %4968 = vmatprep.mubr.f32.mxu0 0.0
    %4969 = vmatmul.mubr.f32.gmra.mxu0 %v4857
    %v4970 = vpop.f32.mrf.mxu0
    %v4971 = vadd.f32 %v4854, %v4970
    %v4972 = vpop.f32.mrf.mxu0
    %4973 = vmatprep.mubr.f32.mxu0 0.0
    %4974 = vmatmul.mubr.f32.gmra.mxu0 %v4860
    %v4975 = vpop.f32.mrf.mxu0
    %v4976 = vadd.f32 %v4854, %v4975
    %v4977 = vpop.f32.mrf.mxu0
    %4978 = vmatprep.mubr.f32.mxu0 0.0
    %4979 = vmatmul.mubr.f32.gmra.mxu0 %v4863
    %v4980 = vpop.f32.mrf.mxu0
    %v4981 = vadd.f32 %v4854, %v4980
    %v4982 = vpop.f32.mrf.mxu0
    %4983 = vmatprep.mubr.f32.mxu0 0.0
    %4984 = vmatmul.mubr.f32.gmra.mxu0 %v4866
    %v4985 = vpop.f32.mrf.mxu0
    %v4986 = vadd.f32 %v4854, %v4985
    %v4987 = vpop.f32.mrf.mxu0
    %4988 = vmatprep.mubr.f32.mxu0 0.0
    %4989 = vmatmul.mubr.f32.gmra.mxu0 %v4869
    %v4990 = vpop.f32.mrf.mxu0
    %v4991 = vadd.f32 %v4854, %v4990
    %v4992 = vpop.f32.mrf.mxu0
    %4993 = vmatprep.mubr.f32.mxu0 0.0
    %4994 = vmatmul.mubr.f32.gmra.mxu0 %v4872
    %v4995 = vpop.f32.mrf.mxu0
    %v4996 = vadd.f32 %v4854, %v4995
    %v4997 = vpop.f32.mrf.mxu0
    %4998 = vmatprep.mubr.f32.mxu0 0.0
    %4999 = vmatmul.mubr.f32.gmra.mxu0 %v4875
    %v5000 = vpop.f32.mrf.mxu0
    %v5001 = vadd.f32 %v4854, %v5000
    %v5002 = vpop.f32.mrf.mxu0
    %5003 = vmatprep.mubr.f32.mxu0 0.0
    %5004 = vmatmul.mubr.f32.gmra.mxu0 %v4878
    %v5005 = vpop.f32.mrf.mxu0
    %v5006 = vadd.f32 %v4854, %v5005
    %v5007 = vpop.f32.mrf.mxu0
    %5008 = vmatprep.mubr.f32.mxu0 0.0
    %5009 = vmatmul.mubr.f32.gmra.mxu0 %v4881
    %v5010 = vpop.f32.mrf.mxu0
    %v5011 = vadd.f32 %v4854, %v5010
    %v5012 = vpop.f32.mrf.mxu0
    %5013 = vmatprep.mubr.f32.mxu0 0.0
    %5014 = vmatmul.mubr.f32.gmra.mxu0 %v4884
    %v5015 = vpop.f32.mrf.mxu0
    %v5016 = vadd.f32 %v4854, %v5015
    %v5017 = vpop.f32.mrf.mxu0
    %5018 = vmatprep.mubr.f32.mxu0 0.0
    %5019 = vmatmul.mubr.f32.gmra.mxu0 %v4887
    %v5020 = vpop.f32.mrf.mxu0
    %v5021 = vadd.f32 %v4854, %v5020
    %v5022 = vpop.f32.mrf.mxu0
    %5023 = vmatprep.mubr.f32.mxu0 0.0
    %5024 = vmatmul.mubr.f32.gmra.mxu0 %v4890
    %v5025 = vpop.f32.mrf.mxu0
    %v5026 = vadd.f32 %v4854, %v5025
    %v5027 = vpop.f32.mrf.mxu0
    %5028 = vmatprep.mubr.f32.mxu0 0.0
    %5029 = vmatmul.mubr.f32.gmra.mxu0 %v4893
    %v5030 = vpop.f32.mrf.mxu0
    %v5031 = vadd.f32 %v4854, %v5030
    %v5032 = vpop.f32.mrf.mxu0
    %5033 = vmatprep.mubr.f32.mxu0 0.0
    %5034 = vmatmul.mubr.f32.gmra.mxu0 %v4896
    %v5035 = vpop.f32.mrf.mxu0
    %v5036 = vadd.f32 %v4854, %v5035
    %v5037 = vpop.f32.mrf.mxu0
    %5038 = vmatprep.mubr.f32.mxu0 0.0
    %5039 = vmatmul.mubr.f32.gmra.mxu0 %v4899
    %v5040 = vpop.f32.mrf.mxu0
    %v5041 = vadd.f32 %v4854, %v5040
    %v5042 = vpop.f32.mrf.mxu0
    %5043 = vmatprep.mubr.f32.mxu0 0.0
    %5044 = vmatmul.mubr.f32.gmra.mxu0 %v4902
    %v5045 = vpop.f32.mrf.mxu0
    %v5046 = vadd.f32 %v4854, %v5045
    %v5047 = vpop.f32.mrf.mxu0
    %5048 = vdwg.mxu0
    %vm5049 = vcmask 261120
    %v5050 = vsel %vm5049, %v4971, 0.0
    %v5051 = vsel %vm5049, %v4976, 0.0
    %v5052 = vadd.f32 %v5050, %v5051
    %v5053 = vsel %vm5049, %v4981, 0.0
    %v5054 = vadd.f32 %v5052, %v5053
    %v5055 = vsel %vm5049, %v4986, 0.0
    %v5056 = vadd.f32 %v5054, %v5055
    %v5057 = vsel %vm5049, %v4991, 0.0
    %v5058 = vadd.f32 %v5056, %v5057
    %v5059 = vsel %vm5049, %v4996, 0.0
    %v5060 = vadd.f32 %v5058, %v5059
    %v5061 = vsel %vm5049, %v5001, 0.0
    %v5062 = vadd.f32 %v5060, %v5061
    %v5063 = vsel %vm5049, %v5006, 0.0
    %v5064 = vadd.f32 %v5062, %v5063
    %v5065 = vsel %vm5049, %v5011, 0.0
    %v5066 = vadd.f32 %v5064, %v5065
    %v5067 = vsel %vm5049, %v5016, 0.0
    %v5068 = vadd.f32 %v5066, %v5067
    %v5069 = vsel %vm5049, %v5021, 0.0
    %v5070 = vadd.f32 %v5068, %v5069
    %v5071 = vsel %vm5049, %v5026, 0.0
    %v5072 = vadd.f32 %v5070, %v5071
    %v5073 = vsel %vm5049, %v5031, 0.0
    %v5074 = vadd.f32 %v5072, %v5073
    %v5075 = vsel %vm5049, %v5036, 0.0
    %v5076 = vadd.f32 %v5074, %v5075
    %v5077 = vsel %vm5049, %v5041, 0.0
    %v5078 = vadd.f32 %v5076, %v5077
    %v5079 = vsel %vm5049, %v5046, 0.0
    %v5080 = vadd.f32 %v5078, %v5079
    %v5081 = vrot.slane %v5080, 4
    %v5082 = vadd.f32 %v5080, %v5081
    %v5083 = vrot.slane %v5082, 2
    %v5084 = vadd.f32 %v5082, %v5083
    %v5085 = vrot.slane %v5084, 1
    %v5086 = vadd.f32 %v5084, %v5085
    %v5087 = vrcp.pop 128.0
    %v5088 = vmul.f32 %v5086, %v5087
    %v5089 = vsub.f32 %v4971, %v5088
    %v5090 = vsub.f32 %v4976, %v5088
    %v5091 = vsub.f32 %v4981, %v5088
    %v5092 = vsub.f32 %v4986, %v5088
    %v5093 = vsub.f32 %v4991, %v5088
    %v5094 = vsub.f32 %v4996, %v5088
    %v5095 = vsub.f32 %v5001, %v5088
    %v5096 = vsub.f32 %v5006, %v5088
    %v5097 = vsub.f32 %v5011, %v5088
    %v5098 = vsub.f32 %v5016, %v5088
    %v5099 = vsub.f32 %v5021, %v5088
    %v5100 = vsub.f32 %v5026, %v5088
    %v5101 = vsub.f32 %v5031, %v5088
    %v5102 = vsub.f32 %v5036, %v5088
    %v5103 = vsub.f32 %v5041, %v5088
    %v5104 = vsub.f32 %v5046, %v5088
    %v5105 = vmul.f32 %v5089, %v5089
    %v5106 = vmul.f32 %v5090, %v5090
    %v5107 = vmul.f32 %v5091, %v5091
    %v5108 = vmul.f32 %v5092, %v5092
    %v5109 = vmul.f32 %v5093, %v5093
    %v5110 = vmul.f32 %v5094, %v5094
    %v5111 = vmul.f32 %v5095, %v5095
    %v5112 = vmul.f32 %v5096, %v5096
    %v5113 = vmul.f32 %v5097, %v5097
    %v5114 = vmul.f32 %v5098, %v5098
    %v5115 = vmul.f32 %v5099, %v5099
    %v5116 = vmul.f32 %v5100, %v5100
    %v5117 = vmul.f32 %v5101, %v5101
    %v5118 = vmul.f32 %v5102, %v5102
    %v5119 = vmul.f32 %v5103, %v5103
    %v5120 = vmul.f32 %v5104, %v5104
    %v5121 = vsel %vm5049, %v5105, 0.0
    %v5122 = vsel %vm5049, %v5106, 0.0
    %v5123 = vadd.f32 %v5121, %v5122
    %v5124 = vsel %vm5049, %v5107, 0.0
    %v5125 = vadd.f32 %v5123, %v5124
    %v5126 = vsel %vm5049, %v5108, 0.0
    %v5127 = vadd.f32 %v5125, %v5126
    %v5128 = vsel %vm5049, %v5109, 0.0
    %v5129 = vadd.f32 %v5127, %v5128
    %v5130 = vsel %vm5049, %v5110, 0.0
    %v5131 = vadd.f32 %v5129, %v5130
    %v5132 = vsel %vm5049, %v5111, 0.0
    %v5133 = vadd.f32 %v5131, %v5132
    %v5134 = vsel %vm5049, %v5112, 0.0
    %v5135 = vadd.f32 %v5133, %v5134
    %v5136 = vsel %vm5049, %v5113, 0.0
    %v5137 = vadd.f32 %v5135, %v5136
    %v5138 = vsel %vm5049, %v5114, 0.0
    %v5139 = vadd.f32 %v5137, %v5138
    %v5140 = vsel %vm5049, %v5115, 0.0
    %v5141 = vadd.f32 %v5139, %v5140
    %v5142 = vsel %vm5049, %v5116, 0.0
    %v5143 = vadd.f32 %v5141, %v5142
    %v5144 = vsel %vm5049, %v5117, 0.0
    %v5145 = vadd.f32 %v5143, %v5144
    %v5146 = vsel %vm5049, %v5118, 0.0
    %v5147 = vadd.f32 %v5145, %v5146
    %v5148 = vsel %vm5049, %v5119, 0.0
    %v5149 = vadd.f32 %v5147, %v5148
    %v5150 = vsel %vm5049, %v5120, 0.0
    %v5151 = vadd.f32 %v5149, %v5150
    %v5152 = vrot.slane %v5151, 4
    %v5153 = vadd.f32 %v5151, %v5152
    %v5154 = vrot.slane %v5153, 2
    %v5155 = vadd.f32 %v5153, %v5154
    %v5156 = vrot.slane %v5155, 1
    %v5157 = vadd.f32 %v5155, %v5156
    %v5158 = vmul.f32 %v5157, %v5087
    %v5159 = vadd.f32 %v5158, 1e-05
    %v5160 = vrsqrt.pop %v5159
    %v5161 = vmul.f32 %v5089, %v5160
    %v5162 = vmul.f32 %v5090, %v5160
    %v5163 = vmul.f32 %v5091, %v5160
    %v5164 = vmul.f32 %v5092, %v5160
    %v5165 = vmul.f32 %v5093, %v5160
    %v5166 = vmul.f32 %v5094, %v5160
    %v5167 = vmul.f32 %v5095, %v5160
    %v5168 = vmul.f32 %v5096, %v5160
    %v5169 = vmul.f32 %v5097, %v5160
    %v5170 = vmul.f32 %v5098, %v5160
    %v5171 = vmul.f32 %v5099, %v5160
    %v5172 = vmul.f32 %v5100, %v5160
    %v5173 = vmul.f32 %v5101, %v5160
    %v5174 = vmul.f32 %v5102, %v5160
    %v5175 = vmul.f32 %v5103, %v5160
    %v5176 = vmul.f32 %v5104, %v5160
    %v5177 = vld [vmem:[#allocation8] sm:$0x1]
    %v5179 = vlaneseq
    %v5180 = vshrl.u32 %v5179, 7
    %v5181 = vsub.s32 0, %v5180
    %v5182 = vrot.slane %v5177, %v5181
    %v5184 = vmul.f32 %v5161, %v5182
    %v5185 = vmul.f32 %v5162, %v5182
    %v5186 = vmul.f32 %v5163, %v5182
    %v5187 = vmul.f32 %v5164, %v5182
    %v5188 = vmul.f32 %v5165, %v5182
    %v5189 = vmul.f32 %v5166, %v5182
    %v5190 = vmul.f32 %v5167, %v5182
    %v5191 = vmul.f32 %v5168, %v5182
    %v5192 = vmul.f32 %v5169, %v5182
    %v5193 = vmul.f32 %v5170, %v5182
    %v5194 = vmul.f32 %v5171, %v5182
    %v5195 = vmul.f32 %v5172, %v5182
    %v5196 = vmul.f32 %v5173, %v5182
    %v5197 = vmul.f32 %v5174, %v5182
    %v5198 = vmul.f32 %v5175, %v5182
    %v5199 = vmul.f32 %v5176, %v5182
    %v5200 = vld [vmem:[#allocation9] sm:$0x1]
    %v5202 = vlaneseq
    %v5203 = vshrl.u32 %v5202, 7
    %v5204 = vsub.s32 0, %v5203
    %v5205 = vrot.slane %v5200, %v5204
    %v5207 = vadd.f32 %v5184, %v5205
    %v5208 = vadd.f32 %v5185, %v5205
    %v5209 = vadd.f32 %v5186, %v5205
    %v5210 = vadd.f32 %v5187, %v5205
    %v5211 = vadd.f32 %v5188, %v5205
    %v5212 = vadd.f32 %v5189, %v5205
    %v5213 = vadd.f32 %v5190, %v5205
    %v5214 = vadd.f32 %v5191, %v5205
    %v5215 = vadd.f32 %v5192, %v5205
    %v5216 = vadd.f32 %v5193, %v5205
    %v5217 = vadd.f32 %v5194, %v5205
    %v5218 = vadd.f32 %v5195, %v5205
    %v5219 = vadd.f32 %v5196, %v5205
    %v5220 = vadd.f32 %v5197, %v5205
    %v5221 = vadd.f32 %v5198, %v5205
    %v5222 = vadd.f32 %v5199, %v5205
    %v5223 = vmul.f32 %v5207, 0.5
    %v5224 = vmul.f32 %v5208, 0.5
    %v5225 = vmul.f32 %v5209, 0.5
    %v5226 = vmul.f32 %v5210, 0.5
    %v5227 = vmul.f32 %v5211, 0.5
    %v5228 = vmul.f32 %v5212, 0.5
    %v5229 = vmul.f32 %v5213, 0.5
    %v5230 = vmul.f32 %v5214, 0.5
    %v5231 = vmul.f32 %v5215, 0.5
    %v5232 = vmul.f32 %v5216, 0.5
    %v5233 = vmul.f32 %v5217, 0.5
    %v5234 = vmul.f32 %v5218, 0.5
    %v5235 = vmul.f32 %v5219, 0.5
    %v5236 = vmul.f32 %v5220, 0.5
    %v5237 = vmul.f32 %v5221, 0.5
    %v5238 = vmul.f32 %v5222, 0.5
    %v5239 = vmul.f32 %v5207, 0.70710677
    %v5240 = vmul.f32 %v5208, 0.70710677
    %v5241 = vmul.f32 %v5209, 0.70710677
    %v5242 = vmul.f32 %v5210, 0.70710677
    %v5243 = vmul.f32 %v5211, 0.70710677
    %v5244 = vmul.f32 %v5212, 0.70710677
    %v5245 = vmul.f32 %v5213, 0.70710677
    %v5246 = vmul.f32 %v5214, 0.70710677
    %v5247 = vmul.f32 %v5215, 0.70710677
    %v5248 = vmul.f32 %v5216, 0.70710677
    %v5249 = vmul.f32 %v5217, 0.70710677
    %v5250 = vmul.f32 %v5218, 0.70710677
    %v5251 = vmul.f32 %v5219, 0.70710677
    %v5252 = vmul.f32 %v5220, 0.70710677
    %v5253 = vmul.f32 %v5221, 0.70710677
    %v5254 = vmul.f32 %v5222, 0.70710677
    %vm5255 = vcmp.ge.f32.partialorder %v5239, 0.0
    %vm5256 = vcmp.ge.f32.partialorder %v5240, 0.0
    %vm5257 = vcmp.ge.f32.partialorder %v5241, 0.0
    %vm5258 = vcmp.ge.f32.partialorder %v5242, 0.0
    %vm5259 = vcmp.ge.f32.partialorder %v5243, 0.0
    %vm5260 = vcmp.ge.f32.partialorder %v5244, 0.0
    %vm5261 = vcmp.ge.f32.partialorder %v5245, 0.0
    %vm5262 = vcmp.ge.f32.partialorder %v5246, 0.0
    %vm5263 = vcmp.ge.f32.partialorder %v5247, 0.0
    %vm5264 = vcmp.ge.f32.partialorder %v5248, 0.0
    %vm5265 = vcmp.ge.f32.partialorder %v5249, 0.0
    %vm5266 = vcmp.ge.f32.partialorder %v5250, 0.0
    %vm5267 = vcmp.ge.f32.partialorder %v5251, 0.0
    %vm5268 = vcmp.ge.f32.partialorder %v5252, 0.0
    %vm5269 = vcmp.ge.f32.partialorder %v5253, 0.0
    %vm5270 = vcmp.ge.f32.partialorder %v5254, 0.0
    %v5271 = vsel %vm5255, 1.0, -1.0
    %v5272 = vsel %vm5256, 1.0, -1.0
    %v5273 = vsel %vm5257, 1.0, -1.0
    %v5274 = vsel %vm5258, 1.0, -1.0
    %v5275 = vsel %vm5259, 1.0, -1.0
    %v5276 = vsel %vm5260, 1.0, -1.0
    %v5277 = vsel %vm5261, 1.0, -1.0
    %v5278 = vsel %vm5262, 1.0, -1.0
    %v5279 = vsel %vm5263, 1.0, -1.0
    %v5280 = vsel %vm5264, 1.0, -1.0
    %v5281 = vsel %vm5265, 1.0, -1.0
    %v5282 = vsel %vm5266, 1.0, -1.0
    %v5283 = vsel %vm5267, 1.0, -1.0
    %v5284 = vsel %vm5268, 1.0, -1.0
    %v5285 = vsel %vm5269, 1.0, -1.0
    %v5286 = vsel %vm5270, 1.0, -1.0
    %v5287 = vand.u32 2147483647, %v5239
    %v5288 = vand.u32 2147483647, %v5240
    %v5289 = vand.u32 2147483647, %v5241
    %v5290 = vand.u32 2147483647, %v5242
    %v5291 = vand.u32 2147483647, %v5243
    %v5292 = vand.u32 2147483647, %v5244
    %v5293 = vand.u32 2147483647, %v5245
    %v5294 = vand.u32 2147483647, %v5246
    %v5295 = vand.u32 2147483647, %v5247
    %v5296 = vand.u32 2147483647, %v5248
    %v5297 = vand.u32 2147483647, %v5249
    %v5298 = vand.u32 2147483647, %v5250
    %v5299 = vand.u32 2147483647, %v5251
    %v5300 = vand.u32 2147483647, %v5252
    %v5301 = vand.u32 2147483647, %v5253
    %v5302 = vand.u32 2147483647, %v5254
    %v5303 = vmul.f32 %v5287, 0.3275911
    %v5304 = vmul.f32 %v5288, 0.3275911
    %v5305 = vmul.f32 %v5289, 0.3275911
    %v5306 = vmul.f32 %v5290, 0.3275911
    %v5307 = vmul.f32 %v5291, 0.3275911
    %v5308 = vmul.f32 %v5292, 0.3275911
    %v5309 = vmul.f32 %v5293, 0.3275911
    %v5310 = vmul.f32 %v5294, 0.3275911
    %v5311 = vmul.f32 %v5295, 0.3275911
    %v5312 = vmul.f32 %v5296, 0.3275911
    %v5313 = vmul.f32 %v5297, 0.3275911
    %v5314 = vmul.f32 %v5298, 0.3275911
    %v5315 = vmul.f32 %v5299, 0.3275911
    %v5316 = vmul.f32 %v5300, 0.3275911
    %v5317 = vmul.f32 %v5301, 0.3275911
    %v5318 = vmul.f32 %v5302, 0.3275911
    %v5319 = vadd.f32 %v5303, 1.0
    %v5320 = vadd.f32 %v5304, 1.0
    %v5321 = vadd.f32 %v5305, 1.0
    %v5322 = vadd.f32 %v5306, 1.0
    %v5323 = vadd.f32 %v5307, 1.0
    %v5324 = vadd.f32 %v5308, 1.0
    %v5325 = vadd.f32 %v5309, 1.0
    %v5326 = vadd.f32 %v5310, 1.0
    %v5327 = vadd.f32 %v5311, 1.0
    %v5328 = vadd.f32 %v5312, 1.0
    %v5329 = vadd.f32 %v5313, 1.0
    %v5330 = vadd.f32 %v5314, 1.0
    %v5331 = vadd.f32 %v5315, 1.0
    %v5332 = vadd.f32 %v5316, 1.0
    %v5333 = vadd.f32 %v5317, 1.0
    %v5334 = vadd.f32 %v5318, 1.0
    %v5335 = vrcp.pop %v5319
    %v5336 = vmul.f32 1.0, %v5335
    %v5337 = vrcp.pop %v5320
    %v5338 = vmul.f32 1.0, %v5337
    %v5339 = vrcp.pop %v5321
    %v5340 = vmul.f32 1.0, %v5339
    %v5341 = vrcp.pop %v5322
    %v5342 = vmul.f32 1.0, %v5341
    %v5343 = vrcp.pop %v5323
    %v5344 = vmul.f32 1.0, %v5343
    %v5345 = vrcp.pop %v5324
    %v5346 = vmul.f32 1.0, %v5345
    %v5347 = vrcp.pop %v5325
    %v5348 = vmul.f32 1.0, %v5347
    %v5349 = vrcp.pop %v5326
    %v5350 = vmul.f32 1.0, %v5349
    %v5351 = vrcp.pop %v5327
    %v5352 = vmul.f32 1.0, %v5351
    %v5353 = vrcp.pop %v5328
    %v5354 = vmul.f32 1.0, %v5353
    %v5355 = vrcp.pop %v5329
    %v5356 = vmul.f32 1.0, %v5355
    %v5357 = vrcp.pop %v5330
    %v5358 = vmul.f32 1.0, %v5357
    %v5359 = vrcp.pop %v5331
    %v5360 = vmul.f32 1.0, %v5359
    %v5361 = vrcp.pop %v5332
    %v5362 = vmul.f32 1.0, %v5361
    %v5363 = vrcp.pop %v5333
    %v5364 = vmul.f32 1.0, %v5363
    %v5365 = vrcp.pop %v5334
    %v5366 = vmul.f32 1.0, %v5365
    %v5367 = vmul.f32 %v5336, 1.0614054
    %v5368 = vmul.f32 %v5338, 1.0614054
    %v5369 = vmul.f32 %v5340, 1.0614054
    %v5370 = vmul.f32 %v5342, 1.0614054
    %v5371 = vmul.f32 %v5344, 1.0614054
    %v5372 = vmul.f32 %v5346, 1.0614054
    %v5373 = vmul.f32 %v5348, 1.0614054
    %v5374 = vmul.f32 %v5350, 1.0614054
    %v5375 = vmul.f32 %v5352, 1.0614054
    %v5376 = vmul.f32 %v5354, 1.0614054
    %v5377 = vmul.f32 %v5356, 1.0614054
    %v5378 = vmul.f32 %v5358, 1.0614054
    %v5379 = vmul.f32 %v5360, 1.0614054
    %v5380 = vmul.f32 %v5362, 1.0614054
    %v5381 = vmul.f32 %v5364, 1.0614054
    %v5382 = vmul.f32 %v5366, 1.0614054
    %v5383 = vadd.f32 %v5367, -1.4531521
    %v5384 = vadd.f32 %v5368, -1.4531521
    %v5385 = vadd.f32 %v5369, -1.4531521
    %v5386 = vadd.f32 %v5370, -1.4531521
    %v5387 = vadd.f32 %v5371, -1.4531521
    %v5388 = vadd.f32 %v5372, -1.4531521
    %v5389 = vadd.f32 %v5373, -1.4531521
    %v5390 = vadd.f32 %v5374, -1.4531521
    %v5391 = vadd.f32 %v5375, -1.4531521
    %v5392 = vadd.f32 %v5376, -1.4531521
    %v5393 = vadd.f32 %v5377, -1.4531521
    %v5394 = vadd.f32 %v5378, -1.4531521
    %v5395 = vadd.f32 %v5379, -1.4531521
    %v5396 = vadd.f32 %v5380, -1.4531521
    %v5397 = vadd.f32 %v5381, -1.4531521
    %v5398 = vadd.f32 %v5382, -1.4531521
    %v5399 = vmul.f32 %v5383, %v5336
    %v5400 = vmul.f32 %v5384, %v5338
    %v5401 = vmul.f32 %v5385, %v5340
    %v5402 = vmul.f32 %v5386, %v5342
    %v5403 = vmul.f32 %v5387, %v5344
    %v5404 = vmul.f32 %v5388, %v5346
    %v5405 = vmul.f32 %v5389, %v5348
    %v5406 = vmul.f32 %v5390, %v5350
    %v5407 = vmul.f32 %v5391, %v5352
    %v5408 = vmul.f32 %v5392, %v5354
    %v5409 = vmul.f32 %v5393, %v5356
    %v5410 = vmul.f32 %v5394, %v5358
    %v5411 = vmul.f32 %v5395, %v5360
    %v5412 = vmul.f32 %v5396, %v5362
    %v5413 = vmul.f32 %v5397, %v5364
    %v5414 = vmul.f32 %v5398, %v5366
    %v5415 = vadd.f32 %v5399, 1.4214138
    %v5416 = vadd.f32 %v5400, 1.4214138
    %v5417 = vadd.f32 %v5401, 1.4214138
    %v5418 = vadd.f32 %v5402, 1.4214138
    %v5419 = vadd.f32 %v5403, 1.4214138
    %v5420 = vadd.f32 %v5404, 1.4214138
    %v5421 = vadd.f32 %v5405, 1.4214138
    %v5422 = vadd.f32 %v5406, 1.4214138
    %v5423 = vadd.f32 %v5407, 1.4214138
    %v5424 = vadd.f32 %v5408, 1.4214138
    %v5425 = vadd.f32 %v5409, 1.4214138
    %v5426 = vadd.f32 %v5410, 1.4214138
    %v5427 = vadd.f32 %v5411, 1.4214138
    %v5428 = vadd.f32 %v5412, 1.4214138
    %v5429 = vadd.f32 %v5413, 1.4214138
    %v5430 = vadd.f32 %v5414, 1.4214138
    %v5431 = vmul.f32 %v5415, %v5336
    %v5432 = vmul.f32 %v5416, %v5338
    %v5433 = vmul.f32 %v5417, %v5340
    %v5434 = vmul.f32 %v5418, %v5342
    %v5435 = vmul.f32 %v5419, %v5344
    %v5436 = vmul.f32 %v5420, %v5346
    %v5437 = vmul.f32 %v5421, %v5348
    %v5438 = vmul.f32 %v5422, %v5350
    %v5439 = vmul.f32 %v5423, %v5352
    %v5440 = vmul.f32 %v5424, %v5354
    %v5441 = vmul.f32 %v5425, %v5356
    %v5442 = vmul.f32 %v5426, %v5358
    %v5443 = vmul.f32 %v5427, %v5360
    %v5444 = vmul.f32 %v5428, %v5362
    %v5445 = vmul.f32 %v5429, %v5364
    %v5446 = vmul.f32 %v5430, %v5366
    %v5447 = vadd.f32 %v5431, -0.28449672
    %v5448 = vadd.f32 %v5432, -0.28449672
    %v5449 = vadd.f32 %v5433, -0.28449672
    %v5450 = vadd.f32 %v5434, -0.28449672
    %v5451 = vadd.f32 %v5435, -0.28449672
    %v5452 = vadd.f32 %v5436, -0.28449672
    %v5453 = vadd.f32 %v5437, -0.28449672
    %v5454 = vadd.f32 %v5438, -0.28449672
    %v5455 = vadd.f32 %v5439, -0.28449672
    %v5456 = vadd.f32 %v5440, -0.28449672
    %v5457 = vadd.f32 %v5441, -0.28449672
    %v5458 = vadd.f32 %v5442, -0.28449672
    %v5459 = vadd.f32 %v5443, -0.28449672
    %v5460 = vadd.f32 %v5444, -0.28449672
    %v5461 = vadd.f32 %v5445, -0.28449672
    %v5462 = vadd.f32 %v5446, -0.28449672
    %v5463 = vmul.f32 %v5447, %v5336
    %v5464 = vmul.f32 %v5448, %v5338
    %v5465 = vmul.f32 %v5449, %v5340
    %v5466 = vmul.f32 %v5450, %v5342
    %v5467 = vmul.f32 %v5451, %v5344
    %v5468 = vmul.f32 %v5452, %v5346
    %v5469 = vmul.f32 %v5453, %v5348
    %v5470 = vmul.f32 %v5454, %v5350
    %v5471 = vmul.f32 %v5455, %v5352
    %v5472 = vmul.f32 %v5456, %v5354
    %v5473 = vmul.f32 %v5457, %v5356
    %v5474 = vmul.f32 %v5458, %v5358
    %v5475 = vmul.f32 %v5459, %v5360
    %v5476 = vmul.f32 %v5460, %v5362
    %v5477 = vmul.f32 %v5461, %v5364
    %v5478 = vmul.f32 %v5462, %v5366
    %v5479 = vadd.f32 %v5463, 0.2548296
    %v5480 = vadd.f32 %v5464, 0.2548296
    %v5481 = vadd.f32 %v5465, 0.2548296
    %v5482 = vadd.f32 %v5466, 0.2548296
    %v5483 = vadd.f32 %v5467, 0.2548296
    %v5484 = vadd.f32 %v5468, 0.2548296
    %v5485 = vadd.f32 %v5469, 0.2548296
    %v5486 = vadd.f32 %v5470, 0.2548296
    %v5487 = vadd.f32 %v5471, 0.2548296
    %v5488 = vadd.f32 %v5472, 0.2548296
    %v5489 = vadd.f32 %v5473, 0.2548296
    %v5490 = vadd.f32 %v5474, 0.2548296
    %v5491 = vadd.f32 %v5475, 0.2548296
    %v5492 = vadd.f32 %v5476, 0.2548296
    %v5493 = vadd.f32 %v5477, 0.2548296
    %v5494 = vadd.f32 %v5478, 0.2548296
    %v5495 = vmul.f32 %v5479, %v5336
    %v5496 = vmul.f32 %v5480, %v5338
    %v5497 = vmul.f32 %v5481, %v5340
    %v5498 = vmul.f32 %v5482, %v5342
    %v5499 = vmul.f32 %v5483, %v5344
    %v5500 = vmul.f32 %v5484, %v5346
    %v5501 = vmul.f32 %v5485, %v5348
    %v5502 = vmul.f32 %v5486, %v5350
    %v5503 = vmul.f32 %v5487, %v5352
    %v5504 = vmul.f32 %v5488, %v5354
    %v5505 = vmul.f32 %v5489, %v5356
    %v5506 = vmul.f32 %v5490, %v5358
    %v5507 = vmul.f32 %v5491, %v5360
    %v5508 = vmul.f32 %v5492, %v5362
    %v5509 = vmul.f32 %v5493, %v5364
    %v5510 = vmul.f32 %v5494, %v5366
    %v5511 = vsub.f32 0.0, %v5287
    %v5512 = vsub.f32 0.0, %v5288
    %v5513 = vsub.f32 0.0, %v5289
    %v5514 = vsub.f32 0.0, %v5290
    %v5515 = vsub.f32 0.0, %v5291
    %v5516 = vsub.f32 0.0, %v5292
    %v5517 = vsub.f32 0.0, %v5293
    %v5518 = vsub.f32 0.0, %v5294
    %v5519 = vsub.f32 0.0, %v5295
    %v5520 = vsub.f32 0.0, %v5296
    %v5521 = vsub.f32 0.0, %v5297
    %v5522 = vsub.f32 0.0, %v5298
    %v5523 = vsub.f32 0.0, %v5299
    %v5524 = vsub.f32 0.0, %v5300
    %v5525 = vsub.f32 0.0, %v5301
    %v5526 = vsub.f32 0.0, %v5302
    %v5527 = vmul.f32 %v5511, %v5287
    %v5528 = vmul.f32 %v5512, %v5288
    %v5529 = vmul.f32 %v5513, %v5289
    %v5530 = vmul.f32 %v5514, %v5290
    %v5531 = vmul.f32 %v5515, %v5291
    %v5532 = vmul.f32 %v5516, %v5292
    %v5533 = vmul.f32 %v5517, %v5293
    %v5534 = vmul.f32 %v5518, %v5294
    %v5535 = vmul.f32 %v5519, %v5295
    %v5536 = vmul.f32 %v5520, %v5296
    %v5537 = vmul.f32 %v5521, %v5297
    %v5538 = vmul.f32 %v5522, %v5298
    %v5539 = vmul.f32 %v5523, %v5299
    %v5540 = vmul.f32 %v5524, %v5300
    %v5541 = vmul.f32 %v5525, %v5301
    %v5542 = vmul.f32 %v5526, %v5302
    %v5543 = vmul.f32 %v5527, 1.442695
    %v5544 = vpow.pop %v5543
    %v5545 = vmul.f32 %v5528, 1.442695
    %v5546 = vpow.pop %v5545
    %v5547 = vmul.f32 %v5529, 1.442695
    %v5548 = vpow.pop %v5547
    %v5549 = vmul.f32 %v5530, 1.442695
    %v5550 = vpow.pop %v5549
    %v5551 = vmul.f32 %v5531, 1.442695
    %v5552 = vpow.pop %v5551
    %v5553 = vmul.f32 %v5532, 1.442695
    %v5554 = vpow.pop %v5553
    %v5555 = vmul.f32 %v5533, 1.442695
    %v5556 = vpow.pop %v5555
    %v5557 = vmul.f32 %v5534, 1.442695
    %v5558 = vpow.pop %v5557
    %v5559 = vmul.f32 %v5535, 1.442695
    %v5560 = vpow.pop %v5559
    %v5561 = vmul.f32 %v5536, 1.442695
    %v5562 = vpow.pop %v5561
    %v5563 = vmul.f32 %v5537, 1.442695
    %v5564 = vpow.pop %v5563
    %v5565 = vmul.f32 %v5538, 1.442695
    %v5566 = vpow.pop %v5565
    %v5567 = vmul.f32 %v5539, 1.442695
    %v5568 = vpow.pop %v5567
    %v5569 = vmul.f32 %v5540, 1.442695
    %v5570 = vpow.pop %v5569
    %v5571 = vmul.f32 %v5541, 1.442695
    %v5572 = vpow.pop %v5571
    %v5573 = vmul.f32 %v5542, 1.442695
    %v5574 = vpow.pop %v5573
    %v5575 = vmul.f32 %v5495, %v5544
    %v5576 = vmul.f32 %v5496, %v5546
    %v5577 = vmul.f32 %v5497, %v5548
    %v5578 = vmul.f32 %v5498, %v5550
    %v5579 = vmul.f32 %v5499, %v5552
    %v5580 = vmul.f32 %v5500, %v5554
    %v5581 = vmul.f32 %v5501, %v5556
    %v5582 = vmul.f32 %v5502, %v5558
    %v5583 = vmul.f32 %v5503, %v5560
    %v5584 = vmul.f32 %v5504, %v5562
    %v5585 = vmul.f32 %v5505, %v5564
    %v5586 = vmul.f32 %v5506, %v5566
    %v5587 = vmul.f32 %v5507, %v5568
    %v5588 = vmul.f32 %v5508, %v5570
    %v5589 = vmul.f32 %v5509, %v5572
    %v5590 = vmul.f32 %v5510, %v5574
    %v5591 = vsub.f32 1.0, %v5575
    %v5592 = vsub.f32 1.0, %v5576
    %v5593 = vsub.f32 1.0, %v5577
    %v5594 = vsub.f32 1.0, %v5578
    %v5595 = vsub.f32 1.0, %v5579
    %v5596 = vsub.f32 1.0, %v5580
    %v5597 = vsub.f32 1.0, %v5581
    %v5598 = vsub.f32 1.0, %v5582
    %v5599 = vsub.f32 1.0, %v5583
    %v5600 = vsub.f32 1.0, %v5584
    %v5601 = vsub.f32 1.0, %v5585
    %v5602 = vsub.f32 1.0, %v5586
    %v5603 = vsub.f32 1.0, %v5587
    %v5604 = vsub.f32 1.0, %v5588
    %v5605 = vsub.f32 1.0, %v5589
    %v5606 = vsub.f32 1.0, %v5590
    %v5607 = vmul.f32 %v5271, %v5591
    %v5608 = vmul.f32 %v5272, %v5592
    %v5609 = vmul.f32 %v5273, %v5593
    %v5610 = vmul.f32 %v5274, %v5594
    %v5611 = vmul.f32 %v5275, %v5595
    %v5612 = vmul.f32 %v5276, %v5596
    %v5613 = vmul.f32 %v5277, %v5597
    %v5614 = vmul.f32 %v5278, %v5598
    %v5615 = vmul.f32 %v5279, %v5599
    %v5616 = vmul.f32 %v5280, %v5600
    %v5617 = vmul.f32 %v5281, %v5601
    %v5618 = vmul.f32 %v5282, %v5602
    %v5619 = vmul.f32 %v5283, %v5603
    %v5620 = vmul.f32 %v5284, %v5604
    %v5621 = vmul.f32 %v5285, %v5605
    %v5622 = vmul.f32 %v5286, %v5606
    %v5623 = vadd.f32 %v5607, 1.0
    %v5624 = vadd.f32 %v5608, 1.0
    %v5625 = vadd.f32 %v5609, 1.0
    %v5626 = vadd.f32 %v5610, 1.0
    %v5627 = vadd.f32 %v5611, 1.0
    %v5628 = vadd.f32 %v5612, 1.0
    %v5629 = vadd.f32 %v5613, 1.0
    %v5630 = vadd.f32 %v5614, 1.0
    %v5631 = vadd.f32 %v5615, 1.0
    %v5632 = vadd.f32 %v5616, 1.0
    %v5633 = vadd.f32 %v5617, 1.0
    %v5634 = vadd.f32 %v5618, 1.0
    %v5635 = vadd.f32 %v5619, 1.0
    %v5636 = vadd.f32 %v5620, 1.0
    %v5637 = vadd.f32 %v5621, 1.0
    %v5638 = vadd.f32 %v5622, 1.0
    %v5639 = vmul.f32 %v5223, %v5623
    %v5640 = vmul.f32 %v5224, %v5624
    %v5641 = vmul.f32 %v5225, %v5625
    %v5642 = vmul.f32 %v5226, %v5626
    %v5643 = vmul.f32 %v5227, %v5627
    %v5644 = vmul.f32 %v5228, %v5628
    %v5645 = vmul.f32 %v5229, %v5629
    %v5646 = vmul.f32 %v5230, %v5630
    %v5647 = vmul.f32 %v5231, %v5631
    %v5648 = vmul.f32 %v5232, %v5632
    %v5649 = vmul.f32 %v5233, %v5633
    %v5650 = vmul.f32 %v5234, %v5634
    %v5651 = vmul.f32 %v5235, %v5635
    %v5652 = vmul.f32 %v5236, %v5636
    %v5653 = vmul.f32 %v5237, %v5637
    %v5654 = vmul.f32 %v5238, %v5638
    %v5655 = vld [vmem:[%s9] sm:$0xff]
    %v5656 = vld [vmem:[%s9 + $0x8] sm:$0xff]
    %v5657 = vld [vmem:[%s9 + $0x10] sm:$0xff]
    %v5658 = vld [vmem:[%s9 + $0x18] sm:$0xff]
    %v5659 = vld [vmem:[%s10] sm:$0x1]
    %v5661 = vlaneseq
    %v5662 = vshrl.u32 %v5661, 7
    %v5663 = vsub.s32 0, %v5662
    %v5664 = vrot.slane %v5659, %v5663
    %v5667 = vsel %vm5049, %v5639, 0
    %v5670 = vsel %vm5049, %v5640, 0
    %v5673 = vsel %vm5049, %v5641, 0
    %v5676 = vsel %vm5049, %v5642, 0
    %v5679 = vsel %vm5049, %v5643, 0
    %v5682 = vsel %vm5049, %v5644, 0
    %v5685 = vsel %vm5049, %v5645, 0
    %v5688 = vsel %vm5049, %v5646, 0
    %v5691 = vsel %vm5049, %v5647, 0
    %v5694 = vsel %vm5049, %v5648, 0
    %v5697 = vsel %vm5049, %v5649, 0
    %v5700 = vsel %vm5049, %v5650, 0
    %v5703 = vsel %vm5049, %v5651, 0
    %v5706 = vsel %vm5049, %v5652, 0
    %v5709 = vsel %vm5049, %v5653, 0
    %v5712 = vsel %vm5049, %v5654, 0
    %5714 = vmatprep.subr.mxu0 0.0
    %5715 = vmatpush1.msra.mxu0 0.0
    %5716 = vmatprep.subr.mxu0 0.0
    %5717 = vmatpush1.msra.mxu0 0.0
    %5718 = vmatprep.subr.mxu0 0.0
    %5719 = vmatpush1.msra.mxu0 0.0
    %5720 = vmatprep.subr.mxu0 0.0
    %5721 = vmatpush1.msra.mxu0 0.0
    %5722 = vmatprep.subr.mxu0 0.0
    %5723 = vmatpush1.msra.mxu0 0.0
    %5724 = vmatprep.subr.mxu0 0.0
    %5725 = vmatpush1.msra.mxu0 0.0
    %5726 = vmatprep.subr.mxu0 0.0
    %5727 = vmatpush1.msra.mxu0 0.0
    %5728 = vmatprep.subr.mxu0 0.0
    %5729 = vmatpush1.msra.mxu0 0.0
    %5730 = vmatprep.subr.mxu0 0.0
    %5731 = vmatpush1.msra.mxu0 0.0
    %5732 = vmatprep.subr.mxu0 0.0
    %5733 = vmatpush1.msra.mxu0 0.0
    %5734 = vmatprep.subr.mxu0 0.0
    %5735 = vmatpush1.msra.mxu0 0.0
    %5736 = vmatprep.subr.mxu0 0.0
    %5737 = vmatpush1.msra.mxu0 0.0
    %5738 = vmatprep.subr.mxu0 0.0
    %5739 = vmatpush1.msra.mxu0 %v5658
    %5740 = vmatprep.subr.mxu0 0.0
    %5741 = vmatpush1.msra.mxu0 %v5657
    %5742 = vmatprep.subr.mxu0 0.0
    %5743 = vmatpush1.msra.mxu0 %v5656
    %5744 = vmatprep.subr.mxu0 0.0
    %5745 = vmatpush1.msra.mxu0 %v5655
    %5746 = vmatprep.subr.mxu0 0.0
    %5747 = vmatpush2.msra.mxu0 0.0
    %5748 = vmatprep.subr.mxu0 0.0
    %5749 = vmatpush2.msra.mxu0 0.0
    %5750 = vmatprep.subr.mxu0 0.0
    %5751 = vmatpush2.msra.mxu0 0.0
    %5752 = vmatprep.subr.mxu0 0.0
    %5753 = vmatpush2.msra.mxu0 0.0
    %5754 = vmatprep.subr.mxu0 0.0
    %5755 = vmatpush2.msra.mxu0 0.0
    %5756 = vmatprep.subr.mxu0 0.0
    %5757 = vmatpush2.msra.mxu0 0.0
    %5758 = vmatprep.subr.mxu0 0.0
    %5759 = vmatpush2.msra.mxu0 0.0
    %5760 = vmatprep.subr.mxu0 0.0
    %5761 = vmatpush2.msra.mxu0 0.0
    %5762 = vmatprep.subr.mxu0 0.0
    %5763 = vmatpush2.msra.mxu0 0.0
    %5764 = vmatprep.subr.mxu0 0.0
    %5765 = vmatpush2.msra.mxu0 0.0
    %5766 = vmatprep.subr.mxu0 0.0
    %5767 = vmatpush2.msra.mxu0 0.0
    %5768 = vmatprep.subr.mxu0 0.0
    %5769 = vmatpush2.msra.mxu0 0.0
    %5770 = vmatprep.subr.mxu0 0.0
    %5771 = vmatpush2.msra.mxu0 0.0
    %5772 = vmatprep.subr.mxu0 0.0
    %5773 = vmatpush2.msra.mxu0 0.0
    %5774 = vmatprep.subr.mxu0 0.0
    %5775 = vmatpush2.msra.mxu0 0.0
    %5776 = vmatprep.subr.mxu0 0.0
    %5777 = vmatpush2.msra.mxu0 0.0
    %5778 = vmatprep.mubr.f32.mxu0 0.0
    %5779 = vmatmul.mubr.f32.gmra.mxu0 %v5667
    %v5780 = vpop.f32.mrf.mxu0
    %v5781 = vadd.f32 %v5664, %v5780
    %v5782 = vpop.f32.mrf.mxu0
    %5783 = vmatprep.mubr.f32.mxu0 0.0
    %5784 = vmatmul.mubr.f32.gmra.mxu0 %v5670
    %v5785 = vpop.f32.mrf.mxu0
    %v5786 = vadd.f32 %v5664, %v5785
    %v5787 = vpop.f32.mrf.mxu0
    %5788 = vmatprep.mubr.f32.mxu0 0.0
    %5789 = vmatmul.mubr.f32.gmra.mxu0 %v5673
    %v5790 = vpop.f32.mrf.mxu0
    %v5791 = vadd.f32 %v5664, %v5790
    %v5792 = vpop.f32.mrf.mxu0
    %5793 = vmatprep.mubr.f32.mxu0 0.0
    %5794 = vmatmul.mubr.f32.gmra.mxu0 %v5676
    %v5795 = vpop.f32.mrf.mxu0
    %v5796 = vadd.f32 %v5664, %v5795
    %v5797 = vpop.f32.mrf.mxu0
    %5798 = vmatprep.mubr.f32.mxu0 0.0
    %5799 = vmatmul.mubr.f32.gmra.mxu0 %v5679
    %v5800 = vpop.f32.mrf.mxu0
    %v5801 = vadd.f32 %v5664, %v5800
    %v5802 = vpop.f32.mrf.mxu0
    %5803 = vmatprep.mubr.f32.mxu0 0.0
    %5804 = vmatmul.mubr.f32.gmra.mxu0 %v5682
    %v5805 = vpop.f32.mrf.mxu0
    %v5806 = vadd.f32 %v5664, %v5805
    %v5807 = vpop.f32.mrf.mxu0
    %5808 = vmatprep.mubr.f32.mxu0 0.0
    %5809 = vmatmul.mubr.f32.gmra.mxu0 %v5685
    %v5810 = vpop.f32.mrf.mxu0
    %v5811 = vadd.f32 %v5664, %v5810
    %v5812 = vpop.f32.mrf.mxu0
    %5813 = vmatprep.mubr.f32.mxu0 0.0
    %5814 = vmatmul.mubr.f32.gmra.mxu0 %v5688
    %v5815 = vpop.f32.mrf.mxu0
    %v5816 = vadd.f32 %v5664, %v5815
    %v5817 = vpop.f32.mrf.mxu0
    %5818 = vmatprep.mubr.f32.mxu0 0.0
    %5819 = vmatmul.mubr.f32.gmra.mxu0 %v5691
    %v5820 = vpop.f32.mrf.mxu0
    %v5821 = vadd.f32 %v5664, %v5820
    %v5822 = vpop.f32.mrf.mxu0
    %5823 = vmatprep.mubr.f32.mxu0 0.0
    %5824 = vmatmul.mubr.f32.gmra.mxu0 %v5694
    %v5825 = vpop.f32.mrf.mxu0
    %v5826 = vadd.f32 %v5664, %v5825
    %v5827 = vpop.f32.mrf.mxu0
    %5828 = vmatprep.mubr.f32.mxu0 0.0
    %5829 = vmatmul.mubr.f32.gmra.mxu0 %v5697
    %v5830 = vpop.f32.mrf.mxu0
    %v5831 = vadd.f32 %v5664, %v5830
    %v5832 = vpop.f32.mrf.mxu0
    %5833 = vmatprep.mubr.f32.mxu0 0.0
    %5834 = vmatmul.mubr.f32.gmra.mxu0 %v5700
    %v5835 = vpop.f32.mrf.mxu0
    %v5836 = vadd.f32 %v5664, %v5835
    %v5837 = vpop.f32.mrf.mxu0
    %5838 = vmatprep.mubr.f32.mxu0 0.0
    %5839 = vmatmul.mubr.f32.gmra.mxu0 %v5703
    %v5840 = vpop.f32.mrf.mxu0
    %v5841 = vadd.f32 %v5664, %v5840
    %v5842 = vpop.f32.mrf.mxu0
    %5843 = vmatprep.mubr.f32.mxu0 0.0
    %5844 = vmatmul.mubr.f32.gmra.mxu0 %v5706
    %v5845 = vpop.f32.mrf.mxu0
    %v5846 = vadd.f32 %v5664, %v5845
    %v5847 = vpop.f32.mrf.mxu0
    %5848 = vmatprep.mubr.f32.mxu0 0.0
    %5849 = vmatmul.mubr.f32.gmra.mxu0 %v5709
    %v5850 = vpop.f32.mrf.mxu0
    %v5851 = vadd.f32 %v5664, %v5850
    %v5852 = vpop.f32.mrf.mxu0
    %5853 = vmatprep.mubr.f32.mxu0 0.0
    %5854 = vmatmul.mubr.f32.gmra.mxu0 %v5712
    %v5855 = vpop.f32.mrf.mxu0
    %v5856 = vadd.f32 %v5664, %v5855
    %v5857 = vpop.f32.mrf.mxu0
    %5858 = vdwg.mxu0
    %v5859 = vmul.f32 %v5781, %v238
    %v5860 = vmul.f32 %v5786, %v243
    %v5861 = vmul.f32 %v5791, %v248
    %v5862 = vmul.f32 %v5796, %v253
    %v5863 = vmul.f32 %v5801, %v258
    %v5864 = vmul.f32 %v5806, %v263
    %v5865 = vmul.f32 %v5811, %v268
    %v5866 = vmul.f32 %v5816, %v273
    %v5867 = vmul.f32 %v5821, %v278
    %v5868 = vmul.f32 %v5826, %v283
    %v5869 = vmul.f32 %v5831, %v288
    %v5870 = vmul.f32 %v5836, %v293
    %v5871 = vmul.f32 %v5841, %v298
    %v5872 = vmul.f32 %v5846, %v303
    %v5873 = vmul.f32 %v5851, %v308
    %v5874 = vmul.f32 %v5856, %v313
    %v5875 = vld [vmem:[#allocation11] sm:$0xff]
    %v5876 = vld [vmem:[#allocation11 + $0x8] sm:$0xff]
    %v5877 = vld [vmem:[%s12] sm:$0x1]
    %v5879 = vlaneseq
    %v5880 = vshrl.u32 %v5879, 7
    %v5881 = vsub.s32 0, %v5880
    %v5882 = vrot.slane %v5877, %v5881
    %v5885 = vsel %vm122, %v5859, 0
    %v5888 = vsel %vm122, %v5860, 0
    %v5891 = vsel %vm122, %v5861, 0
    %v5894 = vsel %vm122, %v5862, 0
    %v5897 = vsel %vm122, %v5863, 0
    %v5900 = vsel %vm122, %v5864, 0
    %v5903 = vsel %vm122, %v5865, 0
    %v5906 = vsel %vm122, %v5866, 0
    %v5909 = vsel %vm122, %v5867, 0
    %v5912 = vsel %vm122, %v5868, 0
    %v5915 = vsel %vm122, %v5869, 0
    %v5918 = vsel %vm122, %v5870, 0
    %v5921 = vsel %vm122, %v5871, 0
    %v5924 = vsel %vm122, %v5872, 0
    %v5927 = vsel %vm122, %v5873, 0
    %v5930 = vsel %vm122, %v5874, 0
    %5932 = vmatprep.subr.mxu0 0.0
    %5933 = vmatpush1.msra.mxu0 0.0
    %5934 = vmatprep.subr.mxu0 0.0
    %5935 = vmatpush1.msra.mxu0 0.0
    %5936 = vmatprep.subr.mxu0 0.0
    %5937 = vmatpush1.msra.mxu0 0.0
    %5938 = vmatprep.subr.mxu0 0.0
    %5939 = vmatpush1.msra.mxu0 0.0
    %5940 = vmatprep.subr.mxu0 0.0
    %5941 = vmatpush1.msra.mxu0 0.0
    %5942 = vmatprep.subr.mxu0 0.0
    %5943 = vmatpush1.msra.mxu0 0.0
    %5944 = vmatprep.subr.mxu0 0.0
    %5945 = vmatpush1.msra.mxu0 0.0
    %5946 = vmatprep.subr.mxu0 0.0
    %5947 = vmatpush1.msra.mxu0 0.0
    %5948 = vmatprep.subr.mxu0 0.0
    %5949 = vmatpush1.msra.mxu0 0.0
    %5950 = vmatprep.subr.mxu0 0.0
    %5951 = vmatpush1.msra.mxu0 0.0
    %5952 = vmatprep.subr.mxu0 0.0
    %5953 = vmatpush1.msra.mxu0 0.0
    %5954 = vmatprep.subr.mxu0 0.0
    %5955 = vmatpush1.msra.mxu0 0.0
    %5956 = vmatprep.subr.mxu0 0.0
    %5957 = vmatpush1.msra.mxu0 0.0
    %5958 = vmatprep.subr.mxu0 0.0
    %5959 = vmatpush1.msra.mxu0 0.0
    %5960 = vmatprep.subr.mxu0 0.0
    %5961 = vmatpush1.msra.mxu0 %v5876
    %5962 = vmatprep.subr.mxu0 0.0
    %5963 = vmatpush1.msra.mxu0 %v5875
    %5964 = vmatprep.subr.mxu0 0.0
    %5965 = vmatpush2.msra.mxu0 0.0
    %5966 = vmatprep.subr.mxu0 0.0
    %5967 = vmatpush2.msra.mxu0 0.0
    %5968 = vmatprep.subr.mxu0 0.0
    %5969 = vmatpush2.msra.mxu0 0.0
    %5970 = vmatprep.subr.mxu0 0.0
    %5971 = vmatpush2.msra.mxu0 0.0
    %5972 = vmatprep.subr.mxu0 0.0
    %5973 = vmatpush2.msra.mxu0 0.0
    %5974 = vmatprep.subr.mxu0 0.0
    %5975 = vmatpush2.msra.mxu0 0.0
    %5976 = vmatprep.subr.mxu0 0.0
    %5977 = vmatpush2.msra.mxu0 0.0
    %5978 = vmatprep.subr.mxu0 0.0
    %5979 = vmatpush2.msra.mxu0 0.0
    %5980 = vmatprep.subr.mxu0 0.0
    %5981 = vmatpush2.msra.mxu0 0.0
    %5982 = vmatprep.subr.mxu0 0.0
    %5983 = vmatpush2.msra.mxu0 0.0
    %5984 = vmatprep.subr.mxu0 0.0
    %5985 = vmatpush2.msra.mxu0 0.0
    %5986 = vmatprep.subr.mxu0 0.0
    %5987 = vmatpush2.msra.mxu0 0.0
    %5988 = vmatprep.subr.mxu0 0.0
    %5989 = vmatpush2.msra.mxu0 0.0
    %5990 = vmatprep.subr.mxu0 0.0
    %5991 = vmatpush2.msra.mxu0 0.0
    %5992 = vmatprep.subr.mxu0 0.0
    %5993 = vmatpush2.msra.mxu0 0.0
    %5994 = vmatprep.subr.mxu0 0.0
    %5995 = vmatpush2.msra.mxu0 0.0
    %5996 = vmatprep.mubr.f32.mxu0 0.0
    %5997 = vmatmul.mubr.f32.gmra.mxu0 %v5885
    %v5998 = vpop.f32.mrf.mxu0
    %v5999 = vadd.f32 %v5882, %v5998
    %v6000 = vpop.f32.mrf.mxu0
    %6001 = vmatprep.mubr.f32.mxu0 0.0
    %6002 = vmatmul.mubr.f32.gmra.mxu0 %v5888
    %v6003 = vpop.f32.mrf.mxu0
    %v6004 = vadd.f32 %v5882, %v6003
    %v6005 = vpop.f32.mrf.mxu0
    %6006 = vmatprep.mubr.f32.mxu0 0.0
    %6007 = vmatmul.mubr.f32.gmra.mxu0 %v5891
    %v6008 = vpop.f32.mrf.mxu0
    %v6009 = vadd.f32 %v5882, %v6008
    %v6010 = vpop.f32.mrf.mxu0
    %6011 = vmatprep.mubr.f32.mxu0 0.0
    %6012 = vmatmul.mubr.f32.gmra.mxu0 %v5894
    %v6013 = vpop.f32.mrf.mxu0
    %v6014 = vadd.f32 %v5882, %v6013
    %v6015 = vpop.f32.mrf.mxu0
    %6016 = vmatprep.mubr.f32.mxu0 0.0
    %6017 = vmatmul.mubr.f32.gmra.mxu0 %v5897
    %v6018 = vpop.f32.mrf.mxu0
    %v6019 = vadd.f32 %v5882, %v6018
    %v6020 = vpop.f32.mrf.mxu0
    %6021 = vmatprep.mubr.f32.mxu0 0.0
    %6022 = vmatmul.mubr.f32.gmra.mxu0 %v5900
    %v6023 = vpop.f32.mrf.mxu0
    %v6024 = vadd.f32 %v5882, %v6023
    %v6025 = vpop.f32.mrf.mxu0
    %6026 = vmatprep.mubr.f32.mxu0 0.0
    %6027 = vmatmul.mubr.f32.gmra.mxu0 %v5903
    %v6028 = vpop.f32.mrf.mxu0
    %v6029 = vadd.f32 %v5882, %v6028
    %v6030 = vpop.f32.mrf.mxu0
    %6031 = vmatprep.mubr.f32.mxu0 0.0
    %6032 = vmatmul.mubr.f32.gmra.mxu0 %v5906
    %v6033 = vpop.f32.mrf.mxu0
    %v6034 = vadd.f32 %v5882, %v6033
    %v6035 = vpop.f32.mrf.mxu0
    %6036 = vmatprep.mubr.f32.mxu0 0.0
    %6037 = vmatmul.mubr.f32.gmra.mxu0 %v5909
    %v6038 = vpop.f32.mrf.mxu0
    %v6039 = vadd.f32 %v5882, %v6038
    %v6040 = vpop.f32.mrf.mxu0
    %6041 = vmatprep.mubr.f32.mxu0 0.0
    %6042 = vmatmul.mubr.f32.gmra.mxu0 %v5912
    %v6043 = vpop.f32.mrf.mxu0
    %v6044 = vadd.f32 %v5882, %v6043
    %v6045 = vpop.f32.mrf.mxu0
    %6046 = vmatprep.mubr.f32.mxu0 0.0
    %6047 = vmatmul.mubr.f32.gmra.mxu0 %v5915
    %v6048 = vpop.f32.mrf.mxu0
    %v6049 = vadd.f32 %v5882, %v6048
    %v6050 = vpop.f32.mrf.mxu0
    %6051 = vmatprep.mubr.f32.mxu0 0.0
    %6052 = vmatmul.mubr.f32.gmra.mxu0 %v5918
    %v6053 = vpop.f32.mrf.mxu0
    %v6054 = vadd.f32 %v5882, %v6053
    %v6055 = vpop.f32.mrf.mxu0
    %6056 = vmatprep.mubr.f32.mxu0 0.0
    %6057 = vmatmul.mubr.f32.gmra.mxu0 %v5921
    %v6058 = vpop.f32.mrf.mxu0
    %v6059 = vadd.f32 %v5882, %v6058
    %v6060 = vpop.f32.mrf.mxu0
    %6061 = vmatprep.mubr.f32.mxu0 0.0
    %6062 = vmatmul.mubr.f32.gmra.mxu0 %v5924
    %v6063 = vpop.f32.mrf.mxu0
    %v6064 = vadd.f32 %v5882, %v6063
    %v6065 = vpop.f32.mrf.mxu0
    %6066 = vmatprep.mubr.f32.mxu0 0.0
    %6067 = vmatmul.mubr.f32.gmra.mxu0 %v5927
    %v6068 = vpop.f32.mrf.mxu0
    %v6069 = vadd.f32 %v5882, %v6068
    %v6070 = vpop.f32.mrf.mxu0
    %6071 = vmatprep.mubr.f32.mxu0 0.0
    %6072 = vmatmul.mubr.f32.gmra.mxu0 %v5930
    %v6073 = vpop.f32.mrf.mxu0
    %v6074 = vadd.f32 %v5882, %v6073
    %v6075 = vpop.f32.mrf.mxu0
    %6076 = vdwg.mxu0
    %6077 = vst.msk [vmem:[%s13] sm:$0xff] %vm122, %v5999
    %6078 = vst.msk [vmem:[%s13 + $0x8] sm:$0xff] %vm122, %v6004
    %6079 = vst.msk [vmem:[%s13 + $0x10] sm:$0xff] %vm122, %v6009
    %6080 = vst.msk [vmem:[%s13 + $0x18] sm:$0xff] %vm122, %v6014
    %6081 = vst.msk [vmem:[%s13 + $0x20] sm:$0xff] %vm122, %v6019
    %6082 = vst.msk [vmem:[%s13 + $0x28] sm:$0xff] %vm122, %v6024
    %6083 = vst.msk [vmem:[%s13 + $0x30] sm:$0xff] %vm122, %v6029
    %6084 = vst.msk [vmem:[%s13 + $0x38] sm:$0xff] %vm122, %v6034
    %6085 = vst.msk [vmem:[%s13 + $0x40] sm:$0xff] %vm122, %v6039
    %6086 = vst.msk [vmem:[%s13 + $0x48] sm:$0xff] %vm122, %v6044
    %6087 = vst.msk [vmem:[%s13 + $0x50] sm:$0xff] %vm122, %v6049
    %6088 = vst.msk [vmem:[%s13 + $0x58] sm:$0xff] %vm122, %v6054
    %6089 = vst.msk [vmem:[%s13 + $0x60] sm:$0xff] %vm122, %v6059
    %6090 = vst.msk [vmem:[%s13 + $0x68] sm:$0xff] %vm122, %v6064
    %6091 = vst.msk [vmem:[%s13 + $0x70] sm:$0xff] %vm122, %v6069
    %6092 = vst.msk [vmem:[%s13 + $0x78] sm:$0xff] %vm122, %v6074
    // Predicated region
    $region74: #{tpu_custom_call.1} parent=1 // pred_check
      _
    $region75: #{tpu_custom_call.1} parent=1 // pred_check_branch
      %6094 = sbr.rel (0) target = $region77
    $region76: #{tpu_custom_call.1} parent=1 // pred_region
      _
    $region77: #{tpu_custom_call.1} parent=1 // pred_fallthru
      _
    // Predicated region
    $region78: #{tpu_custom_call.1} parent=1 // pred_check
      _
    $region79: #{tpu_custom_call.1} parent=1 // pred_check_branch
      %6096 = sbr.rel (0) target = $region81
    $region80: #{tpu_custom_call.1} parent=1 // pred_region
      _
    $region81: #{tpu_custom_call.1} parent=1 // pred_fallthru
      _
    %6097 = vsyncpa [#allocation5], 1
    %6098 = vsyncpa [#allocation7], 1
    %6099 = vsyncpa [#allocation10], 1

</llo_original>
